<compile_context>
chip_gen: v7x
topology: tpu7x:2x2x1
jax: 0.10.0
libtpu: 0.0.40
codegen_flags: <defaults>
</compile_context>

<pallas_src>
import jax
import jax.numpy as jnp
import numpy as np
from jax.experimental import pallas as pl
from jax.experimental.pallas import tpu as pltpu


# ----------------------------------------------------------------------------
# NGP hash-grid encoding configuration (matches the PyTorch module's config)
# ----------------------------------------------------------------------------
BASE_RES = 16
N_LEVELS = 8
N_FEATS = 4
LOG2_T = 22
PER_LEVEL_SCALE = 2.0
TABLE_SIZE = 1 << LOG2_T
ENC_DIMS = N_LEVELS * N_FEATS          # 32
GEO_DIMS = 3 * 4                       # x, wi, n, f_d -> 12
IN_FEATURES = GEO_DIMS + ENC_DIMS      # 44
N_NEURONS = 256
OUT_PAD = 128                          # MXU-friendly padded width of layer 5


def ngp_encode(x, tables_flat):
    """Batched NGP hash-grid encoding.

    x:           (N, 3) f32 positions in [0, 1]
    tables_flat: (N_LEVELS * TABLE_SIZE, N_FEATS) bf16
    returns:     (N, 32) bf16
    """
    n = x.shape[0]
    res = np.floor(BASE_RES * PER_LEVEL_SCALE ** np.arange(N_LEVELS)).astype(np.float32)
    dense = (res + 1.0) ** 3 <= TABLE_SIZE          # coarse levels: direct indexing

    x = jnp.clip(x, 0.0, 1.0)
    pos = x[:, None, :] * jnp.asarray(res)[None, :, None]      # (N, L, 3)
    pos0f = jnp.floor(pos)
    w = pos - pos0f                                            # trilinear weights
    pos0 = pos0f.astype(jnp.int32)

    offs = np.array([[(c >> d) & 1 for d in range(3)] for c in range(8)], np.int32)
    c = pos0[:, :, None, :] + jnp.asarray(offs)[None, None, :, :]   # (N, L, 8, 3)
    cu = c.astype(jnp.uint32)

    # Dense (direct) indices — only valid/used for coarse levels.
    # Note: for x == 1.0 exactly the +1 corner is one past the dense grid but
    # stays within the 2^22-entry level slab and is zero-weighted -> benign.
    stride_u = jnp.asarray((res + 1.0).astype(np.uint32))[None, :, None]
    idx_dense = cu[..., 0] + stride_u * (cu[..., 1] + stride_u * cu[..., 2])

    # Hashed indices (tcnn spatial hash).
    idx_hash = (cu[..., 0] * jnp.uint32(1)) \
             ^ (cu[..., 1] * jnp.uint32(2654435761)) \
             ^ (cu[..., 2] * jnp.uint32(805459861))
    idx_hash = idx_hash & jnp.uint32(TABLE_SIZE - 1)

    idx = jnp.where(jnp.asarray(dense)[None, :, None], idx_dense, idx_hash)
    idx = idx.astype(jnp.int32)                                     # (N, L, 8)
    lvl_off = (jnp.arange(N_LEVELS, dtype=jnp.int32) * TABLE_SIZE)[None, :, None]
    gidx = (idx + lvl_off).reshape(n, N_LEVELS * 8)

    # Single batched gather (64 corners across all levels at once).
    gathered = jnp.take(tables_flat, gidx, axis=0, mode="clip")     # (N, 64, F)
    gathered = gathered.reshape(n, N_LEVELS, 8, N_FEATS).astype(jnp.float32)

    offs_j = jnp.asarray(offs)                                      # (8, 3)
    wc = jnp.prod(jnp.where(offs_j[None, None, :, :] == 1,
                            w[:, :, None, :], 1.0 - w[:, :, None, :]),
                  axis=-1)                                          # (N, L, 8)
    z = jnp.sum(gathered * wc[..., None], axis=2)                   # (N, L, F)
    return z.reshape(n, ENC_DIMS).astype(jnp.bfloat16)


# ----------------------------------------------------------------------------
# Pallas MLP kernel: [geo(12) | enc(32)] -> 256 -> 256 -> 256 -> 256 -> 3
# bf16 matmuls on the MXU, f32 accumulation, ReLU between layers, abs output.
# ----------------------------------------------------------------------------
def _mlp_kernel(geo_ref, enc_ref,
                w1g_ref, w1e_ref, b1_ref,
                w2_ref, b2_ref, w3_ref, b3_ref, w4_ref, b4_ref,
                w5_ref, b5_ref,
                out_ref):
    # Layer 1 as two partial matmuls (avoids a (N,44) concat in HBM).
    h = (jnp.dot(geo_ref[...], w1g_ref[...], preferred_element_type=jnp.float32)
         + jnp.dot(enc_ref[...], w1e_ref[...], preferred_element_type=jnp.float32)
         + b1_ref[...])
    h = jnp.maximum(h, 0.0).astype(jnp.bfloat16)
    h = jnp.maximum(
        jnp.dot(h, w2_ref[...], preferred_element_type=jnp.float32) + b2_ref[...],
        0.0).astype(jnp.bfloat16)
    h = jnp.maximum(
        jnp.dot(h, w3_ref[...], preferred_element_type=jnp.float32) + b3_ref[...],
        0.0).astype(jnp.bfloat16)
    h = jnp.maximum(
        jnp.dot(h, w4_ref[...], preferred_element_type=jnp.float32) + b4_ref[...],
        0.0).astype(jnp.bfloat16)
    out = jnp.dot(h, w5_ref[...], preferred_element_type=jnp.float32) + b5_ref[...]
    # Keep compute 128-wide for the MXU, but only store the 3 real columns.
    out_ref[...] = jnp.abs(out[:, :3])


def mlp_pallas(geo, enc, params, tile=2048):
    """geo: (N, 12) bf16; enc: (N, 32) bf16; params: flat tuple of bf16 W / f32 b.

    Returns (N, 3) f32 (abs-ed MLP output).
    """
    n = geo.shape[0]
    # Clamp the tile for small N (avoid huge zero-padding in tiny calls) while
    # keeping it a multiple of 256 for the 256-wide MXU on v6e/v7x.
    tile = max(256, min(tile, pl.cdiv(n, 256) * 256))
    n_pad = pl.cdiv(n, tile) * tile
    if n_pad != n:
        geo = jnp.pad(geo, ((0, n_pad - n), (0, 0)))
        enc = jnp.pad(enc, ((0, n_pad - n), (0, 0)))
    grid = (n_pad // tile,)

    def resident(shape):
        # Constant index_map -> weights stay resident in VMEM across grid steps.
        return pl.BlockSpec(shape, lambda i: (0, 0))

    in_specs = [pl.BlockSpec((tile, GEO_DIMS), lambda i: (i, 0)),
                pl.BlockSpec((tile, ENC_DIMS), lambda i: (i, 0))]
    in_specs += [resident(p.shape) for p in params]

    flops = 2 * n_pad * (GEO_DIMS * N_NEURONS + ENC_DIMS * N_NEURONS
                         + 3 * N_NEURONS * N_NEURONS + N_NEURONS * OUT_PAD)
    weight_bytes = int(sum(int(np.prod(p.shape)) * p.dtype.itemsize for p in params))
    bytes_accessed = n_pad * (GEO_DIMS * 2 + ENC_DIMS * 2 + 3 * 4) + weight_bytes

    out = pl.pallas_call(
        _mlp_kernel,
        out_shape=jax.ShapeDtypeStruct((n_pad, 3), jnp.float32),
        grid=grid,
        in_specs=in_specs,
        out_specs=pl.BlockSpec((tile, 3), lambda i: (i, 0)),
        compiler_params=pltpu.CompilerParams(
            dimension_semantics=("parallel",),
            vmem_limit_bytes=32 * 1024 * 1024),
        cost_estimate=pl.CostEstimate(flops=flops, transcendentals=0,
                                      bytes_accessed=bytes_accessed),
    )(geo, enc, *params)
    return out[:n]


def mlp_reference(geo, enc, params):
    """Pure-JAX reference with the same bf16/f32 mixed precision."""
    w1g, w1e, b1, w2, b2, w3, b3, w4, b4, w5, b5 = params
    h = (jnp.dot(geo, w1g, preferred_element_type=jnp.float32)
         + jnp.dot(enc, w1e, preferred_element_type=jnp.float32) + b1)
    h = jnp.maximum(h, 0.0).astype(jnp.bfloat16)
    h = jnp.maximum(jnp.dot(h, w2, preferred_element_type=jnp.float32) + b2,
                    0.0).astype(jnp.bfloat16)
    h = jnp.maximum(jnp.dot(h, w3, preferred_element_type=jnp.float32) + b3,
                    0.0).astype(jnp.bfloat16)
    h = jnp.maximum(jnp.dot(h, w4, preferred_element_type=jnp.float32) + b4,
                    0.0).astype(jnp.bfloat16)
    out = jnp.dot(h, w5, preferred_element_type=jnp.float32) + b5
    return jnp.abs(out[:, :3])


# ----------------------------------------------------------------------------
# Parameter construction (deterministic, PyTorch-Linear-style uniform init)
# ----------------------------------------------------------------------------
def init_params(key):
    sizes = [(IN_FEATURES, N_NEURONS),
             (N_NEURONS, N_NEURONS),
             (N_NEURONS, N_NEURONS),
             (N_NEURONS, N_NEURONS),
             (N_NEURONS, 3)]
    weights, biases = [], []
    for li, (fan_in, fan_out) in enumerate(sizes):
        key, kw, kb = jax.random.split(key, 3)
        bound = 1.0 / np.sqrt(fan_in)
        w = jax.random.uniform(kw, (fan_in, fan_out), jnp.float32, -bound, bound)
        b = jax.random.uniform(kb, (1, fan_out), jnp.float32, -bound, bound)
        if li == len(sizes) - 1:
            # Pad output layer to 128 columns (zeros) to keep the MXU happy.
            w = jnp.pad(w, ((0, 0), (0, OUT_PAD - fan_out)))
            b = jnp.pad(b, ((0, 0), (0, OUT_PAD - fan_out)))
        weights.append(w.astype(jnp.bfloat16))
        biases.append(b.astype(jnp.float32))

    # Split W1 into its geo (first 12 rows) and encoding (last 32 rows) parts.
    w1g = weights[0][:GEO_DIMS, :]
    w1e = weights[0][GEO_DIMS:, :]
    params = (w1g, w1e, biases[0],
              weights[1], biases[1], weights[2], biases[2],
              weights[3], biases[3], weights[4], biases[4])

    key, kt = jax.random.split(key)
    # NGP-style small-uniform hash-table init, stored flat + bf16.
    tables_flat = jax.random.uniform(kt, (N_LEVELS * TABLE_SIZE, N_FEATS),
                                     jnp.bfloat16, -1e-4, 1e-4)
    return params, tables_flat


# ----------------------------------------------------------------------------
# Full NRField forward
# ----------------------------------------------------------------------------
@jax.jit
def nrfield_forward(p, wi, n, f_d, bb_min, bb_max, tables_flat, params):
    # normalize positions into the bounding box: (si.p - bb_min)/(bb_max - bb_min)
    x = (p - bb_min) / (bb_max - bb_min)                       # (N, 3)
    z_x = ngp_encode(x, tables_flat)                           # (N, 32) bf16
    geo = jnp.concatenate([x, wi, n, f_d], axis=1).astype(jnp.bfloat16)  # (N, 12)
    return mlp_pallas(geo, z_x, params)                        # (N, 3) f32


if __name__ == "__main__":
    key = jax.random.PRNGKey(0)
    params, tables_flat = init_params(key)

    N = 1000  # number of surface-interaction samples (exercises cdiv padding)
    bb_min = jnp.array([-1.0, -1.0, -1.0], jnp.float32)
    bb_max = jnp.array([1.0, 1.0, 1.0], jnp.float32)

    kp, kw, kn, kf = jax.random.split(jax.random.PRNGKey(0), 4)
    p = jax.random.uniform(kp, (N, 3), jnp.float32, -1.0, 1.0)     # si.p
    wi = jax.random.normal(kw, (N, 3), jnp.float32)
    wi = wi / jnp.linalg.norm(wi, axis=1, keepdims=True)           # world-space wi
    nrm = jax.random.normal(kn, (N, 3), jnp.float32)
    nrm = nrm / jnp.linalg.norm(nrm, axis=1, keepdims=True)        # shading normal
    f_d = jax.random.uniform(kf, (N, 3), jnp.float32, 0.0, 1.0)    # diffuse reflectance

    out = nrfield_forward(p, wi, nrm, f_d, bb_min, bb_max, tables_flat, params)
    out = jax.block_until_ready(out)

    # Correctness checks against a pure-JAX reference of the same precision.
    x = (p - bb_min) / (bb_max - bb_min)
    z_x = ngp_encode(x, tables_flat)
    geo = jnp.concatenate([x, wi, nrm, f_d], axis=1).astype(jnp.bfloat16)
    ref = jax.block_until_ready(mlp_reference(geo, z_x, params))

    assert out.shape == (N, 3) and out.dtype == jnp.float32
    assert bool(jnp.all(out >= 0.0))
    assert bool(jnp.all(jnp.isfinite(out)))
    np.testing.assert_allclose(np.asarray(out), np.asarray(ref), rtol=5e-2, atol=1e-3)
    print("KERNEL_OK")
</pallas_src>

<mosaic_0001>
module attributes {stable_mosaic.version = 11 : i64} {
  func.func private @main(%arg0: i32) attributes {dimension_semantics = [#tpu.dimension_semantics<core_parallel>], iteration_bounds = array<i64: 2>, tpu.core_type = #tpu.core_type<sc_scalar_subcore>, window_params = []} {
    return
  }
}

module attributes {stable_mosaic.version = 11 : i64} {
  func.func private @main(%arg0: i32) attributes {dimension_semantics = [#tpu.dimension_semantics<core_parallel>], iteration_bounds = array<i64: 2>, tpu.core_type = #tpu.core_type<sc_scalar_subcore>, window_params = []} {
    return
  }
}

module attributes {stable_mosaic.version = 11 : i64} {
  func.func @_mlp_kernel(%arg0: i32, %arg1: memref<1024x12xbf16, #tpu.memory_space<vmem>>, %arg2: memref<1024x32xbf16, #tpu.memory_space<vmem>>, %arg3: memref<12x256xbf16, #tpu.memory_space<vmem>>, %arg4: memref<32x256xbf16, #tpu.memory_space<vmem>>, %arg5: memref<1x256xf32, #tpu.memory_space<vmem>>, %arg6: memref<256x256xbf16, #tpu.memory_space<vmem>>, %arg7: memref<1x256xf32, #tpu.memory_space<vmem>>, %arg8: memref<256x256xbf16, #tpu.memory_space<vmem>>, %arg9: memref<1x256xf32, #tpu.memory_space<vmem>>, %arg10: memref<256x256xbf16, #tpu.memory_space<vmem>>, %arg11: memref<1x256xf32, #tpu.memory_space<vmem>>, %arg12: memref<256x128xbf16, #tpu.memory_space<vmem>>, %arg13: memref<1x128xf32, #tpu.memory_space<vmem>>, %arg14: memref<1024x3xf32, #tpu.memory_space<vmem>>) attributes {dimension_semantics = [#tpu.dimension_semantics<parallel>], iteration_bounds = array<i64: 1>, scalar_prefetch = 0 : i64, scratch_operands = 0 : i64, tpu.core_type = #tpu.core_type<tc>, window_params = [{transform_indices = @transform_0, window_bounds = array<i64: 1024, 12>}, {transform_indices = @transform_1, window_bounds = array<i64: 1024, 32>}, {pipeline_mode = #tpu.pipeline_mode<synchronous>, transform_indices = @transform_2, window_bounds = array<i64: 12, 256>}, {pipeline_mode = #tpu.pipeline_mode<synchronous>, transform_indices = @transform_3, window_bounds = array<i64: 32, 256>}, {pipeline_mode = #tpu.pipeline_mode<synchronous>, transform_indices = @transform_4, window_bounds = array<i64: 1, 256>}, {pipeline_mode = #tpu.pipeline_mode<synchronous>, transform_indices = @transform_5, window_bounds = array<i64: 256, 256>}, {pipeline_mode = #tpu.pipeline_mode<synchronous>, transform_indices = @transform_6, window_bounds = array<i64: 1, 256>}, {pipeline_mode = #tpu.pipeline_mode<synchronous>, transform_indices = @transform_7, window_bounds = array<i64: 256, 256>}, {pipeline_mode = #tpu.pipeline_mode<synchronous>, transform_indices = @transform_8, window_bounds = array<i64: 1, 256>}, {pipeline_mode = #tpu.pipeline_mode<synchronous>, transform_indices = @transform_9, window_bounds = array<i64: 256, 256>}, {pipeline_mode = #tpu.pipeline_mode<synchronous>, transform_indices = @transform_10, window_bounds = array<i64: 1, 256>}, {pipeline_mode = #tpu.pipeline_mode<synchronous>, transform_indices = @transform_11, window_bounds = array<i64: 256, 128>}, {pipeline_mode = #tpu.pipeline_mode<synchronous>, transform_indices = @transform_12, window_bounds = array<i64: 1, 128>}, {transform_indices = @transform_13, window_bounds = array<i64: 1024, 3>}]} {
    %c0 = arith.constant 0 : index
    %c0_0 = arith.constant 0 : index
    %0 = vector.load %arg1[%c0, %c0_0] : memref<1024x12xbf16, #tpu.memory_space<vmem>>, vector<1024x12xbf16>
    %c0_1 = arith.constant 0 : index
    %c0_2 = arith.constant 0 : index
    %1 = vector.load %arg3[%c0_1, %c0_2] : memref<12x256xbf16, #tpu.memory_space<vmem>>, vector<12x256xbf16>
    %cst = arith.constant dense<0.000000e+00> : vector<1024x256xf32>
    %2 = tpu.matmul %0, %1, %cst {dimension_numbers = #tpu.dot_dimension_numbers<[1], [0], [0], [1], [0, 0, 1, 1], [], []>} : vector<1024x12xbf16>, vector<12x256xbf16>, vector<1024x256xf32> -> vector<1024x256xf32>
    %c0_3 = arith.constant 0 : index
    %c0_4 = arith.constant 0 : index
    %3 = vector.load %arg2[%c0_3, %c0_4] : memref<1024x32xbf16, #tpu.memory_space<vmem>>, vector<1024x32xbf16>
    %c0_5 = arith.constant 0 : index
    %c0_6 = arith.constant 0 : index
    %4 = vector.load %arg4[%c0_5, %c0_6] : memref<32x256xbf16, #tpu.memory_space<vmem>>, vector<32x256xbf16>
    %cst_7 = arith.constant dense<0.000000e+00> : vector<1024x256xf32>
    %5 = tpu.matmul %3, %4, %cst_7 {dimension_numbers = #tpu.dot_dimension_numbers<[1], [0], [0], [1], [0, 0, 1, 1], [], []>} : vector<1024x32xbf16>, vector<32x256xbf16>, vector<1024x256xf32> -> vector<1024x256xf32>
    %6 = arith.addf %2, %5 : vector<1024x256xf32>
    %c0_8 = arith.constant 0 : index
    %c0_9 = arith.constant 0 : index
    %7 = vector.load %arg5[%c0_8, %c0_9] : memref<1x256xf32, #tpu.memory_space<vmem>>, vector<1x256xf32>
    %8 = vector.broadcast %7 : vector<1x256xf32> to vector<1024x256xf32>
    %9 = arith.addf %6, %8 : vector<1024x256xf32>
    %cst_10 = arith.constant 0.000000e+00 : f32
    %10 = vector.broadcast %cst_10 : f32 to vector<1024x256xf32>
    %11 = arith.maximumf %9, %10 : vector<1024x256xf32>
    %12 = arith.truncf %11 : vector<1024x256xf32> to vector<1024x256xbf16>
    %c0_11 = arith.constant 0 : index
    %c0_12 = arith.constant 0 : index
    %13 = vector.load %arg6[%c0_11, %c0_12] : memref<256x256xbf16, #tpu.memory_space<vmem>>, vector<256x256xbf16>
    %cst_13 = arith.constant dense<0.000000e+00> : vector<1024x256xf32>
    %14 = tpu.matmul %12, %13, %cst_13 {dimension_numbers = #tpu.dot_dimension_numbers<[1], [0], [0], [1], [0, 0, 1, 1], [], []>} : vector<1024x256xbf16>, vector<256x256xbf16>, vector<1024x256xf32> -> vector<1024x256xf32>
    %c0_14 = arith.constant 0 : index
    %c0_15 = arith.constant 0 : index
    %15 = vector.load %arg7[%c0_14, %c0_15] : memref<1x256xf32, #tpu.memory_space<vmem>>, vector<1x256xf32>
    %16 = vector.broadcast %15 : vector<1x256xf32> to vector<1024x256xf32>
    %17 = arith.addf %14, %16 : vector<1024x256xf32>
    %cst_16 = arith.constant 0.000000e+00 : f32
    %18 = vector.broadcast %cst_16 : f32 to vector<1024x256xf32>
    %19 = arith.maximumf %17, %18 : vector<1024x256xf32>
    %20 = arith.truncf %19 : vector<1024x256xf32> to vector<1024x256xbf16>
    %c0_17 = arith.constant 0 : index
    %c0_18 = arith.constant 0 : index
    %21 = vector.load %arg8[%c0_17, %c0_18] : memref<256x256xbf16, #tpu.memory_space<vmem>>, vector<256x256xbf16>
    %cst_19 = arith.constant dense<0.000000e+00> : vector<1024x256xf32>
    %22 = tpu.matmul %20, %21, %cst_19 {dimension_numbers = #tpu.dot_dimension_numbers<[1], [0], [0], [1], [0, 0, 1, 1], [], []>} : vector<1024x256xbf16>, vector<256x256xbf16>, vector<1024x256xf32> -> vector<1024x256xf32>
    %c0_20 = arith.constant 0 : index
    %c0_21 = arith.constant 0 : index
    %23 = vector.load %arg9[%c0_20, %c0_21] : memref<1x256xf32, #tpu.memory_space<vmem>>, vector<1x256xf32>
    %24 = vector.broadcast %23 : vector<1x256xf32> to vector<1024x256xf32>
    %25 = arith.addf %22, %24 : vector<1024x256xf32>
    %cst_22 = arith.constant 0.000000e+00 : f32
    %26 = vector.broadcast %cst_22 : f32 to vector<1024x256xf32>
    %27 = arith.maximumf %25, %26 : vector<1024x256xf32>
    %28 = arith.truncf %27 : vector<1024x256xf32> to vector<1024x256xbf16>
    %c0_23 = arith.constant 0 : index
    %c0_24 = arith.constant 0 : index
    %29 = vector.load %arg10[%c0_23, %c0_24] : memref<256x256xbf16, #tpu.memory_space<vmem>>, vector<256x256xbf16>
    %cst_25 = arith.constant dense<0.000000e+00> : vector<1024x256xf32>
    %30 = tpu.matmul %28, %29, %cst_25 {dimension_numbers = #tpu.dot_dimension_numbers<[1], [0], [0], [1], [0, 0, 1, 1], [], []>} : vector<1024x256xbf16>, vector<256x256xbf16>, vector<1024x256xf32> -> vector<1024x256xf32>
    %c0_26 = arith.constant 0 : index
    %c0_27 = arith.constant 0 : index
    %31 = vector.load %arg11[%c0_26, %c0_27] : memref<1x256xf32, #tpu.memory_space<vmem>>, vector<1x256xf32>
    %32 = vector.broadcast %31 : vector<1x256xf32> to vector<1024x256xf32>
    %33 = arith.addf %30, %32 : vector<1024x256xf32>
    %cst_28 = arith.constant 0.000000e+00 : f32
    %34 = vector.broadcast %cst_28 : f32 to vector<1024x256xf32>
    %35 = arith.maximumf %33, %34 : vector<1024x256xf32>
    %36 = arith.truncf %35 : vector<1024x256xf32> to vector<1024x256xbf16>
    %c0_29 = arith.constant 0 : index
    %c0_30 = arith.constant 0 : index
    %37 = vector.load %arg12[%c0_29, %c0_30] : memref<256x128xbf16, #tpu.memory_space<vmem>>, vector<256x128xbf16>
    %cst_31 = arith.constant dense<0.000000e+00> : vector<1024x128xf32>
    %38 = tpu.matmul %36, %37, %cst_31 {dimension_numbers = #tpu.dot_dimension_numbers<[1], [0], [0], [1], [0, 0, 1, 1], [], []>} : vector<1024x256xbf16>, vector<256x128xbf16>, vector<1024x128xf32> -> vector<1024x128xf32>
    %c0_32 = arith.constant 0 : index
    %c0_33 = arith.constant 0 : index
    %39 = vector.load %arg13[%c0_32, %c0_33] : memref<1x128xf32, #tpu.memory_space<vmem>>, vector<1x128xf32>
    %40 = vector.broadcast %39 : vector<1x128xf32> to vector<1024x128xf32>
    %41 = arith.addf %38, %40 : vector<1024x128xf32>
    %42 = vector.extract_strided_slice %41 {offsets = [0, 0], sizes = [1024, 3], strides = [1, 1]} : vector<1024x128xf32> to vector<1024x3xf32>
    %43 = math.absf %42 : vector<1024x3xf32>
    %c0_34 = arith.constant 0 : index
    %c0_35 = arith.constant 0 : index
    %44 = vector.load %arg14[%c0_34, %c0_35] : memref<1024x3xf32, #tpu.memory_space<vmem>>, vector<1024x3xf32>
    tpu.vector_store %arg14[%c0_34, %c0_35], %43 {strides = array<i32>} : memref<1024x3xf32, #tpu.memory_space<vmem>>, vector<1024x3xf32>,
    return
  }
  func.func @transform_0(%arg0: i32) -> (i32, i32) {
    %c0_i32 = arith.constant 0 : i32
    %c0_i32_0 = arith.constant 0 : i32
    return %arg0, %c0_i32 : i32, i32
  }
  func.func @transform_1(%arg0: i32) -> (i32, i32) {
    %c0_i32 = arith.constant 0 : i32
    %c0_i32_0 = arith.constant 0 : i32
    return %arg0, %c0_i32 : i32, i32
  }
  func.func @transform_2(%arg0: i32) -> (i32, i32) {
    %c0_i32 = arith.constant 0 : i32
    %c0_i32_0 = arith.constant 0 : i32
    %c0_i32_1 = arith.constant 0 : i32
    return %c0_i32, %c0_i32_0 : i32, i32
  }
  func.func @transform_3(%arg0: i32) -> (i32, i32) {
    %c0_i32 = arith.constant 0 : i32
    %c0_i32_0 = arith.constant 0 : i32
    %c0_i32_1 = arith.constant 0 : i32
    return %c0_i32, %c0_i32_0 : i32, i32
  }
  func.func @transform_4(%arg0: i32) -> (i32, i32) {
    %c0_i32 = arith.constant 0 : i32
    %c0_i32_0 = arith.constant 0 : i32
    %c0_i32_1 = arith.constant 0 : i32
    return %c0_i32, %c0_i32_0 : i32, i32
  }
  func.func @transform_5(%arg0: i32) -> (i32, i32) {
    %c0_i32 = arith.constant 0 : i32
    %c0_i32_0 = arith.constant 0 : i32
    %c0_i32_1 = arith.constant 0 : i32
    return %c0_i32, %c0_i32_0 : i32, i32
  }
  func.func @transform_6(%arg0: i32) -> (i32, i32) {
    %c0_i32 = arith.constant 0 : i32
    %c0_i32_0 = arith.constant 0 : i32
    %c0_i32_1 = arith.constant 0 : i32
    return %c0_i32, %c0_i32_0 : i32, i32
  }
  func.func @transform_7(%arg0: i32) -> (i32, i32) {
    %c0_i32 = arith.constant 0 : i32
    %c0_i32_0 = arith.constant 0 : i32
    %c0_i32_1 = arith.constant 0 : i32
    return %c0_i32, %c0_i32_0 : i32, i32
  }
  func.func @transform_8(%arg0: i32) -> (i32, i32) {
    %c0_i32 = arith.constant 0 : i32
    %c0_i32_0 = arith.constant 0 : i32
    %c0_i32_1 = arith.constant 0 : i32
    return %c0_i32, %c0_i32_0 : i32, i32
  }
  func.func @transform_9(%arg0: i32) -> (i32, i32) {
    %c0_i32 = arith.constant 0 : i32
    %c0_i32_0 = arith.constant 0 : i32
    %c0_i32_1 = arith.constant 0 : i32
    return %c0_i32, %c0_i32_0 : i32, i32
  }
  func.func @transform_10(%arg0: i32) -> (i32, i32) {
    %c0_i32 = arith.constant 0 : i32
    %c0_i32_0 = arith.constant 0 : i32
    %c0_i32_1 = arith.constant 0 : i32
    return %c0_i32, %c0_i32_0 : i32, i32
  }
  func.func @transform_11(%arg0: i32) -> (i32, i32) {
    %c0_i32 = arith.constant 0 : i32
    %c0_i32_0 = arith.constant 0 : i32
    %c0_i32_1 = arith.constant 0 : i32
    return %c0_i32, %c0_i32_0 : i32, i32
  }
  func.func @transform_12(%arg0: i32) -> (i32, i32) {
    %c0_i32 = arith.constant 0 : i32
    %c0_i32_0 = arith.constant 0 : i32
    %c0_i32_1 = arith.constant 0 : i32
    return %c0_i32, %c0_i32_0 : i32, i32
  }
  func.func @transform_13(%arg0: i32) -> (i32, i32) {
    %c0_i32 = arith.constant 0 : i32
    %c0_i32_0 = arith.constant 0 : i32
    return %arg0, %c0_i32 : i32, i32
  }
}

</mosaic_0001>

<llo_original>
// kernel: sub.13
$region0: #{sub.13}
  #allocation4 [shape = 's32[1]{0}', space=sflag, size = 0x4, scoped, tag = 'scoped memory for sub.13']
  %s0 = inlined_call_operand.hbm [shape: f32[3], index: 0, kind: input, shape index: {}]
  %s1 = inlined_call_operand.hbm [shape: f32[3], index: 1, kind: input, shape index: {}]
  %s2 = inlined_call_operand.vmem [shape: f32[3], index: 2, kind: output, shape index: {}]
  $region1: #{sub.13} parent=0
    #allocation0 [shape = 'u8[512]{0}', space=vmem, size = 0x400, scoped, tag = 'operand span for operand 0']
    #allocation1 [shape = 's32[1]{0}', space=sflag, size = 0x4, scoped, tag = 'scoped memory for sub.13']
    #allocation2 [shape = 'u8[512]{0}', space=vmem, size = 0x400, scoped, tag = 'operand span for operand 1']
    #allocation3 [shape = 's32[1]{0}', space=sflag, size = 0x4, scoped, tag = 'scoped memory for sub.13']
    %3 = vsyncpa [#allocation1], 0
    %4 = vsyncpa [#allocation3], 0
    %s6 = ssub.s32 16, 16
    %7 = vsyncadd [#allocation1], %s6
    %s9 = sshll.u32 [#allocation0], 4
    %s10 = int_to_ptr.vmem [resolvable:$true] %s9
    %12 = dma.hbm_to_vmem [thread:$0]  %s0, 16, %s10, [#allocation1]
    %s14 = ssub.s32 16, 16
    %15 = vsyncadd [#allocation3], %s14
    %s17 = sshll.u32 [#allocation2], 4
    %s18 = int_to_ptr.vmem [resolvable:$true] %s17
    %20 = dma.hbm_to_vmem [thread:$0]  %s1, 16, %s18, [#allocation3]
    %21 = dma.done [#allocation1], 16
    %22 = dma.done [#allocation3], 16
    %v23 = vld [vmem:[#allocation0] sm:$0x1]
    %v24 = vld [vmem:[#allocation2] sm:$0x1]
    %25 = xla_tuple %v23, %v24
    %26 = xla_tuple %25
    %v27 = vsub.f32 %v23, %v24
    %28 = xla_tuple %v27
    %29 = vst [vmem:[%s2] sm:$0x1] %v27
    %30 = vsyncpa [#allocation1], 1
    %31 = vsyncpa [#allocation3], 1

// kernel: nrfield_forward.1
$region0: #{nrfield_forward.1}
  #allocation0 [shape = 'u32[]', space=smem, size = 0x4, offset = 0x4, fixed_abs, tag = 'smem constant byte address 0x4 - core index']
  #allocation1 [shape = 'u32[144,128]{1,0:T(1,128)}', space=vmem, size = 0x12000, scoped, tag = 'internal scratch']
  %s0 = inlined_call_operand.vmem [shape: bf16[1024,12], index: 0, kind: input, shape index: {}]
  %s1 = inlined_call_operand.vmem [shape: bf16[1024,32], index: 1, kind: input, shape index: {}]
  %s2 = inlined_call_operand.vmem [shape: bf16[12,256], index: 2, kind: input, shape index: {}]
  %s3 = inlined_call_operand.vmem [shape: bf16[32,256], index: 3, kind: input, shape index: {}]
  %s4 = inlined_call_operand.vmem [shape: f32[1,256], index: 4, kind: input, shape index: {}]
  %s5 = inlined_call_operand.vmem [shape: bf16[256,256], index: 5, kind: input, shape index: {}]
  %s6 = inlined_call_operand.vmem [shape: f32[1,256], index: 6, kind: input, shape index: {}]
  %s7 = inlined_call_operand.vmem [shape: bf16[256,256], index: 7, kind: input, shape index: {}]
  %s8 = inlined_call_operand.vmem [shape: f32[1,256], index: 8, kind: input, shape index: {}]
  %s9 = inlined_call_operand.vmem [shape: bf16[256,256], index: 9, kind: input, shape index: {}]
  %s10 = inlined_call_operand.vmem [shape: f32[1,256], index: 10, kind: input, shape index: {}]
  %s11 = inlined_call_operand.vmem [shape: bf16[256,128], index: 11, kind: input, shape index: {}]
  %s12 = inlined_call_operand.vmem [shape: f32[1,128], index: 12, kind: input, shape index: {}]
  %s13 = inlined_call_operand.vmem [shape: f32[1024,3], index: 13, kind: output, shape index: {}]
  %s14 = sld [smem:[#allocation0]]
  $region62: #{nrfield_forward.1} parent=0
    _
  %s16 = ssub.s32 1, %s14
  %s17 = scalar_select 0, %s16, %s14
  // Predicated region
  $region2: #{nrfield_forward.1} parent=0 // pred_check
    _
  $region3: #{nrfield_forward.1} parent=0 // pred_check_branch
    %19 = sbr.rel (0) target = $region5
  $region4: #{nrfield_forward.1} parent=0 // pred_region
    _
  $region5: #{nrfield_forward.1} parent=0 // pred_fallthru
    _
  // Predicated region
  $region6: #{nrfield_forward.1} parent=0 // pred_check
    _
  $region7: #{nrfield_forward.1} parent=0 // pred_check_branch
    %21 = sbr.rel (0) target = $region9
  $region8: #{nrfield_forward.1} parent=0 // pred_region
    _
  $region9: #{nrfield_forward.1} parent=0 // pred_fallthru
    _
  // Predicated region
  $region10: #{nrfield_forward.1} parent=0 // pred_check
    _
  $region11: #{nrfield_forward.1} parent=0 // pred_check_branch
    %23 = sbr.rel (0) target = $region13
  $region12: #{nrfield_forward.1} parent=0 // pred_region
    _
  $region13: #{nrfield_forward.1} parent=0 // pred_fallthru
    _
  // Predicated region
  $region14: #{nrfield_forward.1} parent=0 // pred_check
    _
  $region15: #{nrfield_forward.1} parent=0 // pred_check_branch
    %25 = sbr.rel (0) target = $region17
  $region16: #{nrfield_forward.1} parent=0 // pred_region
    _
  $region17: #{nrfield_forward.1} parent=0 // pred_fallthru
    _
  // Predicated region
  $region18: #{nrfield_forward.1} parent=0 // pred_check
    _
  $region19: #{nrfield_forward.1} parent=0 // pred_check_branch
    %27 = sbr.rel (0) target = $region21
  $region20: #{nrfield_forward.1} parent=0 // pred_region
    _
  $region21: #{nrfield_forward.1} parent=0 // pred_fallthru
    _
  // Predicated region
  $region22: #{nrfield_forward.1} parent=0 // pred_check
    _
  $region23: #{nrfield_forward.1} parent=0 // pred_check_branch
    %29 = sbr.rel (0) target = $region25
  $region24: #{nrfield_forward.1} parent=0 // pred_region
    _
  $region25: #{nrfield_forward.1} parent=0 // pred_fallthru
    _
  // Predicated region
  $region26: #{nrfield_forward.1} parent=0 // pred_check
    _
  $region27: #{nrfield_forward.1} parent=0 // pred_check_branch
    %31 = sbr.rel (0) target = $region29
  $region28: #{nrfield_forward.1} parent=0 // pred_region
    _
  $region29: #{nrfield_forward.1} parent=0 // pred_fallthru
    _
  // Predicated region
  $region30: #{nrfield_forward.1} parent=0 // pred_check
    _
  $region31: #{nrfield_forward.1} parent=0 // pred_check_branch
    %33 = sbr.rel (0) target = $region33
  $region32: #{nrfield_forward.1} parent=0 // pred_region
    _
  $region33: #{nrfield_forward.1} parent=0 // pred_fallthru
    _
  // Predicated region
  $region34: #{nrfield_forward.1} parent=0 // pred_check
    _
  $region35: #{nrfield_forward.1} parent=0 // pred_check_branch
    %35 = sbr.rel (0) target = $region37
  $region36: #{nrfield_forward.1} parent=0 // pred_region
    _
  $region37: #{nrfield_forward.1} parent=0 // pred_fallthru
    _
  // Predicated region
  $region38: #{nrfield_forward.1} parent=0 // pred_check
    _
  $region39: #{nrfield_forward.1} parent=0 // pred_check_branch
    %37 = sbr.rel (0) target = $region41
  $region40: #{nrfield_forward.1} parent=0 // pred_region
    _
  $region41: #{nrfield_forward.1} parent=0 // pred_fallthru
    _
  // Predicated region
  $region42: #{nrfield_forward.1} parent=0 // pred_check
    _
  $region43: #{nrfield_forward.1} parent=0 // pred_check_branch
    %39 = sbr.rel (0) target = $region45
  $region44: #{nrfield_forward.1} parent=0 // pred_region
    _
  $region45: #{nrfield_forward.1} parent=0 // pred_fallthru
    _
  // Predicated region
  $region46: #{nrfield_forward.1} parent=0 // pred_check
    _
  $region47: #{nrfield_forward.1} parent=0 // pred_check_branch
    %41 = sbr.rel (0) target = $region49
  $region48: #{nrfield_forward.1} parent=0 // pred_region
    _
  $region49: #{nrfield_forward.1} parent=0 // pred_fallthru
    _
  // Predicated region
  $region50: #{nrfield_forward.1} parent=0 // pred_check
    _
  $region51: #{nrfield_forward.1} parent=0 // pred_check_branch
    %43 = sbr.rel (0) target = $region53
  $region52: #{nrfield_forward.1} parent=0 // pred_region
    _
  $region53: #{nrfield_forward.1} parent=0 // pred_fallthru
    _
  %v45 = vld [vmem:[%s0] sm:$0xf]
  %v46 = vld [vmem:[%s0 + $0x4] sm:$0xf]
  %v47 = vld [vmem:[%s0 + $0x8] sm:$0xf]
  %v48 = vld [vmem:[%s0 + $0xc] sm:$0xf]
  %v49 = vld [vmem:[%s0 + $0x10] sm:$0xf]
  %v50 = vld [vmem:[%s0 + $0x14] sm:$0xf]
  %v51 = vld [vmem:[%s0 + $0x18] sm:$0xf]
  %v52 = vld [vmem:[%s0 + $0x1c] sm:$0xf]
  %v53 = vld [vmem:[%s0 + $0x20] sm:$0xf]
  %v54 = vld [vmem:[%s0 + $0x24] sm:$0xf]
  %v55 = vld [vmem:[%s0 + $0x28] sm:$0xf]
  %v56 = vld [vmem:[%s0 + $0x2c] sm:$0xf]
  %v57 = vld [vmem:[%s0 + $0x30] sm:$0xf]
  %v58 = vld [vmem:[%s0 + $0x34] sm:$0xf]
  %v59 = vld [vmem:[%s0 + $0x38] sm:$0xf]
  %v60 = vld [vmem:[%s0 + $0x3c] sm:$0xf]
  %v61 = vld [vmem:[%s0 + $0x40] sm:$0xf]
  %v62 = vld [vmem:[%s0 + $0x44] sm:$0xf]
  %v63 = vld [vmem:[%s0 + $0x48] sm:$0xf]
  %v64 = vld [vmem:[%s0 + $0x4c] sm:$0xf]
  %v65 = vld [vmem:[%s0 + $0x50] sm:$0xf]
  %v66 = vld [vmem:[%s0 + $0x54] sm:$0xf]
  %v67 = vld [vmem:[%s0 + $0x58] sm:$0xf]
  %v68 = vld [vmem:[%s0 + $0x5c] sm:$0xf]
  %v69 = vld [vmem:[%s0 + $0x60] sm:$0xf]
  %v70 = vld [vmem:[%s0 + $0x64] sm:$0xf]
  %v71 = vld [vmem:[%s0 + $0x68] sm:$0xf]
  %v72 = vld [vmem:[%s0 + $0x6c] sm:$0xf]
  %v73 = vld [vmem:[%s0 + $0x70] sm:$0xf]
  %v74 = vld [vmem:[%s0 + $0x74] sm:$0xf]
  %v75 = vld [vmem:[%s0 + $0x78] sm:$0xf]
  %v76 = vld [vmem:[%s0 + $0x7c] sm:$0xf]
  %v77 = vld [vmem:[%s0 + $0x80] sm:$0xf]
  %v78 = vld [vmem:[%s0 + $0x84] sm:$0xf]
  %v79 = vld [vmem:[%s0 + $0x88] sm:$0xf]
  %v80 = vld [vmem:[%s0 + $0x8c] sm:$0xf]
  %v81 = vld [vmem:[%s0 + $0x90] sm:$0xf]
  %v82 = vld [vmem:[%s0 + $0x94] sm:$0xf]
  %v83 = vld [vmem:[%s0 + $0x98] sm:$0xf]
  %v84 = vld [vmem:[%s0 + $0x9c] sm:$0xf]
  %v85 = vld [vmem:[%s0 + $0xa0] sm:$0xf]
  %v86 = vld [vmem:[%s0 + $0xa4] sm:$0xf]
  %v87 = vld [vmem:[%s0 + $0xa8] sm:$0xf]
  %v88 = vld [vmem:[%s0 + $0xac] sm:$0xf]
  %v89 = vld [vmem:[%s0 + $0xb0] sm:$0xf]
  %v90 = vld [vmem:[%s0 + $0xb4] sm:$0xf]
  %v91 = vld [vmem:[%s0 + $0xb8] sm:$0xf]
  %v92 = vld [vmem:[%s0 + $0xbc] sm:$0xf]
  %v93 = vld [vmem:[%s0 + $0xc0] sm:$0xf]
  %v94 = vld [vmem:[%s0 + $0xc4] sm:$0xf]
  %v95 = vld [vmem:[%s0 + $0xc8] sm:$0xf]
  %v96 = vld [vmem:[%s0 + $0xcc] sm:$0xf]
  %v97 = vld [vmem:[%s0 + $0xd0] sm:$0xf]
  %v98 = vld [vmem:[%s0 + $0xd4] sm:$0xf]
  %v99 = vld [vmem:[%s0 + $0xd8] sm:$0xf]
  %v100 = vld [vmem:[%s0 + $0xdc] sm:$0xf]
  %v101 = vld [vmem:[%s0 + $0xe0] sm:$0xf]
  %v102 = vld [vmem:[%s0 + $0xe4] sm:$0xf]
  %v103 = vld [vmem:[%s0 + $0xe8] sm:$0xf]
  %v104 = vld [vmem:[%s0 + $0xec] sm:$0xf]
  %v105 = vld [vmem:[%s0 + $0xf0] sm:$0xf]
  %v106 = vld [vmem:[%s0 + $0xf4] sm:$0xf]
  %v107 = vld [vmem:[%s0 + $0xf8] sm:$0xf]
  %v108 = vld [vmem:[%s0 + $0xfc] sm:$0xf]
  %v109 = vld [vmem:[%s0 + $0x100] sm:$0xf]
  %v110 = vld [vmem:[%s0 + $0x104] sm:$0xf]
  %v111 = vld [vmem:[%s0 + $0x108] sm:$0xf]
  %v112 = vld [vmem:[%s0 + $0x10c] sm:$0xf]
  %v113 = vld [vmem:[%s0 + $0x110] sm:$0xf]
  %v114 = vld [vmem:[%s0 + $0x114] sm:$0xf]
  %v115 = vld [vmem:[%s0 + $0x118] sm:$0xf]
  %v116 = vld [vmem:[%s0 + $0x11c] sm:$0xf]
  %v117 = vld [vmem:[%s0 + $0x120] sm:$0xf]
  %v118 = vld [vmem:[%s0 + $0x124] sm:$0xf]
  %v119 = vld [vmem:[%s0 + $0x128] sm:$0xf]
  %v120 = vld [vmem:[%s0 + $0x12c] sm:$0xf]
  %v121 = vld [vmem:[%s0 + $0x130] sm:$0xf]
  %v122 = vld [vmem:[%s0 + $0x134] sm:$0xf]
  %v123 = vld [vmem:[%s0 + $0x138] sm:$0xf]
  %v124 = vld [vmem:[%s0 + $0x13c] sm:$0xf]
  %v125 = vld [vmem:[%s0 + $0x140] sm:$0xf]
  %v126 = vld [vmem:[%s0 + $0x144] sm:$0xf]
  %v127 = vld [vmem:[%s0 + $0x148] sm:$0xf]
  %v128 = vld [vmem:[%s0 + $0x14c] sm:$0xf]
  %v129 = vld [vmem:[%s0 + $0x150] sm:$0xf]
  %v130 = vld [vmem:[%s0 + $0x154] sm:$0xf]
  %v131 = vld [vmem:[%s0 + $0x158] sm:$0xf]
  %v132 = vld [vmem:[%s0 + $0x15c] sm:$0xf]
  %v133 = vld [vmem:[%s0 + $0x160] sm:$0xf]
  %v134 = vld [vmem:[%s0 + $0x164] sm:$0xf]
  %v135 = vld [vmem:[%s0 + $0x168] sm:$0xf]
  %v136 = vld [vmem:[%s0 + $0x16c] sm:$0xf]
  %v137 = vld [vmem:[%s0 + $0x170] sm:$0xf]
  %v138 = vld [vmem:[%s0 + $0x174] sm:$0xf]
  %v139 = vld [vmem:[%s0 + $0x178] sm:$0xf]
  %v140 = vld [vmem:[%s0 + $0x17c] sm:$0xf]
  %v141 = vld [vmem:[%s0 + $0x180] sm:$0xf]
  %v142 = vld [vmem:[%s0 + $0x184] sm:$0xf]
  %v143 = vld [vmem:[%s0 + $0x188] sm:$0xf]
  %v144 = vld [vmem:[%s0 + $0x18c] sm:$0xf]
  %v145 = vld [vmem:[%s0 + $0x190] sm:$0xf]
  %v146 = vld [vmem:[%s0 + $0x194] sm:$0xf]
  %v147 = vld [vmem:[%s0 + $0x198] sm:$0xf]
  %v148 = vld [vmem:[%s0 + $0x19c] sm:$0xf]
  %v149 = vld [vmem:[%s0 + $0x1a0] sm:$0xf]
  %v150 = vld [vmem:[%s0 + $0x1a4] sm:$0xf]
  %v151 = vld [vmem:[%s0 + $0x1a8] sm:$0xf]
  %v152 = vld [vmem:[%s0 + $0x1ac] sm:$0xf]
  %v153 = vld [vmem:[%s0 + $0x1b0] sm:$0xf]
  %v154 = vld [vmem:[%s0 + $0x1b4] sm:$0xf]
  %v155 = vld [vmem:[%s0 + $0x1b8] sm:$0xf]
  %v156 = vld [vmem:[%s0 + $0x1bc] sm:$0xf]
  %v157 = vld [vmem:[%s0 + $0x1c0] sm:$0xf]
  %v158 = vld [vmem:[%s0 + $0x1c4] sm:$0xf]
  %v159 = vld [vmem:[%s0 + $0x1c8] sm:$0xf]
  %v160 = vld [vmem:[%s0 + $0x1cc] sm:$0xf]
  %v161 = vld [vmem:[%s0 + $0x1d0] sm:$0xf]
  %v162 = vld [vmem:[%s0 + $0x1d4] sm:$0xf]
  %v163 = vld [vmem:[%s0 + $0x1d8] sm:$0xf]
  %v164 = vld [vmem:[%s0 + $0x1dc] sm:$0xf]
  %v165 = vld [vmem:[%s0 + $0x1e0] sm:$0xf]
  %v166 = vld [vmem:[%s0 + $0x1e4] sm:$0xf]
  %v167 = vld [vmem:[%s0 + $0x1e8] sm:$0xf]
  %v168 = vld [vmem:[%s0 + $0x1ec] sm:$0xf]
  %v169 = vld [vmem:[%s0 + $0x1f0] sm:$0xf]
  %v170 = vld [vmem:[%s0 + $0x1f4] sm:$0xf]
  %v171 = vld [vmem:[%s0 + $0x1f8] sm:$0xf]
  %v172 = vld [vmem:[%s0 + $0x1fc] sm:$0xf]
  %v173 = vld [vmem:[%s2] sm:$0xff]
  %v174 = vld [vmem:[%s2 + $0x8] sm:$0x33]
  %v175 = vld [vmem:[%s1] sm:$0xf]
  %v176 = vld [vmem:[%s1 + $0x4] sm:$0xf]
  %v177 = vld [vmem:[%s1 + $0x8] sm:$0xf]
  %v178 = vld [vmem:[%s1 + $0xc] sm:$0xf]
  %v179 = vld [vmem:[%s1 + $0x10] sm:$0xf]
  %v180 = vld [vmem:[%s1 + $0x14] sm:$0xf]
  %v181 = vld [vmem:[%s1 + $0x18] sm:$0xf]
  %v182 = vld [vmem:[%s1 + $0x1c] sm:$0xf]
  %v183 = vld [vmem:[%s1 + $0x20] sm:$0xf]
  %v184 = vld [vmem:[%s1 + $0x24] sm:$0xf]
  %v185 = vld [vmem:[%s1 + $0x28] sm:$0xf]
  %v186 = vld [vmem:[%s1 + $0x2c] sm:$0xf]
  %v187 = vld [vmem:[%s1 + $0x30] sm:$0xf]
  %v188 = vld [vmem:[%s1 + $0x34] sm:$0xf]
  %v189 = vld [vmem:[%s1 + $0x38] sm:$0xf]
  %v190 = vld [vmem:[%s1 + $0x3c] sm:$0xf]
  %v191 = vld [vmem:[%s1 + $0x40] sm:$0xf]
  %v192 = vld [vmem:[%s1 + $0x44] sm:$0xf]
  %v193 = vld [vmem:[%s1 + $0x48] sm:$0xf]
  %v194 = vld [vmem:[%s1 + $0x4c] sm:$0xf]
  %v195 = vld [vmem:[%s1 + $0x50] sm:$0xf]
  %v196 = vld [vmem:[%s1 + $0x54] sm:$0xf]
  %v197 = vld [vmem:[%s1 + $0x58] sm:$0xf]
  %v198 = vld [vmem:[%s1 + $0x5c] sm:$0xf]
  %v199 = vld [vmem:[%s1 + $0x60] sm:$0xf]
  %v200 = vld [vmem:[%s1 + $0x64] sm:$0xf]
  %v201 = vld [vmem:[%s1 + $0x68] sm:$0xf]
  %v202 = vld [vmem:[%s1 + $0x6c] sm:$0xf]
  %v203 = vld [vmem:[%s1 + $0x70] sm:$0xf]
  %v204 = vld [vmem:[%s1 + $0x74] sm:$0xf]
  %v205 = vld [vmem:[%s1 + $0x78] sm:$0xf]
  %v206 = vld [vmem:[%s1 + $0x7c] sm:$0xf]
  %v207 = vld [vmem:[%s1 + $0x80] sm:$0xf]
  %v208 = vld [vmem:[%s1 + $0x84] sm:$0xf]
  %v209 = vld [vmem:[%s1 + $0x88] sm:$0xf]
  %v210 = vld [vmem:[%s1 + $0x8c] sm:$0xf]
  %v211 = vld [vmem:[%s1 + $0x90] sm:$0xf]
  %v212 = vld [vmem:[%s1 + $0x94] sm:$0xf]
  %v213 = vld [vmem:[%s1 + $0x98] sm:$0xf]
  %v214 = vld [vmem:[%s1 + $0x9c] sm:$0xf]
  %v215 = vld [vmem:[%s1 + $0xa0] sm:$0xf]
  %v216 = vld [vmem:[%s1 + $0xa4] sm:$0xf]
  %v217 = vld [vmem:[%s1 + $0xa8] sm:$0xf]
  %v218 = vld [vmem:[%s1 + $0xac] sm:$0xf]
  %v219 = vld [vmem:[%s1 + $0xb0] sm:$0xf]
  %v220 = vld [vmem:[%s1 + $0xb4] sm:$0xf]
  %v221 = vld [vmem:[%s1 + $0xb8] sm:$0xf]
  %v222 = vld [vmem:[%s1 + $0xbc] sm:$0xf]
  %v223 = vld [vmem:[%s1 + $0xc0] sm:$0xf]
  %v224 = vld [vmem:[%s1 + $0xc4] sm:$0xf]
  %v225 = vld [vmem:[%s1 + $0xc8] sm:$0xf]
  %v226 = vld [vmem:[%s1 + $0xcc] sm:$0xf]
  %v227 = vld [vmem:[%s1 + $0xd0] sm:$0xf]
  %v228 = vld [vmem:[%s1 + $0xd4] sm:$0xf]
  %v229 = vld [vmem:[%s1 + $0xd8] sm:$0xf]
  %v230 = vld [vmem:[%s1 + $0xdc] sm:$0xf]
  %v231 = vld [vmem:[%s1 + $0xe0] sm:$0xf]
  %v232 = vld [vmem:[%s1 + $0xe4] sm:$0xf]
  %v233 = vld [vmem:[%s1 + $0xe8] sm:$0xf]
  %v234 = vld [vmem:[%s1 + $0xec] sm:$0xf]
  %v235 = vld [vmem:[%s1 + $0xf0] sm:$0xf]
  %v236 = vld [vmem:[%s1 + $0xf4] sm:$0xf]
  %v237 = vld [vmem:[%s1 + $0xf8] sm:$0xf]
  %v238 = vld [vmem:[%s1 + $0xfc] sm:$0xf]
  %v239 = vld [vmem:[%s1 + $0x100] sm:$0xf]
  %v240 = vld [vmem:[%s1 + $0x104] sm:$0xf]
  %v241 = vld [vmem:[%s1 + $0x108] sm:$0xf]
  %v242 = vld [vmem:[%s1 + $0x10c] sm:$0xf]
  %v243 = vld [vmem:[%s1 + $0x110] sm:$0xf]
  %v244 = vld [vmem:[%s1 + $0x114] sm:$0xf]
  %v245 = vld [vmem:[%s1 + $0x118] sm:$0xf]
  %v246 = vld [vmem:[%s1 + $0x11c] sm:$0xf]
  %v247 = vld [vmem:[%s1 + $0x120] sm:$0xf]
  %v248 = vld [vmem:[%s1 + $0x124] sm:$0xf]
  %v249 = vld [vmem:[%s1 + $0x128] sm:$0xf]
  %v250 = vld [vmem:[%s1 + $0x12c] sm:$0xf]
  %v251 = vld [vmem:[%s1 + $0x130] sm:$0xf]
  %v252 = vld [vmem:[%s1 + $0x134] sm:$0xf]
  %v253 = vld [vmem:[%s1 + $0x138] sm:$0xf]
  %v254 = vld [vmem:[%s1 + $0x13c] sm:$0xf]
  %v255 = vld [vmem:[%s1 + $0x140] sm:$0xf]
  %v256 = vld [vmem:[%s1 + $0x144] sm:$0xf]
  %v257 = vld [vmem:[%s1 + $0x148] sm:$0xf]
  %v258 = vld [vmem:[%s1 + $0x14c] sm:$0xf]
  %v259 = vld [vmem:[%s1 + $0x150] sm:$0xf]
  %v260 = vld [vmem:[%s1 + $0x154] sm:$0xf]
  %v261 = vld [vmem:[%s1 + $0x158] sm:$0xf]
  %v262 = vld [vmem:[%s1 + $0x15c] sm:$0xf]
  %v263 = vld [vmem:[%s1 + $0x160] sm:$0xf]
  %v264 = vld [vmem:[%s1 + $0x164] sm:$0xf]
  %v265 = vld [vmem:[%s1 + $0x168] sm:$0xf]
  %v266 = vld [vmem:[%s1 + $0x16c] sm:$0xf]
  %v267 = vld [vmem:[%s1 + $0x170] sm:$0xf]
  %v268 = vld [vmem:[%s1 + $0x174] sm:$0xf]
  %v269 = vld [vmem:[%s1 + $0x178] sm:$0xf]
  %v270 = vld [vmem:[%s1 + $0x17c] sm:$0xf]
  %v271 = vld [vmem:[%s1 + $0x180] sm:$0xf]
  %v272 = vld [vmem:[%s1 + $0x184] sm:$0xf]
  %v273 = vld [vmem:[%s1 + $0x188] sm:$0xf]
  %v274 = vld [vmem:[%s1 + $0x18c] sm:$0xf]
  %v275 = vld [vmem:[%s1 + $0x190] sm:$0xf]
  %v276 = vld [vmem:[%s1 + $0x194] sm:$0xf]
  %v277 = vld [vmem:[%s1 + $0x198] sm:$0xf]
  %v278 = vld [vmem:[%s1 + $0x19c] sm:$0xf]
  %v279 = vld [vmem:[%s1 + $0x1a0] sm:$0xf]
  %v280 = vld [vmem:[%s1 + $0x1a4] sm:$0xf]
  %v281 = vld [vmem:[%s1 + $0x1a8] sm:$0xf]
  %v282 = vld [vmem:[%s1 + $0x1ac] sm:$0xf]
  %v283 = vld [vmem:[%s1 + $0x1b0] sm:$0xf]
  %v284 = vld [vmem:[%s1 + $0x1b4] sm:$0xf]
  %v285 = vld [vmem:[%s1 + $0x1b8] sm:$0xf]
  %v286 = vld [vmem:[%s1 + $0x1bc] sm:$0xf]
  %v287 = vld [vmem:[%s1 + $0x1c0] sm:$0xf]
  %v288 = vld [vmem:[%s1 + $0x1c4] sm:$0xf]
  %v289 = vld [vmem:[%s1 + $0x1c8] sm:$0xf]
  %v290 = vld [vmem:[%s1 + $0x1cc] sm:$0xf]
  %v291 = vld [vmem:[%s1 + $0x1d0] sm:$0xf]
  %v292 = vld [vmem:[%s1 + $0x1d4] sm:$0xf]
  %v293 = vld [vmem:[%s1 + $0x1d8] sm:$0xf]
  %v294 = vld [vmem:[%s1 + $0x1dc] sm:$0xf]
  %v295 = vld [vmem:[%s1 + $0x1e0] sm:$0xf]
  %v296 = vld [vmem:[%s1 + $0x1e4] sm:$0xf]
  %v297 = vld [vmem:[%s1 + $0x1e8] sm:$0xf]
  %v298 = vld [vmem:[%s1 + $0x1ec] sm:$0xf]
  %v299 = vld [vmem:[%s1 + $0x1f0] sm:$0xf]
  %v300 = vld [vmem:[%s1 + $0x1f4] sm:$0xf]
  %v301 = vld [vmem:[%s1 + $0x1f8] sm:$0xf]
  %v302 = vld [vmem:[%s1 + $0x1fc] sm:$0xf]
  %v303 = vld [vmem:[%s3] sm:$0xff]
  %v304 = vld [vmem:[%s3 + $0x8] sm:$0xff]
  %v305 = vld [vmem:[%s3 + $0x10] sm:$0xff]
  %v306 = vld [vmem:[%s3 + $0x18] sm:$0xff]
  %v435 = vunpack.c.l.b16 %v175
  %v436 = vunpack.c.l.b16 %v176
  %v437 = vunpack.c.l.b16 %v177
  %v438 = vunpack.c.l.b16 %v178
  %v439 = vunpack.c.l.b16 %v179
  %v440 = vunpack.c.l.b16 %v180
  %v441 = vunpack.c.l.b16 %v181
  %v442 = vunpack.c.l.b16 %v182
  %v443 = vunpack.c.l.b16 %v183
  %v444 = vunpack.c.l.b16 %v184
  %v445 = vunpack.c.l.b16 %v185
  %v446 = vunpack.c.l.b16 %v186
  %v447 = vunpack.c.l.b16 %v187
  %v448 = vunpack.c.l.b16 %v188
  %v449 = vunpack.c.l.b16 %v189
  %v450 = vunpack.c.l.b16 %v190
  %v451 = vunpack.c.l.b16 %v191
  %v452 = vunpack.c.l.b16 %v192
  %v453 = vunpack.c.l.b16 %v193
  %v454 = vunpack.c.l.b16 %v194
  %v455 = vunpack.c.l.b16 %v195
  %v456 = vunpack.c.l.b16 %v196
  %v457 = vunpack.c.l.b16 %v197
  %v458 = vunpack.c.l.b16 %v198
  %v459 = vunpack.c.l.b16 %v199
  %v460 = vunpack.c.l.b16 %v200
  %v461 = vunpack.c.l.b16 %v201
  %v462 = vunpack.c.l.b16 %v202
  %v463 = vunpack.c.l.b16 %v203
  %v464 = vunpack.c.l.b16 %v204
  %v465 = vunpack.c.l.b16 %v205
  %v466 = vunpack.c.l.b16 %v206
  %v467 = vunpack.c.l.b16 %v207
  %v468 = vunpack.c.l.b16 %v208
  %v469 = vunpack.c.l.b16 %v209
  %v470 = vunpack.c.l.b16 %v210
  %v471 = vunpack.c.l.b16 %v211
  %v472 = vunpack.c.l.b16 %v212
  %v473 = vunpack.c.l.b16 %v213
  %v474 = vunpack.c.l.b16 %v214
  %v475 = vunpack.c.l.b16 %v215
  %v476 = vunpack.c.l.b16 %v216
  %v477 = vunpack.c.l.b16 %v217
  %v478 = vunpack.c.l.b16 %v218
  %v479 = vunpack.c.l.b16 %v219
  %v480 = vunpack.c.l.b16 %v220
  %v481 = vunpack.c.l.b16 %v221
  %v482 = vunpack.c.l.b16 %v222
  %v483 = vunpack.c.l.b16 %v223
  %v484 = vunpack.c.l.b16 %v224
  %v485 = vunpack.c.l.b16 %v225
  %v486 = vunpack.c.l.b16 %v226
  %v487 = vunpack.c.l.b16 %v227
  %v488 = vunpack.c.l.b16 %v228
  %v489 = vunpack.c.l.b16 %v229
  %v490 = vunpack.c.l.b16 %v230
  %v491 = vunpack.c.l.b16 %v231
  %v492 = vunpack.c.l.b16 %v232
  %v493 = vunpack.c.l.b16 %v233
  %v494 = vunpack.c.l.b16 %v234
  %v495 = vunpack.c.l.b16 %v235
  %v496 = vunpack.c.l.b16 %v236
  %v497 = vunpack.c.l.b16 %v237
  %v498 = vunpack.c.l.b16 %v238
  %v499 = vunpack.c.l.b16 %v239
  %v500 = vunpack.c.l.b16 %v240
  %v501 = vunpack.c.l.b16 %v241
  %v502 = vunpack.c.l.b16 %v242
  %v503 = vunpack.c.l.b16 %v243
  %v504 = vunpack.c.l.b16 %v244
  %v505 = vunpack.c.l.b16 %v245
  %v506 = vunpack.c.l.b16 %v246
  %v507 = vunpack.c.l.b16 %v247
  %v508 = vunpack.c.l.b16 %v248
  %v509 = vunpack.c.l.b16 %v249
  %v510 = vunpack.c.l.b16 %v250
  %v511 = vunpack.c.l.b16 %v251
  %v512 = vunpack.c.l.b16 %v252
  %v513 = vunpack.c.l.b16 %v253
  %v514 = vunpack.c.l.b16 %v254
  %v515 = vunpack.c.l.b16 %v255
  %v516 = vunpack.c.l.b16 %v256
  %v517 = vunpack.c.l.b16 %v257
  %v518 = vunpack.c.l.b16 %v258
  %v519 = vunpack.c.l.b16 %v259
  %v520 = vunpack.c.l.b16 %v260
  %v521 = vunpack.c.l.b16 %v261
  %v522 = vunpack.c.l.b16 %v262
  %v523 = vunpack.c.l.b16 %v263
  %v524 = vunpack.c.l.b16 %v264
  %v525 = vunpack.c.l.b16 %v265
  %v526 = vunpack.c.l.b16 %v266
  %v527 = vunpack.c.l.b16 %v267
  %v528 = vunpack.c.l.b16 %v268
  %v529 = vunpack.c.l.b16 %v269
  %v530 = vunpack.c.l.b16 %v270
  %v531 = vunpack.c.l.b16 %v271
  %v532 = vunpack.c.l.b16 %v272
  %v533 = vunpack.c.l.b16 %v273
  %v534 = vunpack.c.l.b16 %v274
  %v535 = vunpack.c.l.b16 %v275
  %v536 = vunpack.c.l.b16 %v276
  %v537 = vunpack.c.l.b16 %v277
  %v538 = vunpack.c.l.b16 %v278
  %v539 = vunpack.c.l.b16 %v279
  %v540 = vunpack.c.l.b16 %v280
  %v541 = vunpack.c.l.b16 %v281
  %v542 = vunpack.c.l.b16 %v282
  %v543 = vunpack.c.l.b16 %v283
  %v544 = vunpack.c.l.b16 %v284
  %v545 = vunpack.c.l.b16 %v285
  %v546 = vunpack.c.l.b16 %v286
  %v547 = vunpack.c.l.b16 %v287
  %v548 = vunpack.c.l.b16 %v288
  %v549 = vunpack.c.l.b16 %v289
  %v550 = vunpack.c.l.b16 %v290
  %v551 = vunpack.c.l.b16 %v291
  %v552 = vunpack.c.l.b16 %v292
  %v553 = vunpack.c.l.b16 %v293
  %v554 = vunpack.c.l.b16 %v294
  %v555 = vunpack.c.l.b16 %v295
  %v556 = vunpack.c.l.b16 %v296
  %v557 = vunpack.c.l.b16 %v297
  %v558 = vunpack.c.l.b16 %v298
  %v559 = vunpack.c.l.b16 %v299
  %v560 = vunpack.c.l.b16 %v300
  %v561 = vunpack.c.l.b16 %v301
  %v562 = vunpack.c.l.b16 %v302
  %v563 = vpack.c.b16 %v436, %v435
  %v564 = vpack.c.b16 %v438, %v437
  %v565 = vpack.c.b16 %v440, %v439
  %v566 = vpack.c.b16 %v442, %v441
  %v567 = vpack.c.b16 %v444, %v443
  %v568 = vpack.c.b16 %v446, %v445
  %v569 = vpack.c.b16 %v448, %v447
  %v570 = vpack.c.b16 %v450, %v449
  %v571 = vpack.c.b16 %v452, %v451
  %v572 = vpack.c.b16 %v454, %v453
  %v573 = vpack.c.b16 %v456, %v455
  %v574 = vpack.c.b16 %v458, %v457
  %v575 = vpack.c.b16 %v460, %v459
  %v576 = vpack.c.b16 %v462, %v461
  %v577 = vpack.c.b16 %v464, %v463
  %v578 = vpack.c.b16 %v466, %v465
  %v579 = vpack.c.b16 %v468, %v467
  %v580 = vpack.c.b16 %v470, %v469
  %v581 = vpack.c.b16 %v472, %v471
  %v582 = vpack.c.b16 %v474, %v473
  %v583 = vpack.c.b16 %v476, %v475
  %v584 = vpack.c.b16 %v478, %v477
  %v585 = vpack.c.b16 %v480, %v479
  %v586 = vpack.c.b16 %v482, %v481
  %v587 = vpack.c.b16 %v484, %v483
  %v588 = vpack.c.b16 %v486, %v485
  %v589 = vpack.c.b16 %v488, %v487
  %v590 = vpack.c.b16 %v490, %v489
  %v591 = vpack.c.b16 %v492, %v491
  %v592 = vpack.c.b16 %v494, %v493
  %v593 = vpack.c.b16 %v496, %v495
  %v594 = vpack.c.b16 %v498, %v497
  %v595 = vpack.c.b16 %v500, %v499
  %v596 = vpack.c.b16 %v502, %v501
  %v597 = vpack.c.b16 %v504, %v503
  %v598 = vpack.c.b16 %v506, %v505
  %v599 = vpack.c.b16 %v508, %v507
  %v600 = vpack.c.b16 %v510, %v509
  %v601 = vpack.c.b16 %v512, %v511
  %v602 = vpack.c.b16 %v514, %v513
  %v603 = vpack.c.b16 %v516, %v515
  %v604 = vpack.c.b16 %v518, %v517
  %v605 = vpack.c.b16 %v520, %v519
  %v606 = vpack.c.b16 %v522, %v521
  %v607 = vpack.c.b16 %v524, %v523
  %v608 = vpack.c.b16 %v526, %v525
  %v609 = vpack.c.b16 %v528, %v527
  %v610 = vpack.c.b16 %v530, %v529
  %v611 = vpack.c.b16 %v532, %v531
  %v612 = vpack.c.b16 %v534, %v533
  %v613 = vpack.c.b16 %v536, %v535
  %v614 = vpack.c.b16 %v538, %v537
  %v615 = vpack.c.b16 %v540, %v539
  %v616 = vpack.c.b16 %v542, %v541
  %v617 = vpack.c.b16 %v544, %v543
  %v618 = vpack.c.b16 %v546, %v545
  %v619 = vpack.c.b16 %v548, %v547
  %v620 = vpack.c.b16 %v550, %v549
  %v621 = vpack.c.b16 %v552, %v551
  %v622 = vpack.c.b16 %v554, %v553
  %v623 = vpack.c.b16 %v556, %v555
  %v624 = vpack.c.b16 %v558, %v557
  %v625 = vpack.c.b16 %v560, %v559
  %v626 = vpack.c.b16 %v562, %v561
  %v631 = vunpack.c.l.b16 %v303
  %v632 = vunpack.c.h.b16 %v303
  %v633 = vunpack.c.l.b16 %v304
  %v634 = vunpack.c.h.b16 %v304
  %v635 = vunpack.c.l.b16 %v305
  %v636 = vunpack.c.h.b16 %v305
  %v637 = vunpack.c.l.b16 %v306
  %v638 = vunpack.c.h.b16 %v306
  %v639 = vpack.c.b16 %v633, %v631
  %v640 = vpack.c.b16 %v634, %v632
  %v641 = vpack.c.b16 %v637, %v635
  %v642 = vpack.c.b16 %v638, %v636
  %vm647 = vcmask 261120
  %v649 = vsel %vm647, %v563, 0
  %v652 = vsel %vm647, %v564, 0
  %v655 = vsel %vm647, %v565, 0
  %v658 = vsel %vm647, %v566, 0
  %v661 = vsel %vm647, %v567, 0
  %v664 = vsel %vm647, %v568, 0
  %v667 = vsel %vm647, %v569, 0
  %v670 = vsel %vm647, %v570, 0
  %v673 = vsel %vm647, %v571, 0
  %v676 = vsel %vm647, %v572, 0
  %v679 = vsel %vm647, %v573, 0
  %v682 = vsel %vm647, %v574, 0
  %v685 = vsel %vm647, %v575, 0
  %v688 = vsel %vm647, %v576, 0
  %v691 = vsel %vm647, %v577, 0
  %v694 = vsel %vm647, %v578, 0
  %v697 = vsel %vm647, %v579, 0
  %v700 = vsel %vm647, %v580, 0
  %v703 = vsel %vm647, %v581, 0
  %v706 = vsel %vm647, %v582, 0
  %v709 = vsel %vm647, %v583, 0
  %v712 = vsel %vm647, %v584, 0
  %v715 = vsel %vm647, %v585, 0
  %v718 = vsel %vm647, %v586, 0
  %v721 = vsel %vm647, %v587, 0
  %v724 = vsel %vm647, %v588, 0
  %v727 = vsel %vm647, %v589, 0
  %v730 = vsel %vm647, %v590, 0
  %v733 = vsel %vm647, %v591, 0
  %v736 = vsel %vm647, %v592, 0
  %v739 = vsel %vm647, %v593, 0
  %v742 = vsel %vm647, %v594, 0
  %v745 = vsel %vm647, %v595, 0
  %v748 = vsel %vm647, %v596, 0
  %v751 = vsel %vm647, %v597, 0
  %v754 = vsel %vm647, %v598, 0
  %v757 = vsel %vm647, %v599, 0
  %v760 = vsel %vm647, %v600, 0
  %v763 = vsel %vm647, %v601, 0
  %v766 = vsel %vm647, %v602, 0
  %v769 = vsel %vm647, %v603, 0
  %v772 = vsel %vm647, %v604, 0
  %v775 = vsel %vm647, %v605, 0
  %v778 = vsel %vm647, %v606, 0
  %v781 = vsel %vm647, %v607, 0
  %v784 = vsel %vm647, %v608, 0
  %v787 = vsel %vm647, %v609, 0
  %v790 = vsel %vm647, %v610, 0
  %v793 = vsel %vm647, %v611, 0
  %v796 = vsel %vm647, %v612, 0
  %v799 = vsel %vm647, %v613, 0
  %v802 = vsel %vm647, %v614, 0
  %v805 = vsel %vm647, %v615, 0
  %v808 = vsel %vm647, %v616, 0
  %v811 = vsel %vm647, %v617, 0
  %v814 = vsel %vm647, %v618, 0
  %v817 = vsel %vm647, %v619, 0
  %v820 = vsel %vm647, %v620, 0
  %v823 = vsel %vm647, %v621, 0
  %v826 = vsel %vm647, %v622, 0
  %v829 = vsel %vm647, %v623, 0
  %v832 = vsel %vm647, %v624, 0
  %v835 = vsel %vm647, %v625, 0
  %v838 = vsel %vm647, %v626, 0
  %840 = vmatprep.subr.bf16.mxu0 %v640
  %841 = vmatpush1.bf16.msra.mxu0 %v639
  %842 = vmatprep.subr.bf16.mxu0 %v642
  %843 = vmatpush1.bf16.msra.mxu0 %v641
  %844 = vmatprep.subr.bf16.mxu0 0
  %845 = vmatpush1.bf16.msra.mxu0 0
  %846 = vmatprep.subr.bf16.mxu0 0
  %847 = vmatpush1.bf16.msra.mxu0 0
  %848 = vmatprep.subr.bf16.mxu0 0
  %849 = vmatpush1.bf16.msra.mxu0 0
  %850 = vmatprep.subr.bf16.mxu0 0
  %851 = vmatpush1.bf16.msra.mxu0 0
  %852 = vmatprep.subr.bf16.mxu0 0
  %853 = vmatpush1.bf16.msra.mxu0 0
  %854 = vmatprep.subr.bf16.mxu0 0
  %855 = vmatpush1.bf16.msra.mxu0 0
  %856 = vmatprep.subr.bf16.mxu0 0
  %857 = vmatpush1.bf16.msra.mxu0 0
  %858 = vmatprep.subr.bf16.mxu0 0
  %859 = vmatpush1.bf16.msra.mxu0 0
  %860 = vmatprep.subr.bf16.mxu0 0
  %861 = vmatpush1.bf16.msra.mxu0 0
  %862 = vmatprep.subr.bf16.mxu0 0
  %863 = vmatpush1.bf16.msra.mxu0 0
  %864 = vmatprep.subr.bf16.mxu0 0
  %865 = vmatpush1.bf16.msra.mxu0 0
  %866 = vmatprep.subr.bf16.mxu0 0
  %867 = vmatpush1.bf16.msra.mxu0 0
  %868 = vmatprep.subr.bf16.mxu0 0
  %869 = vmatpush1.bf16.msra.mxu0 0
  %870 = vmatprep.subr.bf16.mxu0 0
  %871 = vmatpush1.bf16.msra.mxu0 0
  %872 = vmatprep.mubr.bf16.mxu0 0
  %873 = vmatmul.mubr.bf16.gmra.mrb[0].mxu0 %v649
  %v874 = vpop.f32.mrb[0].mxu0
  %v875 = vadd.f32 0.0, %v874
  %v876 = vpop.f32.mrb[0].mxu0
  %v877 = vadd.f32 0.0, %v876
  %v878 = vpop.f32.mrb[0].mxu0
  %v879 = vadd.f32 0.0, %v878
  %v880 = vpop.f32.mrb[0].mxu0
  %v881 = vadd.f32 0.0, %v880
  %882 = vmatprep.mubr.bf16.mxu0 0
  %883 = vmatmul.mubr.bf16.gmra.mrb[0].mxu0 %v652
  %v884 = vpop.f32.mrb[0].mxu0
  %v885 = vadd.f32 0.0, %v884
  %v886 = vpop.f32.mrb[0].mxu0
  %v887 = vadd.f32 0.0, %v886
  %v888 = vpop.f32.mrb[0].mxu0
  %v889 = vadd.f32 0.0, %v888
  %v890 = vpop.f32.mrb[0].mxu0
  %v891 = vadd.f32 0.0, %v890
  %892 = vmatprep.mubr.bf16.mxu0 0
  %893 = vmatmul.mubr.bf16.gmra.mrb[0].mxu0 %v655
  %v894 = vpop.f32.mrb[0].mxu0
  %v895 = vadd.f32 0.0, %v894
  %v896 = vpop.f32.mrb[0].mxu0
  %v897 = vadd.f32 0.0, %v896
  %v898 = vpop.f32.mrb[0].mxu0
  %v899 = vadd.f32 0.0, %v898
  %v900 = vpop.f32.mrb[0].mxu0
  %v901 = vadd.f32 0.0, %v900
  %902 = vmatprep.mubr.bf16.mxu0 0
  %903 = vmatmul.mubr.bf16.gmra.mrb[0].mxu0 %v658
  %v904 = vpop.f32.mrb[0].mxu0
  %v905 = vadd.f32 0.0, %v904
  %v906 = vpop.f32.mrb[0].mxu0
  %v907 = vadd.f32 0.0, %v906
  %v908 = vpop.f32.mrb[0].mxu0
  %v909 = vadd.f32 0.0, %v908
  %v910 = vpop.f32.mrb[0].mxu0
  %v911 = vadd.f32 0.0, %v910
  %912 = vmatprep.mubr.bf16.mxu0 0
  %913 = vmatmul.mubr.bf16.gmra.mrb[0].mxu0 %v661
  %v914 = vpop.f32.mrb[0].mxu0
  %v915 = vadd.f32 0.0, %v914
  %v916 = vpop.f32.mrb[0].mxu0
  %v917 = vadd.f32 0.0, %v916
  %v918 = vpop.f32.mrb[0].mxu0
  %v919 = vadd.f32 0.0, %v918
  %v920 = vpop.f32.mrb[0].mxu0
  %v921 = vadd.f32 0.0, %v920
  %922 = vmatprep.mubr.bf16.mxu0 0
  %923 = vmatmul.mubr.bf16.gmra.mrb[0].mxu0 %v664
  %v924 = vpop.f32.mrb[0].mxu0
  %v925 = vadd.f32 0.0, %v924
  %v926 = vpop.f32.mrb[0].mxu0
  %v927 = vadd.f32 0.0, %v926
  %v928 = vpop.f32.mrb[0].mxu0
  %v929 = vadd.f32 0.0, %v928
  %v930 = vpop.f32.mrb[0].mxu0
  %v931 = vadd.f32 0.0, %v930
  %932 = vmatprep.mubr.bf16.mxu0 0
  %933 = vmatmul.mubr.bf16.gmra.mrb[0].mxu0 %v667
  %v934 = vpop.f32.mrb[0].mxu0
  %v935 = vadd.f32 0.0, %v934
  %v936 = vpop.f32.mrb[0].mxu0
  %v937 = vadd.f32 0.0, %v936
  %v938 = vpop.f32.mrb[0].mxu0
  %v939 = vadd.f32 0.0, %v938
  %v940 = vpop.f32.mrb[0].mxu0
  %v941 = vadd.f32 0.0, %v940
  %942 = vmatprep.mubr.bf16.mxu0 0
  %943 = vmatmul.mubr.bf16.gmra.mrb[0].mxu0 %v670
  %v944 = vpop.f32.mrb[0].mxu0
  %v945 = vadd.f32 0.0, %v944
  %v946 = vpop.f32.mrb[0].mxu0
  %v947 = vadd.f32 0.0, %v946
  %v948 = vpop.f32.mrb[0].mxu0
  %v949 = vadd.f32 0.0, %v948
  %v950 = vpop.f32.mrb[0].mxu0
  %v951 = vadd.f32 0.0, %v950
  %952 = vmatprep.mubr.bf16.mxu0 0
  %953 = vmatmul.mubr.bf16.gmra.mrb[0].mxu0 %v673
  %v954 = vpop.f32.mrb[0].mxu0
  %v955 = vadd.f32 0.0, %v954
  %v956 = vpop.f32.mrb[0].mxu0
  %v957 = vadd.f32 0.0, %v956
  %v958 = vpop.f32.mrb[0].mxu0
  %v959 = vadd.f32 0.0, %v958
  %v960 = vpop.f32.mrb[0].mxu0
  %v961 = vadd.f32 0.0, %v960
  %962 = vmatprep.mubr.bf16.mxu0 0
  %963 = vmatmul.mubr.bf16.gmra.mrb[0].mxu0 %v676
  %v964 = vpop.f32.mrb[0].mxu0
  %v965 = vadd.f32 0.0, %v964
  %v966 = vpop.f32.mrb[0].mxu0
  %v967 = vadd.f32 0.0, %v966
  %v968 = vpop.f32.mrb[0].mxu0
  %v969 = vadd.f32 0.0, %v968
  %v970 = vpop.f32.mrb[0].mxu0
  %v971 = vadd.f32 0.0, %v970
  %972 = vmatprep.mubr.bf16.mxu0 0
  %973 = vmatmul.mubr.bf16.gmra.mrb[0].mxu0 %v679
  %v974 = vpop.f32.mrb[0].mxu0
  %v975 = vadd.f32 0.0, %v974
  %v976 = vpop.f32.mrb[0].mxu0
  %v977 = vadd.f32 0.0, %v976
  %v978 = vpop.f32.mrb[0].mxu0
  %v979 = vadd.f32 0.0, %v978
  %v980 = vpop.f32.mrb[0].mxu0
  %v981 = vadd.f32 0.0, %v980
  %982 = vmatprep.mubr.bf16.mxu0 0
  %983 = vmatmul.mubr.bf16.gmra.mrb[0].mxu0 %v682
  %v984 = vpop.f32.mrb[0].mxu0
  %v985 = vadd.f32 0.0, %v984
  %v986 = vpop.f32.mrb[0].mxu0
  %v987 = vadd.f32 0.0, %v986
  %v988 = vpop.f32.mrb[0].mxu0
  %v989 = vadd.f32 0.0, %v988
  %v990 = vpop.f32.mrb[0].mxu0
  %v991 = vadd.f32 0.0, %v990
  %992 = vmatprep.mubr.bf16.mxu0 0
  %993 = vmatmul.mubr.bf16.gmra.mrb[0].mxu0 %v685
  %v994 = vpop.f32.mrb[0].mxu0
  %v995 = vadd.f32 0.0, %v994
  %v996 = vpop.f32.mrb[0].mxu0
  %v997 = vadd.f32 0.0, %v996
  %v998 = vpop.f32.mrb[0].mxu0
  %v999 = vadd.f32 0.0, %v998
  %v1000 = vpop.f32.mrb[0].mxu0
  %v1001 = vadd.f32 0.0, %v1000
  %1002 = vmatprep.mubr.bf16.mxu0 0
  %1003 = vmatmul.mubr.bf16.gmra.mrb[0].mxu0 %v688
  %v1004 = vpop.f32.mrb[0].mxu0
  %v1005 = vadd.f32 0.0, %v1004
  %v1006 = vpop.f32.mrb[0].mxu0
  %v1007 = vadd.f32 0.0, %v1006
  %v1008 = vpop.f32.mrb[0].mxu0
  %v1009 = vadd.f32 0.0, %v1008
  %v1010 = vpop.f32.mrb[0].mxu0
  %v1011 = vadd.f32 0.0, %v1010
  %1012 = vmatprep.mubr.bf16.mxu0 0
  %1013 = vmatmul.mubr.bf16.gmra.mrb[0].mxu0 %v691
  %v1014 = vpop.f32.mrb[0].mxu0
  %v1015 = vadd.f32 0.0, %v1014
  %v1016 = vpop.f32.mrb[0].mxu0
  %v1017 = vadd.f32 0.0, %v1016
  %v1018 = vpop.f32.mrb[0].mxu0
  %v1019 = vadd.f32 0.0, %v1018
  %v1020 = vpop.f32.mrb[0].mxu0
  %v1021 = vadd.f32 0.0, %v1020
  %1022 = vmatprep.mubr.bf16.mxu0 0
  %1023 = vmatmul.mubr.bf16.gmra.mrb[0].mxu0 %v694
  %v1024 = vpop.f32.mrb[0].mxu0
  %v1025 = vadd.f32 0.0, %v1024
  %v1026 = vpop.f32.mrb[0].mxu0
  %v1027 = vadd.f32 0.0, %v1026
  %v1028 = vpop.f32.mrb[0].mxu0
  %v1029 = vadd.f32 0.0, %v1028
  %v1030 = vpop.f32.mrb[0].mxu0
  %v1031 = vadd.f32 0.0, %v1030
  %1032 = vmatprep.mubr.bf16.mxu0 0
  %1033 = vmatmul.mubr.bf16.gmra.mrb[0].mxu0 %v697
  %v1034 = vpop.f32.mrb[0].mxu0
  %v1035 = vadd.f32 0.0, %v1034
  %v1036 = vpop.f32.mrb[0].mxu0
  %v1037 = vadd.f32 0.0, %v1036
  %v1038 = vpop.f32.mrb[0].mxu0
  %v1039 = vadd.f32 0.0, %v1038
  %v1040 = vpop.f32.mrb[0].mxu0
  %v1041 = vadd.f32 0.0, %v1040
  %1042 = vmatprep.mubr.bf16.mxu0 0
  %1043 = vmatmul.mubr.bf16.gmra.mrb[0].mxu0 %v700
  %v1044 = vpop.f32.mrb[0].mxu0
  %v1045 = vadd.f32 0.0, %v1044
  %v1046 = vpop.f32.mrb[0].mxu0
  %v1047 = vadd.f32 0.0, %v1046
  %v1048 = vpop.f32.mrb[0].mxu0
  %v1049 = vadd.f32 0.0, %v1048
  %v1050 = vpop.f32.mrb[0].mxu0
  %v1051 = vadd.f32 0.0, %v1050
  %1052 = vmatprep.mubr.bf16.mxu0 0
  %1053 = vmatmul.mubr.bf16.gmra.mrb[0].mxu0 %v703
  %v1054 = vpop.f32.mrb[0].mxu0
  %v1055 = vadd.f32 0.0, %v1054
  %v1056 = vpop.f32.mrb[0].mxu0
  %v1057 = vadd.f32 0.0, %v1056
  %v1058 = vpop.f32.mrb[0].mxu0
  %v1059 = vadd.f32 0.0, %v1058
  %v1060 = vpop.f32.mrb[0].mxu0
  %v1061 = vadd.f32 0.0, %v1060
  %1062 = vmatprep.mubr.bf16.mxu0 0
  %1063 = vmatmul.mubr.bf16.gmra.mrb[0].mxu0 %v706
  %v1064 = vpop.f32.mrb[0].mxu0
  %v1065 = vadd.f32 0.0, %v1064
  %v1066 = vpop.f32.mrb[0].mxu0
  %v1067 = vadd.f32 0.0, %v1066
  %v1068 = vpop.f32.mrb[0].mxu0
  %v1069 = vadd.f32 0.0, %v1068
  %v1070 = vpop.f32.mrb[0].mxu0
  %v1071 = vadd.f32 0.0, %v1070
  %1072 = vmatprep.mubr.bf16.mxu0 0
  %1073 = vmatmul.mubr.bf16.gmra.mrb[0].mxu0 %v709
  %v1074 = vpop.f32.mrb[0].mxu0
  %v1075 = vadd.f32 0.0, %v1074
  %v1076 = vpop.f32.mrb[0].mxu0
  %v1077 = vadd.f32 0.0, %v1076
  %v1078 = vpop.f32.mrb[0].mxu0
  %v1079 = vadd.f32 0.0, %v1078
  %v1080 = vpop.f32.mrb[0].mxu0
  %v1081 = vadd.f32 0.0, %v1080
  %1082 = vmatprep.mubr.bf16.mxu0 0
  %1083 = vmatmul.mubr.bf16.gmra.mrb[0].mxu0 %v712
  %v1084 = vpop.f32.mrb[0].mxu0
  %v1085 = vadd.f32 0.0, %v1084
  %v1086 = vpop.f32.mrb[0].mxu0
  %v1087 = vadd.f32 0.0, %v1086
  %v1088 = vpop.f32.mrb[0].mxu0
  %v1089 = vadd.f32 0.0, %v1088
  %v1090 = vpop.f32.mrb[0].mxu0
  %v1091 = vadd.f32 0.0, %v1090
  %1092 = vmatprep.mubr.bf16.mxu0 0
  %1093 = vmatmul.mubr.bf16.gmra.mrb[0].mxu0 %v715
  %v1094 = vpop.f32.mrb[0].mxu0
  %v1095 = vadd.f32 0.0, %v1094
  %v1096 = vpop.f32.mrb[0].mxu0
  %v1097 = vadd.f32 0.0, %v1096
  %v1098 = vpop.f32.mrb[0].mxu0
  %v1099 = vadd.f32 0.0, %v1098
  %v1100 = vpop.f32.mrb[0].mxu0
  %v1101 = vadd.f32 0.0, %v1100
  %1102 = vmatprep.mubr.bf16.mxu0 0
  %1103 = vmatmul.mubr.bf16.gmra.mrb[0].mxu0 %v718
  %v1104 = vpop.f32.mrb[0].mxu0
  %v1105 = vadd.f32 0.0, %v1104
  %v1106 = vpop.f32.mrb[0].mxu0
  %v1107 = vadd.f32 0.0, %v1106
  %v1108 = vpop.f32.mrb[0].mxu0
  %v1109 = vadd.f32 0.0, %v1108
  %v1110 = vpop.f32.mrb[0].mxu0
  %v1111 = vadd.f32 0.0, %v1110
  %1112 = vmatprep.mubr.bf16.mxu0 0
  %1113 = vmatmul.mubr.bf16.gmra.mrb[0].mxu0 %v721
  %v1114 = vpop.f32.mrb[0].mxu0
  %v1115 = vadd.f32 0.0, %v1114
  %v1116 = vpop.f32.mrb[0].mxu0
  %v1117 = vadd.f32 0.0, %v1116
  %v1118 = vpop.f32.mrb[0].mxu0
  %v1119 = vadd.f32 0.0, %v1118
  %v1120 = vpop.f32.mrb[0].mxu0
  %v1121 = vadd.f32 0.0, %v1120
  %1122 = vmatprep.mubr.bf16.mxu0 0
  %1123 = vmatmul.mubr.bf16.gmra.mrb[0].mxu0 %v724
  %v1124 = vpop.f32.mrb[0].mxu0
  %v1125 = vadd.f32 0.0, %v1124
  %v1126 = vpop.f32.mrb[0].mxu0
  %v1127 = vadd.f32 0.0, %v1126
  %v1128 = vpop.f32.mrb[0].mxu0
  %v1129 = vadd.f32 0.0, %v1128
  %v1130 = vpop.f32.mrb[0].mxu0
  %v1131 = vadd.f32 0.0, %v1130
  %1132 = vmatprep.mubr.bf16.mxu0 0
  %1133 = vmatmul.mubr.bf16.gmra.mrb[0].mxu0 %v727
  %v1134 = vpop.f32.mrb[0].mxu0
  %v1135 = vadd.f32 0.0, %v1134
  %v1136 = vpop.f32.mrb[0].mxu0
  %v1137 = vadd.f32 0.0, %v1136
  %v1138 = vpop.f32.mrb[0].mxu0
  %v1139 = vadd.f32 0.0, %v1138
  %v1140 = vpop.f32.mrb[0].mxu0
  %v1141 = vadd.f32 0.0, %v1140
  %1142 = vmatprep.mubr.bf16.mxu0 0
  %1143 = vmatmul.mubr.bf16.gmra.mrb[0].mxu0 %v730
  %v1144 = vpop.f32.mrb[0].mxu0
  %v1145 = vadd.f32 0.0, %v1144
  %v1146 = vpop.f32.mrb[0].mxu0
  %v1147 = vadd.f32 0.0, %v1146
  %v1148 = vpop.f32.mrb[0].mxu0
  %v1149 = vadd.f32 0.0, %v1148
  %v1150 = vpop.f32.mrb[0].mxu0
  %v1151 = vadd.f32 0.0, %v1150
  %1152 = vmatprep.mubr.bf16.mxu0 0
  %1153 = vmatmul.mubr.bf16.gmra.mrb[0].mxu0 %v733
  %v1154 = vpop.f32.mrb[0].mxu0
  %v1155 = vadd.f32 0.0, %v1154
  %v1156 = vpop.f32.mrb[0].mxu0
  %v1157 = vadd.f32 0.0, %v1156
  %v1158 = vpop.f32.mrb[0].mxu0
  %v1159 = vadd.f32 0.0, %v1158
  %v1160 = vpop.f32.mrb[0].mxu0
  %v1161 = vadd.f32 0.0, %v1160
  %1162 = vmatprep.mubr.bf16.mxu0 0
  %1163 = vmatmul.mubr.bf16.gmra.mrb[0].mxu0 %v736
  %v1164 = vpop.f32.mrb[0].mxu0
  %v1165 = vadd.f32 0.0, %v1164
  %v1166 = vpop.f32.mrb[0].mxu0
  %v1167 = vadd.f32 0.0, %v1166
  %v1168 = vpop.f32.mrb[0].mxu0
  %v1169 = vadd.f32 0.0, %v1168
  %v1170 = vpop.f32.mrb[0].mxu0
  %v1171 = vadd.f32 0.0, %v1170
  %1172 = vmatprep.mubr.bf16.mxu0 0
  %1173 = vmatmul.mubr.bf16.gmra.mrb[0].mxu0 %v739
  %v1174 = vpop.f32.mrb[0].mxu0
  %v1175 = vadd.f32 0.0, %v1174
  %v1176 = vpop.f32.mrb[0].mxu0
  %v1177 = vadd.f32 0.0, %v1176
  %v1178 = vpop.f32.mrb[0].mxu0
  %v1179 = vadd.f32 0.0, %v1178
  %v1180 = vpop.f32.mrb[0].mxu0
  %v1181 = vadd.f32 0.0, %v1180
  %1182 = vmatprep.mubr.bf16.mxu0 0
  %1183 = vmatmul.mubr.bf16.gmra.mrb[0].mxu0 %v742
  %v1184 = vpop.f32.mrb[0].mxu0
  %v1185 = vadd.f32 0.0, %v1184
  %v1186 = vpop.f32.mrb[0].mxu0
  %v1187 = vadd.f32 0.0, %v1186
  %v1188 = vpop.f32.mrb[0].mxu0
  %v1189 = vadd.f32 0.0, %v1188
  %v1190 = vpop.f32.mrb[0].mxu0
  %v1191 = vadd.f32 0.0, %v1190
  %1192 = vmatprep.mubr.bf16.mxu0 0
  %1193 = vmatmul.mubr.bf16.gmra.mrb[0].mxu0 %v745
  %v1194 = vpop.f32.mrb[0].mxu0
  %v1195 = vadd.f32 0.0, %v1194
  %v1196 = vpop.f32.mrb[0].mxu0
  %v1197 = vadd.f32 0.0, %v1196
  %v1198 = vpop.f32.mrb[0].mxu0
  %v1199 = vadd.f32 0.0, %v1198
  %v1200 = vpop.f32.mrb[0].mxu0
  %v1201 = vadd.f32 0.0, %v1200
  %1202 = vmatprep.mubr.bf16.mxu0 0
  %1203 = vmatmul.mubr.bf16.gmra.mrb[0].mxu0 %v748
  %v1204 = vpop.f32.mrb[0].mxu0
  %v1205 = vadd.f32 0.0, %v1204
  %v1206 = vpop.f32.mrb[0].mxu0
  %v1207 = vadd.f32 0.0, %v1206
  %v1208 = vpop.f32.mrb[0].mxu0
  %v1209 = vadd.f32 0.0, %v1208
  %v1210 = vpop.f32.mrb[0].mxu0
  %v1211 = vadd.f32 0.0, %v1210
  %1212 = vmatprep.mubr.bf16.mxu0 0
  %1213 = vmatmul.mubr.bf16.gmra.mrb[0].mxu0 %v751
  %v1214 = vpop.f32.mrb[0].mxu0
  %v1215 = vadd.f32 0.0, %v1214
  %v1216 = vpop.f32.mrb[0].mxu0
  %v1217 = vadd.f32 0.0, %v1216
  %v1218 = vpop.f32.mrb[0].mxu0
  %v1219 = vadd.f32 0.0, %v1218
  %v1220 = vpop.f32.mrb[0].mxu0
  %v1221 = vadd.f32 0.0, %v1220
  %1222 = vmatprep.mubr.bf16.mxu0 0
  %1223 = vmatmul.mubr.bf16.gmra.mrb[0].mxu0 %v754
  %v1224 = vpop.f32.mrb[0].mxu0
  %v1225 = vadd.f32 0.0, %v1224
  %v1226 = vpop.f32.mrb[0].mxu0
  %v1227 = vadd.f32 0.0, %v1226
  %v1228 = vpop.f32.mrb[0].mxu0
  %v1229 = vadd.f32 0.0, %v1228
  %v1230 = vpop.f32.mrb[0].mxu0
  %v1231 = vadd.f32 0.0, %v1230
  %1232 = vmatprep.mubr.bf16.mxu0 0
  %1233 = vmatmul.mubr.bf16.gmra.mrb[0].mxu0 %v757
  %v1234 = vpop.f32.mrb[0].mxu0
  %v1235 = vadd.f32 0.0, %v1234
  %v1236 = vpop.f32.mrb[0].mxu0
  %v1237 = vadd.f32 0.0, %v1236
  %v1238 = vpop.f32.mrb[0].mxu0
  %v1239 = vadd.f32 0.0, %v1238
  %v1240 = vpop.f32.mrb[0].mxu0
  %v1241 = vadd.f32 0.0, %v1240
  %1242 = vmatprep.mubr.bf16.mxu0 0
  %1243 = vmatmul.mubr.bf16.gmra.mrb[0].mxu0 %v760
  %v1244 = vpop.f32.mrb[0].mxu0
  %v1245 = vadd.f32 0.0, %v1244
  %v1246 = vpop.f32.mrb[0].mxu0
  %v1247 = vadd.f32 0.0, %v1246
  %v1248 = vpop.f32.mrb[0].mxu0
  %v1249 = vadd.f32 0.0, %v1248
  %v1250 = vpop.f32.mrb[0].mxu0
  %v1251 = vadd.f32 0.0, %v1250
  %1252 = vmatprep.mubr.bf16.mxu0 0
  %1253 = vmatmul.mubr.bf16.gmra.mrb[0].mxu0 %v763
  %v1254 = vpop.f32.mrb[0].mxu0
  %v1255 = vadd.f32 0.0, %v1254
  %v1256 = vpop.f32.mrb[0].mxu0
  %v1257 = vadd.f32 0.0, %v1256
  %v1258 = vpop.f32.mrb[0].mxu0
  %v1259 = vadd.f32 0.0, %v1258
  %v1260 = vpop.f32.mrb[0].mxu0
  %v1261 = vadd.f32 0.0, %v1260
  %1262 = vmatprep.mubr.bf16.mxu0 0
  %1263 = vmatmul.mubr.bf16.gmra.mrb[0].mxu0 %v766
  %v1264 = vpop.f32.mrb[0].mxu0
  %v1265 = vadd.f32 0.0, %v1264
  %v1266 = vpop.f32.mrb[0].mxu0
  %v1267 = vadd.f32 0.0, %v1266
  %v1268 = vpop.f32.mrb[0].mxu0
  %v1269 = vadd.f32 0.0, %v1268
  %v1270 = vpop.f32.mrb[0].mxu0
  %v1271 = vadd.f32 0.0, %v1270
  %1272 = vmatprep.mubr.bf16.mxu0 0
  %1273 = vmatmul.mubr.bf16.gmra.mrb[0].mxu0 %v769
  %v1274 = vpop.f32.mrb[0].mxu0
  %v1275 = vadd.f32 0.0, %v1274
  %v1276 = vpop.f32.mrb[0].mxu0
  %v1277 = vadd.f32 0.0, %v1276
  %v1278 = vpop.f32.mrb[0].mxu0
  %v1279 = vadd.f32 0.0, %v1278
  %v1280 = vpop.f32.mrb[0].mxu0
  %v1281 = vadd.f32 0.0, %v1280
  %1282 = vmatprep.mubr.bf16.mxu0 0
  %1283 = vmatmul.mubr.bf16.gmra.mrb[0].mxu0 %v772
  %v1284 = vpop.f32.mrb[0].mxu0
  %v1285 = vadd.f32 0.0, %v1284
  %v1286 = vpop.f32.mrb[0].mxu0
  %v1287 = vadd.f32 0.0, %v1286
  %v1288 = vpop.f32.mrb[0].mxu0
  %v1289 = vadd.f32 0.0, %v1288
  %v1290 = vpop.f32.mrb[0].mxu0
  %v1291 = vadd.f32 0.0, %v1290
  %1292 = vmatprep.mubr.bf16.mxu0 0
  %1293 = vmatmul.mubr.bf16.gmra.mrb[0].mxu0 %v775
  %v1294 = vpop.f32.mrb[0].mxu0
  %v1295 = vadd.f32 0.0, %v1294
  %v1296 = vpop.f32.mrb[0].mxu0
  %v1297 = vadd.f32 0.0, %v1296
  %v1298 = vpop.f32.mrb[0].mxu0
  %v1299 = vadd.f32 0.0, %v1298
  %v1300 = vpop.f32.mrb[0].mxu0
  %v1301 = vadd.f32 0.0, %v1300
  %1302 = vmatprep.mubr.bf16.mxu0 0
  %1303 = vmatmul.mubr.bf16.gmra.mrb[0].mxu0 %v778
  %v1304 = vpop.f32.mrb[0].mxu0
  %v1305 = vadd.f32 0.0, %v1304
  %v1306 = vpop.f32.mrb[0].mxu0
  %v1307 = vadd.f32 0.0, %v1306
  %v1308 = vpop.f32.mrb[0].mxu0
  %v1309 = vadd.f32 0.0, %v1308
  %v1310 = vpop.f32.mrb[0].mxu0
  %v1311 = vadd.f32 0.0, %v1310
  %1312 = vmatprep.mubr.bf16.mxu0 0
  %1313 = vmatmul.mubr.bf16.gmra.mrb[0].mxu0 %v781
  %v1314 = vpop.f32.mrb[0].mxu0
  %v1315 = vadd.f32 0.0, %v1314
  %v1316 = vpop.f32.mrb[0].mxu0
  %v1317 = vadd.f32 0.0, %v1316
  %v1318 = vpop.f32.mrb[0].mxu0
  %v1319 = vadd.f32 0.0, %v1318
  %v1320 = vpop.f32.mrb[0].mxu0
  %v1321 = vadd.f32 0.0, %v1320
  %1322 = vmatprep.mubr.bf16.mxu0 0
  %1323 = vmatmul.mubr.bf16.gmra.mrb[0].mxu0 %v784
  %v1324 = vpop.f32.mrb[0].mxu0
  %v1325 = vadd.f32 0.0, %v1324
  %v1326 = vpop.f32.mrb[0].mxu0
  %v1327 = vadd.f32 0.0, %v1326
  %v1328 = vpop.f32.mrb[0].mxu0
  %v1329 = vadd.f32 0.0, %v1328
  %v1330 = vpop.f32.mrb[0].mxu0
  %v1331 = vadd.f32 0.0, %v1330
  %1332 = vmatprep.mubr.bf16.mxu0 0
  %1333 = vmatmul.mubr.bf16.gmra.mrb[0].mxu0 %v787
  %v1334 = vpop.f32.mrb[0].mxu0
  %v1335 = vadd.f32 0.0, %v1334
  %v1336 = vpop.f32.mrb[0].mxu0
  %v1337 = vadd.f32 0.0, %v1336
  %v1338 = vpop.f32.mrb[0].mxu0
  %v1339 = vadd.f32 0.0, %v1338
  %v1340 = vpop.f32.mrb[0].mxu0
  %v1341 = vadd.f32 0.0, %v1340
  %1342 = vmatprep.mubr.bf16.mxu0 0
  %1343 = vmatmul.mubr.bf16.gmra.mrb[0].mxu0 %v790
  %v1344 = vpop.f32.mrb[0].mxu0
  %v1345 = vadd.f32 0.0, %v1344
  %v1346 = vpop.f32.mrb[0].mxu0
  %v1347 = vadd.f32 0.0, %v1346
  %v1348 = vpop.f32.mrb[0].mxu0
  %v1349 = vadd.f32 0.0, %v1348
  %v1350 = vpop.f32.mrb[0].mxu0
  %v1351 = vadd.f32 0.0, %v1350
  %1352 = vmatprep.mubr.bf16.mxu0 0
  %1353 = vmatmul.mubr.bf16.gmra.mrb[0].mxu0 %v793
  %v1354 = vpop.f32.mrb[0].mxu0
  %v1355 = vadd.f32 0.0, %v1354
  %v1356 = vpop.f32.mrb[0].mxu0
  %v1357 = vadd.f32 0.0, %v1356
  %v1358 = vpop.f32.mrb[0].mxu0
  %v1359 = vadd.f32 0.0, %v1358
  %v1360 = vpop.f32.mrb[0].mxu0
  %v1361 = vadd.f32 0.0, %v1360
  %1362 = vmatprep.mubr.bf16.mxu0 0
  %1363 = vmatmul.mubr.bf16.gmra.mrb[0].mxu0 %v796
  %v1364 = vpop.f32.mrb[0].mxu0
  %v1365 = vadd.f32 0.0, %v1364
  %v1366 = vpop.f32.mrb[0].mxu0
  %v1367 = vadd.f32 0.0, %v1366
  %v1368 = vpop.f32.mrb[0].mxu0
  %v1369 = vadd.f32 0.0, %v1368
  %v1370 = vpop.f32.mrb[0].mxu0
  %v1371 = vadd.f32 0.0, %v1370
  %1372 = vmatprep.mubr.bf16.mxu0 0
  %1373 = vmatmul.mubr.bf16.gmra.mrb[0].mxu0 %v799
  %v1374 = vpop.f32.mrb[0].mxu0
  %v1375 = vadd.f32 0.0, %v1374
  %v1376 = vpop.f32.mrb[0].mxu0
  %v1377 = vadd.f32 0.0, %v1376
  %v1378 = vpop.f32.mrb[0].mxu0
  %v1379 = vadd.f32 0.0, %v1378
  %v1380 = vpop.f32.mrb[0].mxu0
  %v1381 = vadd.f32 0.0, %v1380
  %1382 = vmatprep.mubr.bf16.mxu0 0
  %1383 = vmatmul.mubr.bf16.gmra.mrb[0].mxu0 %v802
  %v1384 = vpop.f32.mrb[0].mxu0
  %v1385 = vadd.f32 0.0, %v1384
  %v1386 = vpop.f32.mrb[0].mxu0
  %v1387 = vadd.f32 0.0, %v1386
  %v1388 = vpop.f32.mrb[0].mxu0
  %v1389 = vadd.f32 0.0, %v1388
  %v1390 = vpop.f32.mrb[0].mxu0
  %v1391 = vadd.f32 0.0, %v1390
  %1392 = vmatprep.mubr.bf16.mxu0 0
  %1393 = vmatmul.mubr.bf16.gmra.mrb[0].mxu0 %v805
  %v1394 = vpop.f32.mrb[0].mxu0
  %v1395 = vadd.f32 0.0, %v1394
  %v1396 = vpop.f32.mrb[0].mxu0
  %v1397 = vadd.f32 0.0, %v1396
  %v1398 = vpop.f32.mrb[0].mxu0
  %v1399 = vadd.f32 0.0, %v1398
  %v1400 = vpop.f32.mrb[0].mxu0
  %v1401 = vadd.f32 0.0, %v1400
  %1402 = vmatprep.mubr.bf16.mxu0 0
  %1403 = vmatmul.mubr.bf16.gmra.mrb[0].mxu0 %v808
  %v1404 = vpop.f32.mrb[0].mxu0
  %v1405 = vadd.f32 0.0, %v1404
  %v1406 = vpop.f32.mrb[0].mxu0
  %v1407 = vadd.f32 0.0, %v1406
  %v1408 = vpop.f32.mrb[0].mxu0
  %v1409 = vadd.f32 0.0, %v1408
  %v1410 = vpop.f32.mrb[0].mxu0
  %v1411 = vadd.f32 0.0, %v1410
  %1412 = vmatprep.mubr.bf16.mxu0 0
  %1413 = vmatmul.mubr.bf16.gmra.mrb[0].mxu0 %v811
  %v1414 = vpop.f32.mrb[0].mxu0
  %v1415 = vadd.f32 0.0, %v1414
  %v1416 = vpop.f32.mrb[0].mxu0
  %v1417 = vadd.f32 0.0, %v1416
  %v1418 = vpop.f32.mrb[0].mxu0
  %v1419 = vadd.f32 0.0, %v1418
  %v1420 = vpop.f32.mrb[0].mxu0
  %v1421 = vadd.f32 0.0, %v1420
  %1422 = vmatprep.mubr.bf16.mxu0 0
  %1423 = vmatmul.mubr.bf16.gmra.mrb[0].mxu0 %v814
  %v1424 = vpop.f32.mrb[0].mxu0
  %v1425 = vadd.f32 0.0, %v1424
  %v1426 = vpop.f32.mrb[0].mxu0
  %v1427 = vadd.f32 0.0, %v1426
  %v1428 = vpop.f32.mrb[0].mxu0
  %v1429 = vadd.f32 0.0, %v1428
  %v1430 = vpop.f32.mrb[0].mxu0
  %v1431 = vadd.f32 0.0, %v1430
  %1432 = vmatprep.mubr.bf16.mxu0 0
  %1433 = vmatmul.mubr.bf16.gmra.mrb[0].mxu0 %v817
  %v1434 = vpop.f32.mrb[0].mxu0
  %v1435 = vadd.f32 0.0, %v1434
  %v1436 = vpop.f32.mrb[0].mxu0
  %v1437 = vadd.f32 0.0, %v1436
  %v1438 = vpop.f32.mrb[0].mxu0
  %v1439 = vadd.f32 0.0, %v1438
  %v1440 = vpop.f32.mrb[0].mxu0
  %v1441 = vadd.f32 0.0, %v1440
  %1442 = vmatprep.mubr.bf16.mxu0 0
  %1443 = vmatmul.mubr.bf16.gmra.mrb[0].mxu0 %v820
  %v1444 = vpop.f32.mrb[0].mxu0
  %v1445 = vadd.f32 0.0, %v1444
  %v1446 = vpop.f32.mrb[0].mxu0
  %v1447 = vadd.f32 0.0, %v1446
  %v1448 = vpop.f32.mrb[0].mxu0
  %v1449 = vadd.f32 0.0, %v1448
  %v1450 = vpop.f32.mrb[0].mxu0
  %v1451 = vadd.f32 0.0, %v1450
  %1452 = vmatprep.mubr.bf16.mxu0 0
  %1453 = vmatmul.mubr.bf16.gmra.mrb[0].mxu0 %v823
  %v1454 = vpop.f32.mrb[0].mxu0
  %v1455 = vadd.f32 0.0, %v1454
  %v1456 = vpop.f32.mrb[0].mxu0
  %v1457 = vadd.f32 0.0, %v1456
  %v1458 = vpop.f32.mrb[0].mxu0
  %v1459 = vadd.f32 0.0, %v1458
  %v1460 = vpop.f32.mrb[0].mxu0
  %v1461 = vadd.f32 0.0, %v1460
  %1462 = vmatprep.mubr.bf16.mxu0 0
  %1463 = vmatmul.mubr.bf16.gmra.mrb[0].mxu0 %v826
  %v1464 = vpop.f32.mrb[0].mxu0
  %v1465 = vadd.f32 0.0, %v1464
  %v1466 = vpop.f32.mrb[0].mxu0
  %v1467 = vadd.f32 0.0, %v1466
  %v1468 = vpop.f32.mrb[0].mxu0
  %v1469 = vadd.f32 0.0, %v1468
  %v1470 = vpop.f32.mrb[0].mxu0
  %v1471 = vadd.f32 0.0, %v1470
  %1472 = vmatprep.mubr.bf16.mxu0 0
  %1473 = vmatmul.mubr.bf16.gmra.mrb[0].mxu0 %v829
  %v1474 = vpop.f32.mrb[0].mxu0
  %v1475 = vadd.f32 0.0, %v1474
  %v1476 = vpop.f32.mrb[0].mxu0
  %v1477 = vadd.f32 0.0, %v1476
  %v1478 = vpop.f32.mrb[0].mxu0
  %v1479 = vadd.f32 0.0, %v1478
  %v1480 = vpop.f32.mrb[0].mxu0
  %v1481 = vadd.f32 0.0, %v1480
  %1482 = vmatprep.mubr.bf16.mxu0 0
  %1483 = vmatmul.mubr.bf16.gmra.mrb[0].mxu0 %v832
  %v1484 = vpop.f32.mrb[0].mxu0
  %v1485 = vadd.f32 0.0, %v1484
  %v1486 = vpop.f32.mrb[0].mxu0
  %v1487 = vadd.f32 0.0, %v1486
  %v1488 = vpop.f32.mrb[0].mxu0
  %v1489 = vadd.f32 0.0, %v1488
  %v1490 = vpop.f32.mrb[0].mxu0
  %v1491 = vadd.f32 0.0, %v1490
  %1492 = vmatprep.mubr.bf16.mxu0 0
  %1493 = vmatmul.mubr.bf16.gmra.mrb[0].mxu0 %v835
  %v1494 = vpop.f32.mrb[0].mxu0
  %v1495 = vadd.f32 0.0, %v1494
  %v1496 = vpop.f32.mrb[0].mxu0
  %v1497 = vadd.f32 0.0, %v1496
  %v1498 = vpop.f32.mrb[0].mxu0
  %v1499 = vadd.f32 0.0, %v1498
  %v1500 = vpop.f32.mrb[0].mxu0
  %v1501 = vadd.f32 0.0, %v1500
  %1502 = vmatprep.mubr.bf16.mxu0 0
  %1503 = vmatmul.mubr.bf16.gmra.mrb[0].mxu0 %v838
  %v1504 = vpop.f32.mrb[0].mxu0
  %v1505 = vadd.f32 0.0, %v1504
  %v1506 = vpop.f32.mrb[0].mxu0
  %v1507 = vadd.f32 0.0, %v1506
  %v1508 = vpop.f32.mrb[0].mxu0
  %v1509 = vadd.f32 0.0, %v1508
  %v1510 = vpop.f32.mrb[0].mxu0
  %v1511 = vadd.f32 0.0, %v1510
  %1512 = vdwg.mxu0
  %v1641 = vunpack.c.l.b16 %v45
  %v1642 = vunpack.c.l.b16 %v46
  %v1643 = vunpack.c.l.b16 %v47
  %v1644 = vunpack.c.l.b16 %v48
  %v1645 = vunpack.c.l.b16 %v49
  %v1646 = vunpack.c.l.b16 %v50
  %v1647 = vunpack.c.l.b16 %v51
  %v1648 = vunpack.c.l.b16 %v52
  %v1649 = vunpack.c.l.b16 %v53
  %v1650 = vunpack.c.l.b16 %v54
  %v1651 = vunpack.c.l.b16 %v55
  %v1652 = vunpack.c.l.b16 %v56
  %v1653 = vunpack.c.l.b16 %v57
  %v1654 = vunpack.c.l.b16 %v58
  %v1655 = vunpack.c.l.b16 %v59
  %v1656 = vunpack.c.l.b16 %v60
  %v1657 = vunpack.c.l.b16 %v61
  %v1658 = vunpack.c.l.b16 %v62
  %v1659 = vunpack.c.l.b16 %v63
  %v1660 = vunpack.c.l.b16 %v64
  %v1661 = vunpack.c.l.b16 %v65
  %v1662 = vunpack.c.l.b16 %v66
  %v1663 = vunpack.c.l.b16 %v67
  %v1664 = vunpack.c.l.b16 %v68
  %v1665 = vunpack.c.l.b16 %v69
  %v1666 = vunpack.c.l.b16 %v70
  %v1667 = vunpack.c.l.b16 %v71
  %v1668 = vunpack.c.l.b16 %v72
  %v1669 = vunpack.c.l.b16 %v73
  %v1670 = vunpack.c.l.b16 %v74
  %v1671 = vunpack.c.l.b16 %v75
  %v1672 = vunpack.c.l.b16 %v76
  %v1673 = vunpack.c.l.b16 %v77
  %v1674 = vunpack.c.l.b16 %v78
  %v1675 = vunpack.c.l.b16 %v79
  %v1676 = vunpack.c.l.b16 %v80
  %v1677 = vunpack.c.l.b16 %v81
  %v1678 = vunpack.c.l.b16 %v82
  %v1679 = vunpack.c.l.b16 %v83
  %v1680 = vunpack.c.l.b16 %v84
  %v1681 = vunpack.c.l.b16 %v85
  %v1682 = vunpack.c.l.b16 %v86
  %v1683 = vunpack.c.l.b16 %v87
  %v1684 = vunpack.c.l.b16 %v88
  %v1685 = vunpack.c.l.b16 %v89
  %v1686 = vunpack.c.l.b16 %v90
  %v1687 = vunpack.c.l.b16 %v91
  %v1688 = vunpack.c.l.b16 %v92
  %v1689 = vunpack.c.l.b16 %v93
  %v1690 = vunpack.c.l.b16 %v94
  %v1691 = vunpack.c.l.b16 %v95
  %v1692 = vunpack.c.l.b16 %v96
  %v1693 = vunpack.c.l.b16 %v97
  %v1694 = vunpack.c.l.b16 %v98
  %v1695 = vunpack.c.l.b16 %v99
  %v1696 = vunpack.c.l.b16 %v100
  %v1697 = vunpack.c.l.b16 %v101
  %v1698 = vunpack.c.l.b16 %v102
  %v1699 = vunpack.c.l.b16 %v103
  %v1700 = vunpack.c.l.b16 %v104
  %v1701 = vunpack.c.l.b16 %v105
  %v1702 = vunpack.c.l.b16 %v106
  %v1703 = vunpack.c.l.b16 %v107
  %v1704 = vunpack.c.l.b16 %v108
  %v1705 = vunpack.c.l.b16 %v109
  %v1706 = vunpack.c.l.b16 %v110
  %v1707 = vunpack.c.l.b16 %v111
  %v1708 = vunpack.c.l.b16 %v112
  %v1709 = vunpack.c.l.b16 %v113
  %v1710 = vunpack.c.l.b16 %v114
  %v1711 = vunpack.c.l.b16 %v115
  %v1712 = vunpack.c.l.b16 %v116
  %v1713 = vunpack.c.l.b16 %v117
  %v1714 = vunpack.c.l.b16 %v118
  %v1715 = vunpack.c.l.b16 %v119
  %v1716 = vunpack.c.l.b16 %v120
  %v1717 = vunpack.c.l.b16 %v121
  %v1718 = vunpack.c.l.b16 %v122
  %v1719 = vunpack.c.l.b16 %v123
  %v1720 = vunpack.c.l.b16 %v124
  %v1721 = vunpack.c.l.b16 %v125
  %v1722 = vunpack.c.l.b16 %v126
  %v1723 = vunpack.c.l.b16 %v127
  %v1724 = vunpack.c.l.b16 %v128
  %v1725 = vunpack.c.l.b16 %v129
  %v1726 = vunpack.c.l.b16 %v130
  %v1727 = vunpack.c.l.b16 %v131
  %v1728 = vunpack.c.l.b16 %v132
  %v1729 = vunpack.c.l.b16 %v133
  %v1730 = vunpack.c.l.b16 %v134
  %v1731 = vunpack.c.l.b16 %v135
  %v1732 = vunpack.c.l.b16 %v136
  %v1733 = vunpack.c.l.b16 %v137
  %v1734 = vunpack.c.l.b16 %v138
  %v1735 = vunpack.c.l.b16 %v139
  %v1736 = vunpack.c.l.b16 %v140
  %v1737 = vunpack.c.l.b16 %v141
  %v1738 = vunpack.c.l.b16 %v142
  %v1739 = vunpack.c.l.b16 %v143
  %v1740 = vunpack.c.l.b16 %v144
  %v1741 = vunpack.c.l.b16 %v145
  %v1742 = vunpack.c.l.b16 %v146
  %v1743 = vunpack.c.l.b16 %v147
  %v1744 = vunpack.c.l.b16 %v148
  %v1745 = vunpack.c.l.b16 %v149
  %v1746 = vunpack.c.l.b16 %v150
  %v1747 = vunpack.c.l.b16 %v151
  %v1748 = vunpack.c.l.b16 %v152
  %v1749 = vunpack.c.l.b16 %v153
  %v1750 = vunpack.c.l.b16 %v154
  %v1751 = vunpack.c.l.b16 %v155
  %v1752 = vunpack.c.l.b16 %v156
  %v1753 = vunpack.c.l.b16 %v157
  %v1754 = vunpack.c.l.b16 %v158
  %v1755 = vunpack.c.l.b16 %v159
  %v1756 = vunpack.c.l.b16 %v160
  %v1757 = vunpack.c.l.b16 %v161
  %v1758 = vunpack.c.l.b16 %v162
  %v1759 = vunpack.c.l.b16 %v163
  %v1760 = vunpack.c.l.b16 %v164
  %v1761 = vunpack.c.l.b16 %v165
  %v1762 = vunpack.c.l.b16 %v166
  %v1763 = vunpack.c.l.b16 %v167
  %v1764 = vunpack.c.l.b16 %v168
  %v1765 = vunpack.c.l.b16 %v169
  %v1766 = vunpack.c.l.b16 %v170
  %v1767 = vunpack.c.l.b16 %v171
  %v1768 = vunpack.c.l.b16 %v172
  %v1769 = vpack.c.b16 %v1642, %v1641
  %v1770 = vpack.c.b16 %v1644, %v1643
  %v1771 = vpack.c.b16 %v1646, %v1645
  %v1772 = vpack.c.b16 %v1648, %v1647
  %v1773 = vpack.c.b16 %v1650, %v1649
  %v1774 = vpack.c.b16 %v1652, %v1651
  %v1775 = vpack.c.b16 %v1654, %v1653
  %v1776 = vpack.c.b16 %v1656, %v1655
  %v1777 = vpack.c.b16 %v1658, %v1657
  %v1778 = vpack.c.b16 %v1660, %v1659
  %v1779 = vpack.c.b16 %v1662, %v1661
  %v1780 = vpack.c.b16 %v1664, %v1663
  %v1781 = vpack.c.b16 %v1666, %v1665
  %v1782 = vpack.c.b16 %v1668, %v1667
  %v1783 = vpack.c.b16 %v1670, %v1669
  %v1784 = vpack.c.b16 %v1672, %v1671
  %v1785 = vpack.c.b16 %v1674, %v1673
  %v1786 = vpack.c.b16 %v1676, %v1675
  %v1787 = vpack.c.b16 %v1678, %v1677
  %v1788 = vpack.c.b16 %v1680, %v1679
  %v1789 = vpack.c.b16 %v1682, %v1681
  %v1790 = vpack.c.b16 %v1684, %v1683
  %v1791 = vpack.c.b16 %v1686, %v1685
  %v1792 = vpack.c.b16 %v1688, %v1687
  %v1793 = vpack.c.b16 %v1690, %v1689
  %v1794 = vpack.c.b16 %v1692, %v1691
  %v1795 = vpack.c.b16 %v1694, %v1693
  %v1796 = vpack.c.b16 %v1696, %v1695
  %v1797 = vpack.c.b16 %v1698, %v1697
  %v1798 = vpack.c.b16 %v1700, %v1699
  %v1799 = vpack.c.b16 %v1702, %v1701
  %v1800 = vpack.c.b16 %v1704, %v1703
  %v1801 = vpack.c.b16 %v1706, %v1705
  %v1802 = vpack.c.b16 %v1708, %v1707
  %v1803 = vpack.c.b16 %v1710, %v1709
  %v1804 = vpack.c.b16 %v1712, %v1711
  %v1805 = vpack.c.b16 %v1714, %v1713
  %v1806 = vpack.c.b16 %v1716, %v1715
  %v1807 = vpack.c.b16 %v1718, %v1717
  %v1808 = vpack.c.b16 %v1720, %v1719
  %v1809 = vpack.c.b16 %v1722, %v1721
  %v1810 = vpack.c.b16 %v1724, %v1723
  %v1811 = vpack.c.b16 %v1726, %v1725
  %v1812 = vpack.c.b16 %v1728, %v1727
  %v1813 = vpack.c.b16 %v1730, %v1729
  %v1814 = vpack.c.b16 %v1732, %v1731
  %v1815 = vpack.c.b16 %v1734, %v1733
  %v1816 = vpack.c.b16 %v1736, %v1735
  %v1817 = vpack.c.b16 %v1738, %v1737
  %v1818 = vpack.c.b16 %v1740, %v1739
  %v1819 = vpack.c.b16 %v1742, %v1741
  %v1820 = vpack.c.b16 %v1744, %v1743
  %v1821 = vpack.c.b16 %v1746, %v1745
  %v1822 = vpack.c.b16 %v1748, %v1747
  %v1823 = vpack.c.b16 %v1750, %v1749
  %v1824 = vpack.c.b16 %v1752, %v1751
  %v1825 = vpack.c.b16 %v1754, %v1753
  %v1826 = vpack.c.b16 %v1756, %v1755
  %v1827 = vpack.c.b16 %v1758, %v1757
  %v1828 = vpack.c.b16 %v1760, %v1759
  %v1829 = vpack.c.b16 %v1762, %v1761
  %v1830 = vpack.c.b16 %v1764, %v1763
  %v1831 = vpack.c.b16 %v1766, %v1765
  %v1832 = vpack.c.b16 %v1768, %v1767
  %v1835 = vunpack.c.l.b16 %v173
  %v1836 = vunpack.c.h.b16 %v173
  %v1837 = vunpack.c.l.b16 %v174
  %v1838 = vunpack.c.h.b16 %v174
  %v1839 = vpack.c.b16 %v1837, %v1835
  %v1840 = vpack.c.b16 %v1838, %v1836
  %vm1841 = vcmask 97280
  %v1843 = vsel %vm1841, %v1769, 0
  %v1846 = vsel %vm1841, %v1770, 0
  %v1849 = vsel %vm1841, %v1771, 0
  %v1852 = vsel %vm1841, %v1772, 0
  %v1855 = vsel %vm1841, %v1773, 0
  %v1858 = vsel %vm1841, %v1774, 0
  %v1861 = vsel %vm1841, %v1775, 0
  %v1864 = vsel %vm1841, %v1776, 0
  %v1867 = vsel %vm1841, %v1777, 0
  %v1870 = vsel %vm1841, %v1778, 0
  %v1873 = vsel %vm1841, %v1779, 0
  %v1876 = vsel %vm1841, %v1780, 0
  %v1879 = vsel %vm1841, %v1781, 0
  %v1882 = vsel %vm1841, %v1782, 0
  %v1885 = vsel %vm1841, %v1783, 0
  %v1888 = vsel %vm1841, %v1784, 0
  %v1891 = vsel %vm1841, %v1785, 0
  %v1894 = vsel %vm1841, %v1786, 0
  %v1897 = vsel %vm1841, %v1787, 0
  %v1900 = vsel %vm1841, %v1788, 0
  %v1903 = vsel %vm1841, %v1789, 0
  %v1906 = vsel %vm1841, %v1790, 0
  %v1909 = vsel %vm1841, %v1791, 0
  %v1912 = vsel %vm1841, %v1792, 0
  %v1915 = vsel %vm1841, %v1793, 0
  %v1918 = vsel %vm1841, %v1794, 0
  %v1921 = vsel %vm1841, %v1795, 0
  %v1924 = vsel %vm1841, %v1796, 0
  %v1927 = vsel %vm1841, %v1797, 0
  %v1930 = vsel %vm1841, %v1798, 0
  %v1933 = vsel %vm1841, %v1799, 0
  %v1936 = vsel %vm1841, %v1800, 0
  %v1939 = vsel %vm1841, %v1801, 0
  %v1942 = vsel %vm1841, %v1802, 0
  %v1945 = vsel %vm1841, %v1803, 0
  %v1948 = vsel %vm1841, %v1804, 0
  %v1951 = vsel %vm1841, %v1805, 0
  %v1954 = vsel %vm1841, %v1806, 0
  %v1957 = vsel %vm1841, %v1807, 0
  %v1960 = vsel %vm1841, %v1808, 0
  %v1963 = vsel %vm1841, %v1809, 0
  %v1966 = vsel %vm1841, %v1810, 0
  %v1969 = vsel %vm1841, %v1811, 0
  %v1972 = vsel %vm1841, %v1812, 0
  %v1975 = vsel %vm1841, %v1813, 0
  %v1978 = vsel %vm1841, %v1814, 0
  %v1981 = vsel %vm1841, %v1815, 0
  %v1984 = vsel %vm1841, %v1816, 0
  %v1987 = vsel %vm1841, %v1817, 0
  %v1990 = vsel %vm1841, %v1818, 0
  %v1993 = vsel %vm1841, %v1819, 0
  %v1996 = vsel %vm1841, %v1820, 0
  %v1999 = vsel %vm1841, %v1821, 0
  %v2002 = vsel %vm1841, %v1822, 0
  %v2005 = vsel %vm1841, %v1823, 0
  %v2008 = vsel %vm1841, %v1824, 0
  %v2011 = vsel %vm1841, %v1825, 0
  %v2014 = vsel %vm1841, %v1826, 0
  %v2017 = vsel %vm1841, %v1827, 0
  %v2020 = vsel %vm1841, %v1828, 0
  %v2023 = vsel %vm1841, %v1829, 0
  %v2026 = vsel %vm1841, %v1830, 0
  %v2029 = vsel %vm1841, %v1831, 0
  %v2032 = vsel %vm1841, %v1832, 0
  %vm2034 = vcmask 1045504
  %v2036 = vsel %vm2034, %v1839, 0
  %v2039 = vsel %vm2034, %v1840, 0
  %2041 = vmatprep.subr.bf16.mxu0 %v2039
  %2042 = vmatpush1.bf16.msra.mxu0 %v2036
  %2043 = vmatprep.subr.bf16.mxu0 0
  %2044 = vmatpush1.bf16.msra.mxu0 0
  %2045 = vmatprep.subr.bf16.mxu0 0
  %2046 = vmatpush1.bf16.msra.mxu0 0
  %2047 = vmatprep.subr.bf16.mxu0 0
  %2048 = vmatpush1.bf16.msra.mxu0 0
  %2049 = vmatprep.subr.bf16.mxu0 0
  %2050 = vmatpush1.bf16.msra.mxu0 0
  %2051 = vmatprep.subr.bf16.mxu0 0
  %2052 = vmatpush1.bf16.msra.mxu0 0
  %2053 = vmatprep.subr.bf16.mxu0 0
  %2054 = vmatpush1.bf16.msra.mxu0 0
  %2055 = vmatprep.subr.bf16.mxu0 0
  %2056 = vmatpush1.bf16.msra.mxu0 0
  %2057 = vmatprep.subr.bf16.mxu0 0
  %2058 = vmatpush1.bf16.msra.mxu0 0
  %2059 = vmatprep.subr.bf16.mxu0 0
  %2060 = vmatpush1.bf16.msra.mxu0 0
  %2061 = vmatprep.subr.bf16.mxu0 0
  %2062 = vmatpush1.bf16.msra.mxu0 0
  %2063 = vmatprep.subr.bf16.mxu0 0
  %2064 = vmatpush1.bf16.msra.mxu0 0
  %2065 = vmatprep.subr.bf16.mxu0 0
  %2066 = vmatpush1.bf16.msra.mxu0 0
  %2067 = vmatprep.subr.bf16.mxu0 0
  %2068 = vmatpush1.bf16.msra.mxu0 0
  %2069 = vmatprep.subr.bf16.mxu0 0
  %2070 = vmatpush1.bf16.msra.mxu0 0
  %2071 = vmatprep.subr.bf16.mxu0 0
  %2072 = vmatpush1.bf16.msra.mxu0 0
  %2073 = vmatprep.mubr.bf16.mxu0 0
  %2074 = vmatmul.mubr.bf16.gmra.mrb[0].mxu0 %v1843
  %v2075 = vpop.f32.mrb[0].mxu0
  %v2076 = vadd.f32 %v875, %v2075
  %v2077 = vpop.f32.mrb[0].mxu0
  %v2078 = vadd.f32 %v877, %v2077
  %v2079 = vpop.f32.mrb[0].mxu0
  %v2080 = vadd.f32 %v879, %v2079
  %v2081 = vpop.f32.mrb[0].mxu0
  %v2082 = vadd.f32 %v881, %v2081
  %2083 = vmatprep.mubr.bf16.mxu0 0
  %2084 = vmatmul.mubr.bf16.gmra.mrb[0].mxu0 %v1846
  %v2085 = vpop.f32.mrb[0].mxu0
  %v2086 = vadd.f32 %v885, %v2085
  %v2087 = vpop.f32.mrb[0].mxu0
  %v2088 = vadd.f32 %v887, %v2087
  %v2089 = vpop.f32.mrb[0].mxu0
  %v2090 = vadd.f32 %v889, %v2089
  %v2091 = vpop.f32.mrb[0].mxu0
  %v2092 = vadd.f32 %v891, %v2091
  %2093 = vmatprep.mubr.bf16.mxu0 0
  %2094 = vmatmul.mubr.bf16.gmra.mrb[0].mxu0 %v1849
  %v2095 = vpop.f32.mrb[0].mxu0
  %v2096 = vadd.f32 %v895, %v2095
  %v2097 = vpop.f32.mrb[0].mxu0
  %v2098 = vadd.f32 %v897, %v2097
  %v2099 = vpop.f32.mrb[0].mxu0
  %v2100 = vadd.f32 %v899, %v2099
  %v2101 = vpop.f32.mrb[0].mxu0
  %v2102 = vadd.f32 %v901, %v2101
  %2103 = vmatprep.mubr.bf16.mxu0 0
  %2104 = vmatmul.mubr.bf16.gmra.mrb[0].mxu0 %v1852
  %v2105 = vpop.f32.mrb[0].mxu0
  %v2106 = vadd.f32 %v905, %v2105
  %v2107 = vpop.f32.mrb[0].mxu0
  %v2108 = vadd.f32 %v907, %v2107
  %v2109 = vpop.f32.mrb[0].mxu0
  %v2110 = vadd.f32 %v909, %v2109
  %v2111 = vpop.f32.mrb[0].mxu0
  %v2112 = vadd.f32 %v911, %v2111
  %2113 = vmatprep.mubr.bf16.mxu0 0
  %2114 = vmatmul.mubr.bf16.gmra.mrb[0].mxu0 %v1855
  %v2115 = vpop.f32.mrb[0].mxu0
  %v2116 = vadd.f32 %v915, %v2115
  %v2117 = vpop.f32.mrb[0].mxu0
  %v2118 = vadd.f32 %v917, %v2117
  %v2119 = vpop.f32.mrb[0].mxu0
  %v2120 = vadd.f32 %v919, %v2119
  %v2121 = vpop.f32.mrb[0].mxu0
  %v2122 = vadd.f32 %v921, %v2121
  %2123 = vmatprep.mubr.bf16.mxu0 0
  %2124 = vmatmul.mubr.bf16.gmra.mrb[0].mxu0 %v1858
  %v2125 = vpop.f32.mrb[0].mxu0
  %v2126 = vadd.f32 %v925, %v2125
  %v2127 = vpop.f32.mrb[0].mxu0
  %v2128 = vadd.f32 %v927, %v2127
  %v2129 = vpop.f32.mrb[0].mxu0
  %v2130 = vadd.f32 %v929, %v2129
  %v2131 = vpop.f32.mrb[0].mxu0
  %v2132 = vadd.f32 %v931, %v2131
  %2133 = vmatprep.mubr.bf16.mxu0 0
  %2134 = vmatmul.mubr.bf16.gmra.mrb[0].mxu0 %v1861
  %v2135 = vpop.f32.mrb[0].mxu0
  %v2136 = vadd.f32 %v935, %v2135
  %v2137 = vpop.f32.mrb[0].mxu0
  %v2138 = vadd.f32 %v937, %v2137
  %v2139 = vpop.f32.mrb[0].mxu0
  %v2140 = vadd.f32 %v939, %v2139
  %v2141 = vpop.f32.mrb[0].mxu0
  %v2142 = vadd.f32 %v941, %v2141
  %2143 = vmatprep.mubr.bf16.mxu0 0
  %2144 = vmatmul.mubr.bf16.gmra.mrb[0].mxu0 %v1864
  %v2145 = vpop.f32.mrb[0].mxu0
  %v2146 = vadd.f32 %v945, %v2145
  %v2147 = vpop.f32.mrb[0].mxu0
  %v2148 = vadd.f32 %v947, %v2147
  %v2149 = vpop.f32.mrb[0].mxu0
  %v2150 = vadd.f32 %v949, %v2149
  %v2151 = vpop.f32.mrb[0].mxu0
  %v2152 = vadd.f32 %v951, %v2151
  %2153 = vmatprep.mubr.bf16.mxu0 0
  %2154 = vmatmul.mubr.bf16.gmra.mrb[0].mxu0 %v1867
  %v2155 = vpop.f32.mrb[0].mxu0
  %v2156 = vadd.f32 %v955, %v2155
  %v2157 = vpop.f32.mrb[0].mxu0
  %v2158 = vadd.f32 %v957, %v2157
  %v2159 = vpop.f32.mrb[0].mxu0
  %v2160 = vadd.f32 %v959, %v2159
  %v2161 = vpop.f32.mrb[0].mxu0
  %v2162 = vadd.f32 %v961, %v2161
  %2163 = vmatprep.mubr.bf16.mxu0 0
  %2164 = vmatmul.mubr.bf16.gmra.mrb[0].mxu0 %v1870
  %v2165 = vpop.f32.mrb[0].mxu0
  %v2166 = vadd.f32 %v965, %v2165
  %v2167 = vpop.f32.mrb[0].mxu0
  %v2168 = vadd.f32 %v967, %v2167
  %v2169 = vpop.f32.mrb[0].mxu0
  %v2170 = vadd.f32 %v969, %v2169
  %v2171 = vpop.f32.mrb[0].mxu0
  %v2172 = vadd.f32 %v971, %v2171
  %2173 = vmatprep.mubr.bf16.mxu0 0
  %2174 = vmatmul.mubr.bf16.gmra.mrb[0].mxu0 %v1873
  %v2175 = vpop.f32.mrb[0].mxu0
  %v2176 = vadd.f32 %v975, %v2175
  %v2177 = vpop.f32.mrb[0].mxu0
  %v2178 = vadd.f32 %v977, %v2177
  %v2179 = vpop.f32.mrb[0].mxu0
  %v2180 = vadd.f32 %v979, %v2179
  %v2181 = vpop.f32.mrb[0].mxu0
  %v2182 = vadd.f32 %v981, %v2181
  %2183 = vmatprep.mubr.bf16.mxu0 0
  %2184 = vmatmul.mubr.bf16.gmra.mrb[0].mxu0 %v1876
  %v2185 = vpop.f32.mrb[0].mxu0
  %v2186 = vadd.f32 %v985, %v2185
  %v2187 = vpop.f32.mrb[0].mxu0
  %v2188 = vadd.f32 %v987, %v2187
  %v2189 = vpop.f32.mrb[0].mxu0
  %v2190 = vadd.f32 %v989, %v2189
  %v2191 = vpop.f32.mrb[0].mxu0
  %v2192 = vadd.f32 %v991, %v2191
  %2193 = vmatprep.mubr.bf16.mxu0 0
  %2194 = vmatmul.mubr.bf16.gmra.mrb[0].mxu0 %v1879
  %v2195 = vpop.f32.mrb[0].mxu0
  %v2196 = vadd.f32 %v995, %v2195
  %v2197 = vpop.f32.mrb[0].mxu0
  %v2198 = vadd.f32 %v997, %v2197
  %v2199 = vpop.f32.mrb[0].mxu0
  %v2200 = vadd.f32 %v999, %v2199
  %v2201 = vpop.f32.mrb[0].mxu0
  %v2202 = vadd.f32 %v1001, %v2201
  %2203 = vmatprep.mubr.bf16.mxu0 0
  %2204 = vmatmul.mubr.bf16.gmra.mrb[0].mxu0 %v1882
  %v2205 = vpop.f32.mrb[0].mxu0
  %v2206 = vadd.f32 %v1005, %v2205
  %v2207 = vpop.f32.mrb[0].mxu0
  %v2208 = vadd.f32 %v1007, %v2207
  %v2209 = vpop.f32.mrb[0].mxu0
  %v2210 = vadd.f32 %v1009, %v2209
  %v2211 = vpop.f32.mrb[0].mxu0
  %v2212 = vadd.f32 %v1011, %v2211
  %2213 = vmatprep.mubr.bf16.mxu0 0
  %2214 = vmatmul.mubr.bf16.gmra.mrb[0].mxu0 %v1885
  %v2215 = vpop.f32.mrb[0].mxu0
  %v2216 = vadd.f32 %v1015, %v2215
  %v2217 = vpop.f32.mrb[0].mxu0
  %v2218 = vadd.f32 %v1017, %v2217
  %v2219 = vpop.f32.mrb[0].mxu0
  %v2220 = vadd.f32 %v1019, %v2219
  %v2221 = vpop.f32.mrb[0].mxu0
  %v2222 = vadd.f32 %v1021, %v2221
  %2223 = vmatprep.mubr.bf16.mxu0 0
  %2224 = vmatmul.mubr.bf16.gmra.mrb[0].mxu0 %v1888
  %v2225 = vpop.f32.mrb[0].mxu0
  %v2226 = vadd.f32 %v1025, %v2225
  %v2227 = vpop.f32.mrb[0].mxu0
  %v2228 = vadd.f32 %v1027, %v2227
  %v2229 = vpop.f32.mrb[0].mxu0
  %v2230 = vadd.f32 %v1029, %v2229
  %v2231 = vpop.f32.mrb[0].mxu0
  %v2232 = vadd.f32 %v1031, %v2231
  %2233 = vmatprep.mubr.bf16.mxu0 0
  %2234 = vmatmul.mubr.bf16.gmra.mrb[0].mxu0 %v1891
  %v2235 = vpop.f32.mrb[0].mxu0
  %v2236 = vadd.f32 %v1035, %v2235
  %v2237 = vpop.f32.mrb[0].mxu0
  %v2238 = vadd.f32 %v1037, %v2237
  %v2239 = vpop.f32.mrb[0].mxu0
  %v2240 = vadd.f32 %v1039, %v2239
  %v2241 = vpop.f32.mrb[0].mxu0
  %v2242 = vadd.f32 %v1041, %v2241
  %2243 = vmatprep.mubr.bf16.mxu0 0
  %2244 = vmatmul.mubr.bf16.gmra.mrb[0].mxu0 %v1894
  %v2245 = vpop.f32.mrb[0].mxu0
  %v2246 = vadd.f32 %v1045, %v2245
  %v2247 = vpop.f32.mrb[0].mxu0
  %v2248 = vadd.f32 %v1047, %v2247
  %v2249 = vpop.f32.mrb[0].mxu0
  %v2250 = vadd.f32 %v1049, %v2249
  %v2251 = vpop.f32.mrb[0].mxu0
  %v2252 = vadd.f32 %v1051, %v2251
  %2253 = vmatprep.mubr.bf16.mxu0 0
  %2254 = vmatmul.mubr.bf16.gmra.mrb[0].mxu0 %v1897
  %v2255 = vpop.f32.mrb[0].mxu0
  %v2256 = vadd.f32 %v1055, %v2255
  %v2257 = vpop.f32.mrb[0].mxu0
  %v2258 = vadd.f32 %v1057, %v2257
  %v2259 = vpop.f32.mrb[0].mxu0
  %v2260 = vadd.f32 %v1059, %v2259
  %v2261 = vpop.f32.mrb[0].mxu0
  %v2262 = vadd.f32 %v1061, %v2261
  %2263 = vmatprep.mubr.bf16.mxu0 0
  %2264 = vmatmul.mubr.bf16.gmra.mrb[0].mxu0 %v1900
  %v2265 = vpop.f32.mrb[0].mxu0
  %v2266 = vadd.f32 %v1065, %v2265
  %v2267 = vpop.f32.mrb[0].mxu0
  %v2268 = vadd.f32 %v1067, %v2267
  %v2269 = vpop.f32.mrb[0].mxu0
  %v2270 = vadd.f32 %v1069, %v2269
  %v2271 = vpop.f32.mrb[0].mxu0
  %v2272 = vadd.f32 %v1071, %v2271
  %2273 = vmatprep.mubr.bf16.mxu0 0
  %2274 = vmatmul.mubr.bf16.gmra.mrb[0].mxu0 %v1903
  %v2275 = vpop.f32.mrb[0].mxu0
  %v2276 = vadd.f32 %v1075, %v2275
  %v2277 = vpop.f32.mrb[0].mxu0
  %v2278 = vadd.f32 %v1077, %v2277
  %v2279 = vpop.f32.mrb[0].mxu0
  %v2280 = vadd.f32 %v1079, %v2279
  %v2281 = vpop.f32.mrb[0].mxu0
  %v2282 = vadd.f32 %v1081, %v2281
  %2283 = vmatprep.mubr.bf16.mxu0 0
  %2284 = vmatmul.mubr.bf16.gmra.mrb[0].mxu0 %v1906
  %v2285 = vpop.f32.mrb[0].mxu0
  %v2286 = vadd.f32 %v1085, %v2285
  %v2287 = vpop.f32.mrb[0].mxu0
  %v2288 = vadd.f32 %v1087, %v2287
  %v2289 = vpop.f32.mrb[0].mxu0
  %v2290 = vadd.f32 %v1089, %v2289
  %v2291 = vpop.f32.mrb[0].mxu0
  %v2292 = vadd.f32 %v1091, %v2291
  %2293 = vmatprep.mubr.bf16.mxu0 0
  %2294 = vmatmul.mubr.bf16.gmra.mrb[0].mxu0 %v1909
  %v2295 = vpop.f32.mrb[0].mxu0
  %v2296 = vadd.f32 %v1095, %v2295
  %v2297 = vpop.f32.mrb[0].mxu0
  %v2298 = vadd.f32 %v1097, %v2297
  %v2299 = vpop.f32.mrb[0].mxu0
  %v2300 = vadd.f32 %v1099, %v2299
  %v2301 = vpop.f32.mrb[0].mxu0
  %v2302 = vadd.f32 %v1101, %v2301
  %2303 = vmatprep.mubr.bf16.mxu0 0
  %2304 = vmatmul.mubr.bf16.gmra.mrb[0].mxu0 %v1912
  %v2305 = vpop.f32.mrb[0].mxu0
  %v2306 = vadd.f32 %v1105, %v2305
  %v2307 = vpop.f32.mrb[0].mxu0
  %v2308 = vadd.f32 %v1107, %v2307
  %v2309 = vpop.f32.mrb[0].mxu0
  %v2310 = vadd.f32 %v1109, %v2309
  %v2311 = vpop.f32.mrb[0].mxu0
  %v2312 = vadd.f32 %v1111, %v2311
  %2313 = vmatprep.mubr.bf16.mxu0 0
  %2314 = vmatmul.mubr.bf16.gmra.mrb[0].mxu0 %v1915
  %v2315 = vpop.f32.mrb[0].mxu0
  %v2316 = vadd.f32 %v1115, %v2315
  %v2317 = vpop.f32.mrb[0].mxu0
  %v2318 = vadd.f32 %v1117, %v2317
  %v2319 = vpop.f32.mrb[0].mxu0
  %v2320 = vadd.f32 %v1119, %v2319
  %v2321 = vpop.f32.mrb[0].mxu0
  %v2322 = vadd.f32 %v1121, %v2321
  %2323 = vmatprep.mubr.bf16.mxu0 0
  %2324 = vmatmul.mubr.bf16.gmra.mrb[0].mxu0 %v1918
  %v2325 = vpop.f32.mrb[0].mxu0
  %v2326 = vadd.f32 %v1125, %v2325
  %v2327 = vpop.f32.mrb[0].mxu0
  %v2328 = vadd.f32 %v1127, %v2327
  %v2329 = vpop.f32.mrb[0].mxu0
  %v2330 = vadd.f32 %v1129, %v2329
  %v2331 = vpop.f32.mrb[0].mxu0
  %v2332 = vadd.f32 %v1131, %v2331
  %2333 = vmatprep.mubr.bf16.mxu0 0
  %2334 = vmatmul.mubr.bf16.gmra.mrb[0].mxu0 %v1921
  %v2335 = vpop.f32.mrb[0].mxu0
  %v2336 = vadd.f32 %v1135, %v2335
  %v2337 = vpop.f32.mrb[0].mxu0
  %v2338 = vadd.f32 %v1137, %v2337
  %v2339 = vpop.f32.mrb[0].mxu0
  %v2340 = vadd.f32 %v1139, %v2339
  %v2341 = vpop.f32.mrb[0].mxu0
  %v2342 = vadd.f32 %v1141, %v2341
  %2343 = vmatprep.mubr.bf16.mxu0 0
  %2344 = vmatmul.mubr.bf16.gmra.mrb[0].mxu0 %v1924
  %v2345 = vpop.f32.mrb[0].mxu0
  %v2346 = vadd.f32 %v1145, %v2345
  %v2347 = vpop.f32.mrb[0].mxu0
  %v2348 = vadd.f32 %v1147, %v2347
  %v2349 = vpop.f32.mrb[0].mxu0
  %v2350 = vadd.f32 %v1149, %v2349
  %v2351 = vpop.f32.mrb[0].mxu0
  %v2352 = vadd.f32 %v1151, %v2351
  %2353 = vmatprep.mubr.bf16.mxu0 0
  %2354 = vmatmul.mubr.bf16.gmra.mrb[0].mxu0 %v1927
  %v2355 = vpop.f32.mrb[0].mxu0
  %v2356 = vadd.f32 %v1155, %v2355
  %v2357 = vpop.f32.mrb[0].mxu0
  %v2358 = vadd.f32 %v1157, %v2357
  %v2359 = vpop.f32.mrb[0].mxu0
  %v2360 = vadd.f32 %v1159, %v2359
  %v2361 = vpop.f32.mrb[0].mxu0
  %v2362 = vadd.f32 %v1161, %v2361
  %2363 = vmatprep.mubr.bf16.mxu0 0
  %2364 = vmatmul.mubr.bf16.gmra.mrb[0].mxu0 %v1930
  %v2365 = vpop.f32.mrb[0].mxu0
  %v2366 = vadd.f32 %v1165, %v2365
  %v2367 = vpop.f32.mrb[0].mxu0
  %v2368 = vadd.f32 %v1167, %v2367
  %v2369 = vpop.f32.mrb[0].mxu0
  %v2370 = vadd.f32 %v1169, %v2369
  %v2371 = vpop.f32.mrb[0].mxu0
  %v2372 = vadd.f32 %v1171, %v2371
  %2373 = vmatprep.mubr.bf16.mxu0 0
  %2374 = vmatmul.mubr.bf16.gmra.mrb[0].mxu0 %v1933
  %v2375 = vpop.f32.mrb[0].mxu0
  %v2376 = vadd.f32 %v1175, %v2375
  %v2377 = vpop.f32.mrb[0].mxu0
  %v2378 = vadd.f32 %v1177, %v2377
  %v2379 = vpop.f32.mrb[0].mxu0
  %v2380 = vadd.f32 %v1179, %v2379
  %v2381 = vpop.f32.mrb[0].mxu0
  %v2382 = vadd.f32 %v1181, %v2381
  %2383 = vmatprep.mubr.bf16.mxu0 0
  %2384 = vmatmul.mubr.bf16.gmra.mrb[0].mxu0 %v1936
  %v2385 = vpop.f32.mrb[0].mxu0
  %v2386 = vadd.f32 %v1185, %v2385
  %v2387 = vpop.f32.mrb[0].mxu0
  %v2388 = vadd.f32 %v1187, %v2387
  %v2389 = vpop.f32.mrb[0].mxu0
  %v2390 = vadd.f32 %v1189, %v2389
  %v2391 = vpop.f32.mrb[0].mxu0
  %v2392 = vadd.f32 %v1191, %v2391
  %2393 = vmatprep.mubr.bf16.mxu0 0
  %2394 = vmatmul.mubr.bf16.gmra.mrb[0].mxu0 %v1939
  %v2395 = vpop.f32.mrb[0].mxu0
  %v2396 = vadd.f32 %v1195, %v2395
  %v2397 = vpop.f32.mrb[0].mxu0
  %v2398 = vadd.f32 %v1197, %v2397
  %v2399 = vpop.f32.mrb[0].mxu0
  %v2400 = vadd.f32 %v1199, %v2399
  %v2401 = vpop.f32.mrb[0].mxu0
  %v2402 = vadd.f32 %v1201, %v2401
  %2403 = vmatprep.mubr.bf16.mxu0 0
  %2404 = vmatmul.mubr.bf16.gmra.mrb[0].mxu0 %v1942
  %v2405 = vpop.f32.mrb[0].mxu0
  %v2406 = vadd.f32 %v1205, %v2405
  %v2407 = vpop.f32.mrb[0].mxu0
  %v2408 = vadd.f32 %v1207, %v2407
  %v2409 = vpop.f32.mrb[0].mxu0
  %v2410 = vadd.f32 %v1209, %v2409
  %v2411 = vpop.f32.mrb[0].mxu0
  %v2412 = vadd.f32 %v1211, %v2411
  %2413 = vmatprep.mubr.bf16.mxu0 0
  %2414 = vmatmul.mubr.bf16.gmra.mrb[0].mxu0 %v1945
  %v2415 = vpop.f32.mrb[0].mxu0
  %v2416 = vadd.f32 %v1215, %v2415
  %v2417 = vpop.f32.mrb[0].mxu0
  %v2418 = vadd.f32 %v1217, %v2417
  %v2419 = vpop.f32.mrb[0].mxu0
  %v2420 = vadd.f32 %v1219, %v2419
  %v2421 = vpop.f32.mrb[0].mxu0
  %v2422 = vadd.f32 %v1221, %v2421
  %2423 = vmatprep.mubr.bf16.mxu0 0
  %2424 = vmatmul.mubr.bf16.gmra.mrb[0].mxu0 %v1948
  %v2425 = vpop.f32.mrb[0].mxu0
  %v2426 = vadd.f32 %v1225, %v2425
  %v2427 = vpop.f32.mrb[0].mxu0
  %v2428 = vadd.f32 %v1227, %v2427
  %v2429 = vpop.f32.mrb[0].mxu0
  %v2430 = vadd.f32 %v1229, %v2429
  %v2431 = vpop.f32.mrb[0].mxu0
  %v2432 = vadd.f32 %v1231, %v2431
  %2433 = vmatprep.mubr.bf16.mxu0 0
  %2434 = vmatmul.mubr.bf16.gmra.mrb[0].mxu0 %v1951
  %v2435 = vpop.f32.mrb[0].mxu0
  %v2436 = vadd.f32 %v1235, %v2435
  %v2437 = vpop.f32.mrb[0].mxu0
  %v2438 = vadd.f32 %v1237, %v2437
  %v2439 = vpop.f32.mrb[0].mxu0
  %v2440 = vadd.f32 %v1239, %v2439
  %v2441 = vpop.f32.mrb[0].mxu0
  %v2442 = vadd.f32 %v1241, %v2441
  %2443 = vmatprep.mubr.bf16.mxu0 0
  %2444 = vmatmul.mubr.bf16.gmra.mrb[0].mxu0 %v1954
  %v2445 = vpop.f32.mrb[0].mxu0
  %v2446 = vadd.f32 %v1245, %v2445
  %v2447 = vpop.f32.mrb[0].mxu0
  %v2448 = vadd.f32 %v1247, %v2447
  %v2449 = vpop.f32.mrb[0].mxu0
  %v2450 = vadd.f32 %v1249, %v2449
  %v2451 = vpop.f32.mrb[0].mxu0
  %v2452 = vadd.f32 %v1251, %v2451
  %2453 = vmatprep.mubr.bf16.mxu0 0
  %2454 = vmatmul.mubr.bf16.gmra.mrb[0].mxu0 %v1957
  %v2455 = vpop.f32.mrb[0].mxu0
  %v2456 = vadd.f32 %v1255, %v2455
  %v2457 = vpop.f32.mrb[0].mxu0
  %v2458 = vadd.f32 %v1257, %v2457
  %v2459 = vpop.f32.mrb[0].mxu0
  %v2460 = vadd.f32 %v1259, %v2459
  %v2461 = vpop.f32.mrb[0].mxu0
  %v2462 = vadd.f32 %v1261, %v2461
  %2463 = vmatprep.mubr.bf16.mxu0 0
  %2464 = vmatmul.mubr.bf16.gmra.mrb[0].mxu0 %v1960
  %v2465 = vpop.f32.mrb[0].mxu0
  %v2466 = vadd.f32 %v1265, %v2465
  %v2467 = vpop.f32.mrb[0].mxu0
  %v2468 = vadd.f32 %v1267, %v2467
  %v2469 = vpop.f32.mrb[0].mxu0
  %v2470 = vadd.f32 %v1269, %v2469
  %v2471 = vpop.f32.mrb[0].mxu0
  %v2472 = vadd.f32 %v1271, %v2471
  %2473 = vmatprep.mubr.bf16.mxu0 0
  %2474 = vmatmul.mubr.bf16.gmra.mrb[0].mxu0 %v1963
  %v2475 = vpop.f32.mrb[0].mxu0
  %v2476 = vadd.f32 %v1275, %v2475
  %v2477 = vpop.f32.mrb[0].mxu0
  %v2478 = vadd.f32 %v1277, %v2477
  %v2479 = vpop.f32.mrb[0].mxu0
  %v2480 = vadd.f32 %v1279, %v2479
  %v2481 = vpop.f32.mrb[0].mxu0
  %v2482 = vadd.f32 %v1281, %v2481
  %2483 = vmatprep.mubr.bf16.mxu0 0
  %2484 = vmatmul.mubr.bf16.gmra.mrb[0].mxu0 %v1966
  %v2485 = vpop.f32.mrb[0].mxu0
  %v2486 = vadd.f32 %v1285, %v2485
  %v2487 = vpop.f32.mrb[0].mxu0
  %v2488 = vadd.f32 %v1287, %v2487
  %v2489 = vpop.f32.mrb[0].mxu0
  %v2490 = vadd.f32 %v1289, %v2489
  %v2491 = vpop.f32.mrb[0].mxu0
  %v2492 = vadd.f32 %v1291, %v2491
  %2493 = vmatprep.mubr.bf16.mxu0 0
  %2494 = vmatmul.mubr.bf16.gmra.mrb[0].mxu0 %v1969
  %v2495 = vpop.f32.mrb[0].mxu0
  %v2496 = vadd.f32 %v1295, %v2495
  %v2497 = vpop.f32.mrb[0].mxu0
  %v2498 = vadd.f32 %v1297, %v2497
  %v2499 = vpop.f32.mrb[0].mxu0
  %v2500 = vadd.f32 %v1299, %v2499
  %v2501 = vpop.f32.mrb[0].mxu0
  %v2502 = vadd.f32 %v1301, %v2501
  %2503 = vmatprep.mubr.bf16.mxu0 0
  %2504 = vmatmul.mubr.bf16.gmra.mrb[0].mxu0 %v1972
  %v2505 = vpop.f32.mrb[0].mxu0
  %v2506 = vadd.f32 %v1305, %v2505
  %v2507 = vpop.f32.mrb[0].mxu0
  %v2508 = vadd.f32 %v1307, %v2507
  %v2509 = vpop.f32.mrb[0].mxu0
  %v2510 = vadd.f32 %v1309, %v2509
  %v2511 = vpop.f32.mrb[0].mxu0
  %v2512 = vadd.f32 %v1311, %v2511
  %2513 = vmatprep.mubr.bf16.mxu0 0
  %2514 = vmatmul.mubr.bf16.gmra.mrb[0].mxu0 %v1975
  %v2515 = vpop.f32.mrb[0].mxu0
  %v2516 = vadd.f32 %v1315, %v2515
  %v2517 = vpop.f32.mrb[0].mxu0
  %v2518 = vadd.f32 %v1317, %v2517
  %v2519 = vpop.f32.mrb[0].mxu0
  %v2520 = vadd.f32 %v1319, %v2519
  %v2521 = vpop.f32.mrb[0].mxu0
  %v2522 = vadd.f32 %v1321, %v2521
  %2523 = vmatprep.mubr.bf16.mxu0 0
  %2524 = vmatmul.mubr.bf16.gmra.mrb[0].mxu0 %v1978
  %v2525 = vpop.f32.mrb[0].mxu0
  %v2526 = vadd.f32 %v1325, %v2525
  %v2527 = vpop.f32.mrb[0].mxu0
  %v2528 = vadd.f32 %v1327, %v2527
  %v2529 = vpop.f32.mrb[0].mxu0
  %v2530 = vadd.f32 %v1329, %v2529
  %v2531 = vpop.f32.mrb[0].mxu0
  %v2532 = vadd.f32 %v1331, %v2531
  %2533 = vmatprep.mubr.bf16.mxu0 0
  %2534 = vmatmul.mubr.bf16.gmra.mrb[0].mxu0 %v1981
  %v2535 = vpop.f32.mrb[0].mxu0
  %v2536 = vadd.f32 %v1335, %v2535
  %v2537 = vpop.f32.mrb[0].mxu0
  %v2538 = vadd.f32 %v1337, %v2537
  %v2539 = vpop.f32.mrb[0].mxu0
  %v2540 = vadd.f32 %v1339, %v2539
  %v2541 = vpop.f32.mrb[0].mxu0
  %v2542 = vadd.f32 %v1341, %v2541
  %2543 = vmatprep.mubr.bf16.mxu0 0
  %2544 = vmatmul.mubr.bf16.gmra.mrb[0].mxu0 %v1984
  %v2545 = vpop.f32.mrb[0].mxu0
  %v2546 = vadd.f32 %v1345, %v2545
  %v2547 = vpop.f32.mrb[0].mxu0
  %v2548 = vadd.f32 %v1347, %v2547
  %v2549 = vpop.f32.mrb[0].mxu0
  %v2550 = vadd.f32 %v1349, %v2549
  %v2551 = vpop.f32.mrb[0].mxu0
  %v2552 = vadd.f32 %v1351, %v2551
  %2553 = vmatprep.mubr.bf16.mxu0 0
  %2554 = vmatmul.mubr.bf16.gmra.mrb[0].mxu0 %v1987
  %v2555 = vpop.f32.mrb[0].mxu0
  %v2556 = vadd.f32 %v1355, %v2555
  %v2557 = vpop.f32.mrb[0].mxu0
  %v2558 = vadd.f32 %v1357, %v2557
  %v2559 = vpop.f32.mrb[0].mxu0
  %v2560 = vadd.f32 %v1359, %v2559
  %v2561 = vpop.f32.mrb[0].mxu0
  %v2562 = vadd.f32 %v1361, %v2561
  %2563 = vmatprep.mubr.bf16.mxu0 0
  %2564 = vmatmul.mubr.bf16.gmra.mrb[0].mxu0 %v1990
  %v2565 = vpop.f32.mrb[0].mxu0
  %v2566 = vadd.f32 %v1365, %v2565
  %v2567 = vpop.f32.mrb[0].mxu0
  %v2568 = vadd.f32 %v1367, %v2567
  %v2569 = vpop.f32.mrb[0].mxu0
  %v2570 = vadd.f32 %v1369, %v2569
  %v2571 = vpop.f32.mrb[0].mxu0
  %v2572 = vadd.f32 %v1371, %v2571
  %2573 = vmatprep.mubr.bf16.mxu0 0
  %2574 = vmatmul.mubr.bf16.gmra.mrb[0].mxu0 %v1993
  %v2575 = vpop.f32.mrb[0].mxu0
  %v2576 = vadd.f32 %v1375, %v2575
  %v2577 = vpop.f32.mrb[0].mxu0
  %v2578 = vadd.f32 %v1377, %v2577
  %v2579 = vpop.f32.mrb[0].mxu0
  %v2580 = vadd.f32 %v1379, %v2579
  %v2581 = vpop.f32.mrb[0].mxu0
  %v2582 = vadd.f32 %v1381, %v2581
  %2583 = vmatprep.mubr.bf16.mxu0 0
  %2584 = vmatmul.mubr.bf16.gmra.mrb[0].mxu0 %v1996
  %v2585 = vpop.f32.mrb[0].mxu0
  %v2586 = vadd.f32 %v1385, %v2585
  %v2587 = vpop.f32.mrb[0].mxu0
  %v2588 = vadd.f32 %v1387, %v2587
  %v2589 = vpop.f32.mrb[0].mxu0
  %v2590 = vadd.f32 %v1389, %v2589
  %v2591 = vpop.f32.mrb[0].mxu0
  %v2592 = vadd.f32 %v1391, %v2591
  %2593 = vmatprep.mubr.bf16.mxu0 0
  %2594 = vmatmul.mubr.bf16.gmra.mrb[0].mxu0 %v1999
  %v2595 = vpop.f32.mrb[0].mxu0
  %v2596 = vadd.f32 %v1395, %v2595
  %v2597 = vpop.f32.mrb[0].mxu0
  %v2598 = vadd.f32 %v1397, %v2597
  %v2599 = vpop.f32.mrb[0].mxu0
  %v2600 = vadd.f32 %v1399, %v2599
  %v2601 = vpop.f32.mrb[0].mxu0
  %v2602 = vadd.f32 %v1401, %v2601
  %2603 = vmatprep.mubr.bf16.mxu0 0
  %2604 = vmatmul.mubr.bf16.gmra.mrb[0].mxu0 %v2002
  %v2605 = vpop.f32.mrb[0].mxu0
  %v2606 = vadd.f32 %v1405, %v2605
  %v2607 = vpop.f32.mrb[0].mxu0
  %v2608 = vadd.f32 %v1407, %v2607
  %v2609 = vpop.f32.mrb[0].mxu0
  %v2610 = vadd.f32 %v1409, %v2609
  %v2611 = vpop.f32.mrb[0].mxu0
  %v2612 = vadd.f32 %v1411, %v2611
  %2613 = vmatprep.mubr.bf16.mxu0 0
  %2614 = vmatmul.mubr.bf16.gmra.mrb[0].mxu0 %v2005
  %v2615 = vpop.f32.mrb[0].mxu0
  %v2616 = vadd.f32 %v1415, %v2615
  %v2617 = vpop.f32.mrb[0].mxu0
  %v2618 = vadd.f32 %v1417, %v2617
  %v2619 = vpop.f32.mrb[0].mxu0
  %v2620 = vadd.f32 %v1419, %v2619
  %v2621 = vpop.f32.mrb[0].mxu0
  %v2622 = vadd.f32 %v1421, %v2621
  %2623 = vmatprep.mubr.bf16.mxu0 0
  %2624 = vmatmul.mubr.bf16.gmra.mrb[0].mxu0 %v2008
  %v2625 = vpop.f32.mrb[0].mxu0
  %v2626 = vadd.f32 %v1425, %v2625
  %v2627 = vpop.f32.mrb[0].mxu0
  %v2628 = vadd.f32 %v1427, %v2627
  %v2629 = vpop.f32.mrb[0].mxu0
  %v2630 = vadd.f32 %v1429, %v2629
  %v2631 = vpop.f32.mrb[0].mxu0
  %v2632 = vadd.f32 %v1431, %v2631
  %2633 = vmatprep.mubr.bf16.mxu0 0
  %2634 = vmatmul.mubr.bf16.gmra.mrb[0].mxu0 %v2011
  %v2635 = vpop.f32.mrb[0].mxu0
  %v2636 = vadd.f32 %v1435, %v2635
  %v2637 = vpop.f32.mrb[0].mxu0
  %v2638 = vadd.f32 %v1437, %v2637
  %v2639 = vpop.f32.mrb[0].mxu0
  %v2640 = vadd.f32 %v1439, %v2639
  %v2641 = vpop.f32.mrb[0].mxu0
  %v2642 = vadd.f32 %v1441, %v2641
  %2643 = vmatprep.mubr.bf16.mxu0 0
  %2644 = vmatmul.mubr.bf16.gmra.mrb[0].mxu0 %v2014
  %v2645 = vpop.f32.mrb[0].mxu0
  %v2646 = vadd.f32 %v1445, %v2645
  %v2647 = vpop.f32.mrb[0].mxu0
  %v2648 = vadd.f32 %v1447, %v2647
  %v2649 = vpop.f32.mrb[0].mxu0
  %v2650 = vadd.f32 %v1449, %v2649
  %v2651 = vpop.f32.mrb[0].mxu0
  %v2652 = vadd.f32 %v1451, %v2651
  %2653 = vmatprep.mubr.bf16.mxu0 0
  %2654 = vmatmul.mubr.bf16.gmra.mrb[0].mxu0 %v2017
  %v2655 = vpop.f32.mrb[0].mxu0
  %v2656 = vadd.f32 %v1455, %v2655
  %v2657 = vpop.f32.mrb[0].mxu0
  %v2658 = vadd.f32 %v1457, %v2657
  %v2659 = vpop.f32.mrb[0].mxu0
  %v2660 = vadd.f32 %v1459, %v2659
  %v2661 = vpop.f32.mrb[0].mxu0
  %v2662 = vadd.f32 %v1461, %v2661
  %2663 = vmatprep.mubr.bf16.mxu0 0
  %2664 = vmatmul.mubr.bf16.gmra.mrb[0].mxu0 %v2020
  %v2665 = vpop.f32.mrb[0].mxu0
  %v2666 = vadd.f32 %v1465, %v2665
  %v2667 = vpop.f32.mrb[0].mxu0
  %v2668 = vadd.f32 %v1467, %v2667
  %v2669 = vpop.f32.mrb[0].mxu0
  %v2670 = vadd.f32 %v1469, %v2669
  %v2671 = vpop.f32.mrb[0].mxu0
  %v2672 = vadd.f32 %v1471, %v2671
  %2673 = vmatprep.mubr.bf16.mxu0 0
  %2674 = vmatmul.mubr.bf16.gmra.mrb[0].mxu0 %v2023
  %v2675 = vpop.f32.mrb[0].mxu0
  %v2676 = vadd.f32 %v1475, %v2675
  %v2677 = vpop.f32.mrb[0].mxu0
  %v2678 = vadd.f32 %v1477, %v2677
  %v2679 = vpop.f32.mrb[0].mxu0
  %v2680 = vadd.f32 %v1479, %v2679
  %v2681 = vpop.f32.mrb[0].mxu0
  %v2682 = vadd.f32 %v1481, %v2681
  %2683 = vmatprep.mubr.bf16.mxu0 0
  %2684 = vmatmul.mubr.bf16.gmra.mrb[0].mxu0 %v2026
  %v2685 = vpop.f32.mrb[0].mxu0
  %v2686 = vadd.f32 %v1485, %v2685
  %v2687 = vpop.f32.mrb[0].mxu0
  %v2688 = vadd.f32 %v1487, %v2687
  %v2689 = vpop.f32.mrb[0].mxu0
  %v2690 = vadd.f32 %v1489, %v2689
  %v2691 = vpop.f32.mrb[0].mxu0
  %v2692 = vadd.f32 %v1491, %v2691
  %2693 = vmatprep.mubr.bf16.mxu0 0
  %2694 = vmatmul.mubr.bf16.gmra.mrb[0].mxu0 %v2029
  %v2695 = vpop.f32.mrb[0].mxu0
  %v2696 = vadd.f32 %v1495, %v2695
  %v2697 = vpop.f32.mrb[0].mxu0
  %v2698 = vadd.f32 %v1497, %v2697
  %v2699 = vpop.f32.mrb[0].mxu0
  %v2700 = vadd.f32 %v1499, %v2699
  %v2701 = vpop.f32.mrb[0].mxu0
  %v2702 = vadd.f32 %v1501, %v2701
  %2703 = vmatprep.mubr.bf16.mxu0 0
  %2704 = vmatmul.mubr.bf16.gmra.mrb[0].mxu0 %v2032
  %v2705 = vpop.f32.mrb[0].mxu0
  %v2706 = vadd.f32 %v1505, %v2705
  %v2707 = vpop.f32.mrb[0].mxu0
  %v2708 = vadd.f32 %v1507, %v2707
  %v2709 = vpop.f32.mrb[0].mxu0
  %v2710 = vadd.f32 %v1509, %v2709
  %v2711 = vpop.f32.mrb[0].mxu0
  %v2712 = vadd.f32 %v1511, %v2711
  %2713 = vdwg.mxu0
  %v2714 = vld [vmem:[%s4] sm:$0x3]
  %v2716 = vlaneseq
  %v2717 = vshrl.u32 %v2716, 7
  %v2718 = vsub.s32 0, %v2717
  %v2719 = vrot.slane %v2714, %v2718
  %v2720 = vlaneseq
  %v2721 = vshrl.u32 %v2720, 7
  %v2722 = vsub.s32 1, %v2721
  %v2723 = vrot.slane %v2714, %v2722
  %v2726 = vadd.f32 %v2076, %v2719
  %v2727 = vadd.f32 %v2078, %v2723
  %v2728 = vadd.f32 %v2080, %v2719
  %v2729 = vadd.f32 %v2082, %v2723
  %v2730 = vadd.f32 %v2086, %v2719
  %v2731 = vadd.f32 %v2088, %v2723
  %v2732 = vadd.f32 %v2090, %v2719
  %v2733 = vadd.f32 %v2092, %v2723
  %v2734 = vadd.f32 %v2096, %v2719
  %v2735 = vadd.f32 %v2098, %v2723
  %v2736 = vadd.f32 %v2100, %v2719
  %v2737 = vadd.f32 %v2102, %v2723
  %v2738 = vadd.f32 %v2106, %v2719
  %v2739 = vadd.f32 %v2108, %v2723
  %v2740 = vadd.f32 %v2110, %v2719
  %v2741 = vadd.f32 %v2112, %v2723
  %v2742 = vadd.f32 %v2116, %v2719
  %v2743 = vadd.f32 %v2118, %v2723
  %v2744 = vadd.f32 %v2120, %v2719
  %v2745 = vadd.f32 %v2122, %v2723
  %v2746 = vadd.f32 %v2126, %v2719
  %v2747 = vadd.f32 %v2128, %v2723
  %v2748 = vadd.f32 %v2130, %v2719
  %v2749 = vadd.f32 %v2132, %v2723
  %v2750 = vadd.f32 %v2136, %v2719
  %v2751 = vadd.f32 %v2138, %v2723
  %v2752 = vadd.f32 %v2140, %v2719
  %v2753 = vadd.f32 %v2142, %v2723
  %v2754 = vadd.f32 %v2146, %v2719
  %v2755 = vadd.f32 %v2148, %v2723
  %v2756 = vadd.f32 %v2150, %v2719
  %v2757 = vadd.f32 %v2152, %v2723
  %v2758 = vadd.f32 %v2156, %v2719
  %v2759 = vadd.f32 %v2158, %v2723
  %v2760 = vadd.f32 %v2160, %v2719
  %v2761 = vadd.f32 %v2162, %v2723
  %v2762 = vadd.f32 %v2166, %v2719
  %v2763 = vadd.f32 %v2168, %v2723
  %v2764 = vadd.f32 %v2170, %v2719
  %v2765 = vadd.f32 %v2172, %v2723
  %v2766 = vadd.f32 %v2176, %v2719
  %v2767 = vadd.f32 %v2178, %v2723
  %v2768 = vadd.f32 %v2180, %v2719
  %v2769 = vadd.f32 %v2182, %v2723
  %v2770 = vadd.f32 %v2186, %v2719
  %v2771 = vadd.f32 %v2188, %v2723
  %v2772 = vadd.f32 %v2190, %v2719
  %v2773 = vadd.f32 %v2192, %v2723
  %v2774 = vadd.f32 %v2196, %v2719
  %v2775 = vadd.f32 %v2198, %v2723
  %v2776 = vadd.f32 %v2200, %v2719
  %v2777 = vadd.f32 %v2202, %v2723
  %v2778 = vadd.f32 %v2206, %v2719
  %v2779 = vadd.f32 %v2208, %v2723
  %v2780 = vadd.f32 %v2210, %v2719
  %v2781 = vadd.f32 %v2212, %v2723
  %v2782 = vadd.f32 %v2216, %v2719
  %v2783 = vadd.f32 %v2218, %v2723
  %v2784 = vadd.f32 %v2220, %v2719
  %v2785 = vadd.f32 %v2222, %v2723
  %v2786 = vadd.f32 %v2226, %v2719
  %v2787 = vadd.f32 %v2228, %v2723
  %v2788 = vadd.f32 %v2230, %v2719
  %v2789 = vadd.f32 %v2232, %v2723
  %v2790 = vadd.f32 %v2236, %v2719
  %v2791 = vadd.f32 %v2238, %v2723
  %v2792 = vadd.f32 %v2240, %v2719
  %v2793 = vadd.f32 %v2242, %v2723
  %v2794 = vadd.f32 %v2246, %v2719
  %v2795 = vadd.f32 %v2248, %v2723
  %v2796 = vadd.f32 %v2250, %v2719
  %v2797 = vadd.f32 %v2252, %v2723
  %v2798 = vadd.f32 %v2256, %v2719
  %v2799 = vadd.f32 %v2258, %v2723
  %v2800 = vadd.f32 %v2260, %v2719
  %v2801 = vadd.f32 %v2262, %v2723
  %v2802 = vadd.f32 %v2266, %v2719
  %v2803 = vadd.f32 %v2268, %v2723
  %v2804 = vadd.f32 %v2270, %v2719
  %v2805 = vadd.f32 %v2272, %v2723
  %v2806 = vadd.f32 %v2276, %v2719
  %v2807 = vadd.f32 %v2278, %v2723
  %v2808 = vadd.f32 %v2280, %v2719
  %v2809 = vadd.f32 %v2282, %v2723
  %v2810 = vadd.f32 %v2286, %v2719
  %v2811 = vadd.f32 %v2288, %v2723
  %v2812 = vadd.f32 %v2290, %v2719
  %v2813 = vadd.f32 %v2292, %v2723
  %v2814 = vadd.f32 %v2296, %v2719
  %v2815 = vadd.f32 %v2298, %v2723
  %v2816 = vadd.f32 %v2300, %v2719
  %v2817 = vadd.f32 %v2302, %v2723
  %v2818 = vadd.f32 %v2306, %v2719
  %v2819 = vadd.f32 %v2308, %v2723
  %v2820 = vadd.f32 %v2310, %v2719
  %v2821 = vadd.f32 %v2312, %v2723
  %v2822 = vadd.f32 %v2316, %v2719
  %v2823 = vadd.f32 %v2318, %v2723
  %v2824 = vadd.f32 %v2320, %v2719
  %v2825 = vadd.f32 %v2322, %v2723
  %v2826 = vadd.f32 %v2326, %v2719
  %v2827 = vadd.f32 %v2328, %v2723
  %v2828 = vadd.f32 %v2330, %v2719
  %v2829 = vadd.f32 %v2332, %v2723
  %v2830 = vadd.f32 %v2336, %v2719
  %v2831 = vadd.f32 %v2338, %v2723
  %v2832 = vadd.f32 %v2340, %v2719
  %v2833 = vadd.f32 %v2342, %v2723
  %v2834 = vadd.f32 %v2346, %v2719
  %v2835 = vadd.f32 %v2348, %v2723
  %v2836 = vadd.f32 %v2350, %v2719
  %v2837 = vadd.f32 %v2352, %v2723
  %v2838 = vadd.f32 %v2356, %v2719
  %v2839 = vadd.f32 %v2358, %v2723
  %v2840 = vadd.f32 %v2360, %v2719
  %v2841 = vadd.f32 %v2362, %v2723
  %v2842 = vadd.f32 %v2366, %v2719
  %v2843 = vadd.f32 %v2368, %v2723
  %v2844 = vadd.f32 %v2370, %v2719
  %v2845 = vadd.f32 %v2372, %v2723
  %v2846 = vadd.f32 %v2376, %v2719
  %v2847 = vadd.f32 %v2378, %v2723
  %v2848 = vadd.f32 %v2380, %v2719
  %v2849 = vadd.f32 %v2382, %v2723
  %v2850 = vadd.f32 %v2386, %v2719
  %v2851 = vadd.f32 %v2388, %v2723
  %v2852 = vadd.f32 %v2390, %v2719
  %v2853 = vadd.f32 %v2392, %v2723
  %v2854 = vadd.f32 %v2396, %v2719
  %v2855 = vadd.f32 %v2398, %v2723
  %v2856 = vadd.f32 %v2400, %v2719
  %v2857 = vadd.f32 %v2402, %v2723
  %v2858 = vadd.f32 %v2406, %v2719
  %v2859 = vadd.f32 %v2408, %v2723
  %v2860 = vadd.f32 %v2410, %v2719
  %v2861 = vadd.f32 %v2412, %v2723
  %v2862 = vadd.f32 %v2416, %v2719
  %v2863 = vadd.f32 %v2418, %v2723
  %v2864 = vadd.f32 %v2420, %v2719
  %v2865 = vadd.f32 %v2422, %v2723
  %v2866 = vadd.f32 %v2426, %v2719
  %v2867 = vadd.f32 %v2428, %v2723
  %v2868 = vadd.f32 %v2430, %v2719
  %v2869 = vadd.f32 %v2432, %v2723
  %v2870 = vadd.f32 %v2436, %v2719
  %v2871 = vadd.f32 %v2438, %v2723
  %v2872 = vadd.f32 %v2440, %v2719
  %v2873 = vadd.f32 %v2442, %v2723
  %v2874 = vadd.f32 %v2446, %v2719
  %v2875 = vadd.f32 %v2448, %v2723
  %v2876 = vadd.f32 %v2450, %v2719
  %v2877 = vadd.f32 %v2452, %v2723
  %v2878 = vadd.f32 %v2456, %v2719
  %v2879 = vadd.f32 %v2458, %v2723
  %v2880 = vadd.f32 %v2460, %v2719
  %v2881 = vadd.f32 %v2462, %v2723
  %v2882 = vadd.f32 %v2466, %v2719
  %v2883 = vadd.f32 %v2468, %v2723
  %v2884 = vadd.f32 %v2470, %v2719
  %v2885 = vadd.f32 %v2472, %v2723
  %v2886 = vadd.f32 %v2476, %v2719
  %v2887 = vadd.f32 %v2478, %v2723
  %v2888 = vadd.f32 %v2480, %v2719
  %v2889 = vadd.f32 %v2482, %v2723
  %v2890 = vadd.f32 %v2486, %v2719
  %v2891 = vadd.f32 %v2488, %v2723
  %v2892 = vadd.f32 %v2490, %v2719
  %v2893 = vadd.f32 %v2492, %v2723
  %v2894 = vadd.f32 %v2496, %v2719
  %v2895 = vadd.f32 %v2498, %v2723
  %v2896 = vadd.f32 %v2500, %v2719
  %v2897 = vadd.f32 %v2502, %v2723
  %v2898 = vadd.f32 %v2506, %v2719
  %v2899 = vadd.f32 %v2508, %v2723
  %v2900 = vadd.f32 %v2510, %v2719
  %v2901 = vadd.f32 %v2512, %v2723
  %v2902 = vadd.f32 %v2516, %v2719
  %v2903 = vadd.f32 %v2518, %v2723
  %v2904 = vadd.f32 %v2520, %v2719
  %v2905 = vadd.f32 %v2522, %v2723
  %v2906 = vadd.f32 %v2526, %v2719
  %v2907 = vadd.f32 %v2528, %v2723
  %v2908 = vadd.f32 %v2530, %v2719
  %v2909 = vadd.f32 %v2532, %v2723
  %v2910 = vadd.f32 %v2536, %v2719
  %v2911 = vadd.f32 %v2538, %v2723
  %v2912 = vadd.f32 %v2540, %v2719
  %v2913 = vadd.f32 %v2542, %v2723
  %v2914 = vadd.f32 %v2546, %v2719
  %v2915 = vadd.f32 %v2548, %v2723
  %v2916 = vadd.f32 %v2550, %v2719
  %v2917 = vadd.f32 %v2552, %v2723
  %v2918 = vadd.f32 %v2556, %v2719
  %v2919 = vadd.f32 %v2558, %v2723
  %v2920 = vadd.f32 %v2560, %v2719
  %v2921 = vadd.f32 %v2562, %v2723
  %v2922 = vadd.f32 %v2566, %v2719
  %v2923 = vadd.f32 %v2568, %v2723
  %v2924 = vadd.f32 %v2570, %v2719
  %v2925 = vadd.f32 %v2572, %v2723
  %v2926 = vadd.f32 %v2576, %v2719
  %v2927 = vadd.f32 %v2578, %v2723
  %v2928 = vadd.f32 %v2580, %v2719
  %v2929 = vadd.f32 %v2582, %v2723
  %v2930 = vadd.f32 %v2586, %v2719
  %v2931 = vadd.f32 %v2588, %v2723
  %v2932 = vadd.f32 %v2590, %v2719
  %v2933 = vadd.f32 %v2592, %v2723
  %v2934 = vadd.f32 %v2596, %v2719
  %v2935 = vadd.f32 %v2598, %v2723
  %v2936 = vadd.f32 %v2600, %v2719
  %v2937 = vadd.f32 %v2602, %v2723
  %v2938 = vadd.f32 %v2606, %v2719
  %v2939 = vadd.f32 %v2608, %v2723
  %v2940 = vadd.f32 %v2610, %v2719
  %v2941 = vadd.f32 %v2612, %v2723
  %v2942 = vadd.f32 %v2616, %v2719
  %v2943 = vadd.f32 %v2618, %v2723
  %v2944 = vadd.f32 %v2620, %v2719
  %v2945 = vadd.f32 %v2622, %v2723
  %v2946 = vadd.f32 %v2626, %v2719
  %v2947 = vadd.f32 %v2628, %v2723
  %v2948 = vadd.f32 %v2630, %v2719
  %v2949 = vadd.f32 %v2632, %v2723
  %v2950 = vadd.f32 %v2636, %v2719
  %v2951 = vadd.f32 %v2638, %v2723
  %v2952 = vadd.f32 %v2640, %v2719
  %v2953 = vadd.f32 %v2642, %v2723
  %v2954 = vadd.f32 %v2646, %v2719
  %v2955 = vadd.f32 %v2648, %v2723
  %v2956 = vadd.f32 %v2650, %v2719
  %v2957 = vadd.f32 %v2652, %v2723
  %v2958 = vadd.f32 %v2656, %v2719
  %v2959 = vadd.f32 %v2658, %v2723
  %v2960 = vadd.f32 %v2660, %v2719
  %v2961 = vadd.f32 %v2662, %v2723
  %v2962 = vadd.f32 %v2666, %v2719
  %v2963 = vadd.f32 %v2668, %v2723
  %v2964 = vadd.f32 %v2670, %v2719
  %v2965 = vadd.f32 %v2672, %v2723
  %v2966 = vadd.f32 %v2676, %v2719
  %v2967 = vadd.f32 %v2678, %v2723
  %v2968 = vadd.f32 %v2680, %v2719
  %v2969 = vadd.f32 %v2682, %v2723
  %v2970 = vadd.f32 %v2686, %v2719
  %v2971 = vadd.f32 %v2688, %v2723
  %v2972 = vadd.f32 %v2690, %v2719
  %v2973 = vadd.f32 %v2692, %v2723
  %v2974 = vadd.f32 %v2696, %v2719
  %v2975 = vadd.f32 %v2698, %v2723
  %v2976 = vadd.f32 %v2700, %v2719
  %v2977 = vadd.f32 %v2702, %v2723
  %v2978 = vadd.f32 %v2706, %v2719
  %v2979 = vadd.f32 %v2708, %v2723
  %v2980 = vadd.f32 %v2710, %v2719
  %v2981 = vadd.f32 %v2712, %v2723
  %v2982 = vmax.f32 %v2726, 0.0
  %v2983 = vmax.f32 %v2727, 0.0
  %v2984 = vmax.f32 %v2728, 0.0
  %v2985 = vmax.f32 %v2729, 0.0
  %v2986 = vmax.f32 %v2730, 0.0
  %v2987 = vmax.f32 %v2731, 0.0
  %v2988 = vmax.f32 %v2732, 0.0
  %v2989 = vmax.f32 %v2733, 0.0
  %v2990 = vmax.f32 %v2734, 0.0
  %v2991 = vmax.f32 %v2735, 0.0
  %v2992 = vmax.f32 %v2736, 0.0
  %v2993 = vmax.f32 %v2737, 0.0
  %v2994 = vmax.f32 %v2738, 0.0
  %v2995 = vmax.f32 %v2739, 0.0
  %v2996 = vmax.f32 %v2740, 0.0
  %v2997 = vmax.f32 %v2741, 0.0
  %v2998 = vmax.f32 %v2742, 0.0
  %v2999 = vmax.f32 %v2743, 0.0
  %v3000 = vmax.f32 %v2744, 0.0
  %v3001 = vmax.f32 %v2745, 0.0
  %v3002 = vmax.f32 %v2746, 0.0
  %v3003 = vmax.f32 %v2747, 0.0
  %v3004 = vmax.f32 %v2748, 0.0
  %v3005 = vmax.f32 %v2749, 0.0
  %v3006 = vmax.f32 %v2750, 0.0
  %v3007 = vmax.f32 %v2751, 0.0
  %v3008 = vmax.f32 %v2752, 0.0
  %v3009 = vmax.f32 %v2753, 0.0
  %v3010 = vmax.f32 %v2754, 0.0
  %v3011 = vmax.f32 %v2755, 0.0
  %v3012 = vmax.f32 %v2756, 0.0
  %v3013 = vmax.f32 %v2757, 0.0
  %v3014 = vmax.f32 %v2758, 0.0
  %v3015 = vmax.f32 %v2759, 0.0
  %v3016 = vmax.f32 %v2760, 0.0
  %v3017 = vmax.f32 %v2761, 0.0
  %v3018 = vmax.f32 %v2762, 0.0
  %v3019 = vmax.f32 %v2763, 0.0
  %v3020 = vmax.f32 %v2764, 0.0
  %v3021 = vmax.f32 %v2765, 0.0
  %v3022 = vmax.f32 %v2766, 0.0
  %v3023 = vmax.f32 %v2767, 0.0
  %v3024 = vmax.f32 %v2768, 0.0
  %v3025 = vmax.f32 %v2769, 0.0
  %v3026 = vmax.f32 %v2770, 0.0
  %v3027 = vmax.f32 %v2771, 0.0
  %v3028 = vmax.f32 %v2772, 0.0
  %v3029 = vmax.f32 %v2773, 0.0
  %v3030 = vmax.f32 %v2774, 0.0
  %v3031 = vmax.f32 %v2775, 0.0
  %v3032 = vmax.f32 %v2776, 0.0
  %v3033 = vmax.f32 %v2777, 0.0
  %v3034 = vmax.f32 %v2778, 0.0
  %v3035 = vmax.f32 %v2779, 0.0
  %v3036 = vmax.f32 %v2780, 0.0
  %v3037 = vmax.f32 %v2781, 0.0
  %v3038 = vmax.f32 %v2782, 0.0
  %v3039 = vmax.f32 %v2783, 0.0
  %v3040 = vmax.f32 %v2784, 0.0
  %v3041 = vmax.f32 %v2785, 0.0
  %v3042 = vmax.f32 %v2786, 0.0
  %v3043 = vmax.f32 %v2787, 0.0
  %v3044 = vmax.f32 %v2788, 0.0
  %v3045 = vmax.f32 %v2789, 0.0
  %v3046 = vmax.f32 %v2790, 0.0
  %v3047 = vmax.f32 %v2791, 0.0
  %v3048 = vmax.f32 %v2792, 0.0
  %v3049 = vmax.f32 %v2793, 0.0
  %v3050 = vmax.f32 %v2794, 0.0
  %v3051 = vmax.f32 %v2795, 0.0
  %v3052 = vmax.f32 %v2796, 0.0
  %v3053 = vmax.f32 %v2797, 0.0
  %v3054 = vmax.f32 %v2798, 0.0
  %v3055 = vmax.f32 %v2799, 0.0
  %v3056 = vmax.f32 %v2800, 0.0
  %v3057 = vmax.f32 %v2801, 0.0
  %v3058 = vmax.f32 %v2802, 0.0
  %v3059 = vmax.f32 %v2803, 0.0
  %v3060 = vmax.f32 %v2804, 0.0
  %v3061 = vmax.f32 %v2805, 0.0
  %v3062 = vmax.f32 %v2806, 0.0
  %v3063 = vmax.f32 %v2807, 0.0
  %v3064 = vmax.f32 %v2808, 0.0
  %v3065 = vmax.f32 %v2809, 0.0
  %v3066 = vmax.f32 %v2810, 0.0
  %v3067 = vmax.f32 %v2811, 0.0
  %v3068 = vmax.f32 %v2812, 0.0
  %v3069 = vmax.f32 %v2813, 0.0
  %v3070 = vmax.f32 %v2814, 0.0
  %v3071 = vmax.f32 %v2815, 0.0
  %v3072 = vmax.f32 %v2816, 0.0
  %v3073 = vmax.f32 %v2817, 0.0
  %v3074 = vmax.f32 %v2818, 0.0
  %v3075 = vmax.f32 %v2819, 0.0
  %v3076 = vmax.f32 %v2820, 0.0
  %v3077 = vmax.f32 %v2821, 0.0
  %v3078 = vmax.f32 %v2822, 0.0
  %v3079 = vmax.f32 %v2823, 0.0
  %v3080 = vmax.f32 %v2824, 0.0
  %v3081 = vmax.f32 %v2825, 0.0
  %v3082 = vmax.f32 %v2826, 0.0
  %v3083 = vmax.f32 %v2827, 0.0
  %v3084 = vmax.f32 %v2828, 0.0
  %v3085 = vmax.f32 %v2829, 0.0
  %v3086 = vmax.f32 %v2830, 0.0
  %v3087 = vmax.f32 %v2831, 0.0
  %v3088 = vmax.f32 %v2832, 0.0
  %v3089 = vmax.f32 %v2833, 0.0
  %v3090 = vmax.f32 %v2834, 0.0
  %v3091 = vmax.f32 %v2835, 0.0
  %v3092 = vmax.f32 %v2836, 0.0
  %v3093 = vmax.f32 %v2837, 0.0
  %v3094 = vmax.f32 %v2838, 0.0
  %v3095 = vmax.f32 %v2839, 0.0
  %v3096 = vmax.f32 %v2840, 0.0
  %v3097 = vmax.f32 %v2841, 0.0
  %v3098 = vmax.f32 %v2842, 0.0
  %v3099 = vmax.f32 %v2843, 0.0
  %v3100 = vmax.f32 %v2844, 0.0
  %v3101 = vmax.f32 %v2845, 0.0
  %v3102 = vmax.f32 %v2846, 0.0
  %v3103 = vmax.f32 %v2847, 0.0
  %v3104 = vmax.f32 %v2848, 0.0
  %v3105 = vmax.f32 %v2849, 0.0
  %v3106 = vmax.f32 %v2850, 0.0
  %v3107 = vmax.f32 %v2851, 0.0
  %v3108 = vmax.f32 %v2852, 0.0
  %v3109 = vmax.f32 %v2853, 0.0
  %v3110 = vmax.f32 %v2854, 0.0
  %v3111 = vmax.f32 %v2855, 0.0
  %v3112 = vmax.f32 %v2856, 0.0
  %v3113 = vmax.f32 %v2857, 0.0
  %v3114 = vmax.f32 %v2858, 0.0
  %v3115 = vmax.f32 %v2859, 0.0
  %v3116 = vmax.f32 %v2860, 0.0
  %v3117 = vmax.f32 %v2861, 0.0
  %v3118 = vmax.f32 %v2862, 0.0
  %v3119 = vmax.f32 %v2863, 0.0
  %v3120 = vmax.f32 %v2864, 0.0
  %v3121 = vmax.f32 %v2865, 0.0
  %v3122 = vmax.f32 %v2866, 0.0
  %v3123 = vmax.f32 %v2867, 0.0
  %v3124 = vmax.f32 %v2868, 0.0
  %v3125 = vmax.f32 %v2869, 0.0
  %v3126 = vmax.f32 %v2870, 0.0
  %v3127 = vmax.f32 %v2871, 0.0
  %v3128 = vmax.f32 %v2872, 0.0
  %v3129 = vmax.f32 %v2873, 0.0
  %v3130 = vmax.f32 %v2874, 0.0
  %v3131 = vmax.f32 %v2875, 0.0
  %v3132 = vmax.f32 %v2876, 0.0
  %v3133 = vmax.f32 %v2877, 0.0
  %v3134 = vmax.f32 %v2878, 0.0
  %v3135 = vmax.f32 %v2879, 0.0
  %v3136 = vmax.f32 %v2880, 0.0
  %v3137 = vmax.f32 %v2881, 0.0
  %v3138 = vmax.f32 %v2882, 0.0
  %v3139 = vmax.f32 %v2883, 0.0
  %v3140 = vmax.f32 %v2884, 0.0
  %v3141 = vmax.f32 %v2885, 0.0
  %v3142 = vmax.f32 %v2886, 0.0
  %v3143 = vmax.f32 %v2887, 0.0
  %v3144 = vmax.f32 %v2888, 0.0
  %v3145 = vmax.f32 %v2889, 0.0
  %v3146 = vmax.f32 %v2890, 0.0
  %v3147 = vmax.f32 %v2891, 0.0
  %v3148 = vmax.f32 %v2892, 0.0
  %v3149 = vmax.f32 %v2893, 0.0
  %v3150 = vmax.f32 %v2894, 0.0
  %v3151 = vmax.f32 %v2895, 0.0
  %v3152 = vmax.f32 %v2896, 0.0
  %v3153 = vmax.f32 %v2897, 0.0
  %v3154 = vmax.f32 %v2898, 0.0
  %v3155 = vmax.f32 %v2899, 0.0
  %v3156 = vmax.f32 %v2900, 0.0
  %v3157 = vmax.f32 %v2901, 0.0
  %v3158 = vmax.f32 %v2902, 0.0
  %v3159 = vmax.f32 %v2903, 0.0
  %v3160 = vmax.f32 %v2904, 0.0
  %v3161 = vmax.f32 %v2905, 0.0
  %v3162 = vmax.f32 %v2906, 0.0
  %v3163 = vmax.f32 %v2907, 0.0
  %v3164 = vmax.f32 %v2908, 0.0
  %v3165 = vmax.f32 %v2909, 0.0
  %v3166 = vmax.f32 %v2910, 0.0
  %v3167 = vmax.f32 %v2911, 0.0
  %v3168 = vmax.f32 %v2912, 0.0
  %v3169 = vmax.f32 %v2913, 0.0
  %v3170 = vmax.f32 %v2914, 0.0
  %v3171 = vmax.f32 %v2915, 0.0
  %v3172 = vmax.f32 %v2916, 0.0
  %v3173 = vmax.f32 %v2917, 0.0
  %v3174 = vmax.f32 %v2918, 0.0
  %v3175 = vmax.f32 %v2919, 0.0
  %v3176 = vmax.f32 %v2920, 0.0
  %v3177 = vmax.f32 %v2921, 0.0
  %v3178 = vmax.f32 %v2922, 0.0
  %v3179 = vmax.f32 %v2923, 0.0
  %v3180 = vmax.f32 %v2924, 0.0
  %v3181 = vmax.f32 %v2925, 0.0
  %v3182 = vmax.f32 %v2926, 0.0
  %v3183 = vmax.f32 %v2927, 0.0
  %v3184 = vmax.f32 %v2928, 0.0
  %v3185 = vmax.f32 %v2929, 0.0
  %v3186 = vmax.f32 %v2930, 0.0
  %v3187 = vmax.f32 %v2931, 0.0
  %v3188 = vmax.f32 %v2932, 0.0
  %v3189 = vmax.f32 %v2933, 0.0
  %v3190 = vmax.f32 %v2934, 0.0
  %v3191 = vmax.f32 %v2935, 0.0
  %v3192 = vmax.f32 %v2936, 0.0
  %v3193 = vmax.f32 %v2937, 0.0
  %v3194 = vmax.f32 %v2938, 0.0
  %v3195 = vmax.f32 %v2939, 0.0
  %v3196 = vmax.f32 %v2940, 0.0
  %v3197 = vmax.f32 %v2941, 0.0
  %v3198 = vmax.f32 %v2942, 0.0
  %v3199 = vmax.f32 %v2943, 0.0
  %v3200 = vmax.f32 %v2944, 0.0
  %v3201 = vmax.f32 %v2945, 0.0
  %v3202 = vmax.f32 %v2946, 0.0
  %v3203 = vmax.f32 %v2947, 0.0
  %v3204 = vmax.f32 %v2948, 0.0
  %v3205 = vmax.f32 %v2949, 0.0
  %v3206 = vmax.f32 %v2950, 0.0
  %v3207 = vmax.f32 %v2951, 0.0
  %v3208 = vmax.f32 %v2952, 0.0
  %v3209 = vmax.f32 %v2953, 0.0
  %v3210 = vmax.f32 %v2954, 0.0
  %v3211 = vmax.f32 %v2955, 0.0
  %v3212 = vmax.f32 %v2956, 0.0
  %v3213 = vmax.f32 %v2957, 0.0
  %v3214 = vmax.f32 %v2958, 0.0
  %v3215 = vmax.f32 %v2959, 0.0
  %v3216 = vmax.f32 %v2960, 0.0
  %v3217 = vmax.f32 %v2961, 0.0
  %v3218 = vmax.f32 %v2962, 0.0
  %v3219 = vmax.f32 %v2963, 0.0
  %v3220 = vmax.f32 %v2964, 0.0
  %v3221 = vmax.f32 %v2965, 0.0
  %v3222 = vmax.f32 %v2966, 0.0
  %v3223 = vmax.f32 %v2967, 0.0
  %v3224 = vmax.f32 %v2968, 0.0
  %v3225 = vmax.f32 %v2969, 0.0
  %v3226 = vmax.f32 %v2970, 0.0
  %v3227 = vmax.f32 %v2971, 0.0
  %v3228 = vmax.f32 %v2972, 0.0
  %v3229 = vmax.f32 %v2973, 0.0
  %v3230 = vmax.f32 %v2974, 0.0
  %v3231 = vmax.f32 %v2975, 0.0
  %v3232 = vmax.f32 %v2976, 0.0
  %v3233 = vmax.f32 %v2977, 0.0
  %v3234 = vmax.f32 %v2978, 0.0
  %v3235 = vmax.f32 %v2979, 0.0
  %v3236 = vmax.f32 %v2980, 0.0
  %v3237 = vmax.f32 %v2981, 0.0
  %v3238 = vpack.c.bf16 %v2984, %v2982
  %v3239 = vpack.c.bf16 %v2985, %v2983
  %v3240 = vpack.c.bf16 %v2988, %v2986
  %v3241 = vpack.c.bf16 %v2989, %v2987
  %v3242 = vpack.c.bf16 %v2992, %v2990
  %v3243 = vpack.c.bf16 %v2993, %v2991
  %v3244 = vpack.c.bf16 %v2996, %v2994
  %v3245 = vpack.c.bf16 %v2997, %v2995
  %v3246 = vpack.c.bf16 %v3000, %v2998
  %v3247 = vpack.c.bf16 %v3001, %v2999
  %v3248 = vpack.c.bf16 %v3004, %v3002
  %v3249 = vpack.c.bf16 %v3005, %v3003
  %v3250 = vpack.c.bf16 %v3008, %v3006
  %v3251 = vpack.c.bf16 %v3009, %v3007
  %v3252 = vpack.c.bf16 %v3012, %v3010
  %v3253 = vpack.c.bf16 %v3013, %v3011
  %v3254 = vpack.c.bf16 %v3016, %v3014
  %v3255 = vpack.c.bf16 %v3017, %v3015
  %v3256 = vpack.c.bf16 %v3020, %v3018
  %v3257 = vpack.c.bf16 %v3021, %v3019
  %v3258 = vpack.c.bf16 %v3024, %v3022
  %v3259 = vpack.c.bf16 %v3025, %v3023
  %v3260 = vpack.c.bf16 %v3028, %v3026
  %v3261 = vpack.c.bf16 %v3029, %v3027
  %v3262 = vpack.c.bf16 %v3032, %v3030
  %v3263 = vpack.c.bf16 %v3033, %v3031
  %v3264 = vpack.c.bf16 %v3036, %v3034
  %v3265 = vpack.c.bf16 %v3037, %v3035
  %v3266 = vpack.c.bf16 %v3040, %v3038
  %v3267 = vpack.c.bf16 %v3041, %v3039
  %v3268 = vpack.c.bf16 %v3044, %v3042
  %v3269 = vpack.c.bf16 %v3045, %v3043
  %v3270 = vpack.c.bf16 %v3048, %v3046
  %v3271 = vpack.c.bf16 %v3049, %v3047
  %v3272 = vpack.c.bf16 %v3052, %v3050
  %v3273 = vpack.c.bf16 %v3053, %v3051
  %v3274 = vpack.c.bf16 %v3056, %v3054
  %v3275 = vpack.c.bf16 %v3057, %v3055
  %v3276 = vpack.c.bf16 %v3060, %v3058
  %v3277 = vpack.c.bf16 %v3061, %v3059
  %v3278 = vpack.c.bf16 %v3064, %v3062
  %v3279 = vpack.c.bf16 %v3065, %v3063
  %v3280 = vpack.c.bf16 %v3068, %v3066
  %v3281 = vpack.c.bf16 %v3069, %v3067
  %v3282 = vpack.c.bf16 %v3072, %v3070
  %v3283 = vpack.c.bf16 %v3073, %v3071
  %v3284 = vpack.c.bf16 %v3076, %v3074
  %v3285 = vpack.c.bf16 %v3077, %v3075
  %v3286 = vpack.c.bf16 %v3080, %v3078
  %v3287 = vpack.c.bf16 %v3081, %v3079
  %v3288 = vpack.c.bf16 %v3084, %v3082
  %v3289 = vpack.c.bf16 %v3085, %v3083
  %v3290 = vpack.c.bf16 %v3088, %v3086
  %v3291 = vpack.c.bf16 %v3089, %v3087
  %v3292 = vpack.c.bf16 %v3092, %v3090
  %v3293 = vpack.c.bf16 %v3093, %v3091
  %v3294 = vpack.c.bf16 %v3096, %v3094
  %v3295 = vpack.c.bf16 %v3097, %v3095
  %v3296 = vpack.c.bf16 %v3100, %v3098
  %v3297 = vpack.c.bf16 %v3101, %v3099
  %v3298 = vpack.c.bf16 %v3104, %v3102
  %v3299 = vpack.c.bf16 %v3105, %v3103
  %v3300 = vpack.c.bf16 %v3108, %v3106
  %v3301 = vpack.c.bf16 %v3109, %v3107
  %v3302 = vpack.c.bf16 %v3112, %v3110
  %v3303 = vpack.c.bf16 %v3113, %v3111
  %v3304 = vpack.c.bf16 %v3116, %v3114
  %v3305 = vpack.c.bf16 %v3117, %v3115
  %v3306 = vpack.c.bf16 %v3120, %v3118
  %v3307 = vpack.c.bf16 %v3121, %v3119
  %v3308 = vpack.c.bf16 %v3124, %v3122
  %v3309 = vpack.c.bf16 %v3125, %v3123
  %v3310 = vpack.c.bf16 %v3128, %v3126
  %v3311 = vpack.c.bf16 %v3129, %v3127
  %v3312 = vpack.c.bf16 %v3132, %v3130
  %v3313 = vpack.c.bf16 %v3133, %v3131
  %v3314 = vpack.c.bf16 %v3136, %v3134
  %v3315 = vpack.c.bf16 %v3137, %v3135
  %v3316 = vpack.c.bf16 %v3140, %v3138
  %v3317 = vpack.c.bf16 %v3141, %v3139
  %v3318 = vpack.c.bf16 %v3144, %v3142
  %v3319 = vpack.c.bf16 %v3145, %v3143
  %v3320 = vpack.c.bf16 %v3148, %v3146
  %v3321 = vpack.c.bf16 %v3149, %v3147
  %v3322 = vpack.c.bf16 %v3152, %v3150
  %v3323 = vpack.c.bf16 %v3153, %v3151
  %v3324 = vpack.c.bf16 %v3156, %v3154
  %v3325 = vpack.c.bf16 %v3157, %v3155
  %v3326 = vpack.c.bf16 %v3160, %v3158
  %v3327 = vpack.c.bf16 %v3161, %v3159
  %v3328 = vpack.c.bf16 %v3164, %v3162
  %v3329 = vpack.c.bf16 %v3165, %v3163
  %v3330 = vpack.c.bf16 %v3168, %v3166
  %v3331 = vpack.c.bf16 %v3169, %v3167
  %v3332 = vpack.c.bf16 %v3172, %v3170
  %v3333 = vpack.c.bf16 %v3173, %v3171
  %v3334 = vpack.c.bf16 %v3176, %v3174
  %v3335 = vpack.c.bf16 %v3177, %v3175
  %v3336 = vpack.c.bf16 %v3180, %v3178
  %v3337 = vpack.c.bf16 %v3181, %v3179
  %v3338 = vpack.c.bf16 %v3184, %v3182
  %v3339 = vpack.c.bf16 %v3185, %v3183
  %v3340 = vpack.c.bf16 %v3188, %v3186
  %v3341 = vpack.c.bf16 %v3189, %v3187
  %v3342 = vpack.c.bf16 %v3192, %v3190
  %v3343 = vpack.c.bf16 %v3193, %v3191
  %v3344 = vpack.c.bf16 %v3196, %v3194
  %v3345 = vpack.c.bf16 %v3197, %v3195
  %v3346 = vpack.c.bf16 %v3200, %v3198
  %v3347 = vpack.c.bf16 %v3201, %v3199
  %v3348 = vpack.c.bf16 %v3204, %v3202
  %v3349 = vpack.c.bf16 %v3205, %v3203
  %v3350 = vpack.c.bf16 %v3208, %v3206
  %v3351 = vpack.c.bf16 %v3209, %v3207
  %v3352 = vpack.c.bf16 %v3212, %v3210
  %v3353 = vpack.c.bf16 %v3213, %v3211
  %v3354 = vpack.c.bf16 %v3216, %v3214
  %v3355 = vpack.c.bf16 %v3217, %v3215
  %v3356 = vpack.c.bf16 %v3220, %v3218
  %v3357 = vpack.c.bf16 %v3221, %v3219
  %v3358 = vpack.c.bf16 %v3224, %v3222
  %v3359 = vpack.c.bf16 %v3225, %v3223
  %v3360 = vpack.c.bf16 %v3228, %v3226
  %v3361 = vpack.c.bf16 %v3229, %v3227
  %v3362 = vpack.c.bf16 %v3232, %v3230
  %v3363 = vpack.c.bf16 %v3233, %v3231
  %v3364 = vpack.c.bf16 %v3236, %v3234
  %v3365 = vpack.c.bf16 %v3237, %v3235
  %v3366 = vld [vmem:[%s5] sm:$0xff]
  %v3367 = vld [vmem:[%s5 + $0x8] sm:$0xff]
  %v3368 = vld [vmem:[%s5 + $0x10] sm:$0xff]
  %v3369 = vld [vmem:[%s5 + $0x18] sm:$0xff]
  %v3370 = vld [vmem:[%s5 + $0x20] sm:$0xff]
  %v3371 = vld [vmem:[%s5 + $0x28] sm:$0xff]
  %v3372 = vld [vmem:[%s5 + $0x30] sm:$0xff]
  %v3373 = vld [vmem:[%s5 + $0x38] sm:$0xff]
  %v3374 = vld [vmem:[%s5 + $0x40] sm:$0xff]
  %v3375 = vld [vmem:[%s5 + $0x48] sm:$0xff]
  %v3376 = vld [vmem:[%s5 + $0x50] sm:$0xff]
  %v3377 = vld [vmem:[%s5 + $0x58] sm:$0xff]
  %v3378 = vld [vmem:[%s5 + $0x60] sm:$0xff]
  %v3379 = vld [vmem:[%s5 + $0x68] sm:$0xff]
  %v3380 = vld [vmem:[%s5 + $0x70] sm:$0xff]
  %v3381 = vld [vmem:[%s5 + $0x78] sm:$0xff]
  %v3382 = vld [vmem:[%s5 + $0x80] sm:$0xff]
  %v3383 = vld [vmem:[%s5 + $0x88] sm:$0xff]
  %v3384 = vld [vmem:[%s5 + $0x90] sm:$0xff]
  %v3385 = vld [vmem:[%s5 + $0x98] sm:$0xff]
  %v3386 = vld [vmem:[%s5 + $0xa0] sm:$0xff]
  %v3387 = vld [vmem:[%s5 + $0xa8] sm:$0xff]
  %v3388 = vld [vmem:[%s5 + $0xb0] sm:$0xff]
  %v3389 = vld [vmem:[%s5 + $0xb8] sm:$0xff]
  %v3390 = vld [vmem:[%s5 + $0xc0] sm:$0xff]
  %v3391 = vld [vmem:[%s5 + $0xc8] sm:$0xff]
  %v3392 = vld [vmem:[%s5 + $0xd0] sm:$0xff]
  %v3393 = vld [vmem:[%s5 + $0xd8] sm:$0xff]
  %v3394 = vld [vmem:[%s5 + $0xe0] sm:$0xff]
  %v3395 = vld [vmem:[%s5 + $0xe8] sm:$0xff]
  %v3396 = vld [vmem:[%s5 + $0xf0] sm:$0xff]
  %v3397 = vld [vmem:[%s5 + $0xf8] sm:$0xff]
  %v3398 = vld [vmem:[%s6] sm:$0x3]
  %v3400 = vlaneseq
  %v3401 = vshrl.u32 %v3400, 7
  %v3402 = vsub.s32 0, %v3401
  %v3403 = vrot.slane %v3398, %v3402
  %v3404 = vlaneseq
  %v3405 = vshrl.u32 %v3404, 7
  %v3406 = vsub.s32 1, %v3405
  %v3407 = vrot.slane %v3398, %v3406
  %v3442 = vunpack.c.l.b16 %v3366
  %v3443 = vunpack.c.h.b16 %v3366
  %v3444 = vunpack.c.l.b16 %v3367
  %v3445 = vunpack.c.h.b16 %v3367
  %v3446 = vunpack.c.l.b16 %v3368
  %v3447 = vunpack.c.h.b16 %v3368
  %v3448 = vunpack.c.l.b16 %v3369
  %v3449 = vunpack.c.h.b16 %v3369
  %v3450 = vunpack.c.l.b16 %v3370
  %v3451 = vunpack.c.h.b16 %v3370
  %v3452 = vunpack.c.l.b16 %v3371
  %v3453 = vunpack.c.h.b16 %v3371
  %v3454 = vunpack.c.l.b16 %v3372
  %v3455 = vunpack.c.h.b16 %v3372
  %v3456 = vunpack.c.l.b16 %v3373
  %v3457 = vunpack.c.h.b16 %v3373
  %v3458 = vunpack.c.l.b16 %v3374
  %v3459 = vunpack.c.h.b16 %v3374
  %v3460 = vunpack.c.l.b16 %v3375
  %v3461 = vunpack.c.h.b16 %v3375
  %v3462 = vunpack.c.l.b16 %v3376
  %v3463 = vunpack.c.h.b16 %v3376
  %v3464 = vunpack.c.l.b16 %v3377
  %v3465 = vunpack.c.h.b16 %v3377
  %v3466 = vunpack.c.l.b16 %v3378
  %v3467 = vunpack.c.h.b16 %v3378
  %v3468 = vunpack.c.l.b16 %v3379
  %v3469 = vunpack.c.h.b16 %v3379
  %v3470 = vunpack.c.l.b16 %v3380
  %v3471 = vunpack.c.h.b16 %v3380
  %v3472 = vunpack.c.l.b16 %v3381
  %v3473 = vunpack.c.h.b16 %v3381
  %v3474 = vunpack.c.l.b16 %v3382
  %v3475 = vunpack.c.h.b16 %v3382
  %v3476 = vunpack.c.l.b16 %v3383
  %v3477 = vunpack.c.h.b16 %v3383
  %v3478 = vunpack.c.l.b16 %v3384
  %v3479 = vunpack.c.h.b16 %v3384
  %v3480 = vunpack.c.l.b16 %v3385
  %v3481 = vunpack.c.h.b16 %v3385
  %v3482 = vunpack.c.l.b16 %v3386
  %v3483 = vunpack.c.h.b16 %v3386
  %v3484 = vunpack.c.l.b16 %v3387
  %v3485 = vunpack.c.h.b16 %v3387
  %v3486 = vunpack.c.l.b16 %v3388
  %v3487 = vunpack.c.h.b16 %v3388
  %v3488 = vunpack.c.l.b16 %v3389
  %v3489 = vunpack.c.h.b16 %v3389
  %v3490 = vunpack.c.l.b16 %v3390
  %v3491 = vunpack.c.h.b16 %v3390
  %v3492 = vunpack.c.l.b16 %v3391
  %v3493 = vunpack.c.h.b16 %v3391
  %v3494 = vunpack.c.l.b16 %v3392
  %v3495 = vunpack.c.h.b16 %v3392
  %v3496 = vunpack.c.l.b16 %v3393
  %v3497 = vunpack.c.h.b16 %v3393
  %v3498 = vunpack.c.l.b16 %v3394
  %v3499 = vunpack.c.h.b16 %v3394
  %v3500 = vunpack.c.l.b16 %v3395
  %v3501 = vunpack.c.h.b16 %v3395
  %v3502 = vunpack.c.l.b16 %v3396
  %v3503 = vunpack.c.h.b16 %v3396
  %v3504 = vunpack.c.l.b16 %v3397
  %v3505 = vunpack.c.h.b16 %v3397
  %v3506 = vpack.c.b16 %v3444, %v3442
  %v3507 = vpack.c.b16 %v3445, %v3443
  %v3508 = vpack.c.b16 %v3448, %v3446
  %v3509 = vpack.c.b16 %v3449, %v3447
  %v3510 = vpack.c.b16 %v3452, %v3450
  %v3511 = vpack.c.b16 %v3453, %v3451
  %v3512 = vpack.c.b16 %v3456, %v3454
  %v3513 = vpack.c.b16 %v3457, %v3455
  %v3514 = vpack.c.b16 %v3460, %v3458
  %v3515 = vpack.c.b16 %v3461, %v3459
  %v3516 = vpack.c.b16 %v3464, %v3462
  %v3517 = vpack.c.b16 %v3465, %v3463
  %v3518 = vpack.c.b16 %v3468, %v3466
  %v3519 = vpack.c.b16 %v3469, %v3467
  %v3520 = vpack.c.b16 %v3472, %v3470
  %v3521 = vpack.c.b16 %v3473, %v3471
  %v3522 = vpack.c.b16 %v3476, %v3474
  %v3523 = vpack.c.b16 %v3477, %v3475
  %v3524 = vpack.c.b16 %v3480, %v3478
  %v3525 = vpack.c.b16 %v3481, %v3479
  %v3526 = vpack.c.b16 %v3484, %v3482
  %v3527 = vpack.c.b16 %v3485, %v3483
  %v3528 = vpack.c.b16 %v3488, %v3486
  %v3529 = vpack.c.b16 %v3489, %v3487
  %v3530 = vpack.c.b16 %v3492, %v3490
  %v3531 = vpack.c.b16 %v3493, %v3491
  %v3532 = vpack.c.b16 %v3496, %v3494
  %v3533 = vpack.c.b16 %v3497, %v3495
  %v3534 = vpack.c.b16 %v3500, %v3498
  %v3535 = vpack.c.b16 %v3501, %v3499
  %v3536 = vpack.c.b16 %v3504, %v3502
  %v3537 = vpack.c.b16 %v3505, %v3503
  %3570 = vmatprep.subr.bf16.mxu0 %v3507
  %3571 = vmatpush1.bf16.msra.mxu0 %v3506
  %3572 = vmatprep.subr.bf16.mxu0 %v3509
  %3573 = vmatpush1.bf16.msra.mxu0 %v3508
  %3574 = vmatprep.subr.bf16.mxu0 %v3511
  %3575 = vmatpush1.bf16.msra.mxu0 %v3510
  %3576 = vmatprep.subr.bf16.mxu0 %v3513
  %3577 = vmatpush1.bf16.msra.mxu0 %v3512
  %3578 = vmatprep.subr.bf16.mxu0 %v3515
  %3579 = vmatpush1.bf16.msra.mxu0 %v3514
  %3580 = vmatprep.subr.bf16.mxu0 %v3517
  %3581 = vmatpush1.bf16.msra.mxu0 %v3516
  %3582 = vmatprep.subr.bf16.mxu0 %v3519
  %3583 = vmatpush1.bf16.msra.mxu0 %v3518
  %3584 = vmatprep.subr.bf16.mxu0 %v3521
  %3585 = vmatpush1.bf16.msra.mxu0 %v3520
  %3586 = vmatprep.subr.bf16.mxu0 %v3523
  %3587 = vmatpush1.bf16.msra.mxu0 %v3522
  %3588 = vmatprep.subr.bf16.mxu0 %v3525
  %3589 = vmatpush1.bf16.msra.mxu0 %v3524
  %3590 = vmatprep.subr.bf16.mxu0 %v3527
  %3591 = vmatpush1.bf16.msra.mxu0 %v3526
  %3592 = vmatprep.subr.bf16.mxu0 %v3529
  %3593 = vmatpush1.bf16.msra.mxu0 %v3528
  %3594 = vmatprep.subr.bf16.mxu0 %v3531
  %3595 = vmatpush1.bf16.msra.mxu0 %v3530
  %3596 = vmatprep.subr.bf16.mxu0 %v3533
  %3597 = vmatpush1.bf16.msra.mxu0 %v3532
  %3598 = vmatprep.subr.bf16.mxu0 %v3535
  %3599 = vmatpush1.bf16.msra.mxu0 %v3534
  %3600 = vmatprep.subr.bf16.mxu0 %v3537
  %3601 = vmatpush1.bf16.msra.mxu0 %v3536
  %3602 = vmatprep.mubr.bf16.mxu0 %v3239
  %3603 = vmatmul.mubr.bf16.gmra.mrb[0].mxu0 %v3238
  %v3604 = vpop.f32.mrb[0].mxu0
  %v3605 = vadd.f32 %v3403, %v3604
  %v3606 = vpop.f32.mrb[0].mxu0
  %v3607 = vadd.f32 %v3407, %v3606
  %v3608 = vpop.f32.mrb[0].mxu0
  %v3609 = vadd.f32 %v3403, %v3608
  %v3610 = vpop.f32.mrb[0].mxu0
  %v3611 = vadd.f32 %v3407, %v3610
  %3612 = vmatprep.mubr.bf16.mxu0 %v3241
  %3613 = vmatmul.mubr.bf16.gmra.mrb[0].mxu0 %v3240
  %v3614 = vpop.f32.mrb[0].mxu0
  %v3615 = vadd.f32 %v3403, %v3614
  %v3616 = vpop.f32.mrb[0].mxu0
  %v3617 = vadd.f32 %v3407, %v3616
  %v3618 = vpop.f32.mrb[0].mxu0
  %v3619 = vadd.f32 %v3403, %v3618
  %v3620 = vpop.f32.mrb[0].mxu0
  %v3621 = vadd.f32 %v3407, %v3620
  %3622 = vmatprep.mubr.bf16.mxu0 %v3243
  %3623 = vmatmul.mubr.bf16.gmra.mrb[0].mxu0 %v3242
  %v3624 = vpop.f32.mrb[0].mxu0
  %v3625 = vadd.f32 %v3403, %v3624
  %v3626 = vpop.f32.mrb[0].mxu0
  %v3627 = vadd.f32 %v3407, %v3626
  %v3628 = vpop.f32.mrb[0].mxu0
  %v3629 = vadd.f32 %v3403, %v3628
  %v3630 = vpop.f32.mrb[0].mxu0
  %v3631 = vadd.f32 %v3407, %v3630
  %3632 = vmatprep.mubr.bf16.mxu0 %v3245
  %3633 = vmatmul.mubr.bf16.gmra.mrb[0].mxu0 %v3244
  %v3634 = vpop.f32.mrb[0].mxu0
  %v3635 = vadd.f32 %v3403, %v3634
  %v3636 = vpop.f32.mrb[0].mxu0
  %v3637 = vadd.f32 %v3407, %v3636
  %v3638 = vpop.f32.mrb[0].mxu0
  %v3639 = vadd.f32 %v3403, %v3638
  %v3640 = vpop.f32.mrb[0].mxu0
  %v3641 = vadd.f32 %v3407, %v3640
  %3642 = vmatprep.mubr.bf16.mxu0 %v3247
  %3643 = vmatmul.mubr.bf16.gmra.mrb[0].mxu0 %v3246
  %v3644 = vpop.f32.mrb[0].mxu0
  %v3645 = vadd.f32 %v3403, %v3644
  %v3646 = vpop.f32.mrb[0].mxu0
  %v3647 = vadd.f32 %v3407, %v3646
  %v3648 = vpop.f32.mrb[0].mxu0
  %v3649 = vadd.f32 %v3403, %v3648
  %v3650 = vpop.f32.mrb[0].mxu0
  %v3651 = vadd.f32 %v3407, %v3650
  %3652 = vmatprep.mubr.bf16.mxu0 %v3249
  %3653 = vmatmul.mubr.bf16.gmra.mrb[0].mxu0 %v3248
  %v3654 = vpop.f32.mrb[0].mxu0
  %v3655 = vadd.f32 %v3403, %v3654
  %v3656 = vpop.f32.mrb[0].mxu0
  %v3657 = vadd.f32 %v3407, %v3656
  %v3658 = vpop.f32.mrb[0].mxu0
  %v3659 = vadd.f32 %v3403, %v3658
  %v3660 = vpop.f32.mrb[0].mxu0
  %v3661 = vadd.f32 %v3407, %v3660
  %3662 = vmatprep.mubr.bf16.mxu0 %v3251
  %3663 = vmatmul.mubr.bf16.gmra.mrb[0].mxu0 %v3250
  %v3664 = vpop.f32.mrb[0].mxu0
  %v3665 = vadd.f32 %v3403, %v3664
  %v3666 = vpop.f32.mrb[0].mxu0
  %v3667 = vadd.f32 %v3407, %v3666
  %v3668 = vpop.f32.mrb[0].mxu0
  %v3669 = vadd.f32 %v3403, %v3668
  %v3670 = vpop.f32.mrb[0].mxu0
  %v3671 = vadd.f32 %v3407, %v3670
  %3672 = vmatprep.mubr.bf16.mxu0 %v3253
  %3673 = vmatmul.mubr.bf16.gmra.mrb[0].mxu0 %v3252
  %v3674 = vpop.f32.mrb[0].mxu0
  %v3675 = vadd.f32 %v3403, %v3674
  %v3676 = vpop.f32.mrb[0].mxu0
  %v3677 = vadd.f32 %v3407, %v3676
  %v3678 = vpop.f32.mrb[0].mxu0
  %v3679 = vadd.f32 %v3403, %v3678
  %v3680 = vpop.f32.mrb[0].mxu0
  %v3681 = vadd.f32 %v3407, %v3680
  %3682 = vmatprep.mubr.bf16.mxu0 %v3255
  %3683 = vmatmul.mubr.bf16.gmra.mrb[0].mxu0 %v3254
  %v3684 = vpop.f32.mrb[0].mxu0
  %v3685 = vadd.f32 %v3403, %v3684
  %v3686 = vpop.f32.mrb[0].mxu0
  %v3687 = vadd.f32 %v3407, %v3686
  %v3688 = vpop.f32.mrb[0].mxu0
  %v3689 = vadd.f32 %v3403, %v3688
  %v3690 = vpop.f32.mrb[0].mxu0
  %v3691 = vadd.f32 %v3407, %v3690
  %3692 = vmatprep.mubr.bf16.mxu0 %v3257
  %3693 = vmatmul.mubr.bf16.gmra.mrb[0].mxu0 %v3256
  %v3694 = vpop.f32.mrb[0].mxu0
  %v3695 = vadd.f32 %v3403, %v3694
  %v3696 = vpop.f32.mrb[0].mxu0
  %v3697 = vadd.f32 %v3407, %v3696
  %v3698 = vpop.f32.mrb[0].mxu0
  %v3699 = vadd.f32 %v3403, %v3698
  %v3700 = vpop.f32.mrb[0].mxu0
  %v3701 = vadd.f32 %v3407, %v3700
  %3702 = vmatprep.mubr.bf16.mxu0 %v3259
  %3703 = vmatmul.mubr.bf16.gmra.mrb[0].mxu0 %v3258
  %v3704 = vpop.f32.mrb[0].mxu0
  %v3705 = vadd.f32 %v3403, %v3704
  %v3706 = vpop.f32.mrb[0].mxu0
  %v3707 = vadd.f32 %v3407, %v3706
  %v3708 = vpop.f32.mrb[0].mxu0
  %v3709 = vadd.f32 %v3403, %v3708
  %v3710 = vpop.f32.mrb[0].mxu0
  %v3711 = vadd.f32 %v3407, %v3710
  %3712 = vmatprep.mubr.bf16.mxu0 %v3261
  %3713 = vmatmul.mubr.bf16.gmra.mrb[0].mxu0 %v3260
  %v3714 = vpop.f32.mrb[0].mxu0
  %v3715 = vadd.f32 %v3403, %v3714
  %v3716 = vpop.f32.mrb[0].mxu0
  %v3717 = vadd.f32 %v3407, %v3716
  %v3718 = vpop.f32.mrb[0].mxu0
  %v3719 = vadd.f32 %v3403, %v3718
  %v3720 = vpop.f32.mrb[0].mxu0
  %v3721 = vadd.f32 %v3407, %v3720
  %3722 = vmatprep.mubr.bf16.mxu0 %v3263
  %3723 = vmatmul.mubr.bf16.gmra.mrb[0].mxu0 %v3262
  %v3724 = vpop.f32.mrb[0].mxu0
  %v3725 = vadd.f32 %v3403, %v3724
  %v3726 = vpop.f32.mrb[0].mxu0
  %v3727 = vadd.f32 %v3407, %v3726
  %v3728 = vpop.f32.mrb[0].mxu0
  %v3729 = vadd.f32 %v3403, %v3728
  %v3730 = vpop.f32.mrb[0].mxu0
  %v3731 = vadd.f32 %v3407, %v3730
  %3732 = vmatprep.mubr.bf16.mxu0 %v3265
  %3733 = vmatmul.mubr.bf16.gmra.mrb[0].mxu0 %v3264
  %v3734 = vpop.f32.mrb[0].mxu0
  %v3735 = vadd.f32 %v3403, %v3734
  %v3736 = vpop.f32.mrb[0].mxu0
  %v3737 = vadd.f32 %v3407, %v3736
  %v3738 = vpop.f32.mrb[0].mxu0
  %v3739 = vadd.f32 %v3403, %v3738
  %v3740 = vpop.f32.mrb[0].mxu0
  %v3741 = vadd.f32 %v3407, %v3740
  %3742 = vmatprep.mubr.bf16.mxu0 %v3267
  %3743 = vmatmul.mubr.bf16.gmra.mrb[0].mxu0 %v3266
  %v3744 = vpop.f32.mrb[0].mxu0
  %v3745 = vadd.f32 %v3403, %v3744
  %v3746 = vpop.f32.mrb[0].mxu0
  %v3747 = vadd.f32 %v3407, %v3746
  %v3748 = vpop.f32.mrb[0].mxu0
  %v3749 = vadd.f32 %v3403, %v3748
  %v3750 = vpop.f32.mrb[0].mxu0
  %v3751 = vadd.f32 %v3407, %v3750
  %3752 = vmatprep.mubr.bf16.mxu0 %v3269
  %3753 = vmatmul.mubr.bf16.gmra.mrb[0].mxu0 %v3268
  %v3754 = vpop.f32.mrb[0].mxu0
  %v3755 = vadd.f32 %v3403, %v3754
  %v3756 = vpop.f32.mrb[0].mxu0
  %v3757 = vadd.f32 %v3407, %v3756
  %v3758 = vpop.f32.mrb[0].mxu0
  %v3759 = vadd.f32 %v3403, %v3758
  %v3760 = vpop.f32.mrb[0].mxu0
  %v3761 = vadd.f32 %v3407, %v3760
  %3762 = vmatprep.mubr.bf16.mxu0 %v3271
  %3763 = vmatmul.mubr.bf16.gmra.mrb[0].mxu0 %v3270
  %v3764 = vpop.f32.mrb[0].mxu0
  %v3765 = vadd.f32 %v3403, %v3764
  %v3766 = vpop.f32.mrb[0].mxu0
  %v3767 = vadd.f32 %v3407, %v3766
  %v3768 = vpop.f32.mrb[0].mxu0
  %v3769 = vadd.f32 %v3403, %v3768
  %v3770 = vpop.f32.mrb[0].mxu0
  %v3771 = vadd.f32 %v3407, %v3770
  %3772 = vmatprep.mubr.bf16.mxu0 %v3273
  %3773 = vmatmul.mubr.bf16.gmra.mrb[0].mxu0 %v3272
  %v3774 = vpop.f32.mrb[0].mxu0
  %v3775 = vadd.f32 %v3403, %v3774
  %v3776 = vpop.f32.mrb[0].mxu0
  %v3777 = vadd.f32 %v3407, %v3776
  %v3778 = vpop.f32.mrb[0].mxu0
  %v3779 = vadd.f32 %v3403, %v3778
  %v3780 = vpop.f32.mrb[0].mxu0
  %v3781 = vadd.f32 %v3407, %v3780
  %3782 = vmatprep.mubr.bf16.mxu0 %v3275
  %3783 = vmatmul.mubr.bf16.gmra.mrb[0].mxu0 %v3274
  %v3784 = vpop.f32.mrb[0].mxu0
  %v3785 = vadd.f32 %v3403, %v3784
  %v3786 = vpop.f32.mrb[0].mxu0
  %v3787 = vadd.f32 %v3407, %v3786
  %v3788 = vpop.f32.mrb[0].mxu0
  %v3789 = vadd.f32 %v3403, %v3788
  %v3790 = vpop.f32.mrb[0].mxu0
  %v3791 = vadd.f32 %v3407, %v3790
  %3792 = vmatprep.mubr.bf16.mxu0 %v3277
  %3793 = vmatmul.mubr.bf16.gmra.mrb[0].mxu0 %v3276
  %v3794 = vpop.f32.mrb[0].mxu0
  %v3795 = vadd.f32 %v3403, %v3794
  %v3796 = vpop.f32.mrb[0].mxu0
  %v3797 = vadd.f32 %v3407, %v3796
  %v3798 = vpop.f32.mrb[0].mxu0
  %v3799 = vadd.f32 %v3403, %v3798
  %v3800 = vpop.f32.mrb[0].mxu0
  %v3801 = vadd.f32 %v3407, %v3800
  %3802 = vmatprep.mubr.bf16.mxu0 %v3279
  %3803 = vmatmul.mubr.bf16.gmra.mrb[0].mxu0 %v3278
  %v3804 = vpop.f32.mrb[0].mxu0
  %v3805 = vadd.f32 %v3403, %v3804
  %v3806 = vpop.f32.mrb[0].mxu0
  %v3807 = vadd.f32 %v3407, %v3806
  %v3808 = vpop.f32.mrb[0].mxu0
  %v3809 = vadd.f32 %v3403, %v3808
  %v3810 = vpop.f32.mrb[0].mxu0
  %v3811 = vadd.f32 %v3407, %v3810
  %3812 = vmatprep.mubr.bf16.mxu0 %v3281
  %3813 = vmatmul.mubr.bf16.gmra.mrb[0].mxu0 %v3280
  %v3814 = vpop.f32.mrb[0].mxu0
  %v3815 = vadd.f32 %v3403, %v3814
  %v3816 = vpop.f32.mrb[0].mxu0
  %v3817 = vadd.f32 %v3407, %v3816
  %v3818 = vpop.f32.mrb[0].mxu0
  %v3819 = vadd.f32 %v3403, %v3818
  %v3820 = vpop.f32.mrb[0].mxu0
  %v3821 = vadd.f32 %v3407, %v3820
  %3822 = vmatprep.mubr.bf16.mxu0 %v3283
  %3823 = vmatmul.mubr.bf16.gmra.mrb[0].mxu0 %v3282
  %v3824 = vpop.f32.mrb[0].mxu0
  %v3825 = vadd.f32 %v3403, %v3824
  %v3826 = vpop.f32.mrb[0].mxu0
  %v3827 = vadd.f32 %v3407, %v3826
  %v3828 = vpop.f32.mrb[0].mxu0
  %v3829 = vadd.f32 %v3403, %v3828
  %v3830 = vpop.f32.mrb[0].mxu0
  %v3831 = vadd.f32 %v3407, %v3830
  %3832 = vmatprep.mubr.bf16.mxu0 %v3285
  %3833 = vmatmul.mubr.bf16.gmra.mrb[0].mxu0 %v3284
  %v3834 = vpop.f32.mrb[0].mxu0
  %v3835 = vadd.f32 %v3403, %v3834
  %v3836 = vpop.f32.mrb[0].mxu0
  %v3837 = vadd.f32 %v3407, %v3836
  %v3838 = vpop.f32.mrb[0].mxu0
  %v3839 = vadd.f32 %v3403, %v3838
  %v3840 = vpop.f32.mrb[0].mxu0
  %v3841 = vadd.f32 %v3407, %v3840
  %3842 = vmatprep.mubr.bf16.mxu0 %v3287
  %3843 = vmatmul.mubr.bf16.gmra.mrb[0].mxu0 %v3286
  %v3844 = vpop.f32.mrb[0].mxu0
  %v3845 = vadd.f32 %v3403, %v3844
  %v3846 = vpop.f32.mrb[0].mxu0
  %v3847 = vadd.f32 %v3407, %v3846
  %v3848 = vpop.f32.mrb[0].mxu0
  %v3849 = vadd.f32 %v3403, %v3848
  %v3850 = vpop.f32.mrb[0].mxu0
  %v3851 = vadd.f32 %v3407, %v3850
  %3852 = vmatprep.mubr.bf16.mxu0 %v3289
  %3853 = vmatmul.mubr.bf16.gmra.mrb[0].mxu0 %v3288
  %v3854 = vpop.f32.mrb[0].mxu0
  %v3855 = vadd.f32 %v3403, %v3854
  %v3856 = vpop.f32.mrb[0].mxu0
  %v3857 = vadd.f32 %v3407, %v3856
  %v3858 = vpop.f32.mrb[0].mxu0
  %v3859 = vadd.f32 %v3403, %v3858
  %v3860 = vpop.f32.mrb[0].mxu0
  %v3861 = vadd.f32 %v3407, %v3860
  %3862 = vmatprep.mubr.bf16.mxu0 %v3291
  %3863 = vmatmul.mubr.bf16.gmra.mrb[0].mxu0 %v3290
  %v3864 = vpop.f32.mrb[0].mxu0
  %v3865 = vadd.f32 %v3403, %v3864
  %v3866 = vpop.f32.mrb[0].mxu0
  %v3867 = vadd.f32 %v3407, %v3866
  %v3868 = vpop.f32.mrb[0].mxu0
  %v3869 = vadd.f32 %v3403, %v3868
  %v3870 = vpop.f32.mrb[0].mxu0
  %v3871 = vadd.f32 %v3407, %v3870
  %3872 = vmatprep.mubr.bf16.mxu0 %v3293
  %3873 = vmatmul.mubr.bf16.gmra.mrb[0].mxu0 %v3292
  %v3874 = vpop.f32.mrb[0].mxu0
  %v3875 = vadd.f32 %v3403, %v3874
  %v3876 = vpop.f32.mrb[0].mxu0
  %v3877 = vadd.f32 %v3407, %v3876
  %v3878 = vpop.f32.mrb[0].mxu0
  %v3879 = vadd.f32 %v3403, %v3878
  %v3880 = vpop.f32.mrb[0].mxu0
  %v3881 = vadd.f32 %v3407, %v3880
  %3882 = vmatprep.mubr.bf16.mxu0 %v3295
  %3883 = vmatmul.mubr.bf16.gmra.mrb[0].mxu0 %v3294
  %v3884 = vpop.f32.mrb[0].mxu0
  %v3885 = vadd.f32 %v3403, %v3884
  %v3886 = vpop.f32.mrb[0].mxu0
  %v3887 = vadd.f32 %v3407, %v3886
  %v3888 = vpop.f32.mrb[0].mxu0
  %v3889 = vadd.f32 %v3403, %v3888
  %v3890 = vpop.f32.mrb[0].mxu0
  %v3891 = vadd.f32 %v3407, %v3890
  %3892 = vmatprep.mubr.bf16.mxu0 %v3297
  %3893 = vmatmul.mubr.bf16.gmra.mrb[0].mxu0 %v3296
  %v3894 = vpop.f32.mrb[0].mxu0
  %v3895 = vadd.f32 %v3403, %v3894
  %v3896 = vpop.f32.mrb[0].mxu0
  %v3897 = vadd.f32 %v3407, %v3896
  %v3898 = vpop.f32.mrb[0].mxu0
  %v3899 = vadd.f32 %v3403, %v3898
  %v3900 = vpop.f32.mrb[0].mxu0
  %v3901 = vadd.f32 %v3407, %v3900
  %3902 = vmatprep.mubr.bf16.mxu0 %v3299
  %3903 = vmatmul.mubr.bf16.gmra.mrb[0].mxu0 %v3298
  %v3904 = vpop.f32.mrb[0].mxu0
  %v3905 = vadd.f32 %v3403, %v3904
  %v3906 = vpop.f32.mrb[0].mxu0
  %v3907 = vadd.f32 %v3407, %v3906
  %v3908 = vpop.f32.mrb[0].mxu0
  %v3909 = vadd.f32 %v3403, %v3908
  %v3910 = vpop.f32.mrb[0].mxu0
  %v3911 = vadd.f32 %v3407, %v3910
  %3912 = vmatprep.mubr.bf16.mxu0 %v3301
  %3913 = vmatmul.mubr.bf16.gmra.mrb[0].mxu0 %v3300
  %v3914 = vpop.f32.mrb[0].mxu0
  %v3915 = vadd.f32 %v3403, %v3914
  %v3916 = vpop.f32.mrb[0].mxu0
  %v3917 = vadd.f32 %v3407, %v3916
  %v3918 = vpop.f32.mrb[0].mxu0
  %v3919 = vadd.f32 %v3403, %v3918
  %v3920 = vpop.f32.mrb[0].mxu0
  %v3921 = vadd.f32 %v3407, %v3920
  %3922 = vmatprep.mubr.bf16.mxu0 %v3303
  %3923 = vmatmul.mubr.bf16.gmra.mrb[0].mxu0 %v3302
  %v3924 = vpop.f32.mrb[0].mxu0
  %v3925 = vadd.f32 %v3403, %v3924
  %v3926 = vpop.f32.mrb[0].mxu0
  %v3927 = vadd.f32 %v3407, %v3926
  %v3928 = vpop.f32.mrb[0].mxu0
  %v3929 = vadd.f32 %v3403, %v3928
  %v3930 = vpop.f32.mrb[0].mxu0
  %v3931 = vadd.f32 %v3407, %v3930
  %3932 = vmatprep.mubr.bf16.mxu0 %v3305
  %3933 = vmatmul.mubr.bf16.gmra.mrb[0].mxu0 %v3304
  %v3934 = vpop.f32.mrb[0].mxu0
  %v3935 = vadd.f32 %v3403, %v3934
  %v3936 = vpop.f32.mrb[0].mxu0
  %v3937 = vadd.f32 %v3407, %v3936
  %v3938 = vpop.f32.mrb[0].mxu0
  %v3939 = vadd.f32 %v3403, %v3938
  %v3940 = vpop.f32.mrb[0].mxu0
  %v3941 = vadd.f32 %v3407, %v3940
  %3942 = vmatprep.mubr.bf16.mxu0 %v3307
  %3943 = vmatmul.mubr.bf16.gmra.mrb[0].mxu0 %v3306
  %v3944 = vpop.f32.mrb[0].mxu0
  %v3945 = vadd.f32 %v3403, %v3944
  %v3946 = vpop.f32.mrb[0].mxu0
  %v3947 = vadd.f32 %v3407, %v3946
  %v3948 = vpop.f32.mrb[0].mxu0
  %v3949 = vadd.f32 %v3403, %v3948
  %v3950 = vpop.f32.mrb[0].mxu0
  %v3951 = vadd.f32 %v3407, %v3950
  %3952 = vmatprep.mubr.bf16.mxu0 %v3309
  %3953 = vmatmul.mubr.bf16.gmra.mrb[0].mxu0 %v3308
  %v3954 = vpop.f32.mrb[0].mxu0
  %v3955 = vadd.f32 %v3403, %v3954
  %v3956 = vpop.f32.mrb[0].mxu0
  %v3957 = vadd.f32 %v3407, %v3956
  %v3958 = vpop.f32.mrb[0].mxu0
  %v3959 = vadd.f32 %v3403, %v3958
  %v3960 = vpop.f32.mrb[0].mxu0
  %v3961 = vadd.f32 %v3407, %v3960
  %3962 = vmatprep.mubr.bf16.mxu0 %v3311
  %3963 = vmatmul.mubr.bf16.gmra.mrb[0].mxu0 %v3310
  %v3964 = vpop.f32.mrb[0].mxu0
  %v3965 = vadd.f32 %v3403, %v3964
  %v3966 = vpop.f32.mrb[0].mxu0
  %v3967 = vadd.f32 %v3407, %v3966
  %v3968 = vpop.f32.mrb[0].mxu0
  %v3969 = vadd.f32 %v3403, %v3968
  %v3970 = vpop.f32.mrb[0].mxu0
  %v3971 = vadd.f32 %v3407, %v3970
  %3972 = vmatprep.mubr.bf16.mxu0 %v3313
  %3973 = vmatmul.mubr.bf16.gmra.mrb[0].mxu0 %v3312
  %v3974 = vpop.f32.mrb[0].mxu0
  %v3975 = vadd.f32 %v3403, %v3974
  %v3976 = vpop.f32.mrb[0].mxu0
  %v3977 = vadd.f32 %v3407, %v3976
  %v3978 = vpop.f32.mrb[0].mxu0
  %v3979 = vadd.f32 %v3403, %v3978
  %v3980 = vpop.f32.mrb[0].mxu0
  %v3981 = vadd.f32 %v3407, %v3980
  %3982 = vmatprep.mubr.bf16.mxu0 %v3315
  %3983 = vmatmul.mubr.bf16.gmra.mrb[0].mxu0 %v3314
  %v3984 = vpop.f32.mrb[0].mxu0
  %v3985 = vadd.f32 %v3403, %v3984
  %v3986 = vpop.f32.mrb[0].mxu0
  %v3987 = vadd.f32 %v3407, %v3986
  %v3988 = vpop.f32.mrb[0].mxu0
  %v3989 = vadd.f32 %v3403, %v3988
  %v3990 = vpop.f32.mrb[0].mxu0
  %v3991 = vadd.f32 %v3407, %v3990
  %3992 = vmatprep.mubr.bf16.mxu0 %v3317
  %3993 = vmatmul.mubr.bf16.gmra.mrb[0].mxu0 %v3316
  %v3994 = vpop.f32.mrb[0].mxu0
  %v3995 = vadd.f32 %v3403, %v3994
  %v3996 = vpop.f32.mrb[0].mxu0
  %v3997 = vadd.f32 %v3407, %v3996
  %v3998 = vpop.f32.mrb[0].mxu0
  %v3999 = vadd.f32 %v3403, %v3998
  %v4000 = vpop.f32.mrb[0].mxu0
  %v4001 = vadd.f32 %v3407, %v4000
  %4002 = vmatprep.mubr.bf16.mxu0 %v3319
  %4003 = vmatmul.mubr.bf16.gmra.mrb[0].mxu0 %v3318
  %v4004 = vpop.f32.mrb[0].mxu0
  %v4005 = vadd.f32 %v3403, %v4004
  %v4006 = vpop.f32.mrb[0].mxu0
  %v4007 = vadd.f32 %v3407, %v4006
  %v4008 = vpop.f32.mrb[0].mxu0
  %v4009 = vadd.f32 %v3403, %v4008
  %v4010 = vpop.f32.mrb[0].mxu0
  %v4011 = vadd.f32 %v3407, %v4010
  %4012 = vmatprep.mubr.bf16.mxu0 %v3321
  %4013 = vmatmul.mubr.bf16.gmra.mrb[0].mxu0 %v3320
  %v4014 = vpop.f32.mrb[0].mxu0
  %v4015 = vadd.f32 %v3403, %v4014
  %v4016 = vpop.f32.mrb[0].mxu0
  %v4017 = vadd.f32 %v3407, %v4016
  %v4018 = vpop.f32.mrb[0].mxu0
  %v4019 = vadd.f32 %v3403, %v4018
  %v4020 = vpop.f32.mrb[0].mxu0
  %v4021 = vadd.f32 %v3407, %v4020
  %4022 = vmatprep.mubr.bf16.mxu0 %v3323
  %4023 = vmatmul.mubr.bf16.gmra.mrb[0].mxu0 %v3322
  %v4024 = vpop.f32.mrb[0].mxu0
  %v4025 = vadd.f32 %v3403, %v4024
  %v4026 = vpop.f32.mrb[0].mxu0
  %v4027 = vadd.f32 %v3407, %v4026
  %v4028 = vpop.f32.mrb[0].mxu0
  %v4029 = vadd.f32 %v3403, %v4028
  %v4030 = vpop.f32.mrb[0].mxu0
  %v4031 = vadd.f32 %v3407, %v4030
  %4032 = vmatprep.mubr.bf16.mxu0 %v3325
  %4033 = vmatmul.mubr.bf16.gmra.mrb[0].mxu0 %v3324
  %v4034 = vpop.f32.mrb[0].mxu0
  %v4035 = vadd.f32 %v3403, %v4034
  %v4036 = vpop.f32.mrb[0].mxu0
  %v4037 = vadd.f32 %v3407, %v4036
  %v4038 = vpop.f32.mrb[0].mxu0
  %v4039 = vadd.f32 %v3403, %v4038
  %v4040 = vpop.f32.mrb[0].mxu0
  %v4041 = vadd.f32 %v3407, %v4040
  %4042 = vmatprep.mubr.bf16.mxu0 %v3327
  %4043 = vmatmul.mubr.bf16.gmra.mrb[0].mxu0 %v3326
  %v4044 = vpop.f32.mrb[0].mxu0
  %v4045 = vadd.f32 %v3403, %v4044
  %v4046 = vpop.f32.mrb[0].mxu0
  %v4047 = vadd.f32 %v3407, %v4046
  %v4048 = vpop.f32.mrb[0].mxu0
  %v4049 = vadd.f32 %v3403, %v4048
  %v4050 = vpop.f32.mrb[0].mxu0
  %v4051 = vadd.f32 %v3407, %v4050
  %4052 = vmatprep.mubr.bf16.mxu0 %v3329
  %4053 = vmatmul.mubr.bf16.gmra.mrb[0].mxu0 %v3328
  %v4054 = vpop.f32.mrb[0].mxu0
  %v4055 = vadd.f32 %v3403, %v4054
  %v4056 = vpop.f32.mrb[0].mxu0
  %v4057 = vadd.f32 %v3407, %v4056
  %v4058 = vpop.f32.mrb[0].mxu0
  %v4059 = vadd.f32 %v3403, %v4058
  %v4060 = vpop.f32.mrb[0].mxu0
  %v4061 = vadd.f32 %v3407, %v4060
  %4062 = vmatprep.mubr.bf16.mxu0 %v3331
  %4063 = vmatmul.mubr.bf16.gmra.mrb[0].mxu0 %v3330
  %v4064 = vpop.f32.mrb[0].mxu0
  %v4065 = vadd.f32 %v3403, %v4064
  %v4066 = vpop.f32.mrb[0].mxu0
  %v4067 = vadd.f32 %v3407, %v4066
  %v4068 = vpop.f32.mrb[0].mxu0
  %v4069 = vadd.f32 %v3403, %v4068
  %v4070 = vpop.f32.mrb[0].mxu0
  %v4071 = vadd.f32 %v3407, %v4070
  %4072 = vmatprep.mubr.bf16.mxu0 %v3333
  %4073 = vmatmul.mubr.bf16.gmra.mrb[0].mxu0 %v3332
  %v4074 = vpop.f32.mrb[0].mxu0
  %v4075 = vadd.f32 %v3403, %v4074
  %v4076 = vpop.f32.mrb[0].mxu0
  %v4077 = vadd.f32 %v3407, %v4076
  %v4078 = vpop.f32.mrb[0].mxu0
  %v4079 = vadd.f32 %v3403, %v4078
  %v4080 = vpop.f32.mrb[0].mxu0
  %v4081 = vadd.f32 %v3407, %v4080
  %4082 = vmatprep.mubr.bf16.mxu0 %v3335
  %4083 = vmatmul.mubr.bf16.gmra.mrb[0].mxu0 %v3334
  %v4084 = vpop.f32.mrb[0].mxu0
  %v4085 = vadd.f32 %v3403, %v4084
  %v4086 = vpop.f32.mrb[0].mxu0
  %v4087 = vadd.f32 %v3407, %v4086
  %v4088 = vpop.f32.mrb[0].mxu0
  %v4089 = vadd.f32 %v3403, %v4088
  %v4090 = vpop.f32.mrb[0].mxu0
  %v4091 = vadd.f32 %v3407, %v4090
  %4092 = vmatprep.mubr.bf16.mxu0 %v3337
  %4093 = vmatmul.mubr.bf16.gmra.mrb[0].mxu0 %v3336
  %v4094 = vpop.f32.mrb[0].mxu0
  %v4095 = vadd.f32 %v3403, %v4094
  %v4096 = vpop.f32.mrb[0].mxu0
  %v4097 = vadd.f32 %v3407, %v4096
  %v4098 = vpop.f32.mrb[0].mxu0
  %v4099 = vadd.f32 %v3403, %v4098
  %v4100 = vpop.f32.mrb[0].mxu0
  %v4101 = vadd.f32 %v3407, %v4100
  %4102 = vmatprep.mubr.bf16.mxu0 %v3339
  %4103 = vmatmul.mubr.bf16.gmra.mrb[0].mxu0 %v3338
  %v4104 = vpop.f32.mrb[0].mxu0
  %v4105 = vadd.f32 %v3403, %v4104
  %v4106 = vpop.f32.mrb[0].mxu0
  %v4107 = vadd.f32 %v3407, %v4106
  %v4108 = vpop.f32.mrb[0].mxu0
  %v4109 = vadd.f32 %v3403, %v4108
  %v4110 = vpop.f32.mrb[0].mxu0
  %v4111 = vadd.f32 %v3407, %v4110
  %4112 = vmatprep.mubr.bf16.mxu0 %v3341
  %4113 = vmatmul.mubr.bf16.gmra.mrb[0].mxu0 %v3340
  %v4114 = vpop.f32.mrb[0].mxu0
  %v4115 = vadd.f32 %v3403, %v4114
  %v4116 = vpop.f32.mrb[0].mxu0
  %v4117 = vadd.f32 %v3407, %v4116
  %v4118 = vpop.f32.mrb[0].mxu0
  %v4119 = vadd.f32 %v3403, %v4118
  %v4120 = vpop.f32.mrb[0].mxu0
  %v4121 = vadd.f32 %v3407, %v4120
  %4122 = vmatprep.mubr.bf16.mxu0 %v3343
  %4123 = vmatmul.mubr.bf16.gmra.mrb[0].mxu0 %v3342
  %v4124 = vpop.f32.mrb[0].mxu0
  %v4125 = vadd.f32 %v3403, %v4124
  %v4126 = vpop.f32.mrb[0].mxu0
  %v4127 = vadd.f32 %v3407, %v4126
  %v4128 = vpop.f32.mrb[0].mxu0
  %v4129 = vadd.f32 %v3403, %v4128
  %v4130 = vpop.f32.mrb[0].mxu0
  %v4131 = vadd.f32 %v3407, %v4130
  %4132 = vmatprep.mubr.bf16.mxu0 %v3345
  %4133 = vmatmul.mubr.bf16.gmra.mrb[0].mxu0 %v3344
  %v4134 = vpop.f32.mrb[0].mxu0
  %v4135 = vadd.f32 %v3403, %v4134
  %v4136 = vpop.f32.mrb[0].mxu0
  %v4137 = vadd.f32 %v3407, %v4136
  %v4138 = vpop.f32.mrb[0].mxu0
  %v4139 = vadd.f32 %v3403, %v4138
  %v4140 = vpop.f32.mrb[0].mxu0
  %v4141 = vadd.f32 %v3407, %v4140
  %4142 = vmatprep.mubr.bf16.mxu0 %v3347
  %4143 = vmatmul.mubr.bf16.gmra.mrb[0].mxu0 %v3346
  %v4144 = vpop.f32.mrb[0].mxu0
  %v4145 = vadd.f32 %v3403, %v4144
  %v4146 = vpop.f32.mrb[0].mxu0
  %v4147 = vadd.f32 %v3407, %v4146
  %v4148 = vpop.f32.mrb[0].mxu0
  %v4149 = vadd.f32 %v3403, %v4148
  %v4150 = vpop.f32.mrb[0].mxu0
  %v4151 = vadd.f32 %v3407, %v4150
  %4152 = vmatprep.mubr.bf16.mxu0 %v3349
  %4153 = vmatmul.mubr.bf16.gmra.mrb[0].mxu0 %v3348
  %v4154 = vpop.f32.mrb[0].mxu0
  %v4155 = vadd.f32 %v3403, %v4154
  %v4156 = vpop.f32.mrb[0].mxu0
  %v4157 = vadd.f32 %v3407, %v4156
  %v4158 = vpop.f32.mrb[0].mxu0
  %v4159 = vadd.f32 %v3403, %v4158
  %v4160 = vpop.f32.mrb[0].mxu0
  %v4161 = vadd.f32 %v3407, %v4160
  %4162 = vmatprep.mubr.bf16.mxu0 %v3351
  %4163 = vmatmul.mubr.bf16.gmra.mrb[0].mxu0 %v3350
  %v4164 = vpop.f32.mrb[0].mxu0
  %v4165 = vadd.f32 %v3403, %v4164
  %v4166 = vpop.f32.mrb[0].mxu0
  %v4167 = vadd.f32 %v3407, %v4166
  %v4168 = vpop.f32.mrb[0].mxu0
  %v4169 = vadd.f32 %v3403, %v4168
  %v4170 = vpop.f32.mrb[0].mxu0
  %v4171 = vadd.f32 %v3407, %v4170
  %4172 = vmatprep.mubr.bf16.mxu0 %v3353
  %4173 = vmatmul.mubr.bf16.gmra.mrb[0].mxu0 %v3352
  %v4174 = vpop.f32.mrb[0].mxu0
  %v4175 = vadd.f32 %v3403, %v4174
  %v4176 = vpop.f32.mrb[0].mxu0
  %v4177 = vadd.f32 %v3407, %v4176
  %v4178 = vpop.f32.mrb[0].mxu0
  %v4179 = vadd.f32 %v3403, %v4178
  %v4180 = vpop.f32.mrb[0].mxu0
  %v4181 = vadd.f32 %v3407, %v4180
  %4182 = vmatprep.mubr.bf16.mxu0 %v3355
  %4183 = vmatmul.mubr.bf16.gmra.mrb[0].mxu0 %v3354
  %v4184 = vpop.f32.mrb[0].mxu0
  %v4185 = vadd.f32 %v3403, %v4184
  %v4186 = vpop.f32.mrb[0].mxu0
  %v4187 = vadd.f32 %v3407, %v4186
  %v4188 = vpop.f32.mrb[0].mxu0
  %v4189 = vadd.f32 %v3403, %v4188
  %v4190 = vpop.f32.mrb[0].mxu0
  %v4191 = vadd.f32 %v3407, %v4190
  %4192 = vmatprep.mubr.bf16.mxu0 %v3357
  %4193 = vmatmul.mubr.bf16.gmra.mrb[0].mxu0 %v3356
  %v4194 = vpop.f32.mrb[0].mxu0
  %v4195 = vadd.f32 %v3403, %v4194
  %v4196 = vpop.f32.mrb[0].mxu0
  %v4197 = vadd.f32 %v3407, %v4196
  %v4198 = vpop.f32.mrb[0].mxu0
  %v4199 = vadd.f32 %v3403, %v4198
  %v4200 = vpop.f32.mrb[0].mxu0
  %v4201 = vadd.f32 %v3407, %v4200
  %4202 = vmatprep.mubr.bf16.mxu0 %v3359
  %4203 = vmatmul.mubr.bf16.gmra.mrb[0].mxu0 %v3358
  %v4204 = vpop.f32.mrb[0].mxu0
  %v4205 = vadd.f32 %v3403, %v4204
  %v4206 = vpop.f32.mrb[0].mxu0
  %v4207 = vadd.f32 %v3407, %v4206
  %v4208 = vpop.f32.mrb[0].mxu0
  %v4209 = vadd.f32 %v3403, %v4208
  %v4210 = vpop.f32.mrb[0].mxu0
  %v4211 = vadd.f32 %v3407, %v4210
  %4212 = vmatprep.mubr.bf16.mxu0 %v3361
  %4213 = vmatmul.mubr.bf16.gmra.mrb[0].mxu0 %v3360
  %v4214 = vpop.f32.mrb[0].mxu0
  %v4215 = vadd.f32 %v3403, %v4214
  %v4216 = vpop.f32.mrb[0].mxu0
  %v4217 = vadd.f32 %v3407, %v4216
  %v4218 = vpop.f32.mrb[0].mxu0
  %v4219 = vadd.f32 %v3403, %v4218
  %v4220 = vpop.f32.mrb[0].mxu0
  %v4221 = vadd.f32 %v3407, %v4220
  %4222 = vmatprep.mubr.bf16.mxu0 %v3363
  %4223 = vmatmul.mubr.bf16.gmra.mrb[0].mxu0 %v3362
  %v4224 = vpop.f32.mrb[0].mxu0
  %v4225 = vadd.f32 %v3403, %v4224
  %v4226 = vpop.f32.mrb[0].mxu0
  %v4227 = vadd.f32 %v3407, %v4226
  %v4228 = vpop.f32.mrb[0].mxu0
  %v4229 = vadd.f32 %v3403, %v4228
  %v4230 = vpop.f32.mrb[0].mxu0
  %v4231 = vadd.f32 %v3407, %v4230
  %4232 = vmatprep.mubr.bf16.mxu0 %v3365
  %4233 = vmatmul.mubr.bf16.gmra.mrb[0].mxu0 %v3364
  %v4234 = vpop.f32.mrb[0].mxu0
  %v4235 = vadd.f32 %v3403, %v4234
  %v4236 = vpop.f32.mrb[0].mxu0
  %v4237 = vadd.f32 %v3407, %v4236
  %v4238 = vpop.f32.mrb[0].mxu0
  %v4239 = vadd.f32 %v3403, %v4238
  %v4240 = vpop.f32.mrb[0].mxu0
  %v4241 = vadd.f32 %v3407, %v4240
  %4242 = vdwg.mxu0
  %v4243 = vmax.f32 %v3605, 0.0
  %v4244 = vmax.f32 %v3607, 0.0
  %v4245 = vmax.f32 %v3609, 0.0
  %v4246 = vmax.f32 %v3611, 0.0
  %v4247 = vmax.f32 %v3615, 0.0
  %v4248 = vmax.f32 %v3617, 0.0
  %v4249 = vmax.f32 %v3619, 0.0
  %v4250 = vmax.f32 %v3621, 0.0
  %v4251 = vmax.f32 %v3625, 0.0
  %v4252 = vmax.f32 %v3627, 0.0
  %v4253 = vmax.f32 %v3629, 0.0
  %v4254 = vmax.f32 %v3631, 0.0
  %v4255 = vmax.f32 %v3635, 0.0
  %v4256 = vmax.f32 %v3637, 0.0
  %v4257 = vmax.f32 %v3639, 0.0
  %v4258 = vmax.f32 %v3641, 0.0
  %v4259 = vmax.f32 %v3645, 0.0
  %v4260 = vmax.f32 %v3647, 0.0
  %v4261 = vmax.f32 %v3649, 0.0
  %v4262 = vmax.f32 %v3651, 0.0
  %v4263 = vmax.f32 %v3655, 0.0
  %v4264 = vmax.f32 %v3657, 0.0
  %v4265 = vmax.f32 %v3659, 0.0
  %v4266 = vmax.f32 %v3661, 0.0
  %v4267 = vmax.f32 %v3665, 0.0
  %v4268 = vmax.f32 %v3667, 0.0
  %v4269 = vmax.f32 %v3669, 0.0
  %v4270 = vmax.f32 %v3671, 0.0
  %v4271 = vmax.f32 %v3675, 0.0
  %v4272 = vmax.f32 %v3677, 0.0
  %v4273 = vmax.f32 %v3679, 0.0
  %v4274 = vmax.f32 %v3681, 0.0
  %v4275 = vmax.f32 %v3685, 0.0
  %v4276 = vmax.f32 %v3687, 0.0
  %v4277 = vmax.f32 %v3689, 0.0
  %v4278 = vmax.f32 %v3691, 0.0
  %v4279 = vmax.f32 %v3695, 0.0
  %v4280 = vmax.f32 %v3697, 0.0
  %v4281 = vmax.f32 %v3699, 0.0
  %v4282 = vmax.f32 %v3701, 0.0
  %v4283 = vmax.f32 %v3705, 0.0
  %v4284 = vmax.f32 %v3707, 0.0
  %v4285 = vmax.f32 %v3709, 0.0
  %v4286 = vmax.f32 %v3711, 0.0
  %v4287 = vmax.f32 %v3715, 0.0
  %v4288 = vmax.f32 %v3717, 0.0
  %v4289 = vmax.f32 %v3719, 0.0
  %v4290 = vmax.f32 %v3721, 0.0
  %v4291 = vmax.f32 %v3725, 0.0
  %v4292 = vmax.f32 %v3727, 0.0
  %v4293 = vmax.f32 %v3729, 0.0
  %v4294 = vmax.f32 %v3731, 0.0
  %v4295 = vmax.f32 %v3735, 0.0
  %v4296 = vmax.f32 %v3737, 0.0
  %v4297 = vmax.f32 %v3739, 0.0
  %v4298 = vmax.f32 %v3741, 0.0
  %v4299 = vmax.f32 %v3745, 0.0
  %v4300 = vmax.f32 %v3747, 0.0
  %v4301 = vmax.f32 %v3749, 0.0
  %v4302 = vmax.f32 %v3751, 0.0
  %v4303 = vmax.f32 %v3755, 0.0
  %v4304 = vmax.f32 %v3757, 0.0
  %v4305 = vmax.f32 %v3759, 0.0
  %v4306 = vmax.f32 %v3761, 0.0
  %v4307 = vmax.f32 %v3765, 0.0
  %v4308 = vmax.f32 %v3767, 0.0
  %v4309 = vmax.f32 %v3769, 0.0
  %v4310 = vmax.f32 %v3771, 0.0
  %v4311 = vmax.f32 %v3775, 0.0
  %v4312 = vmax.f32 %v3777, 0.0
  %v4313 = vmax.f32 %v3779, 0.0
  %v4314 = vmax.f32 %v3781, 0.0
  %v4315 = vmax.f32 %v3785, 0.0
  %v4316 = vmax.f32 %v3787, 0.0
  %v4317 = vmax.f32 %v3789, 0.0
  %v4318 = vmax.f32 %v3791, 0.0
  %v4319 = vmax.f32 %v3795, 0.0
  %v4320 = vmax.f32 %v3797, 0.0
  %v4321 = vmax.f32 %v3799, 0.0
  %v4322 = vmax.f32 %v3801, 0.0
  %v4323 = vmax.f32 %v3805, 0.0
  %v4324 = vmax.f32 %v3807, 0.0
  %v4325 = vmax.f32 %v3809, 0.0
  %v4326 = vmax.f32 %v3811, 0.0
  %v4327 = vmax.f32 %v3815, 0.0
  %v4328 = vmax.f32 %v3817, 0.0
  %v4329 = vmax.f32 %v3819, 0.0
  %v4330 = vmax.f32 %v3821, 0.0
  %v4331 = vmax.f32 %v3825, 0.0
  %v4332 = vmax.f32 %v3827, 0.0
  %v4333 = vmax.f32 %v3829, 0.0
  %v4334 = vmax.f32 %v3831, 0.0
  %v4335 = vmax.f32 %v3835, 0.0
  %v4336 = vmax.f32 %v3837, 0.0
  %v4337 = vmax.f32 %v3839, 0.0
  %v4338 = vmax.f32 %v3841, 0.0
  %v4339 = vmax.f32 %v3845, 0.0
  %v4340 = vmax.f32 %v3847, 0.0
  %v4341 = vmax.f32 %v3849, 0.0
  %v4342 = vmax.f32 %v3851, 0.0
  %v4343 = vmax.f32 %v3855, 0.0
  %v4344 = vmax.f32 %v3857, 0.0
  %v4345 = vmax.f32 %v3859, 0.0
  %v4346 = vmax.f32 %v3861, 0.0
  %v4347 = vmax.f32 %v3865, 0.0
  %v4348 = vmax.f32 %v3867, 0.0
  %v4349 = vmax.f32 %v3869, 0.0
  %v4350 = vmax.f32 %v3871, 0.0
  %v4351 = vmax.f32 %v3875, 0.0
  %v4352 = vmax.f32 %v3877, 0.0
  %v4353 = vmax.f32 %v3879, 0.0
  %v4354 = vmax.f32 %v3881, 0.0
  %v4355 = vmax.f32 %v3885, 0.0
  %v4356 = vmax.f32 %v3887, 0.0
  %v4357 = vmax.f32 %v3889, 0.0
  %v4358 = vmax.f32 %v3891, 0.0
  %v4359 = vmax.f32 %v3895, 0.0
  %v4360 = vmax.f32 %v3897, 0.0
  %v4361 = vmax.f32 %v3899, 0.0
  %v4362 = vmax.f32 %v3901, 0.0
  %v4363 = vmax.f32 %v3905, 0.0
  %v4364 = vmax.f32 %v3907, 0.0
  %v4365 = vmax.f32 %v3909, 0.0
  %v4366 = vmax.f32 %v3911, 0.0
  %v4367 = vmax.f32 %v3915, 0.0
  %v4368 = vmax.f32 %v3917, 0.0
  %v4369 = vmax.f32 %v3919, 0.0
  %v4370 = vmax.f32 %v3921, 0.0
  %v4371 = vmax.f32 %v3925, 0.0
  %v4372 = vmax.f32 %v3927, 0.0
  %v4373 = vmax.f32 %v3929, 0.0
  %v4374 = vmax.f32 %v3931, 0.0
  %v4375 = vmax.f32 %v3935, 0.0
  %v4376 = vmax.f32 %v3937, 0.0
  %v4377 = vmax.f32 %v3939, 0.0
  %v4378 = vmax.f32 %v3941, 0.0
  %v4379 = vmax.f32 %v3945, 0.0
  %v4380 = vmax.f32 %v3947, 0.0
  %v4381 = vmax.f32 %v3949, 0.0
  %v4382 = vmax.f32 %v3951, 0.0
  %v4383 = vmax.f32 %v3955, 0.0
  %v4384 = vmax.f32 %v3957, 0.0
  %v4385 = vmax.f32 %v3959, 0.0
  %v4386 = vmax.f32 %v3961, 0.0
  %v4387 = vmax.f32 %v3965, 0.0
  %v4388 = vmax.f32 %v3967, 0.0
  %v4389 = vmax.f32 %v3969, 0.0
  %v4390 = vmax.f32 %v3971, 0.0
  %v4391 = vmax.f32 %v3975, 0.0
  %v4392 = vmax.f32 %v3977, 0.0
  %v4393 = vmax.f32 %v3979, 0.0
  %v4394 = vmax.f32 %v3981, 0.0
  %v4395 = vmax.f32 %v3985, 0.0
  %v4396 = vmax.f32 %v3987, 0.0
  %v4397 = vmax.f32 %v3989, 0.0
  %v4398 = vmax.f32 %v3991, 0.0
  %v4399 = vmax.f32 %v3995, 0.0
  %v4400 = vmax.f32 %v3997, 0.0
  %v4401 = vmax.f32 %v3999, 0.0
  %v4402 = vmax.f32 %v4001, 0.0
  %v4403 = vmax.f32 %v4005, 0.0
  %v4404 = vmax.f32 %v4007, 0.0
  %v4405 = vmax.f32 %v4009, 0.0
  %v4406 = vmax.f32 %v4011, 0.0
  %v4407 = vmax.f32 %v4015, 0.0
  %v4408 = vmax.f32 %v4017, 0.0
  %v4409 = vmax.f32 %v4019, 0.0
  %v4410 = vmax.f32 %v4021, 0.0
  %v4411 = vmax.f32 %v4025, 0.0
  %v4412 = vmax.f32 %v4027, 0.0
  %v4413 = vmax.f32 %v4029, 0.0
  %v4414 = vmax.f32 %v4031, 0.0
  %v4415 = vmax.f32 %v4035, 0.0
  %v4416 = vmax.f32 %v4037, 0.0
  %v4417 = vmax.f32 %v4039, 0.0
  %v4418 = vmax.f32 %v4041, 0.0
  %v4419 = vmax.f32 %v4045, 0.0
  %v4420 = vmax.f32 %v4047, 0.0
  %v4421 = vmax.f32 %v4049, 0.0
  %v4422 = vmax.f32 %v4051, 0.0
  %v4423 = vmax.f32 %v4055, 0.0
  %v4424 = vmax.f32 %v4057, 0.0
  %v4425 = vmax.f32 %v4059, 0.0
  %v4426 = vmax.f32 %v4061, 0.0
  %v4427 = vmax.f32 %v4065, 0.0
  %v4428 = vmax.f32 %v4067, 0.0
  %v4429 = vmax.f32 %v4069, 0.0
  %v4430 = vmax.f32 %v4071, 0.0
  %v4431 = vmax.f32 %v4075, 0.0
  %v4432 = vmax.f32 %v4077, 0.0
  %v4433 = vmax.f32 %v4079, 0.0
  %v4434 = vmax.f32 %v4081, 0.0
  %v4435 = vmax.f32 %v4085, 0.0
  %v4436 = vmax.f32 %v4087, 0.0
  %v4437 = vmax.f32 %v4089, 0.0
  %v4438 = vmax.f32 %v4091, 0.0
  %v4439 = vmax.f32 %v4095, 0.0
  %v4440 = vmax.f32 %v4097, 0.0
  %v4441 = vmax.f32 %v4099, 0.0
  %v4442 = vmax.f32 %v4101, 0.0
  %v4443 = vmax.f32 %v4105, 0.0
  %v4444 = vmax.f32 %v4107, 0.0
  %v4445 = vmax.f32 %v4109, 0.0
  %v4446 = vmax.f32 %v4111, 0.0
  %v4447 = vmax.f32 %v4115, 0.0
  %v4448 = vmax.f32 %v4117, 0.0
  %v4449 = vmax.f32 %v4119, 0.0
  %v4450 = vmax.f32 %v4121, 0.0
  %v4451 = vmax.f32 %v4125, 0.0
  %v4452 = vmax.f32 %v4127, 0.0
  %v4453 = vmax.f32 %v4129, 0.0
  %v4454 = vmax.f32 %v4131, 0.0
  %v4455 = vmax.f32 %v4135, 0.0
  %v4456 = vmax.f32 %v4137, 0.0
  %v4457 = vmax.f32 %v4139, 0.0
  %v4458 = vmax.f32 %v4141, 0.0
  %v4459 = vmax.f32 %v4145, 0.0
  %v4460 = vmax.f32 %v4147, 0.0
  %v4461 = vmax.f32 %v4149, 0.0
  %v4462 = vmax.f32 %v4151, 0.0
  %v4463 = vmax.f32 %v4155, 0.0
  %v4464 = vmax.f32 %v4157, 0.0
  %v4465 = vmax.f32 %v4159, 0.0
  %v4466 = vmax.f32 %v4161, 0.0
  %v4467 = vmax.f32 %v4165, 0.0
  %v4468 = vmax.f32 %v4167, 0.0
  %v4469 = vmax.f32 %v4169, 0.0
  %v4470 = vmax.f32 %v4171, 0.0
  %v4471 = vmax.f32 %v4175, 0.0
  %v4472 = vmax.f32 %v4177, 0.0
  %v4473 = vmax.f32 %v4179, 0.0
  %v4474 = vmax.f32 %v4181, 0.0
  %v4475 = vmax.f32 %v4185, 0.0
  %v4476 = vmax.f32 %v4187, 0.0
  %v4477 = vmax.f32 %v4189, 0.0
  %v4478 = vmax.f32 %v4191, 0.0
  %v4479 = vmax.f32 %v4195, 0.0
  %v4480 = vmax.f32 %v4197, 0.0
  %v4481 = vmax.f32 %v4199, 0.0
  %v4482 = vmax.f32 %v4201, 0.0
  %v4483 = vmax.f32 %v4205, 0.0
  %v4484 = vmax.f32 %v4207, 0.0
  %v4485 = vmax.f32 %v4209, 0.0
  %v4486 = vmax.f32 %v4211, 0.0
  %v4487 = vmax.f32 %v4215, 0.0
  %v4488 = vmax.f32 %v4217, 0.0
  %v4489 = vmax.f32 %v4219, 0.0
  %v4490 = vmax.f32 %v4221, 0.0
  %v4491 = vmax.f32 %v4225, 0.0
  %v4492 = vmax.f32 %v4227, 0.0
  %v4493 = vmax.f32 %v4229, 0.0
  %v4494 = vmax.f32 %v4231, 0.0
  %v4495 = vmax.f32 %v4235, 0.0
  %v4496 = vmax.f32 %v4237, 0.0
  %v4497 = vmax.f32 %v4239, 0.0
  %v4498 = vmax.f32 %v4241, 0.0
  %v4499 = vpack.c.bf16 %v4245, %v4243
  %v4500 = vpack.c.bf16 %v4246, %v4244
  %v4501 = vpack.c.bf16 %v4249, %v4247
  %v4502 = vpack.c.bf16 %v4250, %v4248
  %v4503 = vpack.c.bf16 %v4253, %v4251
  %v4504 = vpack.c.bf16 %v4254, %v4252
  %v4505 = vpack.c.bf16 %v4257, %v4255
  %v4506 = vpack.c.bf16 %v4258, %v4256
  %v4507 = vpack.c.bf16 %v4261, %v4259
  %v4508 = vpack.c.bf16 %v4262, %v4260
  %v4509 = vpack.c.bf16 %v4265, %v4263
  %v4510 = vpack.c.bf16 %v4266, %v4264
  %v4511 = vpack.c.bf16 %v4269, %v4267
  %v4512 = vpack.c.bf16 %v4270, %v4268
  %v4513 = vpack.c.bf16 %v4273, %v4271
  %v4514 = vpack.c.bf16 %v4274, %v4272
  %v4515 = vpack.c.bf16 %v4277, %v4275
  %v4516 = vpack.c.bf16 %v4278, %v4276
  %v4517 = vpack.c.bf16 %v4281, %v4279
  %v4518 = vpack.c.bf16 %v4282, %v4280
  %v4519 = vpack.c.bf16 %v4285, %v4283
  %v4520 = vpack.c.bf16 %v4286, %v4284
  %v4521 = vpack.c.bf16 %v4289, %v4287
  %v4522 = vpack.c.bf16 %v4290, %v4288
  %v4523 = vpack.c.bf16 %v4293, %v4291
  %v4524 = vpack.c.bf16 %v4294, %v4292
  %v4525 = vpack.c.bf16 %v4297, %v4295
  %v4526 = vpack.c.bf16 %v4298, %v4296
  %v4527 = vpack.c.bf16 %v4301, %v4299
  %v4528 = vpack.c.bf16 %v4302, %v4300
  %v4529 = vpack.c.bf16 %v4305, %v4303
  %v4530 = vpack.c.bf16 %v4306, %v4304
  %v4531 = vpack.c.bf16 %v4309, %v4307
  %v4532 = vpack.c.bf16 %v4310, %v4308
  %v4533 = vpack.c.bf16 %v4313, %v4311
  %v4534 = vpack.c.bf16 %v4314, %v4312
  %v4535 = vpack.c.bf16 %v4317, %v4315
  %v4536 = vpack.c.bf16 %v4318, %v4316
  %v4537 = vpack.c.bf16 %v4321, %v4319
  %v4538 = vpack.c.bf16 %v4322, %v4320
  %v4539 = vpack.c.bf16 %v4325, %v4323
  %v4540 = vpack.c.bf16 %v4326, %v4324
  %v4541 = vpack.c.bf16 %v4329, %v4327
  %v4542 = vpack.c.bf16 %v4330, %v4328
  %v4543 = vpack.c.bf16 %v4333, %v4331
  %v4544 = vpack.c.bf16 %v4334, %v4332
  %v4545 = vpack.c.bf16 %v4337, %v4335
  %v4546 = vpack.c.bf16 %v4338, %v4336
  %v4547 = vpack.c.bf16 %v4341, %v4339
  %v4548 = vpack.c.bf16 %v4342, %v4340
  %v4549 = vpack.c.bf16 %v4345, %v4343
  %v4550 = vpack.c.bf16 %v4346, %v4344
  %v4551 = vpack.c.bf16 %v4349, %v4347
  %v4552 = vpack.c.bf16 %v4350, %v4348
  %v4553 = vpack.c.bf16 %v4353, %v4351
  %v4554 = vpack.c.bf16 %v4354, %v4352
  %v4555 = vpack.c.bf16 %v4357, %v4355
  %v4556 = vpack.c.bf16 %v4358, %v4356
  %v4557 = vpack.c.bf16 %v4361, %v4359
  %v4558 = vpack.c.bf16 %v4362, %v4360
  %v4559 = vpack.c.bf16 %v4365, %v4363
  %v4560 = vpack.c.bf16 %v4366, %v4364
  %v4561 = vpack.c.bf16 %v4369, %v4367
  %v4562 = vpack.c.bf16 %v4370, %v4368
  %v4563 = vpack.c.bf16 %v4373, %v4371
  %v4564 = vpack.c.bf16 %v4374, %v4372
  %v4565 = vpack.c.bf16 %v4377, %v4375
  %v4566 = vpack.c.bf16 %v4378, %v4376
  %v4567 = vpack.c.bf16 %v4381, %v4379
  %v4568 = vpack.c.bf16 %v4382, %v4380
  %v4569 = vpack.c.bf16 %v4385, %v4383
  %v4570 = vpack.c.bf16 %v4386, %v4384
  %v4571 = vpack.c.bf16 %v4389, %v4387
  %v4572 = vpack.c.bf16 %v4390, %v4388
  %v4573 = vpack.c.bf16 %v4393, %v4391
  %v4574 = vpack.c.bf16 %v4394, %v4392
  %v4575 = vpack.c.bf16 %v4397, %v4395
  %v4576 = vpack.c.bf16 %v4398, %v4396
  %v4577 = vpack.c.bf16 %v4401, %v4399
  %v4578 = vpack.c.bf16 %v4402, %v4400
  %v4579 = vpack.c.bf16 %v4405, %v4403
  %v4580 = vpack.c.bf16 %v4406, %v4404
  %v4581 = vpack.c.bf16 %v4409, %v4407
  %v4582 = vpack.c.bf16 %v4410, %v4408
  %v4583 = vpack.c.bf16 %v4413, %v4411
  %v4584 = vpack.c.bf16 %v4414, %v4412
  %v4585 = vpack.c.bf16 %v4417, %v4415
  %v4586 = vpack.c.bf16 %v4418, %v4416
  %v4587 = vpack.c.bf16 %v4421, %v4419
  %v4588 = vpack.c.bf16 %v4422, %v4420
  %v4589 = vpack.c.bf16 %v4425, %v4423
  %v4590 = vpack.c.bf16 %v4426, %v4424
  %v4591 = vpack.c.bf16 %v4429, %v4427
  %v4592 = vpack.c.bf16 %v4430, %v4428
  %v4593 = vpack.c.bf16 %v4433, %v4431
  %v4594 = vpack.c.bf16 %v4434, %v4432
  %v4595 = vpack.c.bf16 %v4437, %v4435
  %v4596 = vpack.c.bf16 %v4438, %v4436
  %v4597 = vpack.c.bf16 %v4441, %v4439
  %v4598 = vpack.c.bf16 %v4442, %v4440
  %v4599 = vpack.c.bf16 %v4445, %v4443
  %v4600 = vpack.c.bf16 %v4446, %v4444
  %v4601 = vpack.c.bf16 %v4449, %v4447
  %v4602 = vpack.c.bf16 %v4450, %v4448
  %v4603 = vpack.c.bf16 %v4453, %v4451
  %v4604 = vpack.c.bf16 %v4454, %v4452
  %v4605 = vpack.c.bf16 %v4457, %v4455
  %v4606 = vpack.c.bf16 %v4458, %v4456
  %v4607 = vpack.c.bf16 %v4461, %v4459
  %v4608 = vpack.c.bf16 %v4462, %v4460
  %v4609 = vpack.c.bf16 %v4465, %v4463
  %v4610 = vpack.c.bf16 %v4466, %v4464
  %v4611 = vpack.c.bf16 %v4469, %v4467
  %v4612 = vpack.c.bf16 %v4470, %v4468
  %v4613 = vpack.c.bf16 %v4473, %v4471
  %v4614 = vpack.c.bf16 %v4474, %v4472
  %v4615 = vpack.c.bf16 %v4477, %v4475
  %v4616 = vpack.c.bf16 %v4478, %v4476
  %v4617 = vpack.c.bf16 %v4481, %v4479
  %v4618 = vpack.c.bf16 %v4482, %v4480
  %v4619 = vpack.c.bf16 %v4485, %v4483
  %v4620 = vpack.c.bf16 %v4486, %v4484
  %v4621 = vpack.c.bf16 %v4489, %v4487
  %v4622 = vpack.c.bf16 %v4490, %v4488
  %v4623 = vpack.c.bf16 %v4493, %v4491
  %v4624 = vpack.c.bf16 %v4494, %v4492
  %v4625 = vpack.c.bf16 %v4497, %v4495
  %v4626 = vpack.c.bf16 %v4498, %v4496
  %v4627 = vld [vmem:[%s7] sm:$0xff]
  %v4628 = vld [vmem:[%s7 + $0x8] sm:$0xff]
  %v4629 = vld [vmem:[%s7 + $0x10] sm:$0xff]
  %v4630 = vld [vmem:[%s7 + $0x18] sm:$0xff]
  %v4631 = vld [vmem:[%s7 + $0x20] sm:$0xff]
  %v4632 = vld [vmem:[%s7 + $0x28] sm:$0xff]
  %v4633 = vld [vmem:[%s7 + $0x30] sm:$0xff]
  %v4634 = vld [vmem:[%s7 + $0x38] sm:$0xff]
  %v4635 = vld [vmem:[%s7 + $0x40] sm:$0xff]
  %v4636 = vld [vmem:[%s7 + $0x48] sm:$0xff]
  %v4637 = vld [vmem:[%s7 + $0x50] sm:$0xff]
  %v4638 = vld [vmem:[%s7 + $0x58] sm:$0xff]
  %v4639 = vld [vmem:[%s7 + $0x60] sm:$0xff]
  %v4640 = vld [vmem:[%s7 + $0x68] sm:$0xff]
  %v4641 = vld [vmem:[%s7 + $0x70] sm:$0xff]
  %v4642 = vld [vmem:[%s7 + $0x78] sm:$0xff]
  %v4643 = vld [vmem:[%s7 + $0x80] sm:$0xff]
  %v4644 = vld [vmem:[%s7 + $0x88] sm:$0xff]
  %v4645 = vld [vmem:[%s7 + $0x90] sm:$0xff]
  %v4646 = vld [vmem:[%s7 + $0x98] sm:$0xff]
  %v4647 = vld [vmem:[%s7 + $0xa0] sm:$0xff]
  %v4648 = vld [vmem:[%s7 + $0xa8] sm:$0xff]
  %v4649 = vld [vmem:[%s7 + $0xb0] sm:$0xff]
  %v4650 = vld [vmem:[%s7 + $0xb8] sm:$0xff]
  %v4651 = vld [vmem:[%s7 + $0xc0] sm:$0xff]
  %v4652 = vld [vmem:[%s7 + $0xc8] sm:$0xff]
  %v4653 = vld [vmem:[%s7 + $0xd0] sm:$0xff]
  %v4654 = vld [vmem:[%s7 + $0xd8] sm:$0xff]
  %v4655 = vld [vmem:[%s7 + $0xe0] sm:$0xff]
  %v4656 = vld [vmem:[%s7 + $0xe8] sm:$0xff]
  %v4657 = vld [vmem:[%s7 + $0xf0] sm:$0xff]
  %v4658 = vld [vmem:[%s7 + $0xf8] sm:$0xff]
  %v4659 = vld [vmem:[%s8] sm:$0x3]
  %v4661 = vlaneseq
  %v4662 = vshrl.u32 %v4661, 7
  %v4663 = vsub.s32 0, %v4662
  %v4664 = vrot.slane %v4659, %v4663
  %v4665 = vlaneseq
  %v4666 = vshrl.u32 %v4665, 7
  %v4667 = vsub.s32 1, %v4666
  %v4668 = vrot.slane %v4659, %v4667
  %v4703 = vunpack.c.l.b16 %v4627
  %v4704 = vunpack.c.h.b16 %v4627
  %v4705 = vunpack.c.l.b16 %v4628
  %v4706 = vunpack.c.h.b16 %v4628
  %v4707 = vunpack.c.l.b16 %v4629
  %v4708 = vunpack.c.h.b16 %v4629
  %v4709 = vunpack.c.l.b16 %v4630
  %v4710 = vunpack.c.h.b16 %v4630
  %v4711 = vunpack.c.l.b16 %v4631
  %v4712 = vunpack.c.h.b16 %v4631
  %v4713 = vunpack.c.l.b16 %v4632
  %v4714 = vunpack.c.h.b16 %v4632
  %v4715 = vunpack.c.l.b16 %v4633
  %v4716 = vunpack.c.h.b16 %v4633
  %v4717 = vunpack.c.l.b16 %v4634
  %v4718 = vunpack.c.h.b16 %v4634
  %v4719 = vunpack.c.l.b16 %v4635
  %v4720 = vunpack.c.h.b16 %v4635
  %v4721 = vunpack.c.l.b16 %v4636
  %v4722 = vunpack.c.h.b16 %v4636
  %v4723 = vunpack.c.l.b16 %v4637
  %v4724 = vunpack.c.h.b16 %v4637
  %v4725 = vunpack.c.l.b16 %v4638
  %v4726 = vunpack.c.h.b16 %v4638
  %v4727 = vunpack.c.l.b16 %v4639
  %v4728 = vunpack.c.h.b16 %v4639
  %v4729 = vunpack.c.l.b16 %v4640
  %v4730 = vunpack.c.h.b16 %v4640
  %v4731 = vunpack.c.l.b16 %v4641
  %v4732 = vunpack.c.h.b16 %v4641
  %v4733 = vunpack.c.l.b16 %v4642
  %v4734 = vunpack.c.h.b16 %v4642
  %v4735 = vunpack.c.l.b16 %v4643
  %v4736 = vunpack.c.h.b16 %v4643
  %v4737 = vunpack.c.l.b16 %v4644
  %v4738 = vunpack.c.h.b16 %v4644
  %v4739 = vunpack.c.l.b16 %v4645
  %v4740 = vunpack.c.h.b16 %v4645
  %v4741 = vunpack.c.l.b16 %v4646
  %v4742 = vunpack.c.h.b16 %v4646
  %v4743 = vunpack.c.l.b16 %v4647
  %v4744 = vunpack.c.h.b16 %v4647
  %v4745 = vunpack.c.l.b16 %v4648
  %v4746 = vunpack.c.h.b16 %v4648
  %v4747 = vunpack.c.l.b16 %v4649
  %v4748 = vunpack.c.h.b16 %v4649
  %v4749 = vunpack.c.l.b16 %v4650
  %v4750 = vunpack.c.h.b16 %v4650
  %v4751 = vunpack.c.l.b16 %v4651
  %v4752 = vunpack.c.h.b16 %v4651
  %v4753 = vunpack.c.l.b16 %v4652
  %v4754 = vunpack.c.h.b16 %v4652
  %v4755 = vunpack.c.l.b16 %v4653
  %v4756 = vunpack.c.h.b16 %v4653
  %v4757 = vunpack.c.l.b16 %v4654
  %v4758 = vunpack.c.h.b16 %v4654
  %v4759 = vunpack.c.l.b16 %v4655
  %v4760 = vunpack.c.h.b16 %v4655
  %v4761 = vunpack.c.l.b16 %v4656
  %v4762 = vunpack.c.h.b16 %v4656
  %v4763 = vunpack.c.l.b16 %v4657
  %v4764 = vunpack.c.h.b16 %v4657
  %v4765 = vunpack.c.l.b16 %v4658
  %v4766 = vunpack.c.h.b16 %v4658
  %v4767 = vpack.c.b16 %v4705, %v4703
  %v4768 = vpack.c.b16 %v4706, %v4704
  %v4769 = vpack.c.b16 %v4709, %v4707
  %v4770 = vpack.c.b16 %v4710, %v4708
  %v4771 = vpack.c.b16 %v4713, %v4711
  %v4772 = vpack.c.b16 %v4714, %v4712
  %v4773 = vpack.c.b16 %v4717, %v4715
  %v4774 = vpack.c.b16 %v4718, %v4716
  %v4775 = vpack.c.b16 %v4721, %v4719
  %v4776 = vpack.c.b16 %v4722, %v4720
  %v4777 = vpack.c.b16 %v4725, %v4723
  %v4778 = vpack.c.b16 %v4726, %v4724
  %v4779 = vpack.c.b16 %v4729, %v4727
  %v4780 = vpack.c.b16 %v4730, %v4728
  %v4781 = vpack.c.b16 %v4733, %v4731
  %v4782 = vpack.c.b16 %v4734, %v4732
  %v4783 = vpack.c.b16 %v4737, %v4735
  %v4784 = vpack.c.b16 %v4738, %v4736
  %v4785 = vpack.c.b16 %v4741, %v4739
  %v4786 = vpack.c.b16 %v4742, %v4740
  %v4787 = vpack.c.b16 %v4745, %v4743
  %v4788 = vpack.c.b16 %v4746, %v4744
  %v4789 = vpack.c.b16 %v4749, %v4747
  %v4790 = vpack.c.b16 %v4750, %v4748
  %v4791 = vpack.c.b16 %v4753, %v4751
  %v4792 = vpack.c.b16 %v4754, %v4752
  %v4793 = vpack.c.b16 %v4757, %v4755
  %v4794 = vpack.c.b16 %v4758, %v4756
  %v4795 = vpack.c.b16 %v4761, %v4759
  %v4796 = vpack.c.b16 %v4762, %v4760
  %v4797 = vpack.c.b16 %v4765, %v4763
  %v4798 = vpack.c.b16 %v4766, %v4764
  %4831 = vmatprep.subr.bf16.mxu0 %v4768
  %4832 = vmatpush1.bf16.msra.mxu0 %v4767
  %4833 = vmatprep.subr.bf16.mxu0 %v4770
  %4834 = vmatpush1.bf16.msra.mxu0 %v4769
  %4835 = vmatprep.subr.bf16.mxu0 %v4772
  %4836 = vmatpush1.bf16.msra.mxu0 %v4771
  %4837 = vmatprep.subr.bf16.mxu0 %v4774
  %4838 = vmatpush1.bf16.msra.mxu0 %v4773
  %4839 = vmatprep.subr.bf16.mxu0 %v4776
  %4840 = vmatpush1.bf16.msra.mxu0 %v4775
  %4841 = vmatprep.subr.bf16.mxu0 %v4778
  %4842 = vmatpush1.bf16.msra.mxu0 %v4777
  %4843 = vmatprep.subr.bf16.mxu0 %v4780
  %4844 = vmatpush1.bf16.msra.mxu0 %v4779
  %4845 = vmatprep.subr.bf16.mxu0 %v4782
  %4846 = vmatpush1.bf16.msra.mxu0 %v4781
  %4847 = vmatprep.subr.bf16.mxu0 %v4784
  %4848 = vmatpush1.bf16.msra.mxu0 %v4783
  %4849 = vmatprep.subr.bf16.mxu0 %v4786
  %4850 = vmatpush1.bf16.msra.mxu0 %v4785
  %4851 = vmatprep.subr.bf16.mxu0 %v4788
  %4852 = vmatpush1.bf16.msra.mxu0 %v4787
  %4853 = vmatprep.subr.bf16.mxu0 %v4790
  %4854 = vmatpush1.bf16.msra.mxu0 %v4789
  %4855 = vmatprep.subr.bf16.mxu0 %v4792
  %4856 = vmatpush1.bf16.msra.mxu0 %v4791
  %4857 = vmatprep.subr.bf16.mxu0 %v4794
  %4858 = vmatpush1.bf16.msra.mxu0 %v4793
  %4859 = vmatprep.subr.bf16.mxu0 %v4796
  %4860 = vmatpush1.bf16.msra.mxu0 %v4795
  %4861 = vmatprep.subr.bf16.mxu0 %v4798
  %4862 = vmatpush1.bf16.msra.mxu0 %v4797
  %4863 = vmatprep.mubr.bf16.mxu0 %v4500
  %4864 = vmatmul.mubr.bf16.gmra.mrb[0].mxu0 %v4499
  %v4865 = vpop.f32.mrb[0].mxu0
  %v4866 = vadd.f32 %v4664, %v4865
  %v4867 = vpop.f32.mrb[0].mxu0
  %v4868 = vadd.f32 %v4668, %v4867
  %v4869 = vpop.f32.mrb[0].mxu0
  %v4870 = vadd.f32 %v4664, %v4869
  %v4871 = vpop.f32.mrb[0].mxu0
  %v4872 = vadd.f32 %v4668, %v4871
  %4873 = vmatprep.mubr.bf16.mxu0 %v4502
  %4874 = vmatmul.mubr.bf16.gmra.mrb[0].mxu0 %v4501
  %v4875 = vpop.f32.mrb[0].mxu0
  %v4876 = vadd.f32 %v4664, %v4875
  %v4877 = vpop.f32.mrb[0].mxu0
  %v4878 = vadd.f32 %v4668, %v4877
  %v4879 = vpop.f32.mrb[0].mxu0
  %v4880 = vadd.f32 %v4664, %v4879
  %v4881 = vpop.f32.mrb[0].mxu0
  %v4882 = vadd.f32 %v4668, %v4881
  %4883 = vmatprep.mubr.bf16.mxu0 %v4504
  %4884 = vmatmul.mubr.bf16.gmra.mrb[0].mxu0 %v4503
  %v4885 = vpop.f32.mrb[0].mxu0
  %v4886 = vadd.f32 %v4664, %v4885
  %v4887 = vpop.f32.mrb[0].mxu0
  %v4888 = vadd.f32 %v4668, %v4887
  %v4889 = vpop.f32.mrb[0].mxu0
  %v4890 = vadd.f32 %v4664, %v4889
  %v4891 = vpop.f32.mrb[0].mxu0
  %v4892 = vadd.f32 %v4668, %v4891
  %4893 = vmatprep.mubr.bf16.mxu0 %v4506
  %4894 = vmatmul.mubr.bf16.gmra.mrb[0].mxu0 %v4505
  %v4895 = vpop.f32.mrb[0].mxu0
  %v4896 = vadd.f32 %v4664, %v4895
  %v4897 = vpop.f32.mrb[0].mxu0
  %v4898 = vadd.f32 %v4668, %v4897
  %v4899 = vpop.f32.mrb[0].mxu0
  %v4900 = vadd.f32 %v4664, %v4899
  %v4901 = vpop.f32.mrb[0].mxu0
  %v4902 = vadd.f32 %v4668, %v4901
  %4903 = vmatprep.mubr.bf16.mxu0 %v4508
  %4904 = vmatmul.mubr.bf16.gmra.mrb[0].mxu0 %v4507
  %v4905 = vpop.f32.mrb[0].mxu0
  %v4906 = vadd.f32 %v4664, %v4905
  %v4907 = vpop.f32.mrb[0].mxu0
  %v4908 = vadd.f32 %v4668, %v4907
  %v4909 = vpop.f32.mrb[0].mxu0
  %v4910 = vadd.f32 %v4664, %v4909
  %v4911 = vpop.f32.mrb[0].mxu0
  %v4912 = vadd.f32 %v4668, %v4911
  %4913 = vmatprep.mubr.bf16.mxu0 %v4510
  %4914 = vmatmul.mubr.bf16.gmra.mrb[0].mxu0 %v4509
  %v4915 = vpop.f32.mrb[0].mxu0
  %v4916 = vadd.f32 %v4664, %v4915
  %v4917 = vpop.f32.mrb[0].mxu0
  %v4918 = vadd.f32 %v4668, %v4917
  %v4919 = vpop.f32.mrb[0].mxu0
  %v4920 = vadd.f32 %v4664, %v4919
  %v4921 = vpop.f32.mrb[0].mxu0
  %v4922 = vadd.f32 %v4668, %v4921
  %4923 = vmatprep.mubr.bf16.mxu0 %v4512
  %4924 = vmatmul.mubr.bf16.gmra.mrb[0].mxu0 %v4511
  %v4925 = vpop.f32.mrb[0].mxu0
  %v4926 = vadd.f32 %v4664, %v4925
  %v4927 = vpop.f32.mrb[0].mxu0
  %v4928 = vadd.f32 %v4668, %v4927
  %v4929 = vpop.f32.mrb[0].mxu0
  %v4930 = vadd.f32 %v4664, %v4929
  %v4931 = vpop.f32.mrb[0].mxu0
  %v4932 = vadd.f32 %v4668, %v4931
  %4933 = vmatprep.mubr.bf16.mxu0 %v4514
  %4934 = vmatmul.mubr.bf16.gmra.mrb[0].mxu0 %v4513
  %v4935 = vpop.f32.mrb[0].mxu0
  %v4936 = vadd.f32 %v4664, %v4935
  %v4937 = vpop.f32.mrb[0].mxu0
  %v4938 = vadd.f32 %v4668, %v4937
  %v4939 = vpop.f32.mrb[0].mxu0
  %v4940 = vadd.f32 %v4664, %v4939
  %v4941 = vpop.f32.mrb[0].mxu0
  %v4942 = vadd.f32 %v4668, %v4941
  %4943 = vmatprep.mubr.bf16.mxu0 %v4516
  %4944 = vmatmul.mubr.bf16.gmra.mrb[0].mxu0 %v4515
  %v4945 = vpop.f32.mrb[0].mxu0
  %v4946 = vadd.f32 %v4664, %v4945
  %v4947 = vpop.f32.mrb[0].mxu0
  %v4948 = vadd.f32 %v4668, %v4947
  %v4949 = vpop.f32.mrb[0].mxu0
  %v4950 = vadd.f32 %v4664, %v4949
  %v4951 = vpop.f32.mrb[0].mxu0
  %v4952 = vadd.f32 %v4668, %v4951
  %4953 = vmatprep.mubr.bf16.mxu0 %v4518
  %4954 = vmatmul.mubr.bf16.gmra.mrb[0].mxu0 %v4517
  %v4955 = vpop.f32.mrb[0].mxu0
  %v4956 = vadd.f32 %v4664, %v4955
  %v4957 = vpop.f32.mrb[0].mxu0
  %v4958 = vadd.f32 %v4668, %v4957
  %v4959 = vpop.f32.mrb[0].mxu0
  %v4960 = vadd.f32 %v4664, %v4959
  %v4961 = vpop.f32.mrb[0].mxu0
  %v4962 = vadd.f32 %v4668, %v4961
  %4963 = vmatprep.mubr.bf16.mxu0 %v4520
  %4964 = vmatmul.mubr.bf16.gmra.mrb[0].mxu0 %v4519
  %v4965 = vpop.f32.mrb[0].mxu0
  %v4966 = vadd.f32 %v4664, %v4965
  %v4967 = vpop.f32.mrb[0].mxu0
  %v4968 = vadd.f32 %v4668, %v4967
  %v4969 = vpop.f32.mrb[0].mxu0
  %v4970 = vadd.f32 %v4664, %v4969
  %v4971 = vpop.f32.mrb[0].mxu0
  %v4972 = vadd.f32 %v4668, %v4971
  %4973 = vmatprep.mubr.bf16.mxu0 %v4522
  %4974 = vmatmul.mubr.bf16.gmra.mrb[0].mxu0 %v4521
  %v4975 = vpop.f32.mrb[0].mxu0
  %v4976 = vadd.f32 %v4664, %v4975
  %v4977 = vpop.f32.mrb[0].mxu0
  %v4978 = vadd.f32 %v4668, %v4977
  %v4979 = vpop.f32.mrb[0].mxu0
  %v4980 = vadd.f32 %v4664, %v4979
  %v4981 = vpop.f32.mrb[0].mxu0
  %v4982 = vadd.f32 %v4668, %v4981
  %4983 = vmatprep.mubr.bf16.mxu0 %v4524
  %4984 = vmatmul.mubr.bf16.gmra.mrb[0].mxu0 %v4523
  %v4985 = vpop.f32.mrb[0].mxu0
  %v4986 = vadd.f32 %v4664, %v4985
  %v4987 = vpop.f32.mrb[0].mxu0
  %v4988 = vadd.f32 %v4668, %v4987
  %v4989 = vpop.f32.mrb[0].mxu0
  %v4990 = vadd.f32 %v4664, %v4989
  %v4991 = vpop.f32.mrb[0].mxu0
  %v4992 = vadd.f32 %v4668, %v4991
  %4993 = vmatprep.mubr.bf16.mxu0 %v4526
  %4994 = vmatmul.mubr.bf16.gmra.mrb[0].mxu0 %v4525
  %v4995 = vpop.f32.mrb[0].mxu0
  %v4996 = vadd.f32 %v4664, %v4995
  %v4997 = vpop.f32.mrb[0].mxu0
  %v4998 = vadd.f32 %v4668, %v4997
  %v4999 = vpop.f32.mrb[0].mxu0
  %v5000 = vadd.f32 %v4664, %v4999
  %v5001 = vpop.f32.mrb[0].mxu0
  %v5002 = vadd.f32 %v4668, %v5001
  %5003 = vmatprep.mubr.bf16.mxu0 %v4528
  %5004 = vmatmul.mubr.bf16.gmra.mrb[0].mxu0 %v4527
  %v5005 = vpop.f32.mrb[0].mxu0
  %v5006 = vadd.f32 %v4664, %v5005
  %v5007 = vpop.f32.mrb[0].mxu0
  %v5008 = vadd.f32 %v4668, %v5007
  %v5009 = vpop.f32.mrb[0].mxu0
  %v5010 = vadd.f32 %v4664, %v5009
  %v5011 = vpop.f32.mrb[0].mxu0
  %v5012 = vadd.f32 %v4668, %v5011
  %5013 = vmatprep.mubr.bf16.mxu0 %v4530
  %5014 = vmatmul.mubr.bf16.gmra.mrb[0].mxu0 %v4529
  %v5015 = vpop.f32.mrb[0].mxu0
  %v5016 = vadd.f32 %v4664, %v5015
  %v5017 = vpop.f32.mrb[0].mxu0
  %v5018 = vadd.f32 %v4668, %v5017
  %v5019 = vpop.f32.mrb[0].mxu0
  %v5020 = vadd.f32 %v4664, %v5019
  %v5021 = vpop.f32.mrb[0].mxu0
  %v5022 = vadd.f32 %v4668, %v5021
  %5023 = vmatprep.mubr.bf16.mxu0 %v4532
  %5024 = vmatmul.mubr.bf16.gmra.mrb[0].mxu0 %v4531
  %v5025 = vpop.f32.mrb[0].mxu0
  %v5026 = vadd.f32 %v4664, %v5025
  %v5027 = vpop.f32.mrb[0].mxu0
  %v5028 = vadd.f32 %v4668, %v5027
  %v5029 = vpop.f32.mrb[0].mxu0
  %v5030 = vadd.f32 %v4664, %v5029
  %v5031 = vpop.f32.mrb[0].mxu0
  %v5032 = vadd.f32 %v4668, %v5031
  %5033 = vmatprep.mubr.bf16.mxu0 %v4534
  %5034 = vmatmul.mubr.bf16.gmra.mrb[0].mxu0 %v4533
  %v5035 = vpop.f32.mrb[0].mxu0
  %v5036 = vadd.f32 %v4664, %v5035
  %v5037 = vpop.f32.mrb[0].mxu0
  %v5038 = vadd.f32 %v4668, %v5037
  %v5039 = vpop.f32.mrb[0].mxu0
  %v5040 = vadd.f32 %v4664, %v5039
  %v5041 = vpop.f32.mrb[0].mxu0
  %v5042 = vadd.f32 %v4668, %v5041
  %5043 = vmatprep.mubr.bf16.mxu0 %v4536
  %5044 = vmatmul.mubr.bf16.gmra.mrb[0].mxu0 %v4535
  %v5045 = vpop.f32.mrb[0].mxu0
  %v5046 = vadd.f32 %v4664, %v5045
  %v5047 = vpop.f32.mrb[0].mxu0
  %v5048 = vadd.f32 %v4668, %v5047
  %v5049 = vpop.f32.mrb[0].mxu0
  %v5050 = vadd.f32 %v4664, %v5049
  %v5051 = vpop.f32.mrb[0].mxu0
  %v5052 = vadd.f32 %v4668, %v5051
  %5053 = vmatprep.mubr.bf16.mxu0 %v4538
  %5054 = vmatmul.mubr.bf16.gmra.mrb[0].mxu0 %v4537
  %v5055 = vpop.f32.mrb[0].mxu0
  %v5056 = vadd.f32 %v4664, %v5055
  %v5057 = vpop.f32.mrb[0].mxu0
  %v5058 = vadd.f32 %v4668, %v5057
  %v5059 = vpop.f32.mrb[0].mxu0
  %v5060 = vadd.f32 %v4664, %v5059
  %v5061 = vpop.f32.mrb[0].mxu0
  %v5062 = vadd.f32 %v4668, %v5061
  %5063 = vmatprep.mubr.bf16.mxu0 %v4540
  %5064 = vmatmul.mubr.bf16.gmra.mrb[0].mxu0 %v4539
  %v5065 = vpop.f32.mrb[0].mxu0
  %v5066 = vadd.f32 %v4664, %v5065
  %v5067 = vpop.f32.mrb[0].mxu0
  %v5068 = vadd.f32 %v4668, %v5067
  %v5069 = vpop.f32.mrb[0].mxu0
  %v5070 = vadd.f32 %v4664, %v5069
  %v5071 = vpop.f32.mrb[0].mxu0
  %v5072 = vadd.f32 %v4668, %v5071
  %5073 = vmatprep.mubr.bf16.mxu0 %v4542
  %5074 = vmatmul.mubr.bf16.gmra.mrb[0].mxu0 %v4541
  %v5075 = vpop.f32.mrb[0].mxu0
  %v5076 = vadd.f32 %v4664, %v5075
  %v5077 = vpop.f32.mrb[0].mxu0
  %v5078 = vadd.f32 %v4668, %v5077
  %v5079 = vpop.f32.mrb[0].mxu0
  %v5080 = vadd.f32 %v4664, %v5079
  %v5081 = vpop.f32.mrb[0].mxu0
  %v5082 = vadd.f32 %v4668, %v5081
  %5083 = vmatprep.mubr.bf16.mxu0 %v4544
  %5084 = vmatmul.mubr.bf16.gmra.mrb[0].mxu0 %v4543
  %v5085 = vpop.f32.mrb[0].mxu0
  %v5086 = vadd.f32 %v4664, %v5085
  %v5087 = vpop.f32.mrb[0].mxu0
  %v5088 = vadd.f32 %v4668, %v5087
  %v5089 = vpop.f32.mrb[0].mxu0
  %v5090 = vadd.f32 %v4664, %v5089
  %v5091 = vpop.f32.mrb[0].mxu0
  %v5092 = vadd.f32 %v4668, %v5091
  %5093 = vmatprep.mubr.bf16.mxu0 %v4546
  %5094 = vmatmul.mubr.bf16.gmra.mrb[0].mxu0 %v4545
  %v5095 = vpop.f32.mrb[0].mxu0
  %v5096 = vadd.f32 %v4664, %v5095
  %v5097 = vpop.f32.mrb[0].mxu0
  %v5098 = vadd.f32 %v4668, %v5097
  %v5099 = vpop.f32.mrb[0].mxu0
  %v5100 = vadd.f32 %v4664, %v5099
  %v5101 = vpop.f32.mrb[0].mxu0
  %v5102 = vadd.f32 %v4668, %v5101
  %5103 = vmatprep.mubr.bf16.mxu0 %v4548
  %5104 = vmatmul.mubr.bf16.gmra.mrb[0].mxu0 %v4547
  %v5105 = vpop.f32.mrb[0].mxu0
  %v5106 = vadd.f32 %v4664, %v5105
  %v5107 = vpop.f32.mrb[0].mxu0
  %v5108 = vadd.f32 %v4668, %v5107
  %v5109 = vpop.f32.mrb[0].mxu0
  %v5110 = vadd.f32 %v4664, %v5109
  %v5111 = vpop.f32.mrb[0].mxu0
  %v5112 = vadd.f32 %v4668, %v5111
  %5113 = vmatprep.mubr.bf16.mxu0 %v4550
  %5114 = vmatmul.mubr.bf16.gmra.mrb[0].mxu0 %v4549
  %v5115 = vpop.f32.mrb[0].mxu0
  %v5116 = vadd.f32 %v4664, %v5115
  %v5117 = vpop.f32.mrb[0].mxu0
  %v5118 = vadd.f32 %v4668, %v5117
  %v5119 = vpop.f32.mrb[0].mxu0
  %v5120 = vadd.f32 %v4664, %v5119
  %v5121 = vpop.f32.mrb[0].mxu0
  %v5122 = vadd.f32 %v4668, %v5121
  %5123 = vmatprep.mubr.bf16.mxu0 %v4552
  %5124 = vmatmul.mubr.bf16.gmra.mrb[0].mxu0 %v4551
  %v5125 = vpop.f32.mrb[0].mxu0
  %v5126 = vadd.f32 %v4664, %v5125
  %v5127 = vpop.f32.mrb[0].mxu0
  %v5128 = vadd.f32 %v4668, %v5127
  %v5129 = vpop.f32.mrb[0].mxu0
  %v5130 = vadd.f32 %v4664, %v5129
  %v5131 = vpop.f32.mrb[0].mxu0
  %v5132 = vadd.f32 %v4668, %v5131
  %5133 = vmatprep.mubr.bf16.mxu0 %v4554
  %5134 = vmatmul.mubr.bf16.gmra.mrb[0].mxu0 %v4553
  %v5135 = vpop.f32.mrb[0].mxu0
  %v5136 = vadd.f32 %v4664, %v5135
  %v5137 = vpop.f32.mrb[0].mxu0
  %v5138 = vadd.f32 %v4668, %v5137
  %v5139 = vpop.f32.mrb[0].mxu0
  %v5140 = vadd.f32 %v4664, %v5139
  %v5141 = vpop.f32.mrb[0].mxu0
  %v5142 = vadd.f32 %v4668, %v5141
  %5143 = vmatprep.mubr.bf16.mxu0 %v4556
  %5144 = vmatmul.mubr.bf16.gmra.mrb[0].mxu0 %v4555
  %v5145 = vpop.f32.mrb[0].mxu0
  %v5146 = vadd.f32 %v4664, %v5145
  %v5147 = vpop.f32.mrb[0].mxu0
  %v5148 = vadd.f32 %v4668, %v5147
  %v5149 = vpop.f32.mrb[0].mxu0
  %v5150 = vadd.f32 %v4664, %v5149
  %v5151 = vpop.f32.mrb[0].mxu0
  %v5152 = vadd.f32 %v4668, %v5151
  %5153 = vmatprep.mubr.bf16.mxu0 %v4558
  %5154 = vmatmul.mubr.bf16.gmra.mrb[0].mxu0 %v4557
  %v5155 = vpop.f32.mrb[0].mxu0
  %v5156 = vadd.f32 %v4664, %v5155
  %v5157 = vpop.f32.mrb[0].mxu0
  %v5158 = vadd.f32 %v4668, %v5157
  %v5159 = vpop.f32.mrb[0].mxu0
  %v5160 = vadd.f32 %v4664, %v5159
  %v5161 = vpop.f32.mrb[0].mxu0
  %v5162 = vadd.f32 %v4668, %v5161
  %5163 = vmatprep.mubr.bf16.mxu0 %v4560
  %5164 = vmatmul.mubr.bf16.gmra.mrb[0].mxu0 %v4559
  %v5165 = vpop.f32.mrb[0].mxu0
  %v5166 = vadd.f32 %v4664, %v5165
  %v5167 = vpop.f32.mrb[0].mxu0
  %v5168 = vadd.f32 %v4668, %v5167
  %v5169 = vpop.f32.mrb[0].mxu0
  %v5170 = vadd.f32 %v4664, %v5169
  %v5171 = vpop.f32.mrb[0].mxu0
  %v5172 = vadd.f32 %v4668, %v5171
  %5173 = vmatprep.mubr.bf16.mxu0 %v4562
  %5174 = vmatmul.mubr.bf16.gmra.mrb[0].mxu0 %v4561
  %v5175 = vpop.f32.mrb[0].mxu0
  %v5176 = vadd.f32 %v4664, %v5175
  %v5177 = vpop.f32.mrb[0].mxu0
  %v5178 = vadd.f32 %v4668, %v5177
  %v5179 = vpop.f32.mrb[0].mxu0
  %v5180 = vadd.f32 %v4664, %v5179
  %v5181 = vpop.f32.mrb[0].mxu0
  %v5182 = vadd.f32 %v4668, %v5181
  %5183 = vmatprep.mubr.bf16.mxu0 %v4564
  %5184 = vmatmul.mubr.bf16.gmra.mrb[0].mxu0 %v4563
  %v5185 = vpop.f32.mrb[0].mxu0
  %v5186 = vadd.f32 %v4664, %v5185
  %v5187 = vpop.f32.mrb[0].mxu0
  %v5188 = vadd.f32 %v4668, %v5187
  %v5189 = vpop.f32.mrb[0].mxu0
  %v5190 = vadd.f32 %v4664, %v5189
  %v5191 = vpop.f32.mrb[0].mxu0
  %v5192 = vadd.f32 %v4668, %v5191
  %5193 = vmatprep.mubr.bf16.mxu0 %v4566
  %5194 = vmatmul.mubr.bf16.gmra.mrb[0].mxu0 %v4565
  %v5195 = vpop.f32.mrb[0].mxu0
  %v5196 = vadd.f32 %v4664, %v5195
  %v5197 = vpop.f32.mrb[0].mxu0
  %v5198 = vadd.f32 %v4668, %v5197
  %v5199 = vpop.f32.mrb[0].mxu0
  %v5200 = vadd.f32 %v4664, %v5199
  %v5201 = vpop.f32.mrb[0].mxu0
  %v5202 = vadd.f32 %v4668, %v5201
  %5203 = vmatprep.mubr.bf16.mxu0 %v4568
  %5204 = vmatmul.mubr.bf16.gmra.mrb[0].mxu0 %v4567
  %v5205 = vpop.f32.mrb[0].mxu0
  %v5206 = vadd.f32 %v4664, %v5205
  %v5207 = vpop.f32.mrb[0].mxu0
  %v5208 = vadd.f32 %v4668, %v5207
  %v5209 = vpop.f32.mrb[0].mxu0
  %v5210 = vadd.f32 %v4664, %v5209
  %v5211 = vpop.f32.mrb[0].mxu0
  %v5212 = vadd.f32 %v4668, %v5211
  %5213 = vmatprep.mubr.bf16.mxu0 %v4570
  %5214 = vmatmul.mubr.bf16.gmra.mrb[0].mxu0 %v4569
  %v5215 = vpop.f32.mrb[0].mxu0
  %v5216 = vadd.f32 %v4664, %v5215
  %v5217 = vpop.f32.mrb[0].mxu0
  %v5218 = vadd.f32 %v4668, %v5217
  %v5219 = vpop.f32.mrb[0].mxu0
  %v5220 = vadd.f32 %v4664, %v5219
  %v5221 = vpop.f32.mrb[0].mxu0
  %v5222 = vadd.f32 %v4668, %v5221
  %5223 = vmatprep.mubr.bf16.mxu0 %v4572
  %5224 = vmatmul.mubr.bf16.gmra.mrb[0].mxu0 %v4571
  %v5225 = vpop.f32.mrb[0].mxu0
  %v5226 = vadd.f32 %v4664, %v5225
  %v5227 = vpop.f32.mrb[0].mxu0
  %v5228 = vadd.f32 %v4668, %v5227
  %v5229 = vpop.f32.mrb[0].mxu0
  %v5230 = vadd.f32 %v4664, %v5229
  %v5231 = vpop.f32.mrb[0].mxu0
  %v5232 = vadd.f32 %v4668, %v5231
  %5233 = vmatprep.mubr.bf16.mxu0 %v4574
  %5234 = vmatmul.mubr.bf16.gmra.mrb[0].mxu0 %v4573
  %v5235 = vpop.f32.mrb[0].mxu0
  %v5236 = vadd.f32 %v4664, %v5235
  %v5237 = vpop.f32.mrb[0].mxu0
  %v5238 = vadd.f32 %v4668, %v5237
  %v5239 = vpop.f32.mrb[0].mxu0
  %v5240 = vadd.f32 %v4664, %v5239
  %v5241 = vpop.f32.mrb[0].mxu0
  %v5242 = vadd.f32 %v4668, %v5241
  %5243 = vmatprep.mubr.bf16.mxu0 %v4576
  %5244 = vmatmul.mubr.bf16.gmra.mrb[0].mxu0 %v4575
  %v5245 = vpop.f32.mrb[0].mxu0
  %v5246 = vadd.f32 %v4664, %v5245
  %v5247 = vpop.f32.mrb[0].mxu0
  %v5248 = vadd.f32 %v4668, %v5247
  %v5249 = vpop.f32.mrb[0].mxu0
  %v5250 = vadd.f32 %v4664, %v5249
  %v5251 = vpop.f32.mrb[0].mxu0
  %v5252 = vadd.f32 %v4668, %v5251
  %5253 = vmatprep.mubr.bf16.mxu0 %v4578
  %5254 = vmatmul.mubr.bf16.gmra.mrb[0].mxu0 %v4577
  %v5255 = vpop.f32.mrb[0].mxu0
  %v5256 = vadd.f32 %v4664, %v5255
  %v5257 = vpop.f32.mrb[0].mxu0
  %v5258 = vadd.f32 %v4668, %v5257
  %v5259 = vpop.f32.mrb[0].mxu0
  %v5260 = vadd.f32 %v4664, %v5259
  %v5261 = vpop.f32.mrb[0].mxu0
  %v5262 = vadd.f32 %v4668, %v5261
  %5263 = vmatprep.mubr.bf16.mxu0 %v4580
  %5264 = vmatmul.mubr.bf16.gmra.mrb[0].mxu0 %v4579
  %v5265 = vpop.f32.mrb[0].mxu0
  %v5266 = vadd.f32 %v4664, %v5265
  %v5267 = vpop.f32.mrb[0].mxu0
  %v5268 = vadd.f32 %v4668, %v5267
  %v5269 = vpop.f32.mrb[0].mxu0
  %v5270 = vadd.f32 %v4664, %v5269
  %v5271 = vpop.f32.mrb[0].mxu0
  %v5272 = vadd.f32 %v4668, %v5271
  %5273 = vmatprep.mubr.bf16.mxu0 %v4582
  %5274 = vmatmul.mubr.bf16.gmra.mrb[0].mxu0 %v4581
  %v5275 = vpop.f32.mrb[0].mxu0
  %v5276 = vadd.f32 %v4664, %v5275
  %v5277 = vpop.f32.mrb[0].mxu0
  %v5278 = vadd.f32 %v4668, %v5277
  %v5279 = vpop.f32.mrb[0].mxu0
  %v5280 = vadd.f32 %v4664, %v5279
  %v5281 = vpop.f32.mrb[0].mxu0
  %v5282 = vadd.f32 %v4668, %v5281
  %5283 = vmatprep.mubr.bf16.mxu0 %v4584
  %5284 = vmatmul.mubr.bf16.gmra.mrb[0].mxu0 %v4583
  %v5285 = vpop.f32.mrb[0].mxu0
  %v5286 = vadd.f32 %v4664, %v5285
  %v5287 = vpop.f32.mrb[0].mxu0
  %v5288 = vadd.f32 %v4668, %v5287
  %v5289 = vpop.f32.mrb[0].mxu0
  %v5290 = vadd.f32 %v4664, %v5289
  %v5291 = vpop.f32.mrb[0].mxu0
  %v5292 = vadd.f32 %v4668, %v5291
  %5293 = vmatprep.mubr.bf16.mxu0 %v4586
  %5294 = vmatmul.mubr.bf16.gmra.mrb[0].mxu0 %v4585
  %v5295 = vpop.f32.mrb[0].mxu0
  %v5296 = vadd.f32 %v4664, %v5295
  %v5297 = vpop.f32.mrb[0].mxu0
  %v5298 = vadd.f32 %v4668, %v5297
  %v5299 = vpop.f32.mrb[0].mxu0
  %v5300 = vadd.f32 %v4664, %v5299
  %v5301 = vpop.f32.mrb[0].mxu0
  %v5302 = vadd.f32 %v4668, %v5301
  %5303 = vmatprep.mubr.bf16.mxu0 %v4588
  %5304 = vmatmul.mubr.bf16.gmra.mrb[0].mxu0 %v4587
  %v5305 = vpop.f32.mrb[0].mxu0
  %v5306 = vadd.f32 %v4664, %v5305
  %v5307 = vpop.f32.mrb[0].mxu0
  %v5308 = vadd.f32 %v4668, %v5307
  %v5309 = vpop.f32.mrb[0].mxu0
  %v5310 = vadd.f32 %v4664, %v5309
  %v5311 = vpop.f32.mrb[0].mxu0
  %v5312 = vadd.f32 %v4668, %v5311
  %5313 = vmatprep.mubr.bf16.mxu0 %v4590
  %5314 = vmatmul.mubr.bf16.gmra.mrb[0].mxu0 %v4589
  %v5315 = vpop.f32.mrb[0].mxu0
  %v5316 = vadd.f32 %v4664, %v5315
  %v5317 = vpop.f32.mrb[0].mxu0
  %v5318 = vadd.f32 %v4668, %v5317
  %v5319 = vpop.f32.mrb[0].mxu0
  %v5320 = vadd.f32 %v4664, %v5319
  %v5321 = vpop.f32.mrb[0].mxu0
  %v5322 = vadd.f32 %v4668, %v5321
  %5323 = vmatprep.mubr.bf16.mxu0 %v4592
  %5324 = vmatmul.mubr.bf16.gmra.mrb[0].mxu0 %v4591
  %v5325 = vpop.f32.mrb[0].mxu0
  %v5326 = vadd.f32 %v4664, %v5325
  %v5327 = vpop.f32.mrb[0].mxu0
  %v5328 = vadd.f32 %v4668, %v5327
  %v5329 = vpop.f32.mrb[0].mxu0
  %v5330 = vadd.f32 %v4664, %v5329
  %v5331 = vpop.f32.mrb[0].mxu0
  %v5332 = vadd.f32 %v4668, %v5331
  %5333 = vmatprep.mubr.bf16.mxu0 %v4594
  %5334 = vmatmul.mubr.bf16.gmra.mrb[0].mxu0 %v4593
  %v5335 = vpop.f32.mrb[0].mxu0
  %v5336 = vadd.f32 %v4664, %v5335
  %v5337 = vpop.f32.mrb[0].mxu0
  %v5338 = vadd.f32 %v4668, %v5337
  %v5339 = vpop.f32.mrb[0].mxu0
  %v5340 = vadd.f32 %v4664, %v5339
  %v5341 = vpop.f32.mrb[0].mxu0
  %v5342 = vadd.f32 %v4668, %v5341
  %5343 = vmatprep.mubr.bf16.mxu0 %v4596
  %5344 = vmatmul.mubr.bf16.gmra.mrb[0].mxu0 %v4595
  %v5345 = vpop.f32.mrb[0].mxu0
  %v5346 = vadd.f32 %v4664, %v5345
  %v5347 = vpop.f32.mrb[0].mxu0
  %v5348 = vadd.f32 %v4668, %v5347
  %v5349 = vpop.f32.mrb[0].mxu0
  %v5350 = vadd.f32 %v4664, %v5349
  %v5351 = vpop.f32.mrb[0].mxu0
  %v5352 = vadd.f32 %v4668, %v5351
  %5353 = vmatprep.mubr.bf16.mxu0 %v4598
  %5354 = vmatmul.mubr.bf16.gmra.mrb[0].mxu0 %v4597
  %v5355 = vpop.f32.mrb[0].mxu0
  %v5356 = vadd.f32 %v4664, %v5355
  %v5357 = vpop.f32.mrb[0].mxu0
  %v5358 = vadd.f32 %v4668, %v5357
  %v5359 = vpop.f32.mrb[0].mxu0
  %v5360 = vadd.f32 %v4664, %v5359
  %v5361 = vpop.f32.mrb[0].mxu0
  %v5362 = vadd.f32 %v4668, %v5361
  %5363 = vmatprep.mubr.bf16.mxu0 %v4600
  %5364 = vmatmul.mubr.bf16.gmra.mrb[0].mxu0 %v4599
  %v5365 = vpop.f32.mrb[0].mxu0
  %v5366 = vadd.f32 %v4664, %v5365
  %v5367 = vpop.f32.mrb[0].mxu0
  %v5368 = vadd.f32 %v4668, %v5367
  %v5369 = vpop.f32.mrb[0].mxu0
  %v5370 = vadd.f32 %v4664, %v5369
  %v5371 = vpop.f32.mrb[0].mxu0
  %v5372 = vadd.f32 %v4668, %v5371
  %5373 = vmatprep.mubr.bf16.mxu0 %v4602
  %5374 = vmatmul.mubr.bf16.gmra.mrb[0].mxu0 %v4601
  %v5375 = vpop.f32.mrb[0].mxu0
  %v5376 = vadd.f32 %v4664, %v5375
  %v5377 = vpop.f32.mrb[0].mxu0
  %v5378 = vadd.f32 %v4668, %v5377
  %v5379 = vpop.f32.mrb[0].mxu0
  %v5380 = vadd.f32 %v4664, %v5379
  %v5381 = vpop.f32.mrb[0].mxu0
  %v5382 = vadd.f32 %v4668, %v5381
  %5383 = vmatprep.mubr.bf16.mxu0 %v4604
  %5384 = vmatmul.mubr.bf16.gmra.mrb[0].mxu0 %v4603
  %v5385 = vpop.f32.mrb[0].mxu0
  %v5386 = vadd.f32 %v4664, %v5385
  %v5387 = vpop.f32.mrb[0].mxu0
  %v5388 = vadd.f32 %v4668, %v5387
  %v5389 = vpop.f32.mrb[0].mxu0
  %v5390 = vadd.f32 %v4664, %v5389
  %v5391 = vpop.f32.mrb[0].mxu0
  %v5392 = vadd.f32 %v4668, %v5391
  %5393 = vmatprep.mubr.bf16.mxu0 %v4606
  %5394 = vmatmul.mubr.bf16.gmra.mrb[0].mxu0 %v4605
  %v5395 = vpop.f32.mrb[0].mxu0
  %v5396 = vadd.f32 %v4664, %v5395
  %v5397 = vpop.f32.mrb[0].mxu0
  %v5398 = vadd.f32 %v4668, %v5397
  %v5399 = vpop.f32.mrb[0].mxu0
  %v5400 = vadd.f32 %v4664, %v5399
  %v5401 = vpop.f32.mrb[0].mxu0
  %v5402 = vadd.f32 %v4668, %v5401
  %5403 = vmatprep.mubr.bf16.mxu0 %v4608
  %5404 = vmatmul.mubr.bf16.gmra.mrb[0].mxu0 %v4607
  %v5405 = vpop.f32.mrb[0].mxu0
  %v5406 = vadd.f32 %v4664, %v5405
  %v5407 = vpop.f32.mrb[0].mxu0
  %v5408 = vadd.f32 %v4668, %v5407
  %v5409 = vpop.f32.mrb[0].mxu0
  %v5410 = vadd.f32 %v4664, %v5409
  %v5411 = vpop.f32.mrb[0].mxu0
  %v5412 = vadd.f32 %v4668, %v5411
  %5413 = vmatprep.mubr.bf16.mxu0 %v4610
  %5414 = vmatmul.mubr.bf16.gmra.mrb[0].mxu0 %v4609
  %v5415 = vpop.f32.mrb[0].mxu0
  %v5416 = vadd.f32 %v4664, %v5415
  %v5417 = vpop.f32.mrb[0].mxu0
  %v5418 = vadd.f32 %v4668, %v5417
  %v5419 = vpop.f32.mrb[0].mxu0
  %v5420 = vadd.f32 %v4664, %v5419
  %v5421 = vpop.f32.mrb[0].mxu0
  %v5422 = vadd.f32 %v4668, %v5421
  %5423 = vmatprep.mubr.bf16.mxu0 %v4612
  %5424 = vmatmul.mubr.bf16.gmra.mrb[0].mxu0 %v4611
  %v5425 = vpop.f32.mrb[0].mxu0
  %v5426 = vadd.f32 %v4664, %v5425
  %v5427 = vpop.f32.mrb[0].mxu0
  %v5428 = vadd.f32 %v4668, %v5427
  %v5429 = vpop.f32.mrb[0].mxu0
  %v5430 = vadd.f32 %v4664, %v5429
  %v5431 = vpop.f32.mrb[0].mxu0
  %v5432 = vadd.f32 %v4668, %v5431
  %5433 = vmatprep.mubr.bf16.mxu0 %v4614
  %5434 = vmatmul.mubr.bf16.gmra.mrb[0].mxu0 %v4613
  %v5435 = vpop.f32.mrb[0].mxu0
  %v5436 = vadd.f32 %v4664, %v5435
  %v5437 = vpop.f32.mrb[0].mxu0
  %v5438 = vadd.f32 %v4668, %v5437
  %v5439 = vpop.f32.mrb[0].mxu0
  %v5440 = vadd.f32 %v4664, %v5439
  %v5441 = vpop.f32.mrb[0].mxu0
  %v5442 = vadd.f32 %v4668, %v5441
  %5443 = vmatprep.mubr.bf16.mxu0 %v4616
  %5444 = vmatmul.mubr.bf16.gmra.mrb[0].mxu0 %v4615
  %v5445 = vpop.f32.mrb[0].mxu0
  %v5446 = vadd.f32 %v4664, %v5445
  %v5447 = vpop.f32.mrb[0].mxu0
  %v5448 = vadd.f32 %v4668, %v5447
  %v5449 = vpop.f32.mrb[0].mxu0
  %v5450 = vadd.f32 %v4664, %v5449
  %v5451 = vpop.f32.mrb[0].mxu0
  %v5452 = vadd.f32 %v4668, %v5451
  %5453 = vmatprep.mubr.bf16.mxu0 %v4618
  %5454 = vmatmul.mubr.bf16.gmra.mrb[0].mxu0 %v4617
  %v5455 = vpop.f32.mrb[0].mxu0
  %v5456 = vadd.f32 %v4664, %v5455
  %v5457 = vpop.f32.mrb[0].mxu0
  %v5458 = vadd.f32 %v4668, %v5457
  %v5459 = vpop.f32.mrb[0].mxu0
  %v5460 = vadd.f32 %v4664, %v5459
  %v5461 = vpop.f32.mrb[0].mxu0
  %v5462 = vadd.f32 %v4668, %v5461
  %5463 = vmatprep.mubr.bf16.mxu0 %v4620
  %5464 = vmatmul.mubr.bf16.gmra.mrb[0].mxu0 %v4619
  %v5465 = vpop.f32.mrb[0].mxu0
  %v5466 = vadd.f32 %v4664, %v5465
  %v5467 = vpop.f32.mrb[0].mxu0
  %v5468 = vadd.f32 %v4668, %v5467
  %v5469 = vpop.f32.mrb[0].mxu0
  %v5470 = vadd.f32 %v4664, %v5469
  %v5471 = vpop.f32.mrb[0].mxu0
  %v5472 = vadd.f32 %v4668, %v5471
  %5473 = vmatprep.mubr.bf16.mxu0 %v4622
  %5474 = vmatmul.mubr.bf16.gmra.mrb[0].mxu0 %v4621
  %v5475 = vpop.f32.mrb[0].mxu0
  %v5476 = vadd.f32 %v4664, %v5475
  %v5477 = vpop.f32.mrb[0].mxu0
  %v5478 = vadd.f32 %v4668, %v5477
  %v5479 = vpop.f32.mrb[0].mxu0
  %v5480 = vadd.f32 %v4664, %v5479
  %v5481 = vpop.f32.mrb[0].mxu0
  %v5482 = vadd.f32 %v4668, %v5481
  %5483 = vmatprep.mubr.bf16.mxu0 %v4624
  %5484 = vmatmul.mubr.bf16.gmra.mrb[0].mxu0 %v4623
  %v5485 = vpop.f32.mrb[0].mxu0
  %v5486 = vadd.f32 %v4664, %v5485
  %v5487 = vpop.f32.mrb[0].mxu0
  %v5488 = vadd.f32 %v4668, %v5487
  %v5489 = vpop.f32.mrb[0].mxu0
  %v5490 = vadd.f32 %v4664, %v5489
  %v5491 = vpop.f32.mrb[0].mxu0
  %v5492 = vadd.f32 %v4668, %v5491
  %5493 = vmatprep.mubr.bf16.mxu0 %v4626
  %5494 = vmatmul.mubr.bf16.gmra.mrb[0].mxu0 %v4625
  %v5495 = vpop.f32.mrb[0].mxu0
  %v5496 = vadd.f32 %v4664, %v5495
  %v5497 = vpop.f32.mrb[0].mxu0
  %v5498 = vadd.f32 %v4668, %v5497
  %v5499 = vpop.f32.mrb[0].mxu0
  %v5500 = vadd.f32 %v4664, %v5499
  %v5501 = vpop.f32.mrb[0].mxu0
  %v5502 = vadd.f32 %v4668, %v5501
  %5503 = vdwg.mxu0
  %v5504 = vmax.f32 %v4866, 0.0
  %v5505 = vmax.f32 %v4868, 0.0
  %v5506 = vmax.f32 %v4870, 0.0
  %v5507 = vmax.f32 %v4872, 0.0
  %v5508 = vmax.f32 %v4876, 0.0
  %v5509 = vmax.f32 %v4878, 0.0
  %v5510 = vmax.f32 %v4880, 0.0
  %v5511 = vmax.f32 %v4882, 0.0
  %v5512 = vmax.f32 %v4886, 0.0
  %v5513 = vmax.f32 %v4888, 0.0
  %v5514 = vmax.f32 %v4890, 0.0
  %v5515 = vmax.f32 %v4892, 0.0
  %v5516 = vmax.f32 %v4896, 0.0
  %v5517 = vmax.f32 %v4898, 0.0
  %v5518 = vmax.f32 %v4900, 0.0
  %v5519 = vmax.f32 %v4902, 0.0
  %v5520 = vmax.f32 %v4906, 0.0
  %v5521 = vmax.f32 %v4908, 0.0
  %v5522 = vmax.f32 %v4910, 0.0
  %v5523 = vmax.f32 %v4912, 0.0
  %v5524 = vmax.f32 %v4916, 0.0
  %v5525 = vmax.f32 %v4918, 0.0
  %v5526 = vmax.f32 %v4920, 0.0
  %v5527 = vmax.f32 %v4922, 0.0
  %v5528 = vmax.f32 %v4926, 0.0
  %v5529 = vmax.f32 %v4928, 0.0
  %v5530 = vmax.f32 %v4930, 0.0
  %v5531 = vmax.f32 %v4932, 0.0
  %v5532 = vmax.f32 %v4936, 0.0
  %v5533 = vmax.f32 %v4938, 0.0
  %v5534 = vmax.f32 %v4940, 0.0
  %v5535 = vmax.f32 %v4942, 0.0
  %v5536 = vmax.f32 %v4946, 0.0
  %v5537 = vmax.f32 %v4948, 0.0
  %v5538 = vmax.f32 %v4950, 0.0
  %v5539 = vmax.f32 %v4952, 0.0
  %v5540 = vmax.f32 %v4956, 0.0
  %v5541 = vmax.f32 %v4958, 0.0
  %v5542 = vmax.f32 %v4960, 0.0
  %v5543 = vmax.f32 %v4962, 0.0
  %v5544 = vmax.f32 %v4966, 0.0
  %v5545 = vmax.f32 %v4968, 0.0
  %v5546 = vmax.f32 %v4970, 0.0
  %v5547 = vmax.f32 %v4972, 0.0
  %v5548 = vmax.f32 %v4976, 0.0
  %v5549 = vmax.f32 %v4978, 0.0
  %v5550 = vmax.f32 %v4980, 0.0
  %v5551 = vmax.f32 %v4982, 0.0
  %v5552 = vmax.f32 %v4986, 0.0
  %v5553 = vmax.f32 %v4988, 0.0
  %v5554 = vmax.f32 %v4990, 0.0
  %v5555 = vmax.f32 %v4992, 0.0
  %v5556 = vmax.f32 %v4996, 0.0
  %v5557 = vmax.f32 %v4998, 0.0
  %v5558 = vmax.f32 %v5000, 0.0
  %v5559 = vmax.f32 %v5002, 0.0
  %v5560 = vmax.f32 %v5006, 0.0
  %v5561 = vmax.f32 %v5008, 0.0
  %v5562 = vmax.f32 %v5010, 0.0
  %v5563 = vmax.f32 %v5012, 0.0
  %v5564 = vmax.f32 %v5016, 0.0
  %v5565 = vmax.f32 %v5018, 0.0
  %v5566 = vmax.f32 %v5020, 0.0
  %v5567 = vmax.f32 %v5022, 0.0
  %v5568 = vmax.f32 %v5026, 0.0
  %v5569 = vmax.f32 %v5028, 0.0
  %v5570 = vmax.f32 %v5030, 0.0
  %v5571 = vmax.f32 %v5032, 0.0
  %v5572 = vmax.f32 %v5036, 0.0
  %v5573 = vmax.f32 %v5038, 0.0
  %v5574 = vmax.f32 %v5040, 0.0
  %v5575 = vmax.f32 %v5042, 0.0
  %v5576 = vmax.f32 %v5046, 0.0
  %v5577 = vmax.f32 %v5048, 0.0
  %v5578 = vmax.f32 %v5050, 0.0
  %v5579 = vmax.f32 %v5052, 0.0
  %v5580 = vmax.f32 %v5056, 0.0
  %v5581 = vmax.f32 %v5058, 0.0
  %v5582 = vmax.f32 %v5060, 0.0
  %v5583 = vmax.f32 %v5062, 0.0
  %v5584 = vmax.f32 %v5066, 0.0
  %v5585 = vmax.f32 %v5068, 0.0
  %v5586 = vmax.f32 %v5070, 0.0
  %v5587 = vmax.f32 %v5072, 0.0
  %v5588 = vmax.f32 %v5076, 0.0
  %v5589 = vmax.f32 %v5078, 0.0
  %v5590 = vmax.f32 %v5080, 0.0
  %v5591 = vmax.f32 %v5082, 0.0
  %v5592 = vmax.f32 %v5086, 0.0
  %v5593 = vmax.f32 %v5088, 0.0
  %v5594 = vmax.f32 %v5090, 0.0
  %v5595 = vmax.f32 %v5092, 0.0
  %v5596 = vmax.f32 %v5096, 0.0
  %v5597 = vmax.f32 %v5098, 0.0
  %v5598 = vmax.f32 %v5100, 0.0
  %v5599 = vmax.f32 %v5102, 0.0
  %v5600 = vmax.f32 %v5106, 0.0
  %v5601 = vmax.f32 %v5108, 0.0
  %v5602 = vmax.f32 %v5110, 0.0
  %v5603 = vmax.f32 %v5112, 0.0
  %v5604 = vmax.f32 %v5116, 0.0
  %v5605 = vmax.f32 %v5118, 0.0
  %v5606 = vmax.f32 %v5120, 0.0
  %v5607 = vmax.f32 %v5122, 0.0
  %v5608 = vmax.f32 %v5126, 0.0
  %v5609 = vmax.f32 %v5128, 0.0
  %v5610 = vmax.f32 %v5130, 0.0
  %v5611 = vmax.f32 %v5132, 0.0
  %v5612 = vmax.f32 %v5136, 0.0
  %v5613 = vmax.f32 %v5138, 0.0
  %v5614 = vmax.f32 %v5140, 0.0
  %v5615 = vmax.f32 %v5142, 0.0
  %v5616 = vmax.f32 %v5146, 0.0
  %v5617 = vmax.f32 %v5148, 0.0
  %v5618 = vmax.f32 %v5150, 0.0
  %v5619 = vmax.f32 %v5152, 0.0
  %v5620 = vmax.f32 %v5156, 0.0
  %v5621 = vmax.f32 %v5158, 0.0
  %v5622 = vmax.f32 %v5160, 0.0
  %v5623 = vmax.f32 %v5162, 0.0
  %v5624 = vmax.f32 %v5166, 0.0
  %v5625 = vmax.f32 %v5168, 0.0
  %v5626 = vmax.f32 %v5170, 0.0
  %v5627 = vmax.f32 %v5172, 0.0
  %v5628 = vmax.f32 %v5176, 0.0
  %v5629 = vmax.f32 %v5178, 0.0
  %v5630 = vmax.f32 %v5180, 0.0
  %v5631 = vmax.f32 %v5182, 0.0
  %v5632 = vmax.f32 %v5186, 0.0
  %v5633 = vmax.f32 %v5188, 0.0
  %v5634 = vmax.f32 %v5190, 0.0
  %v5635 = vmax.f32 %v5192, 0.0
  %v5636 = vmax.f32 %v5196, 0.0
  %v5637 = vmax.f32 %v5198, 0.0
  %v5638 = vmax.f32 %v5200, 0.0
  %v5639 = vmax.f32 %v5202, 0.0
  %v5640 = vmax.f32 %v5206, 0.0
  %v5641 = vmax.f32 %v5208, 0.0
  %v5642 = vmax.f32 %v5210, 0.0
  %v5643 = vmax.f32 %v5212, 0.0
  %v5644 = vmax.f32 %v5216, 0.0
  %v5645 = vmax.f32 %v5218, 0.0
  %v5646 = vmax.f32 %v5220, 0.0
  %v5647 = vmax.f32 %v5222, 0.0
  %v5648 = vmax.f32 %v5226, 0.0
  %v5649 = vmax.f32 %v5228, 0.0
  %v5650 = vmax.f32 %v5230, 0.0
  %v5651 = vmax.f32 %v5232, 0.0
  %v5652 = vmax.f32 %v5236, 0.0
  %v5653 = vmax.f32 %v5238, 0.0
  %v5654 = vmax.f32 %v5240, 0.0
  %v5655 = vmax.f32 %v5242, 0.0
  %v5656 = vmax.f32 %v5246, 0.0
  %v5657 = vmax.f32 %v5248, 0.0
  %v5658 = vmax.f32 %v5250, 0.0
  %v5659 = vmax.f32 %v5252, 0.0
  %v5660 = vmax.f32 %v5256, 0.0
  %v5661 = vmax.f32 %v5258, 0.0
  %v5662 = vmax.f32 %v5260, 0.0
  %v5663 = vmax.f32 %v5262, 0.0
  %v5664 = vmax.f32 %v5266, 0.0
  %v5665 = vmax.f32 %v5268, 0.0
  %v5666 = vmax.f32 %v5270, 0.0
  %v5667 = vmax.f32 %v5272, 0.0
  %v5668 = vmax.f32 %v5276, 0.0
  %v5669 = vmax.f32 %v5278, 0.0
  %v5670 = vmax.f32 %v5280, 0.0
  %v5671 = vmax.f32 %v5282, 0.0
  %v5672 = vmax.f32 %v5286, 0.0
  %v5673 = vmax.f32 %v5288, 0.0
  %v5674 = vmax.f32 %v5290, 0.0
  %v5675 = vmax.f32 %v5292, 0.0
  %v5676 = vmax.f32 %v5296, 0.0
  %v5677 = vmax.f32 %v5298, 0.0
  %v5678 = vmax.f32 %v5300, 0.0
  %v5679 = vmax.f32 %v5302, 0.0
  %v5680 = vmax.f32 %v5306, 0.0
  %v5681 = vmax.f32 %v5308, 0.0
  %v5682 = vmax.f32 %v5310, 0.0
  %v5683 = vmax.f32 %v5312, 0.0
  %v5684 = vmax.f32 %v5316, 0.0
  %v5685 = vmax.f32 %v5318, 0.0
  %v5686 = vmax.f32 %v5320, 0.0
  %v5687 = vmax.f32 %v5322, 0.0
  %v5688 = vmax.f32 %v5326, 0.0
  %v5689 = vmax.f32 %v5328, 0.0
  %v5690 = vmax.f32 %v5330, 0.0
  %v5691 = vmax.f32 %v5332, 0.0
  %v5692 = vmax.f32 %v5336, 0.0
  %v5693 = vmax.f32 %v5338, 0.0
  %v5694 = vmax.f32 %v5340, 0.0
  %v5695 = vmax.f32 %v5342, 0.0
  %v5696 = vmax.f32 %v5346, 0.0
  %v5697 = vmax.f32 %v5348, 0.0
  %v5698 = vmax.f32 %v5350, 0.0
  %v5699 = vmax.f32 %v5352, 0.0
  %v5700 = vmax.f32 %v5356, 0.0
  %v5701 = vmax.f32 %v5358, 0.0
  %v5702 = vmax.f32 %v5360, 0.0
  %v5703 = vmax.f32 %v5362, 0.0
  %v5704 = vmax.f32 %v5366, 0.0
  %v5705 = vmax.f32 %v5368, 0.0
  %v5706 = vmax.f32 %v5370, 0.0
  %v5707 = vmax.f32 %v5372, 0.0
  %v5708 = vmax.f32 %v5376, 0.0
  %v5709 = vmax.f32 %v5378, 0.0
  %v5710 = vmax.f32 %v5380, 0.0
  %v5711 = vmax.f32 %v5382, 0.0
  %v5712 = vmax.f32 %v5386, 0.0
  %v5713 = vmax.f32 %v5388, 0.0
  %v5714 = vmax.f32 %v5390, 0.0
  %v5715 = vmax.f32 %v5392, 0.0
  %v5716 = vmax.f32 %v5396, 0.0
  %v5717 = vmax.f32 %v5398, 0.0
  %v5718 = vmax.f32 %v5400, 0.0
  %v5719 = vmax.f32 %v5402, 0.0
  %v5720 = vmax.f32 %v5406, 0.0
  %v5721 = vmax.f32 %v5408, 0.0
  %v5722 = vmax.f32 %v5410, 0.0
  %v5723 = vmax.f32 %v5412, 0.0
  %v5724 = vmax.f32 %v5416, 0.0
  %v5725 = vmax.f32 %v5418, 0.0
  %v5726 = vmax.f32 %v5420, 0.0
  %v5727 = vmax.f32 %v5422, 0.0
  %v5728 = vmax.f32 %v5426, 0.0
  %v5729 = vmax.f32 %v5428, 0.0
  %v5730 = vmax.f32 %v5430, 0.0
  %v5731 = vmax.f32 %v5432, 0.0
  %v5732 = vmax.f32 %v5436, 0.0
  %v5733 = vmax.f32 %v5438, 0.0
  %v5734 = vmax.f32 %v5440, 0.0
  %v5735 = vmax.f32 %v5442, 0.0
  %v5736 = vmax.f32 %v5446, 0.0
  %v5737 = vmax.f32 %v5448, 0.0
  %v5738 = vmax.f32 %v5450, 0.0
  %v5739 = vmax.f32 %v5452, 0.0
  %v5740 = vmax.f32 %v5456, 0.0
  %v5741 = vmax.f32 %v5458, 0.0
  %v5742 = vmax.f32 %v5460, 0.0
  %v5743 = vmax.f32 %v5462, 0.0
  %v5744 = vmax.f32 %v5466, 0.0
  %v5745 = vmax.f32 %v5468, 0.0
  %v5746 = vmax.f32 %v5470, 0.0
  %v5747 = vmax.f32 %v5472, 0.0
  %v5748 = vmax.f32 %v5476, 0.0
  %v5749 = vmax.f32 %v5478, 0.0
  %v5750 = vmax.f32 %v5480, 0.0
  %v5751 = vmax.f32 %v5482, 0.0
  %v5752 = vmax.f32 %v5486, 0.0
  %v5753 = vmax.f32 %v5488, 0.0
  %v5754 = vmax.f32 %v5490, 0.0
  %v5755 = vmax.f32 %v5492, 0.0
  %v5756 = vmax.f32 %v5496, 0.0
  %v5757 = vmax.f32 %v5498, 0.0
  %v5758 = vmax.f32 %v5500, 0.0
  %v5759 = vmax.f32 %v5502, 0.0
  %v5760 = vpack.c.bf16 %v5506, %v5504
  %v5761 = vpack.c.bf16 %v5507, %v5505
  %v5762 = vpack.c.bf16 %v5510, %v5508
  %v5763 = vpack.c.bf16 %v5511, %v5509
  %v5764 = vpack.c.bf16 %v5514, %v5512
  %v5765 = vpack.c.bf16 %v5515, %v5513
  %v5766 = vpack.c.bf16 %v5518, %v5516
  %v5767 = vpack.c.bf16 %v5519, %v5517
  %v5768 = vpack.c.bf16 %v5522, %v5520
  %v5769 = vpack.c.bf16 %v5523, %v5521
  %v5770 = vpack.c.bf16 %v5526, %v5524
  %v5771 = vpack.c.bf16 %v5527, %v5525
  %v5772 = vpack.c.bf16 %v5530, %v5528
  %v5773 = vpack.c.bf16 %v5531, %v5529
  %v5774 = vpack.c.bf16 %v5534, %v5532
  %v5775 = vpack.c.bf16 %v5535, %v5533
  %v5776 = vpack.c.bf16 %v5538, %v5536
  %v5777 = vpack.c.bf16 %v5539, %v5537
  %v5778 = vpack.c.bf16 %v5542, %v5540
  %v5779 = vpack.c.bf16 %v5543, %v5541
  %v5780 = vpack.c.bf16 %v5546, %v5544
  %v5781 = vpack.c.bf16 %v5547, %v5545
  %v5782 = vpack.c.bf16 %v5550, %v5548
  %v5783 = vpack.c.bf16 %v5551, %v5549
  %v5784 = vpack.c.bf16 %v5554, %v5552
  %v5785 = vpack.c.bf16 %v5555, %v5553
  %v5786 = vpack.c.bf16 %v5558, %v5556
  %v5787 = vpack.c.bf16 %v5559, %v5557
  %v5788 = vpack.c.bf16 %v5562, %v5560
  %v5789 = vpack.c.bf16 %v5563, %v5561
  %v5790 = vpack.c.bf16 %v5566, %v5564
  %v5791 = vpack.c.bf16 %v5567, %v5565
  %v5792 = vpack.c.bf16 %v5570, %v5568
  %v5793 = vpack.c.bf16 %v5571, %v5569
  %v5794 = vpack.c.bf16 %v5574, %v5572
  %v5795 = vpack.c.bf16 %v5575, %v5573
  %v5796 = vpack.c.bf16 %v5578, %v5576
  %v5797 = vpack.c.bf16 %v5579, %v5577
  %v5798 = vpack.c.bf16 %v5582, %v5580
  %v5799 = vpack.c.bf16 %v5583, %v5581
  %v5800 = vpack.c.bf16 %v5586, %v5584
  %v5801 = vpack.c.bf16 %v5587, %v5585
  %v5802 = vpack.c.bf16 %v5590, %v5588
  %v5803 = vpack.c.bf16 %v5591, %v5589
  %v5804 = vpack.c.bf16 %v5594, %v5592
  %v5805 = vpack.c.bf16 %v5595, %v5593
  %v5806 = vpack.c.bf16 %v5598, %v5596
  %v5807 = vpack.c.bf16 %v5599, %v5597
  %v5808 = vpack.c.bf16 %v5602, %v5600
  %v5809 = vpack.c.bf16 %v5603, %v5601
  %v5810 = vpack.c.bf16 %v5606, %v5604
  %v5811 = vpack.c.bf16 %v5607, %v5605
  %v5812 = vpack.c.bf16 %v5610, %v5608
  %v5813 = vpack.c.bf16 %v5611, %v5609
  %v5814 = vpack.c.bf16 %v5614, %v5612
  %v5815 = vpack.c.bf16 %v5615, %v5613
  %v5816 = vpack.c.bf16 %v5618, %v5616
  %v5817 = vpack.c.bf16 %v5619, %v5617
  %v5818 = vpack.c.bf16 %v5622, %v5620
  %v5819 = vpack.c.bf16 %v5623, %v5621
  %v5820 = vpack.c.bf16 %v5626, %v5624
  %v5821 = vpack.c.bf16 %v5627, %v5625
  %v5822 = vpack.c.bf16 %v5630, %v5628
  %v5823 = vpack.c.bf16 %v5631, %v5629
  %v5824 = vpack.c.bf16 %v5634, %v5632
  %v5825 = vpack.c.bf16 %v5635, %v5633
  %v5826 = vpack.c.bf16 %v5638, %v5636
  %v5827 = vpack.c.bf16 %v5639, %v5637
  %v5828 = vpack.c.bf16 %v5642, %v5640
  %v5829 = vpack.c.bf16 %v5643, %v5641
  %v5830 = vpack.c.bf16 %v5646, %v5644
  %v5831 = vpack.c.bf16 %v5647, %v5645
  %v5832 = vpack.c.bf16 %v5650, %v5648
  %v5833 = vpack.c.bf16 %v5651, %v5649
  %v5834 = vpack.c.bf16 %v5654, %v5652
  %v5835 = vpack.c.bf16 %v5655, %v5653
  %v5836 = vpack.c.bf16 %v5658, %v5656
  %v5837 = vpack.c.bf16 %v5659, %v5657
  %v5838 = vpack.c.bf16 %v5662, %v5660
  %v5839 = vpack.c.bf16 %v5663, %v5661
  %v5840 = vpack.c.bf16 %v5666, %v5664
  %v5841 = vpack.c.bf16 %v5667, %v5665
  %v5842 = vpack.c.bf16 %v5670, %v5668
  %v5843 = vpack.c.bf16 %v5671, %v5669
  %v5844 = vpack.c.bf16 %v5674, %v5672
  %v5845 = vpack.c.bf16 %v5675, %v5673
  %v5846 = vpack.c.bf16 %v5678, %v5676
  %v5847 = vpack.c.bf16 %v5679, %v5677
  %v5848 = vpack.c.bf16 %v5682, %v5680
  %v5849 = vpack.c.bf16 %v5683, %v5681
  %v5850 = vpack.c.bf16 %v5686, %v5684
  %v5851 = vpack.c.bf16 %v5687, %v5685
  %v5852 = vpack.c.bf16 %v5690, %v5688
  %v5853 = vpack.c.bf16 %v5691, %v5689
  %v5854 = vpack.c.bf16 %v5694, %v5692
  %v5855 = vpack.c.bf16 %v5695, %v5693
  %v5856 = vpack.c.bf16 %v5698, %v5696
  %v5857 = vpack.c.bf16 %v5699, %v5697
  %v5858 = vpack.c.bf16 %v5702, %v5700
  %v5859 = vpack.c.bf16 %v5703, %v5701
  %v5860 = vpack.c.bf16 %v5706, %v5704
  %v5861 = vpack.c.bf16 %v5707, %v5705
  %v5862 = vpack.c.bf16 %v5710, %v5708
  %v5863 = vpack.c.bf16 %v5711, %v5709
  %v5864 = vpack.c.bf16 %v5714, %v5712
  %v5865 = vpack.c.bf16 %v5715, %v5713
  %v5866 = vpack.c.bf16 %v5718, %v5716
  %v5867 = vpack.c.bf16 %v5719, %v5717
  %v5868 = vpack.c.bf16 %v5722, %v5720
  %v5869 = vpack.c.bf16 %v5723, %v5721
  %v5870 = vpack.c.bf16 %v5726, %v5724
  %v5871 = vpack.c.bf16 %v5727, %v5725
  %v5872 = vpack.c.bf16 %v5730, %v5728
  %v5873 = vpack.c.bf16 %v5731, %v5729
  %v5874 = vpack.c.bf16 %v5734, %v5732
  %v5875 = vpack.c.bf16 %v5735, %v5733
  %v5876 = vpack.c.bf16 %v5738, %v5736
  %v5877 = vpack.c.bf16 %v5739, %v5737
  %v5878 = vpack.c.bf16 %v5742, %v5740
  %v5879 = vpack.c.bf16 %v5743, %v5741
  %v5880 = vpack.c.bf16 %v5746, %v5744
  %v5881 = vpack.c.bf16 %v5747, %v5745
  %v5882 = vpack.c.bf16 %v5750, %v5748
  %v5883 = vpack.c.bf16 %v5751, %v5749
  %v5884 = vpack.c.bf16 %v5754, %v5752
  %v5885 = vpack.c.bf16 %v5755, %v5753
  %v5886 = vpack.c.bf16 %v5758, %v5756
  %v5887 = vpack.c.bf16 %v5759, %v5757
  %v5888 = vld [vmem:[%s9] sm:$0xff]
  %v5889 = vld [vmem:[%s9 + $0x8] sm:$0xff]
  %v5890 = vld [vmem:[%s9 + $0x10] sm:$0xff]
  %v5891 = vld [vmem:[%s9 + $0x18] sm:$0xff]
  %v5892 = vld [vmem:[%s9 + $0x20] sm:$0xff]
  %v5893 = vld [vmem:[%s9 + $0x28] sm:$0xff]
  %v5894 = vld [vmem:[%s9 + $0x30] sm:$0xff]
  %v5895 = vld [vmem:[%s9 + $0x38] sm:$0xff]
  %v5896 = vld [vmem:[%s9 + $0x40] sm:$0xff]
  %v5897 = vld [vmem:[%s9 + $0x48] sm:$0xff]
  %v5898 = vld [vmem:[%s9 + $0x50] sm:$0xff]
  %v5899 = vld [vmem:[%s9 + $0x58] sm:$0xff]
  %v5900 = vld [vmem:[%s9 + $0x60] sm:$0xff]
  %v5901 = vld [vmem:[%s9 + $0x68] sm:$0xff]
  %v5902 = vld [vmem:[%s9 + $0x70] sm:$0xff]
  %v5903 = vld [vmem:[%s9 + $0x78] sm:$0xff]
  %v5904 = vld [vmem:[%s9 + $0x80] sm:$0xff]
  %v5905 = vld [vmem:[%s9 + $0x88] sm:$0xff]
  %v5906 = vld [vmem:[%s9 + $0x90] sm:$0xff]
  %v5907 = vld [vmem:[%s9 + $0x98] sm:$0xff]
  %v5908 = vld [vmem:[%s9 + $0xa0] sm:$0xff]
  %v5909 = vld [vmem:[%s9 + $0xa8] sm:$0xff]
  %v5910 = vld [vmem:[%s9 + $0xb0] sm:$0xff]
  %v5911 = vld [vmem:[%s9 + $0xb8] sm:$0xff]
  %v5912 = vld [vmem:[%s9 + $0xc0] sm:$0xff]
  %v5913 = vld [vmem:[%s9 + $0xc8] sm:$0xff]
  %v5914 = vld [vmem:[%s9 + $0xd0] sm:$0xff]
  %v5915 = vld [vmem:[%s9 + $0xd8] sm:$0xff]
  %v5916 = vld [vmem:[%s9 + $0xe0] sm:$0xff]
  %v5917 = vld [vmem:[%s9 + $0xe8] sm:$0xff]
  %v5918 = vld [vmem:[%s9 + $0xf0] sm:$0xff]
  %v5919 = vld [vmem:[%s9 + $0xf8] sm:$0xff]
  %v5920 = vld [vmem:[%s10] sm:$0x3]
  %v5922 = vlaneseq
  %v5923 = vshrl.u32 %v5922, 7
  %v5924 = vsub.s32 0, %v5923
  %v5925 = vrot.slane %v5920, %v5924
  %v5926 = vlaneseq
  %v5927 = vshrl.u32 %v5926, 7
  %v5928 = vsub.s32 1, %v5927
  %v5929 = vrot.slane %v5920, %v5928
  %v5964 = vunpack.c.l.b16 %v5888
  %v5965 = vunpack.c.h.b16 %v5888
  %v5966 = vunpack.c.l.b16 %v5889
  %v5967 = vunpack.c.h.b16 %v5889
  %v5968 = vunpack.c.l.b16 %v5890
  %v5969 = vunpack.c.h.b16 %v5890
  %v5970 = vunpack.c.l.b16 %v5891
  %v5971 = vunpack.c.h.b16 %v5891
  %v5972 = vunpack.c.l.b16 %v5892
  %v5973 = vunpack.c.h.b16 %v5892
  %v5974 = vunpack.c.l.b16 %v5893
  %v5975 = vunpack.c.h.b16 %v5893
  %v5976 = vunpack.c.l.b16 %v5894
  %v5977 = vunpack.c.h.b16 %v5894
  %v5978 = vunpack.c.l.b16 %v5895
  %v5979 = vunpack.c.h.b16 %v5895
  %v5980 = vunpack.c.l.b16 %v5896
  %v5981 = vunpack.c.h.b16 %v5896
  %v5982 = vunpack.c.l.b16 %v5897
  %v5983 = vunpack.c.h.b16 %v5897
  %v5984 = vunpack.c.l.b16 %v5898
  %v5985 = vunpack.c.h.b16 %v5898
  %v5986 = vunpack.c.l.b16 %v5899
  %v5987 = vunpack.c.h.b16 %v5899
  %v5988 = vunpack.c.l.b16 %v5900
  %v5989 = vunpack.c.h.b16 %v5900
  %v5990 = vunpack.c.l.b16 %v5901
  %v5991 = vunpack.c.h.b16 %v5901
  %v5992 = vunpack.c.l.b16 %v5902
  %v5993 = vunpack.c.h.b16 %v5902
  %v5994 = vunpack.c.l.b16 %v5903
  %v5995 = vunpack.c.h.b16 %v5903
  %v5996 = vunpack.c.l.b16 %v5904
  %v5997 = vunpack.c.h.b16 %v5904
  %v5998 = vunpack.c.l.b16 %v5905
  %v5999 = vunpack.c.h.b16 %v5905
  %v6000 = vunpack.c.l.b16 %v5906
  %v6001 = vunpack.c.h.b16 %v5906
  %v6002 = vunpack.c.l.b16 %v5907
  %v6003 = vunpack.c.h.b16 %v5907
  %v6004 = vunpack.c.l.b16 %v5908
  %v6005 = vunpack.c.h.b16 %v5908
  %v6006 = vunpack.c.l.b16 %v5909
  %v6007 = vunpack.c.h.b16 %v5909
  %v6008 = vunpack.c.l.b16 %v5910
  %v6009 = vunpack.c.h.b16 %v5910
  %v6010 = vunpack.c.l.b16 %v5911
  %v6011 = vunpack.c.h.b16 %v5911
  %v6012 = vunpack.c.l.b16 %v5912
  %v6013 = vunpack.c.h.b16 %v5912
  %v6014 = vunpack.c.l.b16 %v5913
  %v6015 = vunpack.c.h.b16 %v5913
  %v6016 = vunpack.c.l.b16 %v5914
  %v6017 = vunpack.c.h.b16 %v5914
  %v6018 = vunpack.c.l.b16 %v5915
  %v6019 = vunpack.c.h.b16 %v5915
  %v6020 = vunpack.c.l.b16 %v5916
  %v6021 = vunpack.c.h.b16 %v5916
  %v6022 = vunpack.c.l.b16 %v5917
  %v6023 = vunpack.c.h.b16 %v5917
  %v6024 = vunpack.c.l.b16 %v5918
  %v6025 = vunpack.c.h.b16 %v5918
  %v6026 = vunpack.c.l.b16 %v5919
  %v6027 = vunpack.c.h.b16 %v5919
  %v6028 = vpack.c.b16 %v5966, %v5964
  %v6029 = vpack.c.b16 %v5967, %v5965
  %v6030 = vpack.c.b16 %v5970, %v5968
  %v6031 = vpack.c.b16 %v5971, %v5969
  %v6032 = vpack.c.b16 %v5974, %v5972
  %v6033 = vpack.c.b16 %v5975, %v5973
  %v6034 = vpack.c.b16 %v5978, %v5976
  %v6035 = vpack.c.b16 %v5979, %v5977
  %v6036 = vpack.c.b16 %v5982, %v5980
  %v6037 = vpack.c.b16 %v5983, %v5981
  %v6038 = vpack.c.b16 %v5986, %v5984
  %v6039 = vpack.c.b16 %v5987, %v5985
  %v6040 = vpack.c.b16 %v5990, %v5988
  %v6041 = vpack.c.b16 %v5991, %v5989
  %v6042 = vpack.c.b16 %v5994, %v5992
  %v6043 = vpack.c.b16 %v5995, %v5993
  %v6044 = vpack.c.b16 %v5998, %v5996
  %v6045 = vpack.c.b16 %v5999, %v5997
  %v6046 = vpack.c.b16 %v6002, %v6000
  %v6047 = vpack.c.b16 %v6003, %v6001
  %v6048 = vpack.c.b16 %v6006, %v6004
  %v6049 = vpack.c.b16 %v6007, %v6005
  %v6050 = vpack.c.b16 %v6010, %v6008
  %v6051 = vpack.c.b16 %v6011, %v6009
  %v6052 = vpack.c.b16 %v6014, %v6012
  %v6053 = vpack.c.b16 %v6015, %v6013
  %v6054 = vpack.c.b16 %v6018, %v6016
  %v6055 = vpack.c.b16 %v6019, %v6017
  %v6056 = vpack.c.b16 %v6022, %v6020
  %v6057 = vpack.c.b16 %v6023, %v6021
  %v6058 = vpack.c.b16 %v6026, %v6024
  %v6059 = vpack.c.b16 %v6027, %v6025
  %6092 = vmatprep.subr.bf16.mxu0 %v6029
  %6093 = vmatpush1.bf16.msra.mxu0 %v6028
  %6094 = vmatprep.subr.bf16.mxu0 %v6031
  %6095 = vmatpush1.bf16.msra.mxu0 %v6030
  %6096 = vmatprep.subr.bf16.mxu0 %v6033
  %6097 = vmatpush1.bf16.msra.mxu0 %v6032
  %6098 = vmatprep.subr.bf16.mxu0 %v6035
  %6099 = vmatpush1.bf16.msra.mxu0 %v6034
  %6100 = vmatprep.subr.bf16.mxu0 %v6037
  %6101 = vmatpush1.bf16.msra.mxu0 %v6036
  %6102 = vmatprep.subr.bf16.mxu0 %v6039
  %6103 = vmatpush1.bf16.msra.mxu0 %v6038
  %6104 = vmatprep.subr.bf16.mxu0 %v6041
  %6105 = vmatpush1.bf16.msra.mxu0 %v6040
  %6106 = vmatprep.subr.bf16.mxu0 %v6043
  %6107 = vmatpush1.bf16.msra.mxu0 %v6042
  %6108 = vmatprep.subr.bf16.mxu0 %v6045
  %6109 = vmatpush1.bf16.msra.mxu0 %v6044
  %6110 = vmatprep.subr.bf16.mxu0 %v6047
  %6111 = vmatpush1.bf16.msra.mxu0 %v6046
  %6112 = vmatprep.subr.bf16.mxu0 %v6049
  %6113 = vmatpush1.bf16.msra.mxu0 %v6048
  %6114 = vmatprep.subr.bf16.mxu0 %v6051
  %6115 = vmatpush1.bf16.msra.mxu0 %v6050
  %6116 = vmatprep.subr.bf16.mxu0 %v6053
  %6117 = vmatpush1.bf16.msra.mxu0 %v6052
  %6118 = vmatprep.subr.bf16.mxu0 %v6055
  %6119 = vmatpush1.bf16.msra.mxu0 %v6054
  %6120 = vmatprep.subr.bf16.mxu0 %v6057
  %6121 = vmatpush1.bf16.msra.mxu0 %v6056
  %6122 = vmatprep.subr.bf16.mxu0 %v6059
  %6123 = vmatpush1.bf16.msra.mxu0 %v6058
  %6124 = vmatprep.mubr.bf16.mxu0 %v5761
  %6125 = vmatmul.mubr.bf16.gmra.mrb[0].mxu0 %v5760
  %v6126 = vpop.f32.mrb[0].mxu0
  %v6127 = vadd.f32 %v5925, %v6126
  %v6128 = vpop.f32.mrb[0].mxu0
  %v6129 = vadd.f32 %v5929, %v6128
  %v6130 = vpop.f32.mrb[0].mxu0
  %v6131 = vadd.f32 %v5925, %v6130
  %v6132 = vpop.f32.mrb[0].mxu0
  %v6133 = vadd.f32 %v5929, %v6132
  %6134 = vmatprep.mubr.bf16.mxu0 %v5763
  %6135 = vmatmul.mubr.bf16.gmra.mrb[0].mxu0 %v5762
  %v6136 = vpop.f32.mrb[0].mxu0
  %v6137 = vadd.f32 %v5925, %v6136
  %v6138 = vpop.f32.mrb[0].mxu0
  %v6139 = vadd.f32 %v5929, %v6138
  %v6140 = vpop.f32.mrb[0].mxu0
  %v6141 = vadd.f32 %v5925, %v6140
  %v6142 = vpop.f32.mrb[0].mxu0
  %v6143 = vadd.f32 %v5929, %v6142
  %6144 = vmatprep.mubr.bf16.mxu0 %v5765
  %6145 = vmatmul.mubr.bf16.gmra.mrb[0].mxu0 %v5764
  %v6146 = vpop.f32.mrb[0].mxu0
  %v6147 = vadd.f32 %v5925, %v6146
  %v6148 = vpop.f32.mrb[0].mxu0
  %v6149 = vadd.f32 %v5929, %v6148
  %v6150 = vpop.f32.mrb[0].mxu0
  %v6151 = vadd.f32 %v5925, %v6150
  %v6152 = vpop.f32.mrb[0].mxu0
  %v6153 = vadd.f32 %v5929, %v6152
  %6154 = vmatprep.mubr.bf16.mxu0 %v5767
  %6155 = vmatmul.mubr.bf16.gmra.mrb[0].mxu0 %v5766
  %v6156 = vpop.f32.mrb[0].mxu0
  %v6157 = vadd.f32 %v5925, %v6156
  %v6158 = vpop.f32.mrb[0].mxu0
  %v6159 = vadd.f32 %v5929, %v6158
  %v6160 = vpop.f32.mrb[0].mxu0
  %v6161 = vadd.f32 %v5925, %v6160
  %v6162 = vpop.f32.mrb[0].mxu0
  %v6163 = vadd.f32 %v5929, %v6162
  %6164 = vmatprep.mubr.bf16.mxu0 %v5769
  %6165 = vmatmul.mubr.bf16.gmra.mrb[0].mxu0 %v5768
  %v6166 = vpop.f32.mrb[0].mxu0
  %v6167 = vadd.f32 %v5925, %v6166
  %v6168 = vpop.f32.mrb[0].mxu0
  %v6169 = vadd.f32 %v5929, %v6168
  %v6170 = vpop.f32.mrb[0].mxu0
  %v6171 = vadd.f32 %v5925, %v6170
  %v6172 = vpop.f32.mrb[0].mxu0
  %v6173 = vadd.f32 %v5929, %v6172
  %6174 = vmatprep.mubr.bf16.mxu0 %v5771
  %6175 = vmatmul.mubr.bf16.gmra.mrb[0].mxu0 %v5770
  %v6176 = vpop.f32.mrb[0].mxu0
  %v6177 = vadd.f32 %v5925, %v6176
  %v6178 = vpop.f32.mrb[0].mxu0
  %v6179 = vadd.f32 %v5929, %v6178
  %v6180 = vpop.f32.mrb[0].mxu0
  %v6181 = vadd.f32 %v5925, %v6180
  %v6182 = vpop.f32.mrb[0].mxu0
  %v6183 = vadd.f32 %v5929, %v6182
  %6184 = vmatprep.mubr.bf16.mxu0 %v5773
  %6185 = vmatmul.mubr.bf16.gmra.mrb[0].mxu0 %v5772
  %v6186 = vpop.f32.mrb[0].mxu0
  %v6187 = vadd.f32 %v5925, %v6186
  %v6188 = vpop.f32.mrb[0].mxu0
  %v6189 = vadd.f32 %v5929, %v6188
  %v6190 = vpop.f32.mrb[0].mxu0
  %v6191 = vadd.f32 %v5925, %v6190
  %v6192 = vpop.f32.mrb[0].mxu0
  %v6193 = vadd.f32 %v5929, %v6192
  %6194 = vmatprep.mubr.bf16.mxu0 %v5775
  %6195 = vmatmul.mubr.bf16.gmra.mrb[0].mxu0 %v5774
  %v6196 = vpop.f32.mrb[0].mxu0
  %v6197 = vadd.f32 %v5925, %v6196
  %v6198 = vpop.f32.mrb[0].mxu0
  %v6199 = vadd.f32 %v5929, %v6198
  %v6200 = vpop.f32.mrb[0].mxu0
  %v6201 = vadd.f32 %v5925, %v6200
  %v6202 = vpop.f32.mrb[0].mxu0
  %v6203 = vadd.f32 %v5929, %v6202
  %6204 = vmatprep.mubr.bf16.mxu0 %v5777
  %6205 = vmatmul.mubr.bf16.gmra.mrb[0].mxu0 %v5776
  %v6206 = vpop.f32.mrb[0].mxu0
  %v6207 = vadd.f32 %v5925, %v6206
  %v6208 = vpop.f32.mrb[0].mxu0
  %v6209 = vadd.f32 %v5929, %v6208
  %v6210 = vpop.f32.mrb[0].mxu0
  %v6211 = vadd.f32 %v5925, %v6210
  %v6212 = vpop.f32.mrb[0].mxu0
  %v6213 = vadd.f32 %v5929, %v6212
  %6214 = vmatprep.mubr.bf16.mxu0 %v5779
  %6215 = vmatmul.mubr.bf16.gmra.mrb[0].mxu0 %v5778
  %v6216 = vpop.f32.mrb[0].mxu0
  %v6217 = vadd.f32 %v5925, %v6216
  %v6218 = vpop.f32.mrb[0].mxu0
  %v6219 = vadd.f32 %v5929, %v6218
  %v6220 = vpop.f32.mrb[0].mxu0
  %v6221 = vadd.f32 %v5925, %v6220
  %v6222 = vpop.f32.mrb[0].mxu0
  %v6223 = vadd.f32 %v5929, %v6222
  %6224 = vmatprep.mubr.bf16.mxu0 %v5781
  %6225 = vmatmul.mubr.bf16.gmra.mrb[0].mxu0 %v5780
  %v6226 = vpop.f32.mrb[0].mxu0
  %v6227 = vadd.f32 %v5925, %v6226
  %v6228 = vpop.f32.mrb[0].mxu0
  %v6229 = vadd.f32 %v5929, %v6228
  %v6230 = vpop.f32.mrb[0].mxu0
  %v6231 = vadd.f32 %v5925, %v6230
  %v6232 = vpop.f32.mrb[0].mxu0
  %v6233 = vadd.f32 %v5929, %v6232
  %6234 = vmatprep.mubr.bf16.mxu0 %v5783
  %6235 = vmatmul.mubr.bf16.gmra.mrb[0].mxu0 %v5782
  %v6236 = vpop.f32.mrb[0].mxu0
  %v6237 = vadd.f32 %v5925, %v6236
  %v6238 = vpop.f32.mrb[0].mxu0
  %v6239 = vadd.f32 %v5929, %v6238
  %v6240 = vpop.f32.mrb[0].mxu0
  %v6241 = vadd.f32 %v5925, %v6240
  %v6242 = vpop.f32.mrb[0].mxu0
  %v6243 = vadd.f32 %v5929, %v6242
  %6244 = vmatprep.mubr.bf16.mxu0 %v5785
  %6245 = vmatmul.mubr.bf16.gmra.mrb[0].mxu0 %v5784
  %v6246 = vpop.f32.mrb[0].mxu0
  %v6247 = vadd.f32 %v5925, %v6246
  %v6248 = vpop.f32.mrb[0].mxu0
  %v6249 = vadd.f32 %v5929, %v6248
  %v6250 = vpop.f32.mrb[0].mxu0
  %v6251 = vadd.f32 %v5925, %v6250
  %v6252 = vpop.f32.mrb[0].mxu0
  %v6253 = vadd.f32 %v5929, %v6252
  %6254 = vmatprep.mubr.bf16.mxu0 %v5787
  %6255 = vmatmul.mubr.bf16.gmra.mrb[0].mxu0 %v5786
  %v6256 = vpop.f32.mrb[0].mxu0
  %v6257 = vadd.f32 %v5925, %v6256
  %v6258 = vpop.f32.mrb[0].mxu0
  %v6259 = vadd.f32 %v5929, %v6258
  %v6260 = vpop.f32.mrb[0].mxu0
  %v6261 = vadd.f32 %v5925, %v6260
  %v6262 = vpop.f32.mrb[0].mxu0
  %v6263 = vadd.f32 %v5929, %v6262
  %6264 = vmatprep.mubr.bf16.mxu0 %v5789
  %6265 = vmatmul.mubr.bf16.gmra.mrb[0].mxu0 %v5788
  %v6266 = vpop.f32.mrb[0].mxu0
  %v6267 = vadd.f32 %v5925, %v6266
  %v6268 = vpop.f32.mrb[0].mxu0
  %v6269 = vadd.f32 %v5929, %v6268
  %v6270 = vpop.f32.mrb[0].mxu0
  %v6271 = vadd.f32 %v5925, %v6270
  %v6272 = vpop.f32.mrb[0].mxu0
  %v6273 = vadd.f32 %v5929, %v6272
  %6274 = vmatprep.mubr.bf16.mxu0 %v5791
  %6275 = vmatmul.mubr.bf16.gmra.mrb[0].mxu0 %v5790
  %v6276 = vpop.f32.mrb[0].mxu0
  %v6277 = vadd.f32 %v5925, %v6276
  %v6278 = vpop.f32.mrb[0].mxu0
  %v6279 = vadd.f32 %v5929, %v6278
  %v6280 = vpop.f32.mrb[0].mxu0
  %v6281 = vadd.f32 %v5925, %v6280
  %v6282 = vpop.f32.mrb[0].mxu0
  %v6283 = vadd.f32 %v5929, %v6282
  %6284 = vmatprep.mubr.bf16.mxu0 %v5793
  %6285 = vmatmul.mubr.bf16.gmra.mrb[0].mxu0 %v5792
  %v6286 = vpop.f32.mrb[0].mxu0
  %v6287 = vadd.f32 %v5925, %v6286
  %v6288 = vpop.f32.mrb[0].mxu0
  %v6289 = vadd.f32 %v5929, %v6288
  %v6290 = vpop.f32.mrb[0].mxu0
  %v6291 = vadd.f32 %v5925, %v6290
  %v6292 = vpop.f32.mrb[0].mxu0
  %v6293 = vadd.f32 %v5929, %v6292
  %6294 = vmatprep.mubr.bf16.mxu0 %v5795
  %6295 = vmatmul.mubr.bf16.gmra.mrb[0].mxu0 %v5794
  %v6296 = vpop.f32.mrb[0].mxu0
  %v6297 = vadd.f32 %v5925, %v6296
  %v6298 = vpop.f32.mrb[0].mxu0
  %v6299 = vadd.f32 %v5929, %v6298
  %v6300 = vpop.f32.mrb[0].mxu0
  %v6301 = vadd.f32 %v5925, %v6300
  %v6302 = vpop.f32.mrb[0].mxu0
  %v6303 = vadd.f32 %v5929, %v6302
  %6304 = vmatprep.mubr.bf16.mxu0 %v5797
  %6305 = vmatmul.mubr.bf16.gmra.mrb[0].mxu0 %v5796
  %v6306 = vpop.f32.mrb[0].mxu0
  %v6307 = vadd.f32 %v5925, %v6306
  %v6308 = vpop.f32.mrb[0].mxu0
  %v6309 = vadd.f32 %v5929, %v6308
  %v6310 = vpop.f32.mrb[0].mxu0
  %v6311 = vadd.f32 %v5925, %v6310
  %v6312 = vpop.f32.mrb[0].mxu0
  %v6313 = vadd.f32 %v5929, %v6312
  %6314 = vmatprep.mubr.bf16.mxu0 %v5799
  %6315 = vmatmul.mubr.bf16.gmra.mrb[0].mxu0 %v5798
  %v6316 = vpop.f32.mrb[0].mxu0
  %v6317 = vadd.f32 %v5925, %v6316
  %v6318 = vpop.f32.mrb[0].mxu0
  %v6319 = vadd.f32 %v5929, %v6318
  %v6320 = vpop.f32.mrb[0].mxu0
  %v6321 = vadd.f32 %v5925, %v6320
  %v6322 = vpop.f32.mrb[0].mxu0
  %v6323 = vadd.f32 %v5929, %v6322
  %6324 = vmatprep.mubr.bf16.mxu0 %v5801
  %6325 = vmatmul.mubr.bf16.gmra.mrb[0].mxu0 %v5800
  %v6326 = vpop.f32.mrb[0].mxu0
  %v6327 = vadd.f32 %v5925, %v6326
  %v6328 = vpop.f32.mrb[0].mxu0
  %v6329 = vadd.f32 %v5929, %v6328
  %v6330 = vpop.f32.mrb[0].mxu0
  %v6331 = vadd.f32 %v5925, %v6330
  %v6332 = vpop.f32.mrb[0].mxu0
  %v6333 = vadd.f32 %v5929, %v6332
  %6334 = vmatprep.mubr.bf16.mxu0 %v5803
  %6335 = vmatmul.mubr.bf16.gmra.mrb[0].mxu0 %v5802
  %v6336 = vpop.f32.mrb[0].mxu0
  %v6337 = vadd.f32 %v5925, %v6336
  %v6338 = vpop.f32.mrb[0].mxu0
  %v6339 = vadd.f32 %v5929, %v6338
  %v6340 = vpop.f32.mrb[0].mxu0
  %v6341 = vadd.f32 %v5925, %v6340
  %v6342 = vpop.f32.mrb[0].mxu0
  %v6343 = vadd.f32 %v5929, %v6342
  %6344 = vmatprep.mubr.bf16.mxu0 %v5805
  %6345 = vmatmul.mubr.bf16.gmra.mrb[0].mxu0 %v5804
  %v6346 = vpop.f32.mrb[0].mxu0
  %v6347 = vadd.f32 %v5925, %v6346
  %v6348 = vpop.f32.mrb[0].mxu0
  %v6349 = vadd.f32 %v5929, %v6348
  %v6350 = vpop.f32.mrb[0].mxu0
  %v6351 = vadd.f32 %v5925, %v6350
  %v6352 = vpop.f32.mrb[0].mxu0
  %v6353 = vadd.f32 %v5929, %v6352
  %6354 = vmatprep.mubr.bf16.mxu0 %v5807
  %6355 = vmatmul.mubr.bf16.gmra.mrb[0].mxu0 %v5806
  %v6356 = vpop.f32.mrb[0].mxu0
  %v6357 = vadd.f32 %v5925, %v6356
  %v6358 = vpop.f32.mrb[0].mxu0
  %v6359 = vadd.f32 %v5929, %v6358
  %v6360 = vpop.f32.mrb[0].mxu0
  %v6361 = vadd.f32 %v5925, %v6360
  %v6362 = vpop.f32.mrb[0].mxu0
  %v6363 = vadd.f32 %v5929, %v6362
  %6364 = vmatprep.mubr.bf16.mxu0 %v5809
  %6365 = vmatmul.mubr.bf16.gmra.mrb[0].mxu0 %v5808
  %v6366 = vpop.f32.mrb[0].mxu0
  %v6367 = vadd.f32 %v5925, %v6366
  %v6368 = vpop.f32.mrb[0].mxu0
  %v6369 = vadd.f32 %v5929, %v6368
  %v6370 = vpop.f32.mrb[0].mxu0
  %v6371 = vadd.f32 %v5925, %v6370
  %v6372 = vpop.f32.mrb[0].mxu0
  %v6373 = vadd.f32 %v5929, %v6372
  %6374 = vmatprep.mubr.bf16.mxu0 %v5811
  %6375 = vmatmul.mubr.bf16.gmra.mrb[0].mxu0 %v5810
  %v6376 = vpop.f32.mrb[0].mxu0
  %v6377 = vadd.f32 %v5925, %v6376
  %v6378 = vpop.f32.mrb[0].mxu0
  %v6379 = vadd.f32 %v5929, %v6378
  %v6380 = vpop.f32.mrb[0].mxu0
  %v6381 = vadd.f32 %v5925, %v6380
  %v6382 = vpop.f32.mrb[0].mxu0
  %v6383 = vadd.f32 %v5929, %v6382
  %6384 = vmatprep.mubr.bf16.mxu0 %v5813
  %6385 = vmatmul.mubr.bf16.gmra.mrb[0].mxu0 %v5812
  %v6386 = vpop.f32.mrb[0].mxu0
  %v6387 = vadd.f32 %v5925, %v6386
  %v6388 = vpop.f32.mrb[0].mxu0
  %v6389 = vadd.f32 %v5929, %v6388
  %v6390 = vpop.f32.mrb[0].mxu0
  %v6391 = vadd.f32 %v5925, %v6390
  %v6392 = vpop.f32.mrb[0].mxu0
  %v6393 = vadd.f32 %v5929, %v6392
  %6394 = vmatprep.mubr.bf16.mxu0 %v5815
  %6395 = vmatmul.mubr.bf16.gmra.mrb[0].mxu0 %v5814
  %v6396 = vpop.f32.mrb[0].mxu0
  %v6397 = vadd.f32 %v5925, %v6396
  %v6398 = vpop.f32.mrb[0].mxu0
  %v6399 = vadd.f32 %v5929, %v6398
  %v6400 = vpop.f32.mrb[0].mxu0
  %v6401 = vadd.f32 %v5925, %v6400
  %v6402 = vpop.f32.mrb[0].mxu0
  %v6403 = vadd.f32 %v5929, %v6402
  %6404 = vmatprep.mubr.bf16.mxu0 %v5817
  %6405 = vmatmul.mubr.bf16.gmra.mrb[0].mxu0 %v5816
  %v6406 = vpop.f32.mrb[0].mxu0
  %v6407 = vadd.f32 %v5925, %v6406
  %v6408 = vpop.f32.mrb[0].mxu0
  %v6409 = vadd.f32 %v5929, %v6408
  %v6410 = vpop.f32.mrb[0].mxu0
  %v6411 = vadd.f32 %v5925, %v6410
  %v6412 = vpop.f32.mrb[0].mxu0
  %v6413 = vadd.f32 %v5929, %v6412
  %6414 = vmatprep.mubr.bf16.mxu0 %v5819
  %6415 = vmatmul.mubr.bf16.gmra.mrb[0].mxu0 %v5818
  %v6416 = vpop.f32.mrb[0].mxu0
  %v6417 = vadd.f32 %v5925, %v6416
  %v6418 = vpop.f32.mrb[0].mxu0
  %v6419 = vadd.f32 %v5929, %v6418
  %v6420 = vpop.f32.mrb[0].mxu0
  %v6421 = vadd.f32 %v5925, %v6420
  %v6422 = vpop.f32.mrb[0].mxu0
  %v6423 = vadd.f32 %v5929, %v6422
  %6424 = vmatprep.mubr.bf16.mxu0 %v5821
  %6425 = vmatmul.mubr.bf16.gmra.mrb[0].mxu0 %v5820
  %v6426 = vpop.f32.mrb[0].mxu0
  %v6427 = vadd.f32 %v5925, %v6426
  %v6428 = vpop.f32.mrb[0].mxu0
  %v6429 = vadd.f32 %v5929, %v6428
  %v6430 = vpop.f32.mrb[0].mxu0
  %v6431 = vadd.f32 %v5925, %v6430
  %v6432 = vpop.f32.mrb[0].mxu0
  %v6433 = vadd.f32 %v5929, %v6432
  %6434 = vmatprep.mubr.bf16.mxu0 %v5823
  %6435 = vmatmul.mubr.bf16.gmra.mrb[0].mxu0 %v5822
  %v6436 = vpop.f32.mrb[0].mxu0
  %v6437 = vadd.f32 %v5925, %v6436
  %v6438 = vpop.f32.mrb[0].mxu0
  %v6439 = vadd.f32 %v5929, %v6438
  %v6440 = vpop.f32.mrb[0].mxu0
  %v6441 = vadd.f32 %v5925, %v6440
  %v6442 = vpop.f32.mrb[0].mxu0
  %v6443 = vadd.f32 %v5929, %v6442
  %6444 = vmatprep.mubr.bf16.mxu0 %v5825
  %6445 = vmatmul.mubr.bf16.gmra.mrb[0].mxu0 %v5824
  %v6446 = vpop.f32.mrb[0].mxu0
  %v6447 = vadd.f32 %v5925, %v6446
  %v6448 = vpop.f32.mrb[0].mxu0
  %v6449 = vadd.f32 %v5929, %v6448
  %v6450 = vpop.f32.mrb[0].mxu0
  %v6451 = vadd.f32 %v5925, %v6450
  %v6452 = vpop.f32.mrb[0].mxu0
  %v6453 = vadd.f32 %v5929, %v6452
  %6454 = vmatprep.mubr.bf16.mxu0 %v5827
  %6455 = vmatmul.mubr.bf16.gmra.mrb[0].mxu0 %v5826
  %v6456 = vpop.f32.mrb[0].mxu0
  %v6457 = vadd.f32 %v5925, %v6456
  %v6458 = vpop.f32.mrb[0].mxu0
  %v6459 = vadd.f32 %v5929, %v6458
  %v6460 = vpop.f32.mrb[0].mxu0
  %v6461 = vadd.f32 %v5925, %v6460
  %v6462 = vpop.f32.mrb[0].mxu0
  %v6463 = vadd.f32 %v5929, %v6462
  %6464 = vmatprep.mubr.bf16.mxu0 %v5829
  %6465 = vmatmul.mubr.bf16.gmra.mrb[0].mxu0 %v5828
  %v6466 = vpop.f32.mrb[0].mxu0
  %v6467 = vadd.f32 %v5925, %v6466
  %v6468 = vpop.f32.mrb[0].mxu0
  %v6469 = vadd.f32 %v5929, %v6468
  %v6470 = vpop.f32.mrb[0].mxu0
  %v6471 = vadd.f32 %v5925, %v6470
  %v6472 = vpop.f32.mrb[0].mxu0
  %v6473 = vadd.f32 %v5929, %v6472
  %6474 = vmatprep.mubr.bf16.mxu0 %v5831
  %6475 = vmatmul.mubr.bf16.gmra.mrb[0].mxu0 %v5830
  %v6476 = vpop.f32.mrb[0].mxu0
  %v6477 = vadd.f32 %v5925, %v6476
  %v6478 = vpop.f32.mrb[0].mxu0
  %v6479 = vadd.f32 %v5929, %v6478
  %v6480 = vpop.f32.mrb[0].mxu0
  %v6481 = vadd.f32 %v5925, %v6480
  %v6482 = vpop.f32.mrb[0].mxu0
  %v6483 = vadd.f32 %v5929, %v6482
  %6484 = vmatprep.mubr.bf16.mxu0 %v5833
  %6485 = vmatmul.mubr.bf16.gmra.mrb[0].mxu0 %v5832
  %v6486 = vpop.f32.mrb[0].mxu0
  %v6487 = vadd.f32 %v5925, %v6486
  %v6488 = vpop.f32.mrb[0].mxu0
  %v6489 = vadd.f32 %v5929, %v6488
  %v6490 = vpop.f32.mrb[0].mxu0
  %v6491 = vadd.f32 %v5925, %v6490
  %v6492 = vpop.f32.mrb[0].mxu0
  %v6493 = vadd.f32 %v5929, %v6492
  %6494 = vmatprep.mubr.bf16.mxu0 %v5835
  %6495 = vmatmul.mubr.bf16.gmra.mrb[0].mxu0 %v5834
  %v6496 = vpop.f32.mrb[0].mxu0
  %v6497 = vadd.f32 %v5925, %v6496
  %v6498 = vpop.f32.mrb[0].mxu0
  %v6499 = vadd.f32 %v5929, %v6498
  %v6500 = vpop.f32.mrb[0].mxu0
  %v6501 = vadd.f32 %v5925, %v6500
  %v6502 = vpop.f32.mrb[0].mxu0
  %v6503 = vadd.f32 %v5929, %v6502
  %6504 = vmatprep.mubr.bf16.mxu0 %v5837
  %6505 = vmatmul.mubr.bf16.gmra.mrb[0].mxu0 %v5836
  %v6506 = vpop.f32.mrb[0].mxu0
  %v6507 = vadd.f32 %v5925, %v6506
  %v6508 = vpop.f32.mrb[0].mxu0
  %v6509 = vadd.f32 %v5929, %v6508
  %v6510 = vpop.f32.mrb[0].mxu0
  %v6511 = vadd.f32 %v5925, %v6510
  %v6512 = vpop.f32.mrb[0].mxu0
  %v6513 = vadd.f32 %v5929, %v6512
  %6514 = vmatprep.mubr.bf16.mxu0 %v5839
  %6515 = vmatmul.mubr.bf16.gmra.mrb[0].mxu0 %v5838
  %v6516 = vpop.f32.mrb[0].mxu0
  %v6517 = vadd.f32 %v5925, %v6516
  %v6518 = vpop.f32.mrb[0].mxu0
  %v6519 = vadd.f32 %v5929, %v6518
  %v6520 = vpop.f32.mrb[0].mxu0
  %v6521 = vadd.f32 %v5925, %v6520
  %v6522 = vpop.f32.mrb[0].mxu0
  %v6523 = vadd.f32 %v5929, %v6522
  %6524 = vmatprep.mubr.bf16.mxu0 %v5841
  %6525 = vmatmul.mubr.bf16.gmra.mrb[0].mxu0 %v5840
  %v6526 = vpop.f32.mrb[0].mxu0
  %v6527 = vadd.f32 %v5925, %v6526
  %v6528 = vpop.f32.mrb[0].mxu0
  %v6529 = vadd.f32 %v5929, %v6528
  %v6530 = vpop.f32.mrb[0].mxu0
  %v6531 = vadd.f32 %v5925, %v6530
  %v6532 = vpop.f32.mrb[0].mxu0
  %v6533 = vadd.f32 %v5929, %v6532
  %6534 = vmatprep.mubr.bf16.mxu0 %v5843
  %6535 = vmatmul.mubr.bf16.gmra.mrb[0].mxu0 %v5842
  %v6536 = vpop.f32.mrb[0].mxu0
  %v6537 = vadd.f32 %v5925, %v6536
  %v6538 = vpop.f32.mrb[0].mxu0
  %v6539 = vadd.f32 %v5929, %v6538
  %v6540 = vpop.f32.mrb[0].mxu0
  %v6541 = vadd.f32 %v5925, %v6540
  %v6542 = vpop.f32.mrb[0].mxu0
  %v6543 = vadd.f32 %v5929, %v6542
  %6544 = vmatprep.mubr.bf16.mxu0 %v5845
  %6545 = vmatmul.mubr.bf16.gmra.mrb[0].mxu0 %v5844
  %v6546 = vpop.f32.mrb[0].mxu0
  %v6547 = vadd.f32 %v5925, %v6546
  %v6548 = vpop.f32.mrb[0].mxu0
  %v6549 = vadd.f32 %v5929, %v6548
  %v6550 = vpop.f32.mrb[0].mxu0
  %v6551 = vadd.f32 %v5925, %v6550
  %v6552 = vpop.f32.mrb[0].mxu0
  %v6553 = vadd.f32 %v5929, %v6552
  %6554 = vmatprep.mubr.bf16.mxu0 %v5847
  %6555 = vmatmul.mubr.bf16.gmra.mrb[0].mxu0 %v5846
  %v6556 = vpop.f32.mrb[0].mxu0
  %v6557 = vadd.f32 %v5925, %v6556
  %v6558 = vpop.f32.mrb[0].mxu0
  %v6559 = vadd.f32 %v5929, %v6558
  %v6560 = vpop.f32.mrb[0].mxu0
  %v6561 = vadd.f32 %v5925, %v6560
  %v6562 = vpop.f32.mrb[0].mxu0
  %v6563 = vadd.f32 %v5929, %v6562
  %6564 = vmatprep.mubr.bf16.mxu0 %v5849
  %6565 = vmatmul.mubr.bf16.gmra.mrb[0].mxu0 %v5848
  %v6566 = vpop.f32.mrb[0].mxu0
  %v6567 = vadd.f32 %v5925, %v6566
  %v6568 = vpop.f32.mrb[0].mxu0
  %v6569 = vadd.f32 %v5929, %v6568
  %v6570 = vpop.f32.mrb[0].mxu0
  %v6571 = vadd.f32 %v5925, %v6570
  %v6572 = vpop.f32.mrb[0].mxu0
  %v6573 = vadd.f32 %v5929, %v6572
  %6574 = vmatprep.mubr.bf16.mxu0 %v5851
  %6575 = vmatmul.mubr.bf16.gmra.mrb[0].mxu0 %v5850
  %v6576 = vpop.f32.mrb[0].mxu0
  %v6577 = vadd.f32 %v5925, %v6576
  %v6578 = vpop.f32.mrb[0].mxu0
  %v6579 = vadd.f32 %v5929, %v6578
  %v6580 = vpop.f32.mrb[0].mxu0
  %v6581 = vadd.f32 %v5925, %v6580
  %v6582 = vpop.f32.mrb[0].mxu0
  %v6583 = vadd.f32 %v5929, %v6582
  %6584 = vmatprep.mubr.bf16.mxu0 %v5853
  %6585 = vmatmul.mubr.bf16.gmra.mrb[0].mxu0 %v5852
  %v6586 = vpop.f32.mrb[0].mxu0
  %v6587 = vadd.f32 %v5925, %v6586
  %v6588 = vpop.f32.mrb[0].mxu0
  %v6589 = vadd.f32 %v5929, %v6588
  %v6590 = vpop.f32.mrb[0].mxu0
  %v6591 = vadd.f32 %v5925, %v6590
  %v6592 = vpop.f32.mrb[0].mxu0
  %v6593 = vadd.f32 %v5929, %v6592
  %6594 = vmatprep.mubr.bf16.mxu0 %v5855
  %6595 = vmatmul.mubr.bf16.gmra.mrb[0].mxu0 %v5854
  %v6596 = vpop.f32.mrb[0].mxu0
  %v6597 = vadd.f32 %v5925, %v6596
  %v6598 = vpop.f32.mrb[0].mxu0
  %v6599 = vadd.f32 %v5929, %v6598
  %v6600 = vpop.f32.mrb[0].mxu0
  %v6601 = vadd.f32 %v5925, %v6600
  %v6602 = vpop.f32.mrb[0].mxu0
  %v6603 = vadd.f32 %v5929, %v6602
  %6604 = vmatprep.mubr.bf16.mxu0 %v5857
  %6605 = vmatmul.mubr.bf16.gmra.mrb[0].mxu0 %v5856
  %v6606 = vpop.f32.mrb[0].mxu0
  %v6607 = vadd.f32 %v5925, %v6606
  %v6608 = vpop.f32.mrb[0].mxu0
  %v6609 = vadd.f32 %v5929, %v6608
  %v6610 = vpop.f32.mrb[0].mxu0
  %v6611 = vadd.f32 %v5925, %v6610
  %v6612 = vpop.f32.mrb[0].mxu0
  %v6613 = vadd.f32 %v5929, %v6612
  %6614 = vmatprep.mubr.bf16.mxu0 %v5859
  %6615 = vmatmul.mubr.bf16.gmra.mrb[0].mxu0 %v5858
  %v6616 = vpop.f32.mrb[0].mxu0
  %v6617 = vadd.f32 %v5925, %v6616
  %v6618 = vpop.f32.mrb[0].mxu0
  %v6619 = vadd.f32 %v5929, %v6618
  %v6620 = vpop.f32.mrb[0].mxu0
  %v6621 = vadd.f32 %v5925, %v6620
  %v6622 = vpop.f32.mrb[0].mxu0
  %v6623 = vadd.f32 %v5929, %v6622
  %6624 = vmatprep.mubr.bf16.mxu0 %v5861
  %6625 = vmatmul.mubr.bf16.gmra.mrb[0].mxu0 %v5860
  %v6626 = vpop.f32.mrb[0].mxu0
  %v6627 = vadd.f32 %v5925, %v6626
  %v6628 = vpop.f32.mrb[0].mxu0
  %v6629 = vadd.f32 %v5929, %v6628
  %v6630 = vpop.f32.mrb[0].mxu0
  %v6631 = vadd.f32 %v5925, %v6630
  %v6632 = vpop.f32.mrb[0].mxu0
  %v6633 = vadd.f32 %v5929, %v6632
  %6634 = vmatprep.mubr.bf16.mxu0 %v5863
  %6635 = vmatmul.mubr.bf16.gmra.mrb[0].mxu0 %v5862
  %v6636 = vpop.f32.mrb[0].mxu0
  %v6637 = vadd.f32 %v5925, %v6636
  %v6638 = vpop.f32.mrb[0].mxu0
  %v6639 = vadd.f32 %v5929, %v6638
  %v6640 = vpop.f32.mrb[0].mxu0
  %v6641 = vadd.f32 %v5925, %v6640
  %v6642 = vpop.f32.mrb[0].mxu0
  %v6643 = vadd.f32 %v5929, %v6642
  %6644 = vmatprep.mubr.bf16.mxu0 %v5865
  %6645 = vmatmul.mubr.bf16.gmra.mrb[0].mxu0 %v5864
  %v6646 = vpop.f32.mrb[0].mxu0
  %v6647 = vadd.f32 %v5925, %v6646
  %v6648 = vpop.f32.mrb[0].mxu0
  %v6649 = vadd.f32 %v5929, %v6648
  %v6650 = vpop.f32.mrb[0].mxu0
  %v6651 = vadd.f32 %v5925, %v6650
  %v6652 = vpop.f32.mrb[0].mxu0
  %v6653 = vadd.f32 %v5929, %v6652
  %6654 = vmatprep.mubr.bf16.mxu0 %v5867
  %6655 = vmatmul.mubr.bf16.gmra.mrb[0].mxu0 %v5866
  %v6656 = vpop.f32.mrb[0].mxu0
  %v6657 = vadd.f32 %v5925, %v6656
  %v6658 = vpop.f32.mrb[0].mxu0
  %v6659 = vadd.f32 %v5929, %v6658
  %v6660 = vpop.f32.mrb[0].mxu0
  %v6661 = vadd.f32 %v5925, %v6660
  %v6662 = vpop.f32.mrb[0].mxu0
  %v6663 = vadd.f32 %v5929, %v6662
  %6664 = vmatprep.mubr.bf16.mxu0 %v5869
  %6665 = vmatmul.mubr.bf16.gmra.mrb[0].mxu0 %v5868
  %v6666 = vpop.f32.mrb[0].mxu0
  %v6667 = vadd.f32 %v5925, %v6666
  %v6668 = vpop.f32.mrb[0].mxu0
  %v6669 = vadd.f32 %v5929, %v6668
  %v6670 = vpop.f32.mrb[0].mxu0
  %v6671 = vadd.f32 %v5925, %v6670
  %v6672 = vpop.f32.mrb[0].mxu0
  %v6673 = vadd.f32 %v5929, %v6672
  %6674 = vmatprep.mubr.bf16.mxu0 %v5871
  %6675 = vmatmul.mubr.bf16.gmra.mrb[0].mxu0 %v5870
  %v6676 = vpop.f32.mrb[0].mxu0
  %v6677 = vadd.f32 %v5925, %v6676
  %v6678 = vpop.f32.mrb[0].mxu0
  %v6679 = vadd.f32 %v5929, %v6678
  %v6680 = vpop.f32.mrb[0].mxu0
  %v6681 = vadd.f32 %v5925, %v6680
  %v6682 = vpop.f32.mrb[0].mxu0
  %v6683 = vadd.f32 %v5929, %v6682
  %6684 = vmatprep.mubr.bf16.mxu0 %v5873
  %6685 = vmatmul.mubr.bf16.gmra.mrb[0].mxu0 %v5872
  %v6686 = vpop.f32.mrb[0].mxu0
  %v6687 = vadd.f32 %v5925, %v6686
  %v6688 = vpop.f32.mrb[0].mxu0
  %v6689 = vadd.f32 %v5929, %v6688
  %v6690 = vpop.f32.mrb[0].mxu0
  %v6691 = vadd.f32 %v5925, %v6690
  %v6692 = vpop.f32.mrb[0].mxu0
  %v6693 = vadd.f32 %v5929, %v6692
  %6694 = vmatprep.mubr.bf16.mxu0 %v5875
  %6695 = vmatmul.mubr.bf16.gmra.mrb[0].mxu0 %v5874
  %v6696 = vpop.f32.mrb[0].mxu0
  %v6697 = vadd.f32 %v5925, %v6696
  %v6698 = vpop.f32.mrb[0].mxu0
  %v6699 = vadd.f32 %v5929, %v6698
  %v6700 = vpop.f32.mrb[0].mxu0
  %v6701 = vadd.f32 %v5925, %v6700
  %v6702 = vpop.f32.mrb[0].mxu0
  %v6703 = vadd.f32 %v5929, %v6702
  %6704 = vmatprep.mubr.bf16.mxu0 %v5877
  %6705 = vmatmul.mubr.bf16.gmra.mrb[0].mxu0 %v5876
  %v6706 = vpop.f32.mrb[0].mxu0
  %v6707 = vadd.f32 %v5925, %v6706
  %v6708 = vpop.f32.mrb[0].mxu0
  %v6709 = vadd.f32 %v5929, %v6708
  %v6710 = vpop.f32.mrb[0].mxu0
  %v6711 = vadd.f32 %v5925, %v6710
  %v6712 = vpop.f32.mrb[0].mxu0
  %v6713 = vadd.f32 %v5929, %v6712
  %6714 = vmatprep.mubr.bf16.mxu0 %v5879
  %6715 = vmatmul.mubr.bf16.gmra.mrb[0].mxu0 %v5878
  %v6716 = vpop.f32.mrb[0].mxu0
  %v6717 = vadd.f32 %v5925, %v6716
  %v6718 = vpop.f32.mrb[0].mxu0
  %v6719 = vadd.f32 %v5929, %v6718
  %v6720 = vpop.f32.mrb[0].mxu0
  %v6721 = vadd.f32 %v5925, %v6720
  %v6722 = vpop.f32.mrb[0].mxu0
  %v6723 = vadd.f32 %v5929, %v6722
  %6724 = vmatprep.mubr.bf16.mxu0 %v5881
  %6725 = vmatmul.mubr.bf16.gmra.mrb[0].mxu0 %v5880
  %v6726 = vpop.f32.mrb[0].mxu0
  %v6727 = vadd.f32 %v5925, %v6726
  %v6728 = vpop.f32.mrb[0].mxu0
  %v6729 = vadd.f32 %v5929, %v6728
  %v6730 = vpop.f32.mrb[0].mxu0
  %v6731 = vadd.f32 %v5925, %v6730
  %v6732 = vpop.f32.mrb[0].mxu0
  %v6733 = vadd.f32 %v5929, %v6732
  %6734 = vmatprep.mubr.bf16.mxu0 %v5883
  %6735 = vmatmul.mubr.bf16.gmra.mrb[0].mxu0 %v5882
  %v6736 = vpop.f32.mrb[0].mxu0
  %v6737 = vadd.f32 %v5925, %v6736
  %v6738 = vpop.f32.mrb[0].mxu0
  %v6739 = vadd.f32 %v5929, %v6738
  %v6740 = vpop.f32.mrb[0].mxu0
  %v6741 = vadd.f32 %v5925, %v6740
  %v6742 = vpop.f32.mrb[0].mxu0
  %v6743 = vadd.f32 %v5929, %v6742
  %6744 = vmatprep.mubr.bf16.mxu0 %v5885
  %6745 = vmatmul.mubr.bf16.gmra.mrb[0].mxu0 %v5884
  %v6746 = vpop.f32.mrb[0].mxu0
  %v6747 = vadd.f32 %v5925, %v6746
  %v6748 = vpop.f32.mrb[0].mxu0
  %v6749 = vadd.f32 %v5929, %v6748
  %v6750 = vpop.f32.mrb[0].mxu0
  %v6751 = vadd.f32 %v5925, %v6750
  %v6752 = vpop.f32.mrb[0].mxu0
  %v6753 = vadd.f32 %v5929, %v6752
  %6754 = vmatprep.mubr.bf16.mxu0 %v5887
  %6755 = vmatmul.mubr.bf16.gmra.mrb[0].mxu0 %v5886
  %v6756 = vpop.f32.mrb[0].mxu0
  %v6757 = vadd.f32 %v5925, %v6756
  %v6758 = vpop.f32.mrb[0].mxu0
  %v6759 = vadd.f32 %v5929, %v6758
  %v6760 = vpop.f32.mrb[0].mxu0
  %v6761 = vadd.f32 %v5925, %v6760
  %v6762 = vpop.f32.mrb[0].mxu0
  %v6763 = vadd.f32 %v5929, %v6762
  %6764 = vdwg.mxu0
  %v6765 = vmax.f32 %v6127, 0.0
  %v6766 = vmax.f32 %v6129, 0.0
  %v6767 = vmax.f32 %v6131, 0.0
  %v6768 = vmax.f32 %v6133, 0.0
  %v6769 = vmax.f32 %v6137, 0.0
  %v6770 = vmax.f32 %v6139, 0.0
  %v6771 = vmax.f32 %v6141, 0.0
  %v6772 = vmax.f32 %v6143, 0.0
  %v6773 = vmax.f32 %v6147, 0.0
  %v6774 = vmax.f32 %v6149, 0.0
  %v6775 = vmax.f32 %v6151, 0.0
  %v6776 = vmax.f32 %v6153, 0.0
  %v6777 = vmax.f32 %v6157, 0.0
  %v6778 = vmax.f32 %v6159, 0.0
  %v6779 = vmax.f32 %v6161, 0.0
  %v6780 = vmax.f32 %v6163, 0.0
  %v6781 = vmax.f32 %v6167, 0.0
  %v6782 = vmax.f32 %v6169, 0.0
  %v6783 = vmax.f32 %v6171, 0.0
  %v6784 = vmax.f32 %v6173, 0.0
  %v6785 = vmax.f32 %v6177, 0.0
  %v6786 = vmax.f32 %v6179, 0.0
  %v6787 = vmax.f32 %v6181, 0.0
  %v6788 = vmax.f32 %v6183, 0.0
  %v6789 = vmax.f32 %v6187, 0.0
  %v6790 = vmax.f32 %v6189, 0.0
  %v6791 = vmax.f32 %v6191, 0.0
  %v6792 = vmax.f32 %v6193, 0.0
  %v6793 = vmax.f32 %v6197, 0.0
  %v6794 = vmax.f32 %v6199, 0.0
  %v6795 = vmax.f32 %v6201, 0.0
  %v6796 = vmax.f32 %v6203, 0.0
  %v6797 = vmax.f32 %v6207, 0.0
  %v6798 = vmax.f32 %v6209, 0.0
  %v6799 = vmax.f32 %v6211, 0.0
  %v6800 = vmax.f32 %v6213, 0.0
  %v6801 = vmax.f32 %v6217, 0.0
  %v6802 = vmax.f32 %v6219, 0.0
  %v6803 = vmax.f32 %v6221, 0.0
  %v6804 = vmax.f32 %v6223, 0.0
  %v6805 = vmax.f32 %v6227, 0.0
  %v6806 = vmax.f32 %v6229, 0.0
  %v6807 = vmax.f32 %v6231, 0.0
  %v6808 = vmax.f32 %v6233, 0.0
  %v6809 = vmax.f32 %v6237, 0.0
  %v6810 = vmax.f32 %v6239, 0.0
  %v6811 = vmax.f32 %v6241, 0.0
  %v6812 = vmax.f32 %v6243, 0.0
  %v6813 = vmax.f32 %v6247, 0.0
  %v6814 = vmax.f32 %v6249, 0.0
  %v6815 = vmax.f32 %v6251, 0.0
  %v6816 = vmax.f32 %v6253, 0.0
  %v6817 = vmax.f32 %v6257, 0.0
  %v6818 = vmax.f32 %v6259, 0.0
  %v6819 = vmax.f32 %v6261, 0.0
  %v6820 = vmax.f32 %v6263, 0.0
  %v6821 = vmax.f32 %v6267, 0.0
  %v6822 = vmax.f32 %v6269, 0.0
  %v6823 = vmax.f32 %v6271, 0.0
  %v6824 = vmax.f32 %v6273, 0.0
  %v6825 = vmax.f32 %v6277, 0.0
  %v6826 = vmax.f32 %v6279, 0.0
  %v6827 = vmax.f32 %v6281, 0.0
  %v6828 = vmax.f32 %v6283, 0.0
  %v6829 = vmax.f32 %v6287, 0.0
  %v6830 = vmax.f32 %v6289, 0.0
  %v6831 = vmax.f32 %v6291, 0.0
  %v6832 = vmax.f32 %v6293, 0.0
  %v6833 = vmax.f32 %v6297, 0.0
  %v6834 = vmax.f32 %v6299, 0.0
  %v6835 = vmax.f32 %v6301, 0.0
  %v6836 = vmax.f32 %v6303, 0.0
  %v6837 = vmax.f32 %v6307, 0.0
  %v6838 = vmax.f32 %v6309, 0.0
  %v6839 = vmax.f32 %v6311, 0.0
  %v6840 = vmax.f32 %v6313, 0.0
  %v6841 = vmax.f32 %v6317, 0.0
  %v6842 = vmax.f32 %v6319, 0.0
  %v6843 = vmax.f32 %v6321, 0.0
  %v6844 = vmax.f32 %v6323, 0.0
  %v6845 = vmax.f32 %v6327, 0.0
  %v6846 = vmax.f32 %v6329, 0.0
  %v6847 = vmax.f32 %v6331, 0.0
  %v6848 = vmax.f32 %v6333, 0.0
  %v6849 = vmax.f32 %v6337, 0.0
  %v6850 = vmax.f32 %v6339, 0.0
  %v6851 = vmax.f32 %v6341, 0.0
  %v6852 = vmax.f32 %v6343, 0.0
  %v6853 = vmax.f32 %v6347, 0.0
  %v6854 = vmax.f32 %v6349, 0.0
  %v6855 = vmax.f32 %v6351, 0.0
  %v6856 = vmax.f32 %v6353, 0.0
  %v6857 = vmax.f32 %v6357, 0.0
  %v6858 = vmax.f32 %v6359, 0.0
  %v6859 = vmax.f32 %v6361, 0.0
  %v6860 = vmax.f32 %v6363, 0.0
  %v6861 = vmax.f32 %v6367, 0.0
  %v6862 = vmax.f32 %v6369, 0.0
  %v6863 = vmax.f32 %v6371, 0.0
  %v6864 = vmax.f32 %v6373, 0.0
  %v6865 = vmax.f32 %v6377, 0.0
  %v6866 = vmax.f32 %v6379, 0.0
  %v6867 = vmax.f32 %v6381, 0.0
  %v6868 = vmax.f32 %v6383, 0.0
  %v6869 = vmax.f32 %v6387, 0.0
  %v6870 = vmax.f32 %v6389, 0.0
  %v6871 = vmax.f32 %v6391, 0.0
  %v6872 = vmax.f32 %v6393, 0.0
  %v6873 = vmax.f32 %v6397, 0.0
  %v6874 = vmax.f32 %v6399, 0.0
  %v6875 = vmax.f32 %v6401, 0.0
  %v6876 = vmax.f32 %v6403, 0.0
  %v6877 = vmax.f32 %v6407, 0.0
  %v6878 = vmax.f32 %v6409, 0.0
  %v6879 = vmax.f32 %v6411, 0.0
  %v6880 = vmax.f32 %v6413, 0.0
  %v6881 = vmax.f32 %v6417, 0.0
  %v6882 = vmax.f32 %v6419, 0.0
  %v6883 = vmax.f32 %v6421, 0.0
  %v6884 = vmax.f32 %v6423, 0.0
  %v6885 = vmax.f32 %v6427, 0.0
  %v6886 = vmax.f32 %v6429, 0.0
  %v6887 = vmax.f32 %v6431, 0.0
  %v6888 = vmax.f32 %v6433, 0.0
  %v6889 = vmax.f32 %v6437, 0.0
  %v6890 = vmax.f32 %v6439, 0.0
  %v6891 = vmax.f32 %v6441, 0.0
  %v6892 = vmax.f32 %v6443, 0.0
  %v6893 = vmax.f32 %v6447, 0.0
  %v6894 = vmax.f32 %v6449, 0.0
  %v6895 = vmax.f32 %v6451, 0.0
  %v6896 = vmax.f32 %v6453, 0.0
  %v6897 = vmax.f32 %v6457, 0.0
  %v6898 = vmax.f32 %v6459, 0.0
  %v6899 = vmax.f32 %v6461, 0.0
  %v6900 = vmax.f32 %v6463, 0.0
  %v6901 = vmax.f32 %v6467, 0.0
  %v6902 = vmax.f32 %v6469, 0.0
  %v6903 = vmax.f32 %v6471, 0.0
  %v6904 = vmax.f32 %v6473, 0.0
  %v6905 = vmax.f32 %v6477, 0.0
  %v6906 = vmax.f32 %v6479, 0.0
  %v6907 = vmax.f32 %v6481, 0.0
  %v6908 = vmax.f32 %v6483, 0.0
  %v6909 = vmax.f32 %v6487, 0.0
  %v6910 = vmax.f32 %v6489, 0.0
  %v6911 = vmax.f32 %v6491, 0.0
  %v6912 = vmax.f32 %v6493, 0.0
  %v6913 = vmax.f32 %v6497, 0.0
  %v6914 = vmax.f32 %v6499, 0.0
  %v6915 = vmax.f32 %v6501, 0.0
  %v6916 = vmax.f32 %v6503, 0.0
  %v6917 = vmax.f32 %v6507, 0.0
  %v6918 = vmax.f32 %v6509, 0.0
  %v6919 = vmax.f32 %v6511, 0.0
  %v6920 = vmax.f32 %v6513, 0.0
  %v6921 = vmax.f32 %v6517, 0.0
  %v6922 = vmax.f32 %v6519, 0.0
  %v6923 = vmax.f32 %v6521, 0.0
  %v6924 = vmax.f32 %v6523, 0.0
  %v6925 = vmax.f32 %v6527, 0.0
  %v6926 = vmax.f32 %v6529, 0.0
  %v6927 = vmax.f32 %v6531, 0.0
  %v6928 = vmax.f32 %v6533, 0.0
  %v6929 = vmax.f32 %v6537, 0.0
  %v6930 = vmax.f32 %v6539, 0.0
  %v6931 = vmax.f32 %v6541, 0.0
  %v6932 = vmax.f32 %v6543, 0.0
  %v6933 = vmax.f32 %v6547, 0.0
  %v6934 = vmax.f32 %v6549, 0.0
  %v6935 = vmax.f32 %v6551, 0.0
  %v6936 = vmax.f32 %v6553, 0.0
  %v6937 = vmax.f32 %v6557, 0.0
  %v6938 = vmax.f32 %v6559, 0.0
  %v6939 = vmax.f32 %v6561, 0.0
  %v6940 = vmax.f32 %v6563, 0.0
  %v6941 = vmax.f32 %v6567, 0.0
  %v6942 = vmax.f32 %v6569, 0.0
  %v6943 = vmax.f32 %v6571, 0.0
  %v6944 = vmax.f32 %v6573, 0.0
  %v6945 = vmax.f32 %v6577, 0.0
  %v6946 = vmax.f32 %v6579, 0.0
  %v6947 = vmax.f32 %v6581, 0.0
  %v6948 = vmax.f32 %v6583, 0.0
  %v6949 = vmax.f32 %v6587, 0.0
  %v6950 = vmax.f32 %v6589, 0.0
  %v6951 = vmax.f32 %v6591, 0.0
  %v6952 = vmax.f32 %v6593, 0.0
  %v6953 = vmax.f32 %v6597, 0.0
  %v6954 = vmax.f32 %v6599, 0.0
  %v6955 = vmax.f32 %v6601, 0.0
  %v6956 = vmax.f32 %v6603, 0.0
  %v6957 = vmax.f32 %v6607, 0.0
  %v6958 = vmax.f32 %v6609, 0.0
  %v6959 = vmax.f32 %v6611, 0.0
  %v6960 = vmax.f32 %v6613, 0.0
  %v6961 = vmax.f32 %v6617, 0.0
  %v6962 = vmax.f32 %v6619, 0.0
  %v6963 = vmax.f32 %v6621, 0.0
  %v6964 = vmax.f32 %v6623, 0.0
  %v6965 = vmax.f32 %v6627, 0.0
  %v6966 = vmax.f32 %v6629, 0.0
  %v6967 = vmax.f32 %v6631, 0.0
  %v6968 = vmax.f32 %v6633, 0.0
  %v6969 = vmax.f32 %v6637, 0.0
  %v6970 = vmax.f32 %v6639, 0.0
  %v6971 = vmax.f32 %v6641, 0.0
  %v6972 = vmax.f32 %v6643, 0.0
  %v6973 = vmax.f32 %v6647, 0.0
  %v6974 = vmax.f32 %v6649, 0.0
  %v6975 = vmax.f32 %v6651, 0.0
  %v6976 = vmax.f32 %v6653, 0.0
  %v6977 = vmax.f32 %v6657, 0.0
  %v6978 = vmax.f32 %v6659, 0.0
  %v6979 = vmax.f32 %v6661, 0.0
  %v6980 = vmax.f32 %v6663, 0.0
  %v6981 = vmax.f32 %v6667, 0.0
  %v6982 = vmax.f32 %v6669, 0.0
  %v6983 = vmax.f32 %v6671, 0.0
  %v6984 = vmax.f32 %v6673, 0.0
  %v6985 = vmax.f32 %v6677, 0.0
  %v6986 = vmax.f32 %v6679, 0.0
  %v6987 = vmax.f32 %v6681, 0.0
  %v6988 = vmax.f32 %v6683, 0.0
  %v6989 = vmax.f32 %v6687, 0.0
  %v6990 = vmax.f32 %v6689, 0.0
  %v6991 = vmax.f32 %v6691, 0.0
  %v6992 = vmax.f32 %v6693, 0.0
  %v6993 = vmax.f32 %v6697, 0.0
  %v6994 = vmax.f32 %v6699, 0.0
  %v6995 = vmax.f32 %v6701, 0.0
  %v6996 = vmax.f32 %v6703, 0.0
  %v6997 = vmax.f32 %v6707, 0.0
  %v6998 = vmax.f32 %v6709, 0.0
  %v6999 = vmax.f32 %v6711, 0.0
  %v7000 = vmax.f32 %v6713, 0.0
  %v7001 = vmax.f32 %v6717, 0.0
  %v7002 = vmax.f32 %v6719, 0.0
  %v7003 = vmax.f32 %v6721, 0.0
  %v7004 = vmax.f32 %v6723, 0.0
  %v7005 = vmax.f32 %v6727, 0.0
  %v7006 = vmax.f32 %v6729, 0.0
  %v7007 = vmax.f32 %v6731, 0.0
  %v7008 = vmax.f32 %v6733, 0.0
  %v7009 = vmax.f32 %v6737, 0.0
  %v7010 = vmax.f32 %v6739, 0.0
  %v7011 = vmax.f32 %v6741, 0.0
  %v7012 = vmax.f32 %v6743, 0.0
  %v7013 = vmax.f32 %v6747, 0.0
  %v7014 = vmax.f32 %v6749, 0.0
  %v7015 = vmax.f32 %v6751, 0.0
  %v7016 = vmax.f32 %v6753, 0.0
  %v7017 = vmax.f32 %v6757, 0.0
  %v7018 = vmax.f32 %v6759, 0.0
  %v7019 = vmax.f32 %v6761, 0.0
  %v7020 = vmax.f32 %v6763, 0.0
  %v7021 = vpack.c.bf16 %v6767, %v6765
  %v7022 = vpack.c.bf16 %v6768, %v6766
  %v7023 = vpack.c.bf16 %v6771, %v6769
  %v7024 = vpack.c.bf16 %v6772, %v6770
  %v7025 = vpack.c.bf16 %v6775, %v6773
  %v7026 = vpack.c.bf16 %v6776, %v6774
  %v7027 = vpack.c.bf16 %v6779, %v6777
  %v7028 = vpack.c.bf16 %v6780, %v6778
  %v7029 = vpack.c.bf16 %v6783, %v6781
  %v7030 = vpack.c.bf16 %v6784, %v6782
  %v7031 = vpack.c.bf16 %v6787, %v6785
  %v7032 = vpack.c.bf16 %v6788, %v6786
  %v7033 = vpack.c.bf16 %v6791, %v6789
  %v7034 = vpack.c.bf16 %v6792, %v6790
  %v7035 = vpack.c.bf16 %v6795, %v6793
  %v7036 = vpack.c.bf16 %v6796, %v6794
  %v7037 = vpack.c.bf16 %v6799, %v6797
  %v7038 = vpack.c.bf16 %v6800, %v6798
  %v7039 = vpack.c.bf16 %v6803, %v6801
  %v7040 = vpack.c.bf16 %v6804, %v6802
  %v7041 = vpack.c.bf16 %v6807, %v6805
  %v7042 = vpack.c.bf16 %v6808, %v6806
  %v7043 = vpack.c.bf16 %v6811, %v6809
  %v7044 = vpack.c.bf16 %v6812, %v6810
  %v7045 = vpack.c.bf16 %v6815, %v6813
  %v7046 = vpack.c.bf16 %v6816, %v6814
  %v7047 = vpack.c.bf16 %v6819, %v6817
  %v7048 = vpack.c.bf16 %v6820, %v6818
  %v7049 = vpack.c.bf16 %v6823, %v6821
  %v7050 = vpack.c.bf16 %v6824, %v6822
  %v7051 = vpack.c.bf16 %v6827, %v6825
  %v7052 = vpack.c.bf16 %v6828, %v6826
  %v7053 = vpack.c.bf16 %v6831, %v6829
  %v7054 = vpack.c.bf16 %v6832, %v6830
  %v7055 = vpack.c.bf16 %v6835, %v6833
  %v7056 = vpack.c.bf16 %v6836, %v6834
  %v7057 = vpack.c.bf16 %v6839, %v6837
  %v7058 = vpack.c.bf16 %v6840, %v6838
  %v7059 = vpack.c.bf16 %v6843, %v6841
  %v7060 = vpack.c.bf16 %v6844, %v6842
  %v7061 = vpack.c.bf16 %v6847, %v6845
  %v7062 = vpack.c.bf16 %v6848, %v6846
  %v7063 = vpack.c.bf16 %v6851, %v6849
  %v7064 = vpack.c.bf16 %v6852, %v6850
  %v7065 = vpack.c.bf16 %v6855, %v6853
  %v7066 = vpack.c.bf16 %v6856, %v6854
  %v7067 = vpack.c.bf16 %v6859, %v6857
  %v7068 = vpack.c.bf16 %v6860, %v6858
  %v7069 = vpack.c.bf16 %v6863, %v6861
  %v7070 = vpack.c.bf16 %v6864, %v6862
  %v7071 = vpack.c.bf16 %v6867, %v6865
  %v7072 = vpack.c.bf16 %v6868, %v6866
  %v7073 = vpack.c.bf16 %v6871, %v6869
  %v7074 = vpack.c.bf16 %v6872, %v6870
  %v7075 = vpack.c.bf16 %v6875, %v6873
  %v7076 = vpack.c.bf16 %v6876, %v6874
  %v7077 = vpack.c.bf16 %v6879, %v6877
  %v7078 = vpack.c.bf16 %v6880, %v6878
  %v7079 = vpack.c.bf16 %v6883, %v6881
  %v7080 = vpack.c.bf16 %v6884, %v6882
  %v7081 = vpack.c.bf16 %v6887, %v6885
  %v7082 = vpack.c.bf16 %v6888, %v6886
  %v7083 = vpack.c.bf16 %v6891, %v6889
  %v7084 = vpack.c.bf16 %v6892, %v6890
  %v7085 = vpack.c.bf16 %v6895, %v6893
  %v7086 = vpack.c.bf16 %v6896, %v6894
  %v7087 = vpack.c.bf16 %v6899, %v6897
  %v7088 = vpack.c.bf16 %v6900, %v6898
  %v7089 = vpack.c.bf16 %v6903, %v6901
  %v7090 = vpack.c.bf16 %v6904, %v6902
  %v7091 = vpack.c.bf16 %v6907, %v6905
  %v7092 = vpack.c.bf16 %v6908, %v6906
  %v7093 = vpack.c.bf16 %v6911, %v6909
  %v7094 = vpack.c.bf16 %v6912, %v6910
  %v7095 = vpack.c.bf16 %v6915, %v6913
  %v7096 = vpack.c.bf16 %v6916, %v6914
  %v7097 = vpack.c.bf16 %v6919, %v6917
  %v7098 = vpack.c.bf16 %v6920, %v6918
  %v7099 = vpack.c.bf16 %v6923, %v6921
  %v7100 = vpack.c.bf16 %v6924, %v6922
  %v7101 = vpack.c.bf16 %v6927, %v6925
  %v7102 = vpack.c.bf16 %v6928, %v6926
  %v7103 = vpack.c.bf16 %v6931, %v6929
  %v7104 = vpack.c.bf16 %v6932, %v6930
  %v7105 = vpack.c.bf16 %v6935, %v6933
  %v7106 = vpack.c.bf16 %v6936, %v6934
  %v7107 = vpack.c.bf16 %v6939, %v6937
  %v7108 = vpack.c.bf16 %v6940, %v6938
  %v7109 = vpack.c.bf16 %v6943, %v6941
  %v7110 = vpack.c.bf16 %v6944, %v6942
  %v7111 = vpack.c.bf16 %v6947, %v6945
  %v7112 = vpack.c.bf16 %v6948, %v6946
  %v7113 = vpack.c.bf16 %v6951, %v6949
  %v7114 = vpack.c.bf16 %v6952, %v6950
  %v7115 = vpack.c.bf16 %v6955, %v6953
  %v7116 = vpack.c.bf16 %v6956, %v6954
  %v7117 = vpack.c.bf16 %v6959, %v6957
  %v7118 = vpack.c.bf16 %v6960, %v6958
  %v7119 = vpack.c.bf16 %v6963, %v6961
  %v7120 = vpack.c.bf16 %v6964, %v6962
  %v7121 = vpack.c.bf16 %v6967, %v6965
  %v7122 = vpack.c.bf16 %v6968, %v6966
  %v7123 = vpack.c.bf16 %v6971, %v6969
  %v7124 = vpack.c.bf16 %v6972, %v6970
  %v7125 = vpack.c.bf16 %v6975, %v6973
  %v7126 = vpack.c.bf16 %v6976, %v6974
  %v7127 = vpack.c.bf16 %v6979, %v6977
  %v7128 = vpack.c.bf16 %v6980, %v6978
  %v7129 = vpack.c.bf16 %v6983, %v6981
  %v7130 = vpack.c.bf16 %v6984, %v6982
  %v7131 = vpack.c.bf16 %v6987, %v6985
  %v7132 = vpack.c.bf16 %v6988, %v6986
  %v7133 = vpack.c.bf16 %v6991, %v6989
  %v7134 = vpack.c.bf16 %v6992, %v6990
  %v7135 = vpack.c.bf16 %v6995, %v6993
  %v7136 = vpack.c.bf16 %v6996, %v6994
  %v7137 = vpack.c.bf16 %v6999, %v6997
  %v7138 = vpack.c.bf16 %v7000, %v6998
  %v7139 = vpack.c.bf16 %v7003, %v7001
  %v7140 = vpack.c.bf16 %v7004, %v7002
  %v7141 = vpack.c.bf16 %v7007, %v7005
  %v7142 = vpack.c.bf16 %v7008, %v7006
  %v7143 = vpack.c.bf16 %v7011, %v7009
  %v7144 = vpack.c.bf16 %v7012, %v7010
  %v7145 = vpack.c.bf16 %v7015, %v7013
  %v7146 = vpack.c.bf16 %v7016, %v7014
  %v7147 = vpack.c.bf16 %v7019, %v7017
  %v7148 = vpack.c.bf16 %v7020, %v7018
  %v7149 = vld [vmem:[%s11] sm:$0xf]
  %v7150 = vld [vmem:[%s11 + $0x4] sm:$0xf]
  %v7151 = vld [vmem:[%s11 + $0x8] sm:$0xf]
  %v7152 = vld [vmem:[%s11 + $0xc] sm:$0xf]
  %v7153 = vld [vmem:[%s11 + $0x10] sm:$0xf]
  %v7154 = vld [vmem:[%s11 + $0x14] sm:$0xf]
  %v7155 = vld [vmem:[%s11 + $0x18] sm:$0xf]
  %v7156 = vld [vmem:[%s11 + $0x1c] sm:$0xf]
  %v7157 = vld [vmem:[%s11 + $0x20] sm:$0xf]
  %v7158 = vld [vmem:[%s11 + $0x24] sm:$0xf]
  %v7159 = vld [vmem:[%s11 + $0x28] sm:$0xf]
  %v7160 = vld [vmem:[%s11 + $0x2c] sm:$0xf]
  %v7161 = vld [vmem:[%s11 + $0x30] sm:$0xf]
  %v7162 = vld [vmem:[%s11 + $0x34] sm:$0xf]
  %v7163 = vld [vmem:[%s11 + $0x38] sm:$0xf]
  %v7164 = vld [vmem:[%s11 + $0x3c] sm:$0xf]
  %v7165 = vld [vmem:[%s11 + $0x40] sm:$0xf]
  %v7166 = vld [vmem:[%s11 + $0x44] sm:$0xf]
  %v7167 = vld [vmem:[%s11 + $0x48] sm:$0xf]
  %v7168 = vld [vmem:[%s11 + $0x4c] sm:$0xf]
  %v7169 = vld [vmem:[%s11 + $0x50] sm:$0xf]
  %v7170 = vld [vmem:[%s11 + $0x54] sm:$0xf]
  %v7171 = vld [vmem:[%s11 + $0x58] sm:$0xf]
  %v7172 = vld [vmem:[%s11 + $0x5c] sm:$0xf]
  %v7173 = vld [vmem:[%s11 + $0x60] sm:$0xf]
  %v7174 = vld [vmem:[%s11 + $0x64] sm:$0xf]
  %v7175 = vld [vmem:[%s11 + $0x68] sm:$0xf]
  %v7176 = vld [vmem:[%s11 + $0x6c] sm:$0xf]
  %v7177 = vld [vmem:[%s11 + $0x70] sm:$0xf]
  %v7178 = vld [vmem:[%s11 + $0x74] sm:$0xf]
  %v7179 = vld [vmem:[%s11 + $0x78] sm:$0xf]
  %v7180 = vld [vmem:[%s11 + $0x7c] sm:$0xf]
  %v7181 = vld [vmem:[%s12] sm:$0x1]
  %v7183 = vlaneseq
  %v7184 = vshrl.u32 %v7183, 7
  %v7185 = vsub.s32 0, %v7184
  %v7186 = vrot.slane %v7181, %v7185
  %v7220 = vunpack.c.l.b16 %v7149
  %v7221 = vunpack.c.l.b16 %v7150
  %v7222 = vunpack.c.l.b16 %v7151
  %v7223 = vunpack.c.l.b16 %v7152
  %v7224 = vunpack.c.l.b16 %v7153
  %v7225 = vunpack.c.l.b16 %v7154
  %v7226 = vunpack.c.l.b16 %v7155
  %v7227 = vunpack.c.l.b16 %v7156
  %v7228 = vunpack.c.l.b16 %v7157
  %v7229 = vunpack.c.l.b16 %v7158
  %v7230 = vunpack.c.l.b16 %v7159
  %v7231 = vunpack.c.l.b16 %v7160
  %v7232 = vunpack.c.l.b16 %v7161
  %v7233 = vunpack.c.l.b16 %v7162
  %v7234 = vunpack.c.l.b16 %v7163
  %v7235 = vunpack.c.l.b16 %v7164
  %v7236 = vunpack.c.l.b16 %v7165
  %v7237 = vunpack.c.l.b16 %v7166
  %v7238 = vunpack.c.l.b16 %v7167
  %v7239 = vunpack.c.l.b16 %v7168
  %v7240 = vunpack.c.l.b16 %v7169
  %v7241 = vunpack.c.l.b16 %v7170
  %v7242 = vunpack.c.l.b16 %v7171
  %v7243 = vunpack.c.l.b16 %v7172
  %v7244 = vunpack.c.l.b16 %v7173
  %v7245 = vunpack.c.l.b16 %v7174
  %v7246 = vunpack.c.l.b16 %v7175
  %v7247 = vunpack.c.l.b16 %v7176
  %v7248 = vunpack.c.l.b16 %v7177
  %v7249 = vunpack.c.l.b16 %v7178
  %v7250 = vunpack.c.l.b16 %v7179
  %v7251 = vunpack.c.l.b16 %v7180
  %v7252 = vpack.c.b16 %v7221, %v7220
  %v7253 = vpack.c.b16 %v7223, %v7222
  %v7254 = vpack.c.b16 %v7225, %v7224
  %v7255 = vpack.c.b16 %v7227, %v7226
  %v7256 = vpack.c.b16 %v7229, %v7228
  %v7257 = vpack.c.b16 %v7231, %v7230
  %v7258 = vpack.c.b16 %v7233, %v7232
  %v7259 = vpack.c.b16 %v7235, %v7234
  %v7260 = vpack.c.b16 %v7237, %v7236
  %v7261 = vpack.c.b16 %v7239, %v7238
  %v7262 = vpack.c.b16 %v7241, %v7240
  %v7263 = vpack.c.b16 %v7243, %v7242
  %v7264 = vpack.c.b16 %v7245, %v7244
  %v7265 = vpack.c.b16 %v7247, %v7246
  %v7266 = vpack.c.b16 %v7249, %v7248
  %v7267 = vpack.c.b16 %v7251, %v7250
  %7284 = vmatprep.subr.bf16.mxu0 0
  %7285 = vmatpush1.bf16.msra.mxu0 %v7252
  %7286 = vmatprep.subr.bf16.mxu0 0
  %7287 = vmatpush1.bf16.msra.mxu0 %v7253
  %7288 = vmatprep.subr.bf16.mxu0 0
  %7289 = vmatpush1.bf16.msra.mxu0 %v7254
  %7290 = vmatprep.subr.bf16.mxu0 0
  %7291 = vmatpush1.bf16.msra.mxu0 %v7255
  %7292 = vmatprep.subr.bf16.mxu0 0
  %7293 = vmatpush1.bf16.msra.mxu0 %v7256
  %7294 = vmatprep.subr.bf16.mxu0 0
  %7295 = vmatpush1.bf16.msra.mxu0 %v7257
  %7296 = vmatprep.subr.bf16.mxu0 0
  %7297 = vmatpush1.bf16.msra.mxu0 %v7258
  %7298 = vmatprep.subr.bf16.mxu0 0
  %7299 = vmatpush1.bf16.msra.mxu0 %v7259
  %7300 = vmatprep.subr.bf16.mxu0 0
  %7301 = vmatpush1.bf16.msra.mxu0 %v7260
  %7302 = vmatprep.subr.bf16.mxu0 0
  %7303 = vmatpush1.bf16.msra.mxu0 %v7261
  %7304 = vmatprep.subr.bf16.mxu0 0
  %7305 = vmatpush1.bf16.msra.mxu0 %v7262
  %7306 = vmatprep.subr.bf16.mxu0 0
  %7307 = vmatpush1.bf16.msra.mxu0 %v7263
  %7308 = vmatprep.subr.bf16.mxu0 0
  %7309 = vmatpush1.bf16.msra.mxu0 %v7264
  %7310 = vmatprep.subr.bf16.mxu0 0
  %7311 = vmatpush1.bf16.msra.mxu0 %v7265
  %7312 = vmatprep.subr.bf16.mxu0 0
  %7313 = vmatpush1.bf16.msra.mxu0 %v7266
  %7314 = vmatprep.subr.bf16.mxu0 0
  %7315 = vmatpush1.bf16.msra.mxu0 %v7267
  %7316 = vmatprep.mubr.bf16.mxu0 %v7022
  %7317 = vmatmul.mubr.bf16.gmra.mrb[0].mxu0 %v7021
  %v7318 = vpop.f32.mrb[0].mxu0
  %v7319 = vadd.f32 %v7186, %v7318
  %v7320 = vpop.f32.mrb[0].mxu0
  %v7321 = vpop.f32.mrb[0].mxu0
  %v7322 = vadd.f32 %v7186, %v7321
  %v7323 = vpop.f32.mrb[0].mxu0
  %7324 = vmatprep.mubr.bf16.mxu0 %v7024
  %7325 = vmatmul.mubr.bf16.gmra.mrb[0].mxu0 %v7023
  %v7326 = vpop.f32.mrb[0].mxu0
  %v7327 = vadd.f32 %v7186, %v7326
  %v7328 = vpop.f32.mrb[0].mxu0
  %v7329 = vpop.f32.mrb[0].mxu0
  %v7330 = vadd.f32 %v7186, %v7329
  %v7331 = vpop.f32.mrb[0].mxu0
  %7332 = vmatprep.mubr.bf16.mxu0 %v7026
  %7333 = vmatmul.mubr.bf16.gmra.mrb[0].mxu0 %v7025
  %v7334 = vpop.f32.mrb[0].mxu0
  %v7335 = vadd.f32 %v7186, %v7334
  %v7336 = vpop.f32.mrb[0].mxu0
  %v7337 = vpop.f32.mrb[0].mxu0
  %v7338 = vadd.f32 %v7186, %v7337
  %v7339 = vpop.f32.mrb[0].mxu0
  %7340 = vmatprep.mubr.bf16.mxu0 %v7028
  %7341 = vmatmul.mubr.bf16.gmra.mrb[0].mxu0 %v7027
  %v7342 = vpop.f32.mrb[0].mxu0
  %v7343 = vadd.f32 %v7186, %v7342
  %v7344 = vpop.f32.mrb[0].mxu0
  %v7345 = vpop.f32.mrb[0].mxu0
  %v7346 = vadd.f32 %v7186, %v7345
  %v7347 = vpop.f32.mrb[0].mxu0
  %7348 = vmatprep.mubr.bf16.mxu0 %v7030
  %7349 = vmatmul.mubr.bf16.gmra.mrb[0].mxu0 %v7029
  %v7350 = vpop.f32.mrb[0].mxu0
  %v7351 = vadd.f32 %v7186, %v7350
  %v7352 = vpop.f32.mrb[0].mxu0
  %v7353 = vpop.f32.mrb[0].mxu0
  %v7354 = vadd.f32 %v7186, %v7353
  %v7355 = vpop.f32.mrb[0].mxu0
  %7356 = vmatprep.mubr.bf16.mxu0 %v7032
  %7357 = vmatmul.mubr.bf16.gmra.mrb[0].mxu0 %v7031
  %v7358 = vpop.f32.mrb[0].mxu0
  %v7359 = vadd.f32 %v7186, %v7358
  %v7360 = vpop.f32.mrb[0].mxu0
  %v7361 = vpop.f32.mrb[0].mxu0
  %v7362 = vadd.f32 %v7186, %v7361
  %v7363 = vpop.f32.mrb[0].mxu0
  %7364 = vmatprep.mubr.bf16.mxu0 %v7034
  %7365 = vmatmul.mubr.bf16.gmra.mrb[0].mxu0 %v7033
  %v7366 = vpop.f32.mrb[0].mxu0
  %v7367 = vadd.f32 %v7186, %v7366
  %v7368 = vpop.f32.mrb[0].mxu0
  %v7369 = vpop.f32.mrb[0].mxu0
  %v7370 = vadd.f32 %v7186, %v7369
  %v7371 = vpop.f32.mrb[0].mxu0
  %7372 = vmatprep.mubr.bf16.mxu0 %v7036
  %7373 = vmatmul.mubr.bf16.gmra.mrb[0].mxu0 %v7035
  %v7374 = vpop.f32.mrb[0].mxu0
  %v7375 = vadd.f32 %v7186, %v7374
  %v7376 = vpop.f32.mrb[0].mxu0
  %v7377 = vpop.f32.mrb[0].mxu0
  %v7378 = vadd.f32 %v7186, %v7377
  %v7379 = vpop.f32.mrb[0].mxu0
  %7380 = vmatprep.mubr.bf16.mxu0 %v7038
  %7381 = vmatmul.mubr.bf16.gmra.mrb[0].mxu0 %v7037
  %v7382 = vpop.f32.mrb[0].mxu0
  %v7383 = vadd.f32 %v7186, %v7382
  %v7384 = vpop.f32.mrb[0].mxu0
  %v7385 = vpop.f32.mrb[0].mxu0
  %v7386 = vadd.f32 %v7186, %v7385
  %v7387 = vpop.f32.mrb[0].mxu0
  %7388 = vmatprep.mubr.bf16.mxu0 %v7040
  %7389 = vmatmul.mubr.bf16.gmra.mrb[0].mxu0 %v7039
  %v7390 = vpop.f32.mrb[0].mxu0
  %v7391 = vadd.f32 %v7186, %v7390
  %v7392 = vpop.f32.mrb[0].mxu0
  %v7393 = vpop.f32.mrb[0].mxu0
  %v7394 = vadd.f32 %v7186, %v7393
  %v7395 = vpop.f32.mrb[0].mxu0
  %7396 = vmatprep.mubr.bf16.mxu0 %v7042
  %7397 = vmatmul.mubr.bf16.gmra.mrb[0].mxu0 %v7041
  %v7398 = vpop.f32.mrb[0].mxu0
  %v7399 = vadd.f32 %v7186, %v7398
  %v7400 = vpop.f32.mrb[0].mxu0
  %v7401 = vpop.f32.mrb[0].mxu0
  %v7402 = vadd.f32 %v7186, %v7401
  %v7403 = vpop.f32.mrb[0].mxu0
  %7404 = vmatprep.mubr.bf16.mxu0 %v7044
  %7405 = vmatmul.mubr.bf16.gmra.mrb[0].mxu0 %v7043
  %v7406 = vpop.f32.mrb[0].mxu0
  %v7407 = vadd.f32 %v7186, %v7406
  %v7408 = vpop.f32.mrb[0].mxu0
  %v7409 = vpop.f32.mrb[0].mxu0
  %v7410 = vadd.f32 %v7186, %v7409
  %v7411 = vpop.f32.mrb[0].mxu0
  %7412 = vmatprep.mubr.bf16.mxu0 %v7046
  %7413 = vmatmul.mubr.bf16.gmra.mrb[0].mxu0 %v7045
  %v7414 = vpop.f32.mrb[0].mxu0
  %v7415 = vadd.f32 %v7186, %v7414
  %v7416 = vpop.f32.mrb[0].mxu0
  %v7417 = vpop.f32.mrb[0].mxu0
  %v7418 = vadd.f32 %v7186, %v7417
  %v7419 = vpop.f32.mrb[0].mxu0
  %7420 = vmatprep.mubr.bf16.mxu0 %v7048
  %7421 = vmatmul.mubr.bf16.gmra.mrb[0].mxu0 %v7047
  %v7422 = vpop.f32.mrb[0].mxu0
  %v7423 = vadd.f32 %v7186, %v7422
  %v7424 = vpop.f32.mrb[0].mxu0
  %v7425 = vpop.f32.mrb[0].mxu0
  %v7426 = vadd.f32 %v7186, %v7425
  %v7427 = vpop.f32.mrb[0].mxu0
  %7428 = vmatprep.mubr.bf16.mxu0 %v7050
  %7429 = vmatmul.mubr.bf16.gmra.mrb[0].mxu0 %v7049
  %v7430 = vpop.f32.mrb[0].mxu0
  %v7431 = vadd.f32 %v7186, %v7430
  %v7432 = vpop.f32.mrb[0].mxu0
  %v7433 = vpop.f32.mrb[0].mxu0
  %v7434 = vadd.f32 %v7186, %v7433
  %v7435 = vpop.f32.mrb[0].mxu0
  %7436 = vmatprep.mubr.bf16.mxu0 %v7052
  %7437 = vmatmul.mubr.bf16.gmra.mrb[0].mxu0 %v7051
  %v7438 = vpop.f32.mrb[0].mxu0
  %v7439 = vadd.f32 %v7186, %v7438
  %v7440 = vpop.f32.mrb[0].mxu0
  %v7441 = vpop.f32.mrb[0].mxu0
  %v7442 = vadd.f32 %v7186, %v7441
  %v7443 = vpop.f32.mrb[0].mxu0
  %7444 = vmatprep.mubr.bf16.mxu0 %v7054
  %7445 = vmatmul.mubr.bf16.gmra.mrb[0].mxu0 %v7053
  %v7446 = vpop.f32.mrb[0].mxu0
  %v7447 = vadd.f32 %v7186, %v7446
  %v7448 = vpop.f32.mrb[0].mxu0
  %v7449 = vpop.f32.mrb[0].mxu0
  %v7450 = vadd.f32 %v7186, %v7449
  %v7451 = vpop.f32.mrb[0].mxu0
  %7452 = vmatprep.mubr.bf16.mxu0 %v7056
  %7453 = vmatmul.mubr.bf16.gmra.mrb[0].mxu0 %v7055
  %v7454 = vpop.f32.mrb[0].mxu0
  %v7455 = vadd.f32 %v7186, %v7454
  %v7456 = vpop.f32.mrb[0].mxu0
  %v7457 = vpop.f32.mrb[0].mxu0
  %v7458 = vadd.f32 %v7186, %v7457
  %v7459 = vpop.f32.mrb[0].mxu0
  %7460 = vmatprep.mubr.bf16.mxu0 %v7058
  %7461 = vmatmul.mubr.bf16.gmra.mrb[0].mxu0 %v7057
  %v7462 = vpop.f32.mrb[0].mxu0
  %v7463 = vadd.f32 %v7186, %v7462
  %v7464 = vpop.f32.mrb[0].mxu0
  %v7465 = vpop.f32.mrb[0].mxu0
  %v7466 = vadd.f32 %v7186, %v7465
  %v7467 = vpop.f32.mrb[0].mxu0
  %7468 = vmatprep.mubr.bf16.mxu0 %v7060
  %7469 = vmatmul.mubr.bf16.gmra.mrb[0].mxu0 %v7059
  %v7470 = vpop.f32.mrb[0].mxu0
  %v7471 = vadd.f32 %v7186, %v7470
  %v7472 = vpop.f32.mrb[0].mxu0
  %v7473 = vpop.f32.mrb[0].mxu0
  %v7474 = vadd.f32 %v7186, %v7473
  %v7475 = vpop.f32.mrb[0].mxu0
  %7476 = vmatprep.mubr.bf16.mxu0 %v7062
  %7477 = vmatmul.mubr.bf16.gmra.mrb[0].mxu0 %v7061
  %v7478 = vpop.f32.mrb[0].mxu0
  %v7479 = vadd.f32 %v7186, %v7478
  %v7480 = vpop.f32.mrb[0].mxu0
  %v7481 = vpop.f32.mrb[0].mxu0
  %v7482 = vadd.f32 %v7186, %v7481
  %v7483 = vpop.f32.mrb[0].mxu0
  %7484 = vmatprep.mubr.bf16.mxu0 %v7064
  %7485 = vmatmul.mubr.bf16.gmra.mrb[0].mxu0 %v7063
  %v7486 = vpop.f32.mrb[0].mxu0
  %v7487 = vadd.f32 %v7186, %v7486
  %v7488 = vpop.f32.mrb[0].mxu0
  %v7489 = vpop.f32.mrb[0].mxu0
  %v7490 = vadd.f32 %v7186, %v7489
  %v7491 = vpop.f32.mrb[0].mxu0
  %7492 = vmatprep.mubr.bf16.mxu0 %v7066
  %7493 = vmatmul.mubr.bf16.gmra.mrb[0].mxu0 %v7065
  %v7494 = vpop.f32.mrb[0].mxu0
  %v7495 = vadd.f32 %v7186, %v7494
  %v7496 = vpop.f32.mrb[0].mxu0
  %v7497 = vpop.f32.mrb[0].mxu0
  %v7498 = vadd.f32 %v7186, %v7497
  %v7499 = vpop.f32.mrb[0].mxu0
  %7500 = vmatprep.mubr.bf16.mxu0 %v7068
  %7501 = vmatmul.mubr.bf16.gmra.mrb[0].mxu0 %v7067
  %v7502 = vpop.f32.mrb[0].mxu0
  %v7503 = vadd.f32 %v7186, %v7502
  %v7504 = vpop.f32.mrb[0].mxu0
  %v7505 = vpop.f32.mrb[0].mxu0
  %v7506 = vadd.f32 %v7186, %v7505
  %v7507 = vpop.f32.mrb[0].mxu0
  %7508 = vmatprep.mubr.bf16.mxu0 %v7070
  %7509 = vmatmul.mubr.bf16.gmra.mrb[0].mxu0 %v7069
  %v7510 = vpop.f32.mrb[0].mxu0
  %v7511 = vadd.f32 %v7186, %v7510
  %v7512 = vpop.f32.mrb[0].mxu0
  %v7513 = vpop.f32.mrb[0].mxu0
  %v7514 = vadd.f32 %v7186, %v7513
  %v7515 = vpop.f32.mrb[0].mxu0
  %7516 = vmatprep.mubr.bf16.mxu0 %v7072
  %7517 = vmatmul.mubr.bf16.gmra.mrb[0].mxu0 %v7071
  %v7518 = vpop.f32.mrb[0].mxu0
  %v7519 = vadd.f32 %v7186, %v7518
  %v7520 = vpop.f32.mrb[0].mxu0
  %v7521 = vpop.f32.mrb[0].mxu0
  %v7522 = vadd.f32 %v7186, %v7521
  %v7523 = vpop.f32.mrb[0].mxu0
  %7524 = vmatprep.mubr.bf16.mxu0 %v7074
  %7525 = vmatmul.mubr.bf16.gmra.mrb[0].mxu0 %v7073
  %v7526 = vpop.f32.mrb[0].mxu0
  %v7527 = vadd.f32 %v7186, %v7526
  %v7528 = vpop.f32.mrb[0].mxu0
  %v7529 = vpop.f32.mrb[0].mxu0
  %v7530 = vadd.f32 %v7186, %v7529
  %v7531 = vpop.f32.mrb[0].mxu0
  %7532 = vmatprep.mubr.bf16.mxu0 %v7076
  %7533 = vmatmul.mubr.bf16.gmra.mrb[0].mxu0 %v7075
  %v7534 = vpop.f32.mrb[0].mxu0
  %v7535 = vadd.f32 %v7186, %v7534
  %v7536 = vpop.f32.mrb[0].mxu0
  %v7537 = vpop.f32.mrb[0].mxu0
  %v7538 = vadd.f32 %v7186, %v7537
  %v7539 = vpop.f32.mrb[0].mxu0
  %7540 = vmatprep.mubr.bf16.mxu0 %v7078
  %7541 = vmatmul.mubr.bf16.gmra.mrb[0].mxu0 %v7077
  %v7542 = vpop.f32.mrb[0].mxu0
  %v7543 = vadd.f32 %v7186, %v7542
  %v7544 = vpop.f32.mrb[0].mxu0
  %v7545 = vpop.f32.mrb[0].mxu0
  %v7546 = vadd.f32 %v7186, %v7545
  %v7547 = vpop.f32.mrb[0].mxu0
  %7548 = vmatprep.mubr.bf16.mxu0 %v7080
  %7549 = vmatmul.mubr.bf16.gmra.mrb[0].mxu0 %v7079
  %v7550 = vpop.f32.mrb[0].mxu0
  %v7551 = vadd.f32 %v7186, %v7550
  %v7552 = vpop.f32.mrb[0].mxu0
  %v7553 = vpop.f32.mrb[0].mxu0
  %v7554 = vadd.f32 %v7186, %v7553
  %v7555 = vpop.f32.mrb[0].mxu0
  %7556 = vmatprep.mubr.bf16.mxu0 %v7082
  %7557 = vmatmul.mubr.bf16.gmra.mrb[0].mxu0 %v7081
  %v7558 = vpop.f32.mrb[0].mxu0
  %v7559 = vadd.f32 %v7186, %v7558
  %v7560 = vpop.f32.mrb[0].mxu0
  %v7561 = vpop.f32.mrb[0].mxu0
  %v7562 = vadd.f32 %v7186, %v7561
  %v7563 = vpop.f32.mrb[0].mxu0
  %7564 = vmatprep.mubr.bf16.mxu0 %v7084
  %7565 = vmatmul.mubr.bf16.gmra.mrb[0].mxu0 %v7083
  %v7566 = vpop.f32.mrb[0].mxu0
  %v7567 = vadd.f32 %v7186, %v7566
  %v7568 = vpop.f32.mrb[0].mxu0
  %v7569 = vpop.f32.mrb[0].mxu0
  %v7570 = vadd.f32 %v7186, %v7569
  %v7571 = vpop.f32.mrb[0].mxu0
  %7572 = vmatprep.mubr.bf16.mxu0 %v7086
  %7573 = vmatmul.mubr.bf16.gmra.mrb[0].mxu0 %v7085
  %v7574 = vpop.f32.mrb[0].mxu0
  %v7575 = vadd.f32 %v7186, %v7574
  %v7576 = vpop.f32.mrb[0].mxu0
  %v7577 = vpop.f32.mrb[0].mxu0
  %v7578 = vadd.f32 %v7186, %v7577
  %v7579 = vpop.f32.mrb[0].mxu0
  %7580 = vmatprep.mubr.bf16.mxu0 %v7088
  %7581 = vmatmul.mubr.bf16.gmra.mrb[0].mxu0 %v7087
  %v7582 = vpop.f32.mrb[0].mxu0
  %v7583 = vadd.f32 %v7186, %v7582
  %v7584 = vpop.f32.mrb[0].mxu0
  %v7585 = vpop.f32.mrb[0].mxu0
  %v7586 = vadd.f32 %v7186, %v7585
  %v7587 = vpop.f32.mrb[0].mxu0
  %7588 = vmatprep.mubr.bf16.mxu0 %v7090
  %7589 = vmatmul.mubr.bf16.gmra.mrb[0].mxu0 %v7089
  %v7590 = vpop.f32.mrb[0].mxu0
  %v7591 = vadd.f32 %v7186, %v7590
  %v7592 = vpop.f32.mrb[0].mxu0
  %v7593 = vpop.f32.mrb[0].mxu0
  %v7594 = vadd.f32 %v7186, %v7593
  %v7595 = vpop.f32.mrb[0].mxu0
  %7596 = vmatprep.mubr.bf16.mxu0 %v7092
  %7597 = vmatmul.mubr.bf16.gmra.mrb[0].mxu0 %v7091
  %v7598 = vpop.f32.mrb[0].mxu0
  %v7599 = vadd.f32 %v7186, %v7598
  %v7600 = vpop.f32.mrb[0].mxu0
  %v7601 = vpop.f32.mrb[0].mxu0
  %v7602 = vadd.f32 %v7186, %v7601
  %v7603 = vpop.f32.mrb[0].mxu0
  %7604 = vmatprep.mubr.bf16.mxu0 %v7094
  %7605 = vmatmul.mubr.bf16.gmra.mrb[0].mxu0 %v7093
  %v7606 = vpop.f32.mrb[0].mxu0
  %v7607 = vadd.f32 %v7186, %v7606
  %v7608 = vpop.f32.mrb[0].mxu0
  %v7609 = vpop.f32.mrb[0].mxu0
  %v7610 = vadd.f32 %v7186, %v7609
  %v7611 = vpop.f32.mrb[0].mxu0
  %7612 = vmatprep.mubr.bf16.mxu0 %v7096
  %7613 = vmatmul.mubr.bf16.gmra.mrb[0].mxu0 %v7095
  %v7614 = vpop.f32.mrb[0].mxu0
  %v7615 = vadd.f32 %v7186, %v7614
  %v7616 = vpop.f32.mrb[0].mxu0
  %v7617 = vpop.f32.mrb[0].mxu0
  %v7618 = vadd.f32 %v7186, %v7617
  %v7619 = vpop.f32.mrb[0].mxu0
  %7620 = vmatprep.mubr.bf16.mxu0 %v7098
  %7621 = vmatmul.mubr.bf16.gmra.mrb[0].mxu0 %v7097
  %v7622 = vpop.f32.mrb[0].mxu0
  %v7623 = vadd.f32 %v7186, %v7622
  %v7624 = vpop.f32.mrb[0].mxu0
  %v7625 = vpop.f32.mrb[0].mxu0
  %v7626 = vadd.f32 %v7186, %v7625
  %v7627 = vpop.f32.mrb[0].mxu0
  %7628 = vmatprep.mubr.bf16.mxu0 %v7100
  %7629 = vmatmul.mubr.bf16.gmra.mrb[0].mxu0 %v7099
  %v7630 = vpop.f32.mrb[0].mxu0
  %v7631 = vadd.f32 %v7186, %v7630
  %v7632 = vpop.f32.mrb[0].mxu0
  %v7633 = vpop.f32.mrb[0].mxu0
  %v7634 = vadd.f32 %v7186, %v7633
  %v7635 = vpop.f32.mrb[0].mxu0
  %7636 = vmatprep.mubr.bf16.mxu0 %v7102
  %7637 = vmatmul.mubr.bf16.gmra.mrb[0].mxu0 %v7101
  %v7638 = vpop.f32.mrb[0].mxu0
  %v7639 = vadd.f32 %v7186, %v7638
  %v7640 = vpop.f32.mrb[0].mxu0
  %v7641 = vpop.f32.mrb[0].mxu0
  %v7642 = vadd.f32 %v7186, %v7641
  %v7643 = vpop.f32.mrb[0].mxu0
  %7644 = vmatprep.mubr.bf16.mxu0 %v7104
  %7645 = vmatmul.mubr.bf16.gmra.mrb[0].mxu0 %v7103
  %v7646 = vpop.f32.mrb[0].mxu0
  %v7647 = vadd.f32 %v7186, %v7646
  %v7648 = vpop.f32.mrb[0].mxu0
  %v7649 = vpop.f32.mrb[0].mxu0
  %v7650 = vadd.f32 %v7186, %v7649
  %v7651 = vpop.f32.mrb[0].mxu0
  %7652 = vmatprep.mubr.bf16.mxu0 %v7106
  %7653 = vmatmul.mubr.bf16.gmra.mrb[0].mxu0 %v7105
  %v7654 = vpop.f32.mrb[0].mxu0
  %v7655 = vadd.f32 %v7186, %v7654
  %v7656 = vpop.f32.mrb[0].mxu0
  %v7657 = vpop.f32.mrb[0].mxu0
  %v7658 = vadd.f32 %v7186, %v7657
  %v7659 = vpop.f32.mrb[0].mxu0
  %7660 = vmatprep.mubr.bf16.mxu0 %v7108
  %7661 = vmatmul.mubr.bf16.gmra.mrb[0].mxu0 %v7107
  %v7662 = vpop.f32.mrb[0].mxu0
  %v7663 = vadd.f32 %v7186, %v7662
  %v7664 = vpop.f32.mrb[0].mxu0
  %v7665 = vpop.f32.mrb[0].mxu0
  %v7666 = vadd.f32 %v7186, %v7665
  %v7667 = vpop.f32.mrb[0].mxu0
  %7668 = vmatprep.mubr.bf16.mxu0 %v7110
  %7669 = vmatmul.mubr.bf16.gmra.mrb[0].mxu0 %v7109
  %v7670 = vpop.f32.mrb[0].mxu0
  %v7671 = vadd.f32 %v7186, %v7670
  %v7672 = vpop.f32.mrb[0].mxu0
  %v7673 = vpop.f32.mrb[0].mxu0
  %v7674 = vadd.f32 %v7186, %v7673
  %v7675 = vpop.f32.mrb[0].mxu0
  %7676 = vmatprep.mubr.bf16.mxu0 %v7112
  %7677 = vmatmul.mubr.bf16.gmra.mrb[0].mxu0 %v7111
  %v7678 = vpop.f32.mrb[0].mxu0
  %v7679 = vadd.f32 %v7186, %v7678
  %v7680 = vpop.f32.mrb[0].mxu0
  %v7681 = vpop.f32.mrb[0].mxu0
  %v7682 = vadd.f32 %v7186, %v7681
  %v7683 = vpop.f32.mrb[0].mxu0
  %7684 = vmatprep.mubr.bf16.mxu0 %v7114
  %7685 = vmatmul.mubr.bf16.gmra.mrb[0].mxu0 %v7113
  %v7686 = vpop.f32.mrb[0].mxu0
  %v7687 = vadd.f32 %v7186, %v7686
  %v7688 = vpop.f32.mrb[0].mxu0
  %v7689 = vpop.f32.mrb[0].mxu0
  %v7690 = vadd.f32 %v7186, %v7689
  %v7691 = vpop.f32.mrb[0].mxu0
  %7692 = vmatprep.mubr.bf16.mxu0 %v7116
  %7693 = vmatmul.mubr.bf16.gmra.mrb[0].mxu0 %v7115
  %v7694 = vpop.f32.mrb[0].mxu0
  %v7695 = vadd.f32 %v7186, %v7694
  %v7696 = vpop.f32.mrb[0].mxu0
  %v7697 = vpop.f32.mrb[0].mxu0
  %v7698 = vadd.f32 %v7186, %v7697
  %v7699 = vpop.f32.mrb[0].mxu0
  %7700 = vmatprep.mubr.bf16.mxu0 %v7118
  %7701 = vmatmul.mubr.bf16.gmra.mrb[0].mxu0 %v7117
  %v7702 = vpop.f32.mrb[0].mxu0
  %v7703 = vadd.f32 %v7186, %v7702
  %v7704 = vpop.f32.mrb[0].mxu0
  %v7705 = vpop.f32.mrb[0].mxu0
  %v7706 = vadd.f32 %v7186, %v7705
  %v7707 = vpop.f32.mrb[0].mxu0
  %7708 = vmatprep.mubr.bf16.mxu0 %v7120
  %7709 = vmatmul.mubr.bf16.gmra.mrb[0].mxu0 %v7119
  %v7710 = vpop.f32.mrb[0].mxu0
  %v7711 = vadd.f32 %v7186, %v7710
  %v7712 = vpop.f32.mrb[0].mxu0
  %v7713 = vpop.f32.mrb[0].mxu0
  %v7714 = vadd.f32 %v7186, %v7713
  %v7715 = vpop.f32.mrb[0].mxu0
  %7716 = vmatprep.mubr.bf16.mxu0 %v7122
  %7717 = vmatmul.mubr.bf16.gmra.mrb[0].mxu0 %v7121
  %v7718 = vpop.f32.mrb[0].mxu0
  %v7719 = vadd.f32 %v7186, %v7718
  %v7720 = vpop.f32.mrb[0].mxu0
  %v7721 = vpop.f32.mrb[0].mxu0
  %v7722 = vadd.f32 %v7186, %v7721
  %v7723 = vpop.f32.mrb[0].mxu0
  %7724 = vmatprep.mubr.bf16.mxu0 %v7124
  %7725 = vmatmul.mubr.bf16.gmra.mrb[0].mxu0 %v7123
  %v7726 = vpop.f32.mrb[0].mxu0
  %v7727 = vadd.f32 %v7186, %v7726
  %v7728 = vpop.f32.mrb[0].mxu0
  %v7729 = vpop.f32.mrb[0].mxu0
  %v7730 = vadd.f32 %v7186, %v7729
  %v7731 = vpop.f32.mrb[0].mxu0
  %7732 = vmatprep.mubr.bf16.mxu0 %v7126
  %7733 = vmatmul.mubr.bf16.gmra.mrb[0].mxu0 %v7125
  %v7734 = vpop.f32.mrb[0].mxu0
  %v7735 = vadd.f32 %v7186, %v7734
  %v7736 = vpop.f32.mrb[0].mxu0
  %v7737 = vpop.f32.mrb[0].mxu0
  %v7738 = vadd.f32 %v7186, %v7737
  %v7739 = vpop.f32.mrb[0].mxu0
  %7740 = vmatprep.mubr.bf16.mxu0 %v7128
  %7741 = vmatmul.mubr.bf16.gmra.mrb[0].mxu0 %v7127
  %v7742 = vpop.f32.mrb[0].mxu0
  %v7743 = vadd.f32 %v7186, %v7742
  %v7744 = vpop.f32.mrb[0].mxu0
  %v7745 = vpop.f32.mrb[0].mxu0
  %v7746 = vadd.f32 %v7186, %v7745
  %v7747 = vpop.f32.mrb[0].mxu0
  %7748 = vmatprep.mubr.bf16.mxu0 %v7130
  %7749 = vmatmul.mubr.bf16.gmra.mrb[0].mxu0 %v7129
  %v7750 = vpop.f32.mrb[0].mxu0
  %v7751 = vadd.f32 %v7186, %v7750
  %v7752 = vpop.f32.mrb[0].mxu0
  %v7753 = vpop.f32.mrb[0].mxu0
  %v7754 = vadd.f32 %v7186, %v7753
  %v7755 = vpop.f32.mrb[0].mxu0
  %7756 = vmatprep.mubr.bf16.mxu0 %v7132
  %7757 = vmatmul.mubr.bf16.gmra.mrb[0].mxu0 %v7131
  %v7758 = vpop.f32.mrb[0].mxu0
  %v7759 = vadd.f32 %v7186, %v7758
  %v7760 = vpop.f32.mrb[0].mxu0
  %v7761 = vpop.f32.mrb[0].mxu0
  %v7762 = vadd.f32 %v7186, %v7761
  %v7763 = vpop.f32.mrb[0].mxu0
  %7764 = vmatprep.mubr.bf16.mxu0 %v7134
  %7765 = vmatmul.mubr.bf16.gmra.mrb[0].mxu0 %v7133
  %v7766 = vpop.f32.mrb[0].mxu0
  %v7767 = vadd.f32 %v7186, %v7766
  %v7768 = vpop.f32.mrb[0].mxu0
  %v7769 = vpop.f32.mrb[0].mxu0
  %v7770 = vadd.f32 %v7186, %v7769
  %v7771 = vpop.f32.mrb[0].mxu0
  %7772 = vmatprep.mubr.bf16.mxu0 %v7136
  %7773 = vmatmul.mubr.bf16.gmra.mrb[0].mxu0 %v7135
  %v7774 = vpop.f32.mrb[0].mxu0
  %v7775 = vadd.f32 %v7186, %v7774
  %v7776 = vpop.f32.mrb[0].mxu0
  %v7777 = vpop.f32.mrb[0].mxu0
  %v7778 = vadd.f32 %v7186, %v7777
  %v7779 = vpop.f32.mrb[0].mxu0
  %7780 = vmatprep.mubr.bf16.mxu0 %v7138
  %7781 = vmatmul.mubr.bf16.gmra.mrb[0].mxu0 %v7137
  %v7782 = vpop.f32.mrb[0].mxu0
  %v7783 = vadd.f32 %v7186, %v7782
  %v7784 = vpop.f32.mrb[0].mxu0
  %v7785 = vpop.f32.mrb[0].mxu0
  %v7786 = vadd.f32 %v7186, %v7785
  %v7787 = vpop.f32.mrb[0].mxu0
  %7788 = vmatprep.mubr.bf16.mxu0 %v7140
  %7789 = vmatmul.mubr.bf16.gmra.mrb[0].mxu0 %v7139
  %v7790 = vpop.f32.mrb[0].mxu0
  %v7791 = vadd.f32 %v7186, %v7790
  %v7792 = vpop.f32.mrb[0].mxu0
  %v7793 = vpop.f32.mrb[0].mxu0
  %v7794 = vadd.f32 %v7186, %v7793
  %v7795 = vpop.f32.mrb[0].mxu0
  %7796 = vmatprep.mubr.bf16.mxu0 %v7142
  %7797 = vmatmul.mubr.bf16.gmra.mrb[0].mxu0 %v7141
  %v7798 = vpop.f32.mrb[0].mxu0
  %v7799 = vadd.f32 %v7186, %v7798
  %v7800 = vpop.f32.mrb[0].mxu0
  %v7801 = vpop.f32.mrb[0].mxu0
  %v7802 = vadd.f32 %v7186, %v7801
  %v7803 = vpop.f32.mrb[0].mxu0
  %7804 = vmatprep.mubr.bf16.mxu0 %v7144
  %7805 = vmatmul.mubr.bf16.gmra.mrb[0].mxu0 %v7143
  %v7806 = vpop.f32.mrb[0].mxu0
  %v7807 = vadd.f32 %v7186, %v7806
  %v7808 = vpop.f32.mrb[0].mxu0
  %v7809 = vpop.f32.mrb[0].mxu0
  %v7810 = vadd.f32 %v7186, %v7809
  %v7811 = vpop.f32.mrb[0].mxu0
  %7812 = vmatprep.mubr.bf16.mxu0 %v7146
  %7813 = vmatmul.mubr.bf16.gmra.mrb[0].mxu0 %v7145
  %v7814 = vpop.f32.mrb[0].mxu0
  %v7815 = vadd.f32 %v7186, %v7814
  %v7816 = vpop.f32.mrb[0].mxu0
  %v7817 = vpop.f32.mrb[0].mxu0
  %v7818 = vadd.f32 %v7186, %v7817
  %v7819 = vpop.f32.mrb[0].mxu0
  %7820 = vmatprep.mubr.bf16.mxu0 %v7148
  %7821 = vmatmul.mubr.bf16.gmra.mrb[0].mxu0 %v7147
  %v7822 = vpop.f32.mrb[0].mxu0
  %v7823 = vadd.f32 %v7186, %v7822
  %v7824 = vpop.f32.mrb[0].mxu0
  %v7825 = vpop.f32.mrb[0].mxu0
  %v7826 = vadd.f32 %v7186, %v7825
  %v7827 = vpop.f32.mrb[0].mxu0
  %7828 = vdwg.mxu0
  %v7829 = vand.u32 2147483647, %v7319
  %v7830 = vand.u32 2147483647, %v7322
  %v7831 = vand.u32 2147483647, %v7327
  %v7832 = vand.u32 2147483647, %v7330
  %v7833 = vand.u32 2147483647, %v7335
  %v7834 = vand.u32 2147483647, %v7338
  %v7835 = vand.u32 2147483647, %v7343
  %v7836 = vand.u32 2147483647, %v7346
  %v7837 = vand.u32 2147483647, %v7351
  %v7838 = vand.u32 2147483647, %v7354
  %v7839 = vand.u32 2147483647, %v7359
  %v7840 = vand.u32 2147483647, %v7362
  %v7841 = vand.u32 2147483647, %v7367
  %v7842 = vand.u32 2147483647, %v7370
  %v7843 = vand.u32 2147483647, %v7375
  %v7844 = vand.u32 2147483647, %v7378
  %v7845 = vand.u32 2147483647, %v7383
  %v7846 = vand.u32 2147483647, %v7386
  %v7847 = vand.u32 2147483647, %v7391
  %v7848 = vand.u32 2147483647, %v7394
  %v7849 = vand.u32 2147483647, %v7399
  %v7850 = vand.u32 2147483647, %v7402
  %v7851 = vand.u32 2147483647, %v7407
  %v7852 = vand.u32 2147483647, %v7410
  %v7853 = vand.u32 2147483647, %v7415
  %v7854 = vand.u32 2147483647, %v7418
  %v7855 = vand.u32 2147483647, %v7423
  %v7856 = vand.u32 2147483647, %v7426
  %v7857 = vand.u32 2147483647, %v7431
  %v7858 = vand.u32 2147483647, %v7434
  %v7859 = vand.u32 2147483647, %v7439
  %v7860 = vand.u32 2147483647, %v7442
  %v7861 = vand.u32 2147483647, %v7447
  %v7862 = vand.u32 2147483647, %v7450
  %v7863 = vand.u32 2147483647, %v7455
  %v7864 = vand.u32 2147483647, %v7458
  %v7865 = vand.u32 2147483647, %v7463
  %v7866 = vand.u32 2147483647, %v7466
  %v7867 = vand.u32 2147483647, %v7471
  %v7868 = vand.u32 2147483647, %v7474
  %v7869 = vand.u32 2147483647, %v7479
  %v7870 = vand.u32 2147483647, %v7482
  %v7871 = vand.u32 2147483647, %v7487
  %v7872 = vand.u32 2147483647, %v7490
  %v7873 = vand.u32 2147483647, %v7495
  %v7874 = vand.u32 2147483647, %v7498
  %v7875 = vand.u32 2147483647, %v7503
  %v7876 = vand.u32 2147483647, %v7506
  %v7877 = vand.u32 2147483647, %v7511
  %v7878 = vand.u32 2147483647, %v7514
  %v7879 = vand.u32 2147483647, %v7519
  %v7880 = vand.u32 2147483647, %v7522
  %v7881 = vand.u32 2147483647, %v7527
  %v7882 = vand.u32 2147483647, %v7530
  %v7883 = vand.u32 2147483647, %v7535
  %v7884 = vand.u32 2147483647, %v7538
  %v7885 = vand.u32 2147483647, %v7543
  %v7886 = vand.u32 2147483647, %v7546
  %v7887 = vand.u32 2147483647, %v7551
  %v7888 = vand.u32 2147483647, %v7554
  %v7889 = vand.u32 2147483647, %v7559
  %v7890 = vand.u32 2147483647, %v7562
  %v7891 = vand.u32 2147483647, %v7567
  %v7892 = vand.u32 2147483647, %v7570
  %v7893 = vand.u32 2147483647, %v7575
  %v7894 = vand.u32 2147483647, %v7578
  %v7895 = vand.u32 2147483647, %v7583
  %v7896 = vand.u32 2147483647, %v7586
  %v7897 = vand.u32 2147483647, %v7591
  %v7898 = vand.u32 2147483647, %v7594
  %v7899 = vand.u32 2147483647, %v7599
  %v7900 = vand.u32 2147483647, %v7602
  %v7901 = vand.u32 2147483647, %v7607
  %v7902 = vand.u32 2147483647, %v7610
  %v7903 = vand.u32 2147483647, %v7615
  %v7904 = vand.u32 2147483647, %v7618
  %v7905 = vand.u32 2147483647, %v7623
  %v7906 = vand.u32 2147483647, %v7626
  %v7907 = vand.u32 2147483647, %v7631
  %v7908 = vand.u32 2147483647, %v7634
  %v7909 = vand.u32 2147483647, %v7639
  %v7910 = vand.u32 2147483647, %v7642
  %v7911 = vand.u32 2147483647, %v7647
  %v7912 = vand.u32 2147483647, %v7650
  %v7913 = vand.u32 2147483647, %v7655
  %v7914 = vand.u32 2147483647, %v7658
  %v7915 = vand.u32 2147483647, %v7663
  %v7916 = vand.u32 2147483647, %v7666
  %v7917 = vand.u32 2147483647, %v7671
  %v7918 = vand.u32 2147483647, %v7674
  %v7919 = vand.u32 2147483647, %v7679
  %v7920 = vand.u32 2147483647, %v7682
  %v7921 = vand.u32 2147483647, %v7687
  %v7922 = vand.u32 2147483647, %v7690
  %v7923 = vand.u32 2147483647, %v7695
  %v7924 = vand.u32 2147483647, %v7698
  %v7925 = vand.u32 2147483647, %v7703
  %v7926 = vand.u32 2147483647, %v7706
  %v7927 = vand.u32 2147483647, %v7711
  %v7928 = vand.u32 2147483647, %v7714
  %v7929 = vand.u32 2147483647, %v7719
  %v7930 = vand.u32 2147483647, %v7722
  %v7931 = vand.u32 2147483647, %v7727
  %v7932 = vand.u32 2147483647, %v7730
  %v7933 = vand.u32 2147483647, %v7735
  %v7934 = vand.u32 2147483647, %v7738
  %v7935 = vand.u32 2147483647, %v7743
  %v7936 = vand.u32 2147483647, %v7746
  %v7937 = vand.u32 2147483647, %v7751
  %v7938 = vand.u32 2147483647, %v7754
  %v7939 = vand.u32 2147483647, %v7759
  %v7940 = vand.u32 2147483647, %v7762
  %v7941 = vand.u32 2147483647, %v7767
  %v7942 = vand.u32 2147483647, %v7770
  %v7943 = vand.u32 2147483647, %v7775
  %v7944 = vand.u32 2147483647, %v7778
  %v7945 = vand.u32 2147483647, %v7783
  %v7946 = vand.u32 2147483647, %v7786
  %v7947 = vand.u32 2147483647, %v7791
  %v7948 = vand.u32 2147483647, %v7794
  %v7949 = vand.u32 2147483647, %v7799
  %v7950 = vand.u32 2147483647, %v7802
  %v7951 = vand.u32 2147483647, %v7807
  %v7952 = vand.u32 2147483647, %v7810
  %v7953 = vand.u32 2147483647, %v7815
  %v7954 = vand.u32 2147483647, %v7818
  %v7955 = vand.u32 2147483647, %v7823
  %v7956 = vand.u32 2147483647, %v7826
  %vm7957 = vcmask 23552
  %7958 = vst.msk [vmem:[%s13] sm:$0xff] %vm7957, %v7829
  %7959 = vst.msk [vmem:[%s13 + $0x8] sm:$0xff] %vm7957, %v7830
  %7960 = vst.msk [vmem:[%s13 + $0x10] sm:$0xff] %vm7957, %v7831
  %7961 = vst.msk [vmem:[%s13 + $0x18] sm:$0xff] %vm7957, %v7832
  %7962 = vst.msk [vmem:[%s13 + $0x20] sm:$0xff] %vm7957, %v7833
  %7963 = vst.msk [vmem:[%s13 + $0x28] sm:$0xff] %vm7957, %v7834
  %7964 = vst.msk [vmem:[%s13 + $0x30] sm:$0xff] %vm7957, %v7835
  %7965 = vst.msk [vmem:[%s13 + $0x38] sm:$0xff] %vm7957, %v7836
  %7966 = vst.msk [vmem:[%s13 + $0x40] sm:$0xff] %vm7957, %v7837
  %7967 = vst.msk [vmem:[%s13 + $0x48] sm:$0xff] %vm7957, %v7838
  %7968 = vst.msk [vmem:[%s13 + $0x50] sm:$0xff] %vm7957, %v7839
  %7969 = vst.msk [vmem:[%s13 + $0x58] sm:$0xff] %vm7957, %v7840
  %7970 = vst.msk [vmem:[%s13 + $0x60] sm:$0xff] %vm7957, %v7841
  %7971 = vst.msk [vmem:[%s13 + $0x68] sm:$0xff] %vm7957, %v7842
  %7972 = vst.msk [vmem:[%s13 + $0x70] sm:$0xff] %vm7957, %v7843
  %7973 = vst.msk [vmem:[%s13 + $0x78] sm:$0xff] %vm7957, %v7844
  %7974 = vst.msk [vmem:[%s13 + $0x80] sm:$0xff] %vm7957, %v7845
  %7975 = vst.msk [vmem:[%s13 + $0x88] sm:$0xff] %vm7957, %v7846
  %7976 = vst.msk [vmem:[%s13 + $0x90] sm:$0xff] %vm7957, %v7847
  %7977 = vst.msk [vmem:[%s13 + $0x98] sm:$0xff] %vm7957, %v7848
  %7978 = vst.msk [vmem:[%s13 + $0xa0] sm:$0xff] %vm7957, %v7849
  %7979 = vst.msk [vmem:[%s13 + $0xa8] sm:$0xff] %vm7957, %v7850
  %7980 = vst.msk [vmem:[%s13 + $0xb0] sm:$0xff] %vm7957, %v7851
  %7981 = vst.msk [vmem:[%s13 + $0xb8] sm:$0xff] %vm7957, %v7852
  %7982 = vst.msk [vmem:[%s13 + $0xc0] sm:$0xff] %vm7957, %v7853
  %7983 = vst.msk [vmem:[%s13 + $0xc8] sm:$0xff] %vm7957, %v7854
  %7984 = vst.msk [vmem:[%s13 + $0xd0] sm:$0xff] %vm7957, %v7855
  %7985 = vst.msk [vmem:[%s13 + $0xd8] sm:$0xff] %vm7957, %v7856
  %7986 = vst.msk [vmem:[%s13 + $0xe0] sm:$0xff] %vm7957, %v7857
  %7987 = vst.msk [vmem:[%s13 + $0xe8] sm:$0xff] %vm7957, %v7858
  %7988 = vst.msk [vmem:[%s13 + $0xf0] sm:$0xff] %vm7957, %v7859
  %7989 = vst.msk [vmem:[%s13 + $0xf8] sm:$0xff] %vm7957, %v7860
  %7990 = vst.msk [vmem:[%s13 + $0x100] sm:$0xff] %vm7957, %v7861
  %7991 = vst.msk [vmem:[%s13 + $0x108] sm:$0xff] %vm7957, %v7862
  %7992 = vst.msk [vmem:[%s13 + $0x110] sm:$0xff] %vm7957, %v7863
  %7993 = vst.msk [vmem:[%s13 + $0x118] sm:$0xff] %vm7957, %v7864
  %7994 = vst.msk [vmem:[%s13 + $0x120] sm:$0xff] %vm7957, %v7865
  %7995 = vst.msk [vmem:[%s13 + $0x128] sm:$0xff] %vm7957, %v7866
  %7996 = vst.msk [vmem:[%s13 + $0x130] sm:$0xff] %vm7957, %v7867
  %7997 = vst.msk [vmem:[%s13 + $0x138] sm:$0xff] %vm7957, %v7868
  %7998 = vst.msk [vmem:[%s13 + $0x140] sm:$0xff] %vm7957, %v7869
  %7999 = vst.msk [vmem:[%s13 + $0x148] sm:$0xff] %vm7957, %v7870
  %8000 = vst.msk [vmem:[%s13 + $0x150] sm:$0xff] %vm7957, %v7871
  %8001 = vst.msk [vmem:[%s13 + $0x158] sm:$0xff] %vm7957, %v7872
  %8002 = vst.msk [vmem:[%s13 + $0x160] sm:$0xff] %vm7957, %v7873
  %8003 = vst.msk [vmem:[%s13 + $0x168] sm:$0xff] %vm7957, %v7874
  %8004 = vst.msk [vmem:[%s13 + $0x170] sm:$0xff] %vm7957, %v7875
  %8005 = vst.msk [vmem:[%s13 + $0x178] sm:$0xff] %vm7957, %v7876
  %8006 = vst.msk [vmem:[%s13 + $0x180] sm:$0xff] %vm7957, %v7877
  %8007 = vst.msk [vmem:[%s13 + $0x188] sm:$0xff] %vm7957, %v7878
  %8008 = vst.msk [vmem:[%s13 + $0x190] sm:$0xff] %vm7957, %v7879
  %8009 = vst.msk [vmem:[%s13 + $0x198] sm:$0xff] %vm7957, %v7880
  %8010 = vst.msk [vmem:[%s13 + $0x1a0] sm:$0xff] %vm7957, %v7881
  %8011 = vst.msk [vmem:[%s13 + $0x1a8] sm:$0xff] %vm7957, %v7882
  %8012 = vst.msk [vmem:[%s13 + $0x1b0] sm:$0xff] %vm7957, %v7883
  %8013 = vst.msk [vmem:[%s13 + $0x1b8] sm:$0xff] %vm7957, %v7884
  %8014 = vst.msk [vmem:[%s13 + $0x1c0] sm:$0xff] %vm7957, %v7885
  %8015 = vst.msk [vmem:[%s13 + $0x1c8] sm:$0xff] %vm7957, %v7886
  %8016 = vst.msk [vmem:[%s13 + $0x1d0] sm:$0xff] %vm7957, %v7887
  %8017 = vst.msk [vmem:[%s13 + $0x1d8] sm:$0xff] %vm7957, %v7888
  %8018 = vst.msk [vmem:[%s13 + $0x1e0] sm:$0xff] %vm7957, %v7889
  %8019 = vst.msk [vmem:[%s13 + $0x1e8] sm:$0xff] %vm7957, %v7890
  %8020 = vst.msk [vmem:[%s13 + $0x1f0] sm:$0xff] %vm7957, %v7891
  %8021 = vst.msk [vmem:[%s13 + $0x1f8] sm:$0xff] %vm7957, %v7892
  %8022 = vst.msk [vmem:[%s13 + $0x200] sm:$0xff] %vm7957, %v7893
  %8023 = vst.msk [vmem:[%s13 + $0x208] sm:$0xff] %vm7957, %v7894
  %8024 = vst.msk [vmem:[%s13 + $0x210] sm:$0xff] %vm7957, %v7895
  %8025 = vst.msk [vmem:[%s13 + $0x218] sm:$0xff] %vm7957, %v7896
  %8026 = vst.msk [vmem:[%s13 + $0x220] sm:$0xff] %vm7957, %v7897
  %8027 = vst.msk [vmem:[%s13 + $0x228] sm:$0xff] %vm7957, %v7898
  %8028 = vst.msk [vmem:[%s13 + $0x230] sm:$0xff] %vm7957, %v7899
  %8029 = vst.msk [vmem:[%s13 + $0x238] sm:$0xff] %vm7957, %v7900
  %8030 = vst.msk [vmem:[%s13 + $0x240] sm:$0xff] %vm7957, %v7901
  %8031 = vst.msk [vmem:[%s13 + $0x248] sm:$0xff] %vm7957, %v7902
  %8032 = vst.msk [vmem:[%s13 + $0x250] sm:$0xff] %vm7957, %v7903
  %8033 = vst.msk [vmem:[%s13 + $0x258] sm:$0xff] %vm7957, %v7904
  %8034 = vst.msk [vmem:[%s13 + $0x260] sm:$0xff] %vm7957, %v7905
  %8035 = vst.msk [vmem:[%s13 + $0x268] sm:$0xff] %vm7957, %v7906
  %8036 = vst.msk [vmem:[%s13 + $0x270] sm:$0xff] %vm7957, %v7907
  %8037 = vst.msk [vmem:[%s13 + $0x278] sm:$0xff] %vm7957, %v7908
  %8038 = vst.msk [vmem:[%s13 + $0x280] sm:$0xff] %vm7957, %v7909
  %8039 = vst.msk [vmem:[%s13 + $0x288] sm:$0xff] %vm7957, %v7910
  %8040 = vst.msk [vmem:[%s13 + $0x290] sm:$0xff] %vm7957, %v7911
  %8041 = vst.msk [vmem:[%s13 + $0x298] sm:$0xff] %vm7957, %v7912
  %8042 = vst.msk [vmem:[%s13 + $0x2a0] sm:$0xff] %vm7957, %v7913
  %8043 = vst.msk [vmem:[%s13 + $0x2a8] sm:$0xff] %vm7957, %v7914
  %8044 = vst.msk [vmem:[%s13 + $0x2b0] sm:$0xff] %vm7957, %v7915
  %8045 = vst.msk [vmem:[%s13 + $0x2b8] sm:$0xff] %vm7957, %v7916
  %8046 = vst.msk [vmem:[%s13 + $0x2c0] sm:$0xff] %vm7957, %v7917
  %8047 = vst.msk [vmem:[%s13 + $0x2c8] sm:$0xff] %vm7957, %v7918
  %8048 = vst.msk [vmem:[%s13 + $0x2d0] sm:$0xff] %vm7957, %v7919
  %8049 = vst.msk [vmem:[%s13 + $0x2d8] sm:$0xff] %vm7957, %v7920
  %8050 = vst.msk [vmem:[%s13 + $0x2e0] sm:$0xff] %vm7957, %v7921
  %8051 = vst.msk [vmem:[%s13 + $0x2e8] sm:$0xff] %vm7957, %v7922
  %8052 = vst.msk [vmem:[%s13 + $0x2f0] sm:$0xff] %vm7957, %v7923
  %8053 = vst.msk [vmem:[%s13 + $0x2f8] sm:$0xff] %vm7957, %v7924
  %8054 = vst.msk [vmem:[%s13 + $0x300] sm:$0xff] %vm7957, %v7925
  %8055 = vst.msk [vmem:[%s13 + $0x308] sm:$0xff] %vm7957, %v7926
  %8056 = vst.msk [vmem:[%s13 + $0x310] sm:$0xff] %vm7957, %v7927
  %8057 = vst.msk [vmem:[%s13 + $0x318] sm:$0xff] %vm7957, %v7928
  %8058 = vst.msk [vmem:[%s13 + $0x320] sm:$0xff] %vm7957, %v7929
  %8059 = vst.msk [vmem:[%s13 + $0x328] sm:$0xff] %vm7957, %v7930
  %8060 = vst.msk [vmem:[%s13 + $0x330] sm:$0xff] %vm7957, %v7931
  %8061 = vst.msk [vmem:[%s13 + $0x338] sm:$0xff] %vm7957, %v7932
  %8062 = vst.msk [vmem:[%s13 + $0x340] sm:$0xff] %vm7957, %v7933
  %8063 = vst.msk [vmem:[%s13 + $0x348] sm:$0xff] %vm7957, %v7934
  %8064 = vst.msk [vmem:[%s13 + $0x350] sm:$0xff] %vm7957, %v7935
  %8065 = vst.msk [vmem:[%s13 + $0x358] sm:$0xff] %vm7957, %v7936
  %8066 = vst.msk [vmem:[%s13 + $0x360] sm:$0xff] %vm7957, %v7937
  %8067 = vst.msk [vmem:[%s13 + $0x368] sm:$0xff] %vm7957, %v7938
  %8068 = vst.msk [vmem:[%s13 + $0x370] sm:$0xff] %vm7957, %v7939
  %8069 = vst.msk [vmem:[%s13 + $0x378] sm:$0xff] %vm7957, %v7940
  %8070 = vst.msk [vmem:[%s13 + $0x380] sm:$0xff] %vm7957, %v7941
  %8071 = vst.msk [vmem:[%s13 + $0x388] sm:$0xff] %vm7957, %v7942
  %8072 = vst.msk [vmem:[%s13 + $0x390] sm:$0xff] %vm7957, %v7943
  %8073 = vst.msk [vmem:[%s13 + $0x398] sm:$0xff] %vm7957, %v7944
  %8074 = vst.msk [vmem:[%s13 + $0x3a0] sm:$0xff] %vm7957, %v7945
  %8075 = vst.msk [vmem:[%s13 + $0x3a8] sm:$0xff] %vm7957, %v7946
  %8076 = vst.msk [vmem:[%s13 + $0x3b0] sm:$0xff] %vm7957, %v7947
  %8077 = vst.msk [vmem:[%s13 + $0x3b8] sm:$0xff] %vm7957, %v7948
  %8078 = vst.msk [vmem:[%s13 + $0x3c0] sm:$0xff] %vm7957, %v7949
  %8079 = vst.msk [vmem:[%s13 + $0x3c8] sm:$0xff] %vm7957, %v7950
  %8080 = vst.msk [vmem:[%s13 + $0x3d0] sm:$0xff] %vm7957, %v7951
  %8081 = vst.msk [vmem:[%s13 + $0x3d8] sm:$0xff] %vm7957, %v7952
  %8082 = vst.msk [vmem:[%s13 + $0x3e0] sm:$0xff] %vm7957, %v7953
  %8083 = vst.msk [vmem:[%s13 + $0x3e8] sm:$0xff] %vm7957, %v7954
  %8084 = vst.msk [vmem:[%s13 + $0x3f0] sm:$0xff] %vm7957, %v7955
  %8085 = vst.msk [vmem:[%s13 + $0x3f8] sm:$0xff] %vm7957, %v7956
  // Predicated region
  $region54: #{nrfield_forward.1} parent=0 // pred_check
    _
  $region55: #{nrfield_forward.1} parent=0 // pred_check_branch
    %8087 = sbr.rel (0) target = $region57
  $region56: #{nrfield_forward.1} parent=0 // pred_region
    _
  $region57: #{nrfield_forward.1} parent=0 // pred_fallthru
    _
  // Predicated region
  $region58: #{nrfield_forward.1} parent=0 // pred_check
    _
  $region59: #{nrfield_forward.1} parent=0 // pred_check_branch
    %8089 = sbr.rel (0) target = $region61
  $region60: #{nrfield_forward.1} parent=0 // pred_region
    _
  $region61: #{nrfield_forward.1} parent=0 // pred_fallthru
    _

</llo_original>
